<compile_context>
chip_gen: v7x
topology: tpu7x:2x2x1
jax: 0.10.0
libtpu: 0.0.40
codegen_flags: <defaults>
</compile_context>

<pallas_src>
import functools

import jax
import jax.numpy as jnp
from jax.experimental import pallas as pl
from jax.experimental.pallas import tpu as pltpu

# ----------------------------- configuration -----------------------------
NUM_STEPS = 2        # num_iterative_steps
EMB_DIM = 32         # emb_dim
KERNEL_DIM = 3       # kernel_dim
NUM_OBJECTS = 3      # num_objects
NUM_HEADS = 4        # num_heads  (head_dim = 8)
MLP_FACTOR = 4       # mlp_factor
LN_EPS = 1e-5        # layer_norm_eps

BS = 2
H_FEAT = 8
W_FEAT = 8

S_VALID = NUM_OBJECTS * KERNEL_DIM ** 2     # 27 exemplar tokens per batch element
S_PAD = 32                                  # sublane-aligned padded token count

_VMEM = pl.BlockSpec(memory_space=pltpu.MemorySpace.VMEM)


# ----------------------------- in-kernel helpers -----------------------------
def _layer_norm(y, g, b, eps):
    mu = jnp.mean(y, axis=-1, keepdims=True)
    var = jnp.mean((y - mu) ** 2, axis=-1, keepdims=True)
    return (y - mu) * jax.lax.rsqrt(var + eps) * g + b


def _softmax_lastdim(x):
    m = jnp.max(x, axis=-1, keepdims=True)
    e = jnp.exp(x - m)
    return e * pl.reciprocal(jnp.sum(e, axis=-1, keepdims=True), approx=True)


# ----------------------------- fused Pallas kernel -----------------------------
def ielf_fused_kernel(seq_ref, mem_ref, pE_ref, pF_ref, out_ref, *,
                      num_steps, num_heads, s_valid, s_pad, bs, eps):
    E = pE_ref.shape[1]
    Dh = E // num_heads
    mha_scale = 1.0 / float(Dh) ** 0.5
    la_scale = float(E) ** (-0.5)

    # packed-weight row offsets (see pack_params)
    R_WQ, R_WK, R_WV, R_WO = 0, E, 2 * E, 3 * E
    R_LAQ, R_LAK, R_LAV, R_FF2, R_VEC = 4 * E, 5 * E, 6 * E, 7 * E, 11 * E

    def vec(i):                                   # one [1, E] bias / LN row
        return pE_ref[R_VEC + i:R_VEC + i + 1, :]

    shape_pad = seq_ref[0]          # [bs*s_pad, E]   (pad rows are zero)
    qpos = seq_ref[1]               # [bs*s_pad, E]
    mem = mem_ref[0]                # [bs*hw, E]
    pos = mem_ref[1]                # [bs*hw, E]

    # ---------------- hoisted loop-invariants ----------------
    # exemplar-attention K / V (key = value = shape_emb, constant across steps)
    K3 = (jnp.dot(shape_pad, pE_ref[R_WK:R_WK + E, :],
                  preferred_element_type=jnp.float32) + vec(1)).reshape(bs, s_pad, E)
    V3 = (jnp.dot(shape_pad, pE_ref[R_WV:R_WV + E, :],
                  preferred_element_type=jnp.float32) + vec(2)).reshape(bs, s_pad, E)
    # key-padding mask (tokens >= s_valid are padding)
    kmask = jax.lax.broadcasted_iota(jnp.int32, (1, 1, s_pad), 2) < s_valid

    # linear-attention context (depends only on memory / pos, not on F_k)
    k_la = jnp.dot(mem + pos, pE_ref[R_LAK:R_LAK + E, :],
                   preferred_element_type=jnp.float32) + vec(5)
    m0 = jnp.max(k_la, axis=0, keepdims=True)
    e0 = jnp.exp(k_la - m0)
    k_la = e0 * pl.reciprocal(jnp.sum(e0, axis=0, keepdims=True), approx=True)  # softmax(dim=0)
    v_la = jnp.dot(mem, pE_ref[R_LAV:R_LAV + E, :],
                   preferred_element_type=jnp.float32) + vec(6)
    ctx_la = jnp.sum(k_la * v_la, axis=0, keepdims=True)                        # [1, E]

    bq, bo, labq, ffb2 = vec(0), vec(3), vec(4), vec(7)
    g1, b1 = vec(8), vec(9)
    g2, b2 = vec(10), vec(11)
    g3, b3 = vec(12), vec(13)
    ffw1 = pF_ref[0:E, :]
    ffb1 = pF_ref[E:E + 1, :]

    # ---------------- iterative refinement (unrolled, fully VMEM resident) ----------------
    Fk = shape_pad
    for step in range(num_steps):
        # --- exemplar multi-head attention + residual + LayerNorm1 ---
        Q3 = (jnp.dot(Fk + qpos, pE_ref[R_WQ:R_WQ + E, :],
                      preferred_element_type=jnp.float32) + bq).reshape(bs, s_pad, E)
        attn = None
        for h in range(num_heads):
            sl = slice(h * Dh, (h + 1) * Dh)
            s = jnp.einsum('bqd,bkd->bqk', Q3[:, :, sl], K3[:, :, sl],
                           preferred_element_type=jnp.float32) * mha_scale
            p = _softmax_lastdim(jnp.where(kmask, s, -1e30))
            oh = jnp.einsum('bqk,bkd->bqd', p, V3[:, :, sl],
                            preferred_element_type=jnp.float32)
            # fold the head directly through its output-projection block (no lane concat)
            ch = jnp.dot(oh.reshape(bs * s_pad, Dh),
                         pE_ref[R_WO + h * Dh:R_WO + (h + 1) * Dh, :],
                         preferred_element_type=jnp.float32)
            attn = ch if attn is None else attn + ch
        Fk = _layer_norm(Fk + attn + bo, g1, b1, eps)

        # --- linear attention (only the q path depends on F_k) + residual + LayerNorm2 ---
        q = jnp.dot(Fk + qpos, pE_ref[R_LAQ:R_LAQ + E, :],
                    preferred_element_type=jnp.float32) + labq
        q = _softmax_lastdim(q * la_scale)
        Fk = _layer_norm(Fk + q * ctx_la, g2, b2, eps)

        # --- feed-forward + residual + LayerNorm3 ---
        hdn = jnp.maximum(
            jnp.dot(Fk, ffw1, preferred_element_type=jnp.float32) + ffb1, 0.0)
        ff = jnp.dot(hdn, pE_ref[R_FF2:R_FF2 + 4 * E, :],
                     preferred_element_type=jnp.float32) + ffb2
        Fk = _layer_norm(Fk + ff, g3, b3, eps)

        out_ref[step] = Fk


# ----------------------------- glue (plain JAX) -----------------------------
def positional_encodings_fixed(bs, h, w, emb_dim, temperature=10000.0):
    """PositionalEncodingsFixed equivalent -> [bs, emb_dim, h, w]."""
    half = emb_dim // 2
    t = jnp.arange(half, dtype=jnp.float32)
    t = temperature ** (2.0 * jnp.floor(t / 2.0) / emb_dim)
    y = jnp.broadcast_to(jnp.arange(1, h + 1, dtype=jnp.float32)[:, None], (h, w))
    x = jnp.broadcast_to(jnp.arange(1, w + 1, dtype=jnp.float32)[None, :], (h, w))

    def enc(v):
        e = v[..., None] / t                          # [h, w, half]
        sin = jnp.sin(e[..., 0::2])
        cos = jnp.cos(e[..., 1::2])
        return jnp.stack([sin, cos], axis=-1).reshape(h, w, half)

    pe = jnp.concatenate([enc(y), enc(x)], axis=-1)   # [h, w, emb_dim]
    pe = jnp.broadcast_to(pe[None], (bs, h, w, emb_dim))
    return jnp.transpose(pe, (0, 3, 1, 2))


def init_params(key):
    E = EMB_DIM
    ks = jax.random.split(key, 16)

    def w(k, shape, s=0.1):
        return jax.random.normal(k, shape, jnp.float32) * s

    p = {}
    # zero-shot shape mapping parameter: nn.init.normal_
    p["shape_mapping"] = jax.random.normal(
        ks[0], (NUM_OBJECTS, KERNEL_DIM ** 2, E), jnp.float32)
    # exemplar multihead attention (weights stored pre-transposed: y = x @ W + b)
    p["mha_wq"] = w(ks[1], (E, E)); p["mha_bq"] = jnp.zeros((1, E), jnp.float32)
    p["mha_wk"] = w(ks[2], (E, E)); p["mha_bk"] = jnp.zeros((1, E), jnp.float32)
    p["mha_wv"] = w(ks[3], (E, E)); p["mha_bv"] = jnp.zeros((1, E), jnp.float32)
    p["mha_wo"] = w(ks[4], (E, E)); p["mha_bo"] = jnp.zeros((1, E), jnp.float32)
    # linear attention projections
    p["la_wq"] = w(ks[5], (E, E)); p["la_bq"] = jnp.zeros((1, E), jnp.float32)
    p["la_wk"] = w(ks[6], (E, E)); p["la_bk"] = jnp.zeros((1, E), jnp.float32)
    p["la_wv"] = w(ks[7], (E, E)); p["la_bv"] = jnp.zeros((1, E), jnp.float32)
    # feed-forward network
    p["ff_w1"] = w(ks[8], (E, MLP_FACTOR * E))
    p["ff_b1"] = jnp.zeros((1, MLP_FACTOR * E), jnp.float32)
    p["ff_w2"] = w(ks[9], (MLP_FACTOR * E, E))
    p["ff_b2"] = jnp.zeros((1, E), jnp.float32)
    # layer norms
    for name in ("1", "2", "3"):
        p["g" + name] = jnp.ones((1, E), jnp.float32)
        p["b" + name] = jnp.zeros((1, E), jnp.float32)
    return p


def pack_params(params, bs):
    """One-time packing of weights / constant activations into 3 kernel operands."""
    E = EMB_DIM
    kd2 = KERNEL_DIM ** 2
    S = NUM_OBJECTS * kd2

    # shape_emb batch-major [bs, S, E]; pad token dim S -> S_PAD with zeros
    shape_bm = jnp.broadcast_to(
        params["shape_mapping"][None], (bs, NUM_OBJECTS, kd2, E)).reshape(bs, S, E)
    shape_pad = jnp.pad(shape_bm, ((0, 0), (0, S_PAD - S), (0, 0))).reshape(bs * S_PAD, E)

    # query positional embedding (kd^2 block repeated per object), batch-major, padded
    qpe = positional_encodings_fixed(bs, KERNEL_DIM, KERNEL_DIM, E)   # [bs, E, kd, kd]
    qpe = qpe.reshape(bs, E, kd2).transpose(0, 2, 1)                  # [bs, kd2, E]
    qpos_bm = jnp.tile(qpe, (1, NUM_OBJECTS, 1))                      # [bs, S, E]
    qpos_pad = jnp.pad(qpos_bm, ((0, 0), (0, S_PAD - S), (0, 0))).reshape(bs * S_PAD, E)

    seq_in = jnp.stack([shape_pad, qpos_pad], axis=0)                 # [2, bs*S_PAD, E]

    # biases + LayerNorm params as rows (order must match kernel's vec() indices)
    vecs = jnp.concatenate(
        [params["mha_bq"], params["mha_bk"], params["mha_bv"], params["mha_bo"],
         params["la_bq"], params["la_bk"], params["la_bv"], params["ff_b2"],
         params["g1"], params["b1"], params["g2"], params["b2"],
         params["g3"], params["b3"]], axis=0)                          # [14, E]

    # all E-wide weight matrices + vecs stacked along sublanes -> one operand
    pE = jnp.concatenate(
        [params["mha_wq"], params["mha_wk"], params["mha_wv"], params["mha_wo"],
         params["la_wq"], params["la_wk"], params["la_wv"],
         params["ff_w2"], vecs], axis=0)                               # [11E+14, E]

    # FF expansion weight + its bias row -> one [E+1, 4E] operand
    pF = jnp.concatenate([params["ff_w1"], params["ff_b1"]], axis=0)   # [E+1, 4E]

    return {"seq_in": seq_in, "pE": pE, "pF": pF}


def ielf_forward(f_e, pos_emb, bboxes, packed):
    del bboxes  # zero_shot=True path: bboxes / roi_align are unused
    bs, E, h, w = f_e.shape
    hw = h * w

    # memory / positional encodings flattened; row ordering is irrelevant to the
    # linear-attention reductions as long as mem & pos rows stay paired (they do).
    mem = f_e.reshape(bs, E, hw).transpose(0, 2, 1).reshape(bs * hw, E)
    pos = pos_emb.transpose(1, 0, 2).reshape(bs * hw, E)
    mem_in = jnp.stack([mem, pos], axis=0)                             # [2, bs*hw, E]

    kernel = functools.partial(
        ielf_fused_kernel, num_steps=NUM_STEPS, num_heads=NUM_HEADS,
        s_valid=S_VALID, s_pad=S_PAD, bs=bs, eps=LN_EPS)

    out = pl.pallas_call(
        kernel,
        out_shape=jax.ShapeDtypeStruct((NUM_STEPS, bs * S_PAD, E), jnp.float32),
        in_specs=[_VMEM] * 4,
        out_specs=_VMEM,
    )(packed["seq_in"], mem_in, packed["pE"], packed["pF"])

    # [steps, bs, S_PAD, E] -> drop padding -> [steps, S, bs, E] (PyTorch layout)
    out = out.reshape(NUM_STEPS, bs, S_PAD, E)[:, :, :S_VALID, :].transpose(0, 2, 1, 3)
    return out


# ----------------------------- main -----------------------------
if __name__ == "__main__":
    key = jax.random.PRNGKey(0)
    kp, kf, kb = jax.random.split(key, 3)
    params = init_params(kp)
    packed = pack_params(params, BS)      # one-time, outside the forward path

    f_e = jax.random.normal(kf, (BS, EMB_DIM, H_FEAT, W_FEAT), jnp.float32)
    pe = positional_encodings_fixed(BS, H_FEAT, W_FEAT, EMB_DIM)            # [B, E, h, w]
    pos_emb = pe.reshape(BS, EMB_DIM, H_FEAT * W_FEAT).transpose(2, 0, 1)   # [hw, B, E]
    bboxes = jax.random.uniform(kb, (BS, NUM_OBJECTS, 4), jnp.float32)

    out = jax.jit(ielf_forward)(f_e, pos_emb, bboxes, packed)
    out = jax.block_until_ready(out)
    assert out.shape == (NUM_STEPS, S_VALID, BS, EMB_DIM)
    assert bool(jnp.all(jnp.isfinite(out)))
    print("KERNEL_OK")
</pallas_src>

<mosaic_0001>
module attributes {stable_mosaic.version = 11 : i64} {
  func.func @ielf_fused_kernel(%arg0: memref<2x64x32xf32, #tpu.memory_space<vmem>>, %arg1: memref<2x128x32xf32, #tpu.memory_space<vmem>>, %arg2: memref<366x32xf32, #tpu.memory_space<vmem>>, %arg3: memref<33x128xf32, #tpu.memory_space<vmem>>, %arg4: memref<2x64x32xf32, #tpu.memory_space<vmem>>) attributes {dimension_semantics = [], scalar_prefetch = 0 : i64, scratch_operands = 0 : i64, tpu.core_type = #tpu.core_type<tc>} {
    %c0 = arith.constant 0 : index
    %c0_0 = arith.constant 0 : index
    %c0_1 = arith.constant 0 : index
    %0 = vector.load %arg0[%c0, %c0_0, %c0_1] : memref<2x64x32xf32, #tpu.memory_space<vmem>>, vector<1x64x32xf32>
    %1 = vector.shape_cast %0 : vector<1x64x32xf32> to vector<64x32xf32>
    %c1 = arith.constant 1 : index
    %c0_2 = arith.constant 0 : index
    %c0_3 = arith.constant 0 : index
    %2 = vector.load %arg0[%c1, %c0_2, %c0_3] : memref<2x64x32xf32, #tpu.memory_space<vmem>>, vector<1x64x32xf32>
    %3 = vector.shape_cast %2 : vector<1x64x32xf32> to vector<64x32xf32>
    %c0_4 = arith.constant 0 : index
    %c0_5 = arith.constant 0 : index
    %c0_6 = arith.constant 0 : index
    %4 = vector.load %arg1[%c0_4, %c0_5, %c0_6] : memref<2x128x32xf32, #tpu.memory_space<vmem>>, vector<1x128x32xf32>
    %5 = vector.shape_cast %4 : vector<1x128x32xf32> to vector<128x32xf32>
    %c1_7 = arith.constant 1 : index
    %c0_8 = arith.constant 0 : index
    %c0_9 = arith.constant 0 : index
    %6 = vector.load %arg1[%c1_7, %c0_8, %c0_9] : memref<2x128x32xf32, #tpu.memory_space<vmem>>, vector<1x128x32xf32>
    %7 = vector.shape_cast %6 : vector<1x128x32xf32> to vector<128x32xf32>
    %c32 = arith.constant 32 : index
    %c0_10 = arith.constant 0 : index
    %8 = vector.load %arg2[%c32, %c0_10] : memref<366x32xf32, #tpu.memory_space<vmem>>, vector<32x32xf32>
    %cst = arith.constant dense<0.000000e+00> : vector<64x32xf32>
    %9 = tpu.matmul %1, %8, %cst {dimension_numbers = #tpu.dot_dimension_numbers<[1], [0], [0], [1], [0, 0, 1, 1], [], []>} : vector<64x32xf32>, vector<32x32xf32>, vector<64x32xf32> -> vector<64x32xf32>
    %c353 = arith.constant 353 : index
    %c0_11 = arith.constant 0 : index
    %10 = vector.load %arg2[%c353, %c0_11] : memref<366x32xf32, #tpu.memory_space<vmem>>, vector<1x32xf32>
    %11 = vector.broadcast %10 : vector<1x32xf32> to vector<64x32xf32>
    %12 = arith.addf %9, %11 : vector<64x32xf32>
    %13 = vector.shape_cast %12 : vector<64x32xf32> to vector<2x32x32xf32>
    %c64 = arith.constant 64 : index
    %c0_12 = arith.constant 0 : index
    %14 = vector.load %arg2[%c64, %c0_12] : memref<366x32xf32, #tpu.memory_space<vmem>>, vector<32x32xf32>
    %cst_13 = arith.constant dense<0.000000e+00> : vector<64x32xf32>
    %15 = tpu.matmul %1, %14, %cst_13 {dimension_numbers = #tpu.dot_dimension_numbers<[1], [0], [0], [1], [0, 0, 1, 1], [], []>} : vector<64x32xf32>, vector<32x32xf32>, vector<64x32xf32> -> vector<64x32xf32>
    %c354 = arith.constant 354 : index
    %c0_14 = arith.constant 0 : index
    %16 = vector.load %arg2[%c354, %c0_14] : memref<366x32xf32, #tpu.memory_space<vmem>>, vector<1x32xf32>
    %17 = vector.broadcast %16 : vector<1x32xf32> to vector<64x32xf32>
    %18 = arith.addf %15, %17 : vector<64x32xf32>
    %19 = vector.shape_cast %18 : vector<64x32xf32> to vector<2x32x32xf32>
    %20 = tpu.iota {dimensions = array<i32: 2>} : vector<1x1x32xi32>
    %c27_i32 = arith.constant 27 : i32
    %21 = vector.broadcast %c27_i32 : i32 to vector<1x1x32xi32>
    %22 = arith.cmpi slt, %20, %21 : vector<1x1x32xi32>
    %23 = arith.addf %5, %7 : vector<128x32xf32>
    %c160 = arith.constant 160 : index
    %c0_15 = arith.constant 0 : index
    %24 = vector.load %arg2[%c160, %c0_15] : memref<366x32xf32, #tpu.memory_space<vmem>>, vector<32x32xf32>
    %cst_16 = arith.constant dense<0.000000e+00> : vector<128x32xf32>
    %25 = tpu.matmul %23, %24, %cst_16 {dimension_numbers = #tpu.dot_dimension_numbers<[1], [0], [0], [1], [0, 0, 1, 1], [], []>} : vector<128x32xf32>, vector<32x32xf32>, vector<128x32xf32> -> vector<128x32xf32>
    %c357 = arith.constant 357 : index
    %c0_17 = arith.constant 0 : index
    %26 = vector.load %arg2[%c357, %c0_17] : memref<366x32xf32, #tpu.memory_space<vmem>>, vector<1x32xf32>
    %27 = vector.broadcast %26 : vector<1x32xf32> to vector<128x32xf32>
    %28 = arith.addf %25, %27 : vector<128x32xf32>
    %cst_18 = arith.constant dense<0xFF800000> : vector<32xf32>
    %29 = vector.multi_reduction <maximumf>, %28, %cst_18 [0] : vector<128x32xf32> to vector<32xf32>
    %30 = vector.shape_cast %29 : vector<32xf32> to vector<1x32xf32>
    %31 = vector.broadcast %30 : vector<1x32xf32> to vector<128x32xf32>
    %32 = arith.subf %28, %31 : vector<128x32xf32>
    %33 = math.exp %32 : vector<128x32xf32>
    %cst_19 = arith.constant dense<0.000000e+00> : vector<32xf32>
    %34 = vector.multi_reduction <add>, %33, %cst_19 [0] : vector<128x32xf32> to vector<32xf32>
    %35 = vector.shape_cast %34 : vector<32xf32> to vector<1x32xf32>
    %36 = tpu.reciprocal %35 {approx = true} : vector<1x32xf32> -> vector<1x32xf32>
    %37 = vector.broadcast %36 : vector<1x32xf32> to vector<128x32xf32>
    %38 = arith.mulf %33, %37 : vector<128x32xf32>
    %c192 = arith.constant 192 : index
    %c0_20 = arith.constant 0 : index
    %39 = vector.load %arg2[%c192, %c0_20] : memref<366x32xf32, #tpu.memory_space<vmem>>, vector<32x32xf32>
    %cst_21 = arith.constant dense<0.000000e+00> : vector<128x32xf32>
    %40 = tpu.matmul %5, %39, %cst_21 {dimension_numbers = #tpu.dot_dimension_numbers<[1], [0], [0], [1], [0, 0, 1, 1], [], []>} : vector<128x32xf32>, vector<32x32xf32>, vector<128x32xf32> -> vector<128x32xf32>
    %c358 = arith.constant 358 : index
    %c0_22 = arith.constant 0 : index
    %41 = vector.load %arg2[%c358, %c0_22] : memref<366x32xf32, #tpu.memory_space<vmem>>, vector<1x32xf32>
    %42 = vector.broadcast %41 : vector<1x32xf32> to vector<128x32xf32>
    %43 = arith.addf %40, %42 : vector<128x32xf32>
    %44 = arith.mulf %38, %43 : vector<128x32xf32>
    %cst_23 = arith.constant dense<0.000000e+00> : vector<32xf32>
    %45 = vector.multi_reduction <add>, %44, %cst_23 [0] : vector<128x32xf32> to vector<32xf32>
    %46 = vector.shape_cast %45 : vector<32xf32> to vector<1x32xf32>
    %c352 = arith.constant 352 : index
    %c0_24 = arith.constant 0 : index
    %47 = vector.load %arg2[%c352, %c0_24] : memref<366x32xf32, #tpu.memory_space<vmem>>, vector<1x32xf32>
    %c355 = arith.constant 355 : index
    %c0_25 = arith.constant 0 : index
    %48 = vector.load %arg2[%c355, %c0_25] : memref<366x32xf32, #tpu.memory_space<vmem>>, vector<1x32xf32>
    %c356 = arith.constant 356 : index
    %c0_26 = arith.constant 0 : index
    %49 = vector.load %arg2[%c356, %c0_26] : memref<366x32xf32, #tpu.memory_space<vmem>>, vector<1x32xf32>
    %c359 = arith.constant 359 : index
    %c0_27 = arith.constant 0 : index
    %50 = vector.load %arg2[%c359, %c0_27] : memref<366x32xf32, #tpu.memory_space<vmem>>, vector<1x32xf32>
    %c360 = arith.constant 360 : index
    %c0_28 = arith.constant 0 : index
    %51 = vector.load %arg2[%c360, %c0_28] : memref<366x32xf32, #tpu.memory_space<vmem>>, vector<1x32xf32>
    %c361 = arith.constant 361 : index
    %c0_29 = arith.constant 0 : index
    %52 = vector.load %arg2[%c361, %c0_29] : memref<366x32xf32, #tpu.memory_space<vmem>>, vector<1x32xf32>
    %c362 = arith.constant 362 : index
    %c0_30 = arith.constant 0 : index
    %53 = vector.load %arg2[%c362, %c0_30] : memref<366x32xf32, #tpu.memory_space<vmem>>, vector<1x32xf32>
    %c363 = arith.constant 363 : index
    %c0_31 = arith.constant 0 : index
    %54 = vector.load %arg2[%c363, %c0_31] : memref<366x32xf32, #tpu.memory_space<vmem>>, vector<1x32xf32>
    %c364 = arith.constant 364 : index
    %c0_32 = arith.constant 0 : index
    %55 = vector.load %arg2[%c364, %c0_32] : memref<366x32xf32, #tpu.memory_space<vmem>>, vector<1x32xf32>
    %c365 = arith.constant 365 : index
    %c0_33 = arith.constant 0 : index
    %56 = vector.load %arg2[%c365, %c0_33] : memref<366x32xf32, #tpu.memory_space<vmem>>, vector<1x32xf32>
    %c0_34 = arith.constant 0 : index
    %c0_35 = arith.constant 0 : index
    %57 = vector.load %arg3[%c0_34, %c0_35] : memref<33x128xf32, #tpu.memory_space<vmem>>, vector<32x128xf32>
    %c32_36 = arith.constant 32 : index
    %c0_37 = arith.constant 0 : index
    %58 = vector.load %arg3[%c32_36, %c0_37] : memref<33x128xf32, #tpu.memory_space<vmem>>, vector<1x128xf32>
    %59 = arith.addf %1, %3 : vector<64x32xf32>
    %c0_38 = arith.constant 0 : index
    %c0_39 = arith.constant 0 : index
    %60 = vector.load %arg2[%c0_38, %c0_39] : memref<366x32xf32, #tpu.memory_space<vmem>>, vector<32x32xf32>
    %cst_40 = arith.constant dense<0.000000e+00> : vector<64x32xf32>
    %61 = tpu.matmul %59, %60, %cst_40 {dimension_numbers = #tpu.dot_dimension_numbers<[1], [0], [0], [1], [0, 0, 1, 1], [], []>} : vector<64x32xf32>, vector<32x32xf32>, vector<64x32xf32> -> vector<64x32xf32>
    %62 = vector.broadcast %47 : vector<1x32xf32> to vector<64x32xf32>
    %63 = arith.addf %61, %62 : vector<64x32xf32>
    %64 = vector.shape_cast %63 : vector<64x32xf32> to vector<2x32x32xf32>
    %65 = vector.extract_strided_slice %64 {offsets = [0, 0, 0], sizes = [2, 32, 8], strides = [1, 1, 1]} : vector<2x32x32xf32> to vector<2x32x8xf32>
    %66 = vector.extract_strided_slice %13 {offsets = [0, 0, 0], sizes = [2, 32, 8], strides = [1, 1, 1]} : vector<2x32x32xf32> to vector<2x32x8xf32>
    "tpu.trace_start"() <{level = 10 : i32, message = "bqd,bkd->bqk"}> : () -> ()
    %cst_41 = arith.constant dense<0.000000e+00> : vector<2x32x32xf32>
    %67 = tpu.matmul %65, %66, %cst_41 {dimension_numbers = #tpu.dot_dimension_numbers<[2], [2], [1], [1], [0, 0, 0, 1, 1, 1], [0], [0]>} : vector<2x32x8xf32>, vector<2x32x8xf32>, vector<2x32x32xf32> -> vector<2x32x32xf32>
    "tpu.trace_stop"() : () -> ()
    %cst_42 = arith.constant 0.353553385 : f32
    %68 = vector.broadcast %cst_42 : f32 to vector<2x32x32xf32>
    %69 = arith.mulf %67, %68 : vector<2x32x32xf32>
    %cst_43 = arith.constant -1.000000e+30 : f32
    %70 = vector.shape_cast %22 : vector<1x1x32xi1> to vector<1x1x32xi1>
    %71 = vector.broadcast %70 : vector<1x1x32xi1> to vector<2x32x32xi1>
    %72 = vector.broadcast %cst_43 : f32 to vector<2x32x32xf32>
    %73 = arith.select %71, %69, %72 : vector<2x32x32xi1>, vector<2x32x32xf32>
    %cst_44 = arith.constant dense<0xFF800000> : vector<2x32xf32>
    %74 = vector.multi_reduction <maximumf>, %73, %cst_44 [2] : vector<2x32x32xf32> to vector<2x32xf32>
    %75 = vector.shape_cast %74 : vector<2x32xf32> to vector<2x32x1xf32>
    %76 = vector.broadcast %75 : vector<2x32x1xf32> to vector<2x32x32xf32>
    %77 = arith.subf %73, %76 : vector<2x32x32xf32>
    %78 = math.exp %77 : vector<2x32x32xf32>
    %cst_45 = arith.constant dense<0.000000e+00> : vector<2x32xf32>
    %79 = vector.multi_reduction <add>, %78, %cst_45 [2] : vector<2x32x32xf32> to vector<2x32xf32>
    %80 = vector.shape_cast %79 : vector<2x32xf32> to vector<2x32x1xf32>
    %81 = tpu.reciprocal %80 {approx = true} : vector<2x32x1xf32> -> vector<2x32x1xf32>
    %82 = vector.broadcast %81 : vector<2x32x1xf32> to vector<2x32x32xf32>
    %83 = arith.mulf %78, %82 : vector<2x32x32xf32>
    %84 = vector.extract_strided_slice %19 {offsets = [0, 0, 0], sizes = [2, 32, 8], strides = [1, 1, 1]} : vector<2x32x32xf32> to vector<2x32x8xf32>
    "tpu.trace_start"() <{level = 10 : i32, message = "bqk,bkd->bqd"}> : () -> ()
    %cst_46 = arith.constant dense<0.000000e+00> : vector<2x32x8xf32>
    %85 = tpu.matmul %83, %84, %cst_46 {dimension_numbers = #tpu.dot_dimension_numbers<[2], [1], [1], [2], [0, 0, 0, 1, 1, 2], [0], [0]>} : vector<2x32x32xf32>, vector<2x32x8xf32>, vector<2x32x8xf32> -> vector<2x32x8xf32>
    "tpu.trace_stop"() : () -> ()
    %86 = vector.shape_cast %85 : vector<2x32x8xf32> to vector<64x8xf32>
    %c96 = arith.constant 96 : index
    %c0_47 = arith.constant 0 : index
    %87 = vector.load %arg2[%c96, %c0_47] : memref<366x32xf32, #tpu.memory_space<vmem>>, vector<8x32xf32>
    %cst_48 = arith.constant dense<0.000000e+00> : vector<64x32xf32>
    %88 = tpu.matmul %86, %87, %cst_48 {dimension_numbers = #tpu.dot_dimension_numbers<[1], [0], [0], [1], [0, 0, 1, 1], [], []>} : vector<64x8xf32>, vector<8x32xf32>, vector<64x32xf32> -> vector<64x32xf32>
    %89 = vector.extract_strided_slice %64 {offsets = [0, 0, 8], sizes = [2, 32, 8], strides = [1, 1, 1]} : vector<2x32x32xf32> to vector<2x32x8xf32>
    %90 = vector.extract_strided_slice %13 {offsets = [0, 0, 8], sizes = [2, 32, 8], strides = [1, 1, 1]} : vector<2x32x32xf32> to vector<2x32x8xf32>
    "tpu.trace_start"() <{level = 10 : i32, message = "bqd,bkd->bqk"}> : () -> ()
    %cst_49 = arith.constant dense<0.000000e+00> : vector<2x32x32xf32>
    %91 = tpu.matmul %89, %90, %cst_49 {dimension_numbers = #tpu.dot_dimension_numbers<[2], [2], [1], [1], [0, 0, 0, 1, 1, 1], [0], [0]>} : vector<2x32x8xf32>, vector<2x32x8xf32>, vector<2x32x32xf32> -> vector<2x32x32xf32>
    "tpu.trace_stop"() : () -> ()
    %cst_50 = arith.constant 0.353553385 : f32
    %92 = vector.broadcast %cst_50 : f32 to vector<2x32x32xf32>
    %93 = arith.mulf %91, %92 : vector<2x32x32xf32>
    %cst_51 = arith.constant -1.000000e+30 : f32
    %94 = vector.shape_cast %22 : vector<1x1x32xi1> to vector<1x1x32xi1>
    %95 = vector.broadcast %94 : vector<1x1x32xi1> to vector<2x32x32xi1>
    %96 = vector.broadcast %cst_51 : f32 to vector<2x32x32xf32>
    %97 = arith.select %95, %93, %96 : vector<2x32x32xi1>, vector<2x32x32xf32>
    %cst_52 = arith.constant dense<0xFF800000> : vector<2x32xf32>
    %98 = vector.multi_reduction <maximumf>, %97, %cst_52 [2] : vector<2x32x32xf32> to vector<2x32xf32>
    %99 = vector.shape_cast %98 : vector<2x32xf32> to vector<2x32x1xf32>
    %100 = vector.broadcast %99 : vector<2x32x1xf32> to vector<2x32x32xf32>
    %101 = arith.subf %97, %100 : vector<2x32x32xf32>
    %102 = math.exp %101 : vector<2x32x32xf32>
    %cst_53 = arith.constant dense<0.000000e+00> : vector<2x32xf32>
    %103 = vector.multi_reduction <add>, %102, %cst_53 [2] : vector<2x32x32xf32> to vector<2x32xf32>
    %104 = vector.shape_cast %103 : vector<2x32xf32> to vector<2x32x1xf32>
    %105 = tpu.reciprocal %104 {approx = true} : vector<2x32x1xf32> -> vector<2x32x1xf32>
    %106 = vector.broadcast %105 : vector<2x32x1xf32> to vector<2x32x32xf32>
    %107 = arith.mulf %102, %106 : vector<2x32x32xf32>
    %108 = vector.extract_strided_slice %19 {offsets = [0, 0, 8], sizes = [2, 32, 8], strides = [1, 1, 1]} : vector<2x32x32xf32> to vector<2x32x8xf32>
    "tpu.trace_start"() <{level = 10 : i32, message = "bqk,bkd->bqd"}> : () -> ()
    %cst_54 = arith.constant dense<0.000000e+00> : vector<2x32x8xf32>
    %109 = tpu.matmul %107, %108, %cst_54 {dimension_numbers = #tpu.dot_dimension_numbers<[2], [1], [1], [2], [0, 0, 0, 1, 1, 2], [0], [0]>} : vector<2x32x32xf32>, vector<2x32x8xf32>, vector<2x32x8xf32> -> vector<2x32x8xf32>
    "tpu.trace_stop"() : () -> ()
    %110 = vector.shape_cast %109 : vector<2x32x8xf32> to vector<64x8xf32>
    %c104 = arith.constant 104 : index
    %c0_55 = arith.constant 0 : index
    %111 = vector.load %arg2[%c104, %c0_55] : memref<366x32xf32, #tpu.memory_space<vmem>>, vector<8x32xf32>
    %cst_56 = arith.constant dense<0.000000e+00> : vector<64x32xf32>
    %112 = tpu.matmul %110, %111, %cst_56 {dimension_numbers = #tpu.dot_dimension_numbers<[1], [0], [0], [1], [0, 0, 1, 1], [], []>} : vector<64x8xf32>, vector<8x32xf32>, vector<64x32xf32> -> vector<64x32xf32>
    %113 = arith.addf %88, %112 : vector<64x32xf32>
    %114 = vector.extract_strided_slice %64 {offsets = [0, 0, 16], sizes = [2, 32, 8], strides = [1, 1, 1]} : vector<2x32x32xf32> to vector<2x32x8xf32>
    %115 = vector.extract_strided_slice %13 {offsets = [0, 0, 16], sizes = [2, 32, 8], strides = [1, 1, 1]} : vector<2x32x32xf32> to vector<2x32x8xf32>
    "tpu.trace_start"() <{level = 10 : i32, message = "bqd,bkd->bqk"}> : () -> ()
    %cst_57 = arith.constant dense<0.000000e+00> : vector<2x32x32xf32>
    %116 = tpu.matmul %114, %115, %cst_57 {dimension_numbers = #tpu.dot_dimension_numbers<[2], [2], [1], [1], [0, 0, 0, 1, 1, 1], [0], [0]>} : vector<2x32x8xf32>, vector<2x32x8xf32>, vector<2x32x32xf32> -> vector<2x32x32xf32>
    "tpu.trace_stop"() : () -> ()
    %cst_58 = arith.constant 0.353553385 : f32
    %117 = vector.broadcast %cst_58 : f32 to vector<2x32x32xf32>
    %118 = arith.mulf %116, %117 : vector<2x32x32xf32>
    %cst_59 = arith.constant -1.000000e+30 : f32
    %119 = vector.shape_cast %22 : vector<1x1x32xi1> to vector<1x1x32xi1>
    %120 = vector.broadcast %119 : vector<1x1x32xi1> to vector<2x32x32xi1>
    %121 = vector.broadcast %cst_59 : f32 to vector<2x32x32xf32>
    %122 = arith.select %120, %118, %121 : vector<2x32x32xi1>, vector<2x32x32xf32>
    %cst_60 = arith.constant dense<0xFF800000> : vector<2x32xf32>
    %123 = vector.multi_reduction <maximumf>, %122, %cst_60 [2] : vector<2x32x32xf32> to vector<2x32xf32>
    %124 = vector.shape_cast %123 : vector<2x32xf32> to vector<2x32x1xf32>
    %125 = vector.broadcast %124 : vector<2x32x1xf32> to vector<2x32x32xf32>
    %126 = arith.subf %122, %125 : vector<2x32x32xf32>
    %127 = math.exp %126 : vector<2x32x32xf32>
    %cst_61 = arith.constant dense<0.000000e+00> : vector<2x32xf32>
    %128 = vector.multi_reduction <add>, %127, %cst_61 [2] : vector<2x32x32xf32> to vector<2x32xf32>
    %129 = vector.shape_cast %128 : vector<2x32xf32> to vector<2x32x1xf32>
    %130 = tpu.reciprocal %129 {approx = true} : vector<2x32x1xf32> -> vector<2x32x1xf32>
    %131 = vector.broadcast %130 : vector<2x32x1xf32> to vector<2x32x32xf32>
    %132 = arith.mulf %127, %131 : vector<2x32x32xf32>
    %133 = vector.extract_strided_slice %19 {offsets = [0, 0, 16], sizes = [2, 32, 8], strides = [1, 1, 1]} : vector<2x32x32xf32> to vector<2x32x8xf32>
    "tpu.trace_start"() <{level = 10 : i32, message = "bqk,bkd->bqd"}> : () -> ()
    %cst_62 = arith.constant dense<0.000000e+00> : vector<2x32x8xf32>
    %134 = tpu.matmul %132, %133, %cst_62 {dimension_numbers = #tpu.dot_dimension_numbers<[2], [1], [1], [2], [0, 0, 0, 1, 1, 2], [0], [0]>} : vector<2x32x32xf32>, vector<2x32x8xf32>, vector<2x32x8xf32> -> vector<2x32x8xf32>
    "tpu.trace_stop"() : () -> ()
    %135 = vector.shape_cast %134 : vector<2x32x8xf32> to vector<64x8xf32>
    %c112 = arith.constant 112 : index
    %c0_63 = arith.constant 0 : index
    %136 = vector.load %arg2[%c112, %c0_63] : memref<366x32xf32, #tpu.memory_space<vmem>>, vector<8x32xf32>
    %cst_64 = arith.constant dense<0.000000e+00> : vector<64x32xf32>
    %137 = tpu.matmul %135, %136, %cst_64 {dimension_numbers = #tpu.dot_dimension_numbers<[1], [0], [0], [1], [0, 0, 1, 1], [], []>} : vector<64x8xf32>, vector<8x32xf32>, vector<64x32xf32> -> vector<64x32xf32>
    %138 = arith.addf %113, %137 : vector<64x32xf32>
    %139 = vector.extract_strided_slice %64 {offsets = [0, 0, 24], sizes = [2, 32, 8], strides = [1, 1, 1]} : vector<2x32x32xf32> to vector<2x32x8xf32>
    %140 = vector.extract_strided_slice %13 {offsets = [0, 0, 24], sizes = [2, 32, 8], strides = [1, 1, 1]} : vector<2x32x32xf32> to vector<2x32x8xf32>
    "tpu.trace_start"() <{level = 10 : i32, message = "bqd,bkd->bqk"}> : () -> ()
    %cst_65 = arith.constant dense<0.000000e+00> : vector<2x32x32xf32>
    %141 = tpu.matmul %139, %140, %cst_65 {dimension_numbers = #tpu.dot_dimension_numbers<[2], [2], [1], [1], [0, 0, 0, 1, 1, 1], [0], [0]>} : vector<2x32x8xf32>, vector<2x32x8xf32>, vector<2x32x32xf32> -> vector<2x32x32xf32>
    "tpu.trace_stop"() : () -> ()
    %cst_66 = arith.constant 0.353553385 : f32
    %142 = vector.broadcast %cst_66 : f32 to vector<2x32x32xf32>
    %143 = arith.mulf %141, %142 : vector<2x32x32xf32>
    %cst_67 = arith.constant -1.000000e+30 : f32
    %144 = vector.shape_cast %22 : vector<1x1x32xi1> to vector<1x1x32xi1>
    %145 = vector.broadcast %144 : vector<1x1x32xi1> to vector<2x32x32xi1>
    %146 = vector.broadcast %cst_67 : f32 to vector<2x32x32xf32>
    %147 = arith.select %145, %143, %146 : vector<2x32x32xi1>, vector<2x32x32xf32>
    %cst_68 = arith.constant dense<0xFF800000> : vector<2x32xf32>
    %148 = vector.multi_reduction <maximumf>, %147, %cst_68 [2] : vector<2x32x32xf32> to vector<2x32xf32>
    %149 = vector.shape_cast %148 : vector<2x32xf32> to vector<2x32x1xf32>
    %150 = vector.broadcast %149 : vector<2x32x1xf32> to vector<2x32x32xf32>
    %151 = arith.subf %147, %150 : vector<2x32x32xf32>
    %152 = math.exp %151 : vector<2x32x32xf32>
    %cst_69 = arith.constant dense<0.000000e+00> : vector<2x32xf32>
    %153 = vector.multi_reduction <add>, %152, %cst_69 [2] : vector<2x32x32xf32> to vector<2x32xf32>
    %154 = vector.shape_cast %153 : vector<2x32xf32> to vector<2x32x1xf32>
    %155 = tpu.reciprocal %154 {approx = true} : vector<2x32x1xf32> -> vector<2x32x1xf32>
    %156 = vector.broadcast %155 : vector<2x32x1xf32> to vector<2x32x32xf32>
    %157 = arith.mulf %152, %156 : vector<2x32x32xf32>
    %158 = vector.extract_strided_slice %19 {offsets = [0, 0, 24], sizes = [2, 32, 8], strides = [1, 1, 1]} : vector<2x32x32xf32> to vector<2x32x8xf32>
    "tpu.trace_start"() <{level = 10 : i32, message = "bqk,bkd->bqd"}> : () -> ()
    %cst_70 = arith.constant dense<0.000000e+00> : vector<2x32x8xf32>
    %159 = tpu.matmul %157, %158, %cst_70 {dimension_numbers = #tpu.dot_dimension_numbers<[2], [1], [1], [2], [0, 0, 0, 1, 1, 2], [0], [0]>} : vector<2x32x32xf32>, vector<2x32x8xf32>, vector<2x32x8xf32> -> vector<2x32x8xf32>
    "tpu.trace_stop"() : () -> ()
    %160 = vector.shape_cast %159 : vector<2x32x8xf32> to vector<64x8xf32>
    %c120 = arith.constant 120 : index
    %c0_71 = arith.constant 0 : index
    %161 = vector.load %arg2[%c120, %c0_71] : memref<366x32xf32, #tpu.memory_space<vmem>>, vector<8x32xf32>
    %cst_72 = arith.constant dense<0.000000e+00> : vector<64x32xf32>
    %162 = tpu.matmul %160, %161, %cst_72 {dimension_numbers = #tpu.dot_dimension_numbers<[1], [0], [0], [1], [0, 0, 1, 1], [], []>} : vector<64x8xf32>, vector<8x32xf32>, vector<64x32xf32> -> vector<64x32xf32>
    %163 = arith.addf %138, %162 : vector<64x32xf32>
    %164 = arith.addf %1, %163 : vector<64x32xf32>
    %165 = vector.broadcast %48 : vector<1x32xf32> to vector<64x32xf32>
    %166 = arith.addf %164, %165 : vector<64x32xf32>
    %cst_73 = arith.constant dense<0.000000e+00> : vector<64xf32>
    %167 = vector.multi_reduction <add>, %166, %cst_73 [1] : vector<64x32xf32> to vector<64xf32>
    %168 = vector.shape_cast %167 : vector<64xf32> to vector<64x1xf32>
    %cst_74 = arith.constant 3.200000e+01 : f32
    %169 = vector.broadcast %cst_74 : f32 to vector<64x1xf32>
    %170 = arith.divf %168, %169 : vector<64x1xf32>
    %171 = vector.broadcast %170 : vector<64x1xf32> to vector<64x32xf32>
    %172 = arith.subf %166, %171 : vector<64x32xf32>
    %173 = arith.mulf %172, %172 : vector<64x32xf32>
    %cst_75 = arith.constant dense<0.000000e+00> : vector<64xf32>
    %174 = vector.multi_reduction <add>, %173, %cst_75 [1] : vector<64x32xf32> to vector<64xf32>
    %175 = vector.shape_cast %174 : vector<64xf32> to vector<64x1xf32>
    %cst_76 = arith.constant 3.200000e+01 : f32
    %176 = vector.broadcast %cst_76 : f32 to vector<64x1xf32>
    %177 = arith.divf %175, %176 : vector<64x1xf32>
    %178 = vector.broadcast %170 : vector<64x1xf32> to vector<64x32xf32>
    %179 = arith.subf %166, %178 : vector<64x32xf32>
    %cst_77 = arith.constant 9.99999974E-6 : f32
    %180 = vector.broadcast %cst_77 : f32 to vector<64x1xf32>
    %181 = arith.addf %177, %180 : vector<64x1xf32>
    %182 = math.rsqrt %181 : vector<64x1xf32>
    %183 = vector.broadcast %182 : vector<64x1xf32> to vector<64x32xf32>
    %184 = arith.mulf %179, %183 : vector<64x32xf32>
    %185 = vector.broadcast %51 : vector<1x32xf32> to vector<64x32xf32>
    %186 = arith.mulf %184, %185 : vector<64x32xf32>
    %187 = vector.broadcast %52 : vector<1x32xf32> to vector<64x32xf32>
    %188 = arith.addf %186, %187 : vector<64x32xf32>
    %189 = arith.addf %188, %3 : vector<64x32xf32>
    %c128 = arith.constant 128 : index
    %c0_78 = arith.constant 0 : index
    %190 = vector.load %arg2[%c128, %c0_78] : memref<366x32xf32, #tpu.memory_space<vmem>>, vector<32x32xf32>
    %cst_79 = arith.constant dense<0.000000e+00> : vector<64x32xf32>
    %191 = tpu.matmul %189, %190, %cst_79 {dimension_numbers = #tpu.dot_dimension_numbers<[1], [0], [0], [1], [0, 0, 1, 1], [], []>} : vector<64x32xf32>, vector<32x32xf32>, vector<64x32xf32> -> vector<64x32xf32>
    %192 = vector.broadcast %49 : vector<1x32xf32> to vector<64x32xf32>
    %193 = arith.addf %191, %192 : vector<64x32xf32>
    %cst_80 = arith.constant 0.176776692 : f32
    %194 = vector.broadcast %cst_80 : f32 to vector<64x32xf32>
    %195 = arith.mulf %193, %194 : vector<64x32xf32>
    %cst_81 = arith.constant dense<0xFF800000> : vector<64xf32>
    %196 = vector.multi_reduction <maximumf>, %195, %cst_81 [1] : vector<64x32xf32> to vector<64xf32>
    %197 = vector.shape_cast %196 : vector<64xf32> to vector<64x1xf32>
    %198 = vector.broadcast %197 : vector<64x1xf32> to vector<64x32xf32>
    %199 = arith.subf %195, %198 : vector<64x32xf32>
    %200 = math.exp %199 : vector<64x32xf32>
    %cst_82 = arith.constant dense<0.000000e+00> : vector<64xf32>
    %201 = vector.multi_reduction <add>, %200, %cst_82 [1] : vector<64x32xf32> to vector<64xf32>
    %202 = vector.shape_cast %201 : vector<64xf32> to vector<64x1xf32>
    %203 = tpu.reciprocal %202 {approx = true} : vector<64x1xf32> -> vector<64x1xf32>
    %204 = vector.broadcast %203 : vector<64x1xf32> to vector<64x32xf32>
    %205 = arith.mulf %200, %204 : vector<64x32xf32>
    %206 = vector.broadcast %46 : vector<1x32xf32> to vector<64x32xf32>
    %207 = arith.mulf %205, %206 : vector<64x32xf32>
    %208 = arith.addf %188, %207 : vector<64x32xf32>
    %cst_83 = arith.constant dense<0.000000e+00> : vector<64xf32>
    %209 = vector.multi_reduction <add>, %208, %cst_83 [1] : vector<64x32xf32> to vector<64xf32>
    %210 = vector.shape_cast %209 : vector<64xf32> to vector<64x1xf32>
    %cst_84 = arith.constant 3.200000e+01 : f32
    %211 = vector.broadcast %cst_84 : f32 to vector<64x1xf32>
    %212 = arith.divf %210, %211 : vector<64x1xf32>
    %213 = vector.broadcast %212 : vector<64x1xf32> to vector<64x32xf32>
    %214 = arith.subf %208, %213 : vector<64x32xf32>
    %215 = arith.mulf %214, %214 : vector<64x32xf32>
    %cst_85 = arith.constant dense<0.000000e+00> : vector<64xf32>
    %216 = vector.multi_reduction <add>, %215, %cst_85 [1] : vector<64x32xf32> to vector<64xf32>
    %217 = vector.shape_cast %216 : vector<64xf32> to vector<64x1xf32>
    %cst_86 = arith.constant 3.200000e+01 : f32
    %218 = vector.broadcast %cst_86 : f32 to vector<64x1xf32>
    %219 = arith.divf %217, %218 : vector<64x1xf32>
    %220 = vector.broadcast %212 : vector<64x1xf32> to vector<64x32xf32>
    %221 = arith.subf %208, %220 : vector<64x32xf32>
    %cst_87 = arith.constant 9.99999974E-6 : f32
    %222 = vector.broadcast %cst_87 : f32 to vector<64x1xf32>
    %223 = arith.addf %219, %222 : vector<64x1xf32>
    %224 = math.rsqrt %223 : vector<64x1xf32>
    %225 = vector.broadcast %224 : vector<64x1xf32> to vector<64x32xf32>
    %226 = arith.mulf %221, %225 : vector<64x32xf32>
    %227 = vector.broadcast %53 : vector<1x32xf32> to vector<64x32xf32>
    %228 = arith.mulf %226, %227 : vector<64x32xf32>
    %229 = vector.broadcast %54 : vector<1x32xf32> to vector<64x32xf32>
    %230 = arith.addf %228, %229 : vector<64x32xf32>
    %cst_88 = arith.constant dense<0.000000e+00> : vector<64x128xf32>
    %231 = tpu.matmul %230, %57, %cst_88 {dimension_numbers = #tpu.dot_dimension_numbers<[1], [0], [0], [1], [0, 0, 1, 1], [], []>} : vector<64x32xf32>, vector<32x128xf32>, vector<64x128xf32> -> vector<64x128xf32>
    %232 = vector.broadcast %58 : vector<1x128xf32> to vector<64x128xf32>
    %233 = arith.addf %231, %232 : vector<64x128xf32>
    %cst_89 = arith.constant 0.000000e+00 : f32
    %234 = vector.broadcast %cst_89 : f32 to vector<64x128xf32>
    %235 = arith.maximumf %233, %234 : vector<64x128xf32>
    %c224 = arith.constant 224 : index
    %c0_90 = arith.constant 0 : index
    %236 = vector.load %arg2[%c224, %c0_90] : memref<366x32xf32, #tpu.memory_space<vmem>>, vector<128x32xf32>
    %cst_91 = arith.constant dense<0.000000e+00> : vector<64x32xf32>
    %237 = tpu.matmul %235, %236, %cst_91 {dimension_numbers = #tpu.dot_dimension_numbers<[1], [0], [0], [1], [0, 0, 1, 1], [], []>} : vector<64x128xf32>, vector<128x32xf32>, vector<64x32xf32> -> vector<64x32xf32>
    %238 = vector.broadcast %50 : vector<1x32xf32> to vector<64x32xf32>
    %239 = arith.addf %237, %238 : vector<64x32xf32>
    %240 = arith.addf %230, %239 : vector<64x32xf32>
    %cst_92 = arith.constant dense<0.000000e+00> : vector<64xf32>
    %241 = vector.multi_reduction <add>, %240, %cst_92 [1] : vector<64x32xf32> to vector<64xf32>
    %242 = vector.shape_cast %241 : vector<64xf32> to vector<64x1xf32>
    %cst_93 = arith.constant 3.200000e+01 : f32
    %243 = vector.broadcast %cst_93 : f32 to vector<64x1xf32>
    %244 = arith.divf %242, %243 : vector<64x1xf32>
    %245 = vector.broadcast %244 : vector<64x1xf32> to vector<64x32xf32>
    %246 = arith.subf %240, %245 : vector<64x32xf32>
    %247 = arith.mulf %246, %246 : vector<64x32xf32>
    %cst_94 = arith.constant dense<0.000000e+00> : vector<64xf32>
    %248 = vector.multi_reduction <add>, %247, %cst_94 [1] : vector<64x32xf32> to vector<64xf32>
    %249 = vector.shape_cast %248 : vector<64xf32> to vector<64x1xf32>
    %cst_95 = arith.constant 3.200000e+01 : f32
    %250 = vector.broadcast %cst_95 : f32 to vector<64x1xf32>
    %251 = arith.divf %249, %250 : vector<64x1xf32>
    %252 = vector.broadcast %244 : vector<64x1xf32> to vector<64x32xf32>
    %253 = arith.subf %240, %252 : vector<64x32xf32>
    %cst_96 = arith.constant 9.99999974E-6 : f32
    %254 = vector.broadcast %cst_96 : f32 to vector<64x1xf32>
    %255 = arith.addf %251, %254 : vector<64x1xf32>
    %256 = math.rsqrt %255 : vector<64x1xf32>
    %257 = vector.broadcast %256 : vector<64x1xf32> to vector<64x32xf32>
    %258 = arith.mulf %253, %257 : vector<64x32xf32>
    %259 = vector.broadcast %55 : vector<1x32xf32> to vector<64x32xf32>
    %260 = arith.mulf %258, %259 : vector<64x32xf32>
    %261 = vector.broadcast %56 : vector<1x32xf32> to vector<64x32xf32>
    %262 = arith.addf %260, %261 : vector<64x32xf32>
    %c0_97 = arith.constant 0 : index
    %c0_98 = arith.constant 0 : index
    %c0_99 = arith.constant 0 : index
    %263 = vector.load %arg4[%c0_97, %c0_98, %c0_99] : memref<2x64x32xf32, #tpu.memory_space<vmem>>, vector<1x64x32xf32>
    %264 = vector.shape_cast %263 : vector<1x64x32xf32> to vector<64x32xf32>
    %265 = vector.shape_cast %262 : vector<64x32xf32> to vector<1x64x32xf32>
    tpu.vector_store %arg4[%c0_97, %c0_98, %c0_99], %265 {strides = array<i32>} : memref<2x64x32xf32, #tpu.memory_space<vmem>>, vector<1x64x32xf32>,
    %266 = arith.addf %262, %3 : vector<64x32xf32>
    %c0_100 = arith.constant 0 : index
    %c0_101 = arith.constant 0 : index
    %267 = vector.load %arg2[%c0_100, %c0_101] : memref<366x32xf32, #tpu.memory_space<vmem>>, vector<32x32xf32>
    %cst_102 = arith.constant dense<0.000000e+00> : vector<64x32xf32>
    %268 = tpu.matmul %266, %267, %cst_102 {dimension_numbers = #tpu.dot_dimension_numbers<[1], [0], [0], [1], [0, 0, 1, 1], [], []>} : vector<64x32xf32>, vector<32x32xf32>, vector<64x32xf32> -> vector<64x32xf32>
    %269 = vector.broadcast %47 : vector<1x32xf32> to vector<64x32xf32>
    %270 = arith.addf %268, %269 : vector<64x32xf32>
    %271 = vector.shape_cast %270 : vector<64x32xf32> to vector<2x32x32xf32>
    %272 = vector.extract_strided_slice %271 {offsets = [0, 0, 0], sizes = [2, 32, 8], strides = [1, 1, 1]} : vector<2x32x32xf32> to vector<2x32x8xf32>
    %273 = vector.extract_strided_slice %13 {offsets = [0, 0, 0], sizes = [2, 32, 8], strides = [1, 1, 1]} : vector<2x32x32xf32> to vector<2x32x8xf32>
    "tpu.trace_start"() <{level = 10 : i32, message = "bqd,bkd->bqk"}> : () -> ()
    %cst_103 = arith.constant dense<0.000000e+00> : vector<2x32x32xf32>
    %274 = tpu.matmul %272, %273, %cst_103 {dimension_numbers = #tpu.dot_dimension_numbers<[2], [2], [1], [1], [0, 0, 0, 1, 1, 1], [0], [0]>} : vector<2x32x8xf32>, vector<2x32x8xf32>, vector<2x32x32xf32> -> vector<2x32x32xf32>
    "tpu.trace_stop"() : () -> ()
    %cst_104 = arith.constant 0.353553385 : f32
    %275 = vector.broadcast %cst_104 : f32 to vector<2x32x32xf32>
    %276 = arith.mulf %274, %275 : vector<2x32x32xf32>
    %cst_105 = arith.constant -1.000000e+30 : f32
    %277 = vector.shape_cast %22 : vector<1x1x32xi1> to vector<1x1x32xi1>
    %278 = vector.broadcast %277 : vector<1x1x32xi1> to vector<2x32x32xi1>
    %279 = vector.broadcast %cst_105 : f32 to vector<2x32x32xf32>
    %280 = arith.select %278, %276, %279 : vector<2x32x32xi1>, vector<2x32x32xf32>
    %cst_106 = arith.constant dense<0xFF800000> : vector<2x32xf32>
    %281 = vector.multi_reduction <maximumf>, %280, %cst_106 [2] : vector<2x32x32xf32> to vector<2x32xf32>
    %282 = vector.shape_cast %281 : vector<2x32xf32> to vector<2x32x1xf32>
    %283 = vector.broadcast %282 : vector<2x32x1xf32> to vector<2x32x32xf32>
    %284 = arith.subf %280, %283 : vector<2x32x32xf32>
    %285 = math.exp %284 : vector<2x32x32xf32>
    %cst_107 = arith.constant dense<0.000000e+00> : vector<2x32xf32>
    %286 = vector.multi_reduction <add>, %285, %cst_107 [2] : vector<2x32x32xf32> to vector<2x32xf32>
    %287 = vector.shape_cast %286 : vector<2x32xf32> to vector<2x32x1xf32>
    %288 = tpu.reciprocal %287 {approx = true} : vector<2x32x1xf32> -> vector<2x32x1xf32>
    %289 = vector.broadcast %288 : vector<2x32x1xf32> to vector<2x32x32xf32>
    %290 = arith.mulf %285, %289 : vector<2x32x32xf32>
    %291 = vector.extract_strided_slice %19 {offsets = [0, 0, 0], sizes = [2, 32, 8], strides = [1, 1, 1]} : vector<2x32x32xf32> to vector<2x32x8xf32>
    "tpu.trace_start"() <{level = 10 : i32, message = "bqk,bkd->bqd"}> : () -> ()
    %cst_108 = arith.constant dense<0.000000e+00> : vector<2x32x8xf32>
    %292 = tpu.matmul %290, %291, %cst_108 {dimension_numbers = #tpu.dot_dimension_numbers<[2], [1], [1], [2], [0, 0, 0, 1, 1, 2], [0], [0]>} : vector<2x32x32xf32>, vector<2x32x8xf32>, vector<2x32x8xf32> -> vector<2x32x8xf32>
    "tpu.trace_stop"() : () -> ()
    %293 = vector.shape_cast %292 : vector<2x32x8xf32> to vector<64x8xf32>
    %c96_109 = arith.constant 96 : index
    %c0_110 = arith.constant 0 : index
    %294 = vector.load %arg2[%c96_109, %c0_110] : memref<366x32xf32, #tpu.memory_space<vmem>>, vector<8x32xf32>
    %cst_111 = arith.constant dense<0.000000e+00> : vector<64x32xf32>
    %295 = tpu.matmul %293, %294, %cst_111 {dimension_numbers = #tpu.dot_dimension_numbers<[1], [0], [0], [1], [0, 0, 1, 1], [], []>} : vector<64x8xf32>, vector<8x32xf32>, vector<64x32xf32> -> vector<64x32xf32>
    %296 = vector.extract_strided_slice %271 {offsets = [0, 0, 8], sizes = [2, 32, 8], strides = [1, 1, 1]} : vector<2x32x32xf32> to vector<2x32x8xf32>
    %297 = vector.extract_strided_slice %13 {offsets = [0, 0, 8], sizes = [2, 32, 8], strides = [1, 1, 1]} : vector<2x32x32xf32> to vector<2x32x8xf32>
    "tpu.trace_start"() <{level = 10 : i32, message = "bqd,bkd->bqk"}> : () -> ()
    %cst_112 = arith.constant dense<0.000000e+00> : vector<2x32x32xf32>
    %298 = tpu.matmul %296, %297, %cst_112 {dimension_numbers = #tpu.dot_dimension_numbers<[2], [2], [1], [1], [0, 0, 0, 1, 1, 1], [0], [0]>} : vector<2x32x8xf32>, vector<2x32x8xf32>, vector<2x32x32xf32> -> vector<2x32x32xf32>
    "tpu.trace_stop"() : () -> ()
    %cst_113 = arith.constant 0.353553385 : f32
    %299 = vector.broadcast %cst_113 : f32 to vector<2x32x32xf32>
    %300 = arith.mulf %298, %299 : vector<2x32x32xf32>
    %cst_114 = arith.constant -1.000000e+30 : f32
    %301 = vector.shape_cast %22 : vector<1x1x32xi1> to vector<1x1x32xi1>
    %302 = vector.broadcast %301 : vector<1x1x32xi1> to vector<2x32x32xi1>
    %303 = vector.broadcast %cst_114 : f32 to vector<2x32x32xf32>
    %304 = arith.select %302, %300, %303 : vector<2x32x32xi1>, vector<2x32x32xf32>
    %cst_115 = arith.constant dense<0xFF800000> : vector<2x32xf32>
    %305 = vector.multi_reduction <maximumf>, %304, %cst_115 [2] : vector<2x32x32xf32> to vector<2x32xf32>
    %306 = vector.shape_cast %305 : vector<2x32xf32> to vector<2x32x1xf32>
    %307 = vector.broadcast %306 : vector<2x32x1xf32> to vector<2x32x32xf32>
    %308 = arith.subf %304, %307 : vector<2x32x32xf32>
    %309 = math.exp %308 : vector<2x32x32xf32>
    %cst_116 = arith.constant dense<0.000000e+00> : vector<2x32xf32>
    %310 = vector.multi_reduction <add>, %309, %cst_116 [2] : vector<2x32x32xf32> to vector<2x32xf32>
    %311 = vector.shape_cast %310 : vector<2x32xf32> to vector<2x32x1xf32>
    %312 = tpu.reciprocal %311 {approx = true} : vector<2x32x1xf32> -> vector<2x32x1xf32>
    %313 = vector.broadcast %312 : vector<2x32x1xf32> to vector<2x32x32xf32>
    %314 = arith.mulf %309, %313 : vector<2x32x32xf32>
    %315 = vector.extract_strided_slice %19 {offsets = [0, 0, 8], sizes = [2, 32, 8], strides = [1, 1, 1]} : vector<2x32x32xf32> to vector<2x32x8xf32>
    "tpu.trace_start"() <{level = 10 : i32, message = "bqk,bkd->bqd"}> : () -> ()
    %cst_117 = arith.constant dense<0.000000e+00> : vector<2x32x8xf32>
    %316 = tpu.matmul %314, %315, %cst_117 {dimension_numbers = #tpu.dot_dimension_numbers<[2], [1], [1], [2], [0, 0, 0, 1, 1, 2], [0], [0]>} : vector<2x32x32xf32>, vector<2x32x8xf32>, vector<2x32x8xf32> -> vector<2x32x8xf32>
    "tpu.trace_stop"() : () -> ()
    %317 = vector.shape_cast %316 : vector<2x32x8xf32> to vector<64x8xf32>
    %c104_118 = arith.constant 104 : index
    %c0_119 = arith.constant 0 : index
    %318 = vector.load %arg2[%c104_118, %c0_119] : memref<366x32xf32, #tpu.memory_space<vmem>>, vector<8x32xf32>
    %cst_120 = arith.constant dense<0.000000e+00> : vector<64x32xf32>
    %319 = tpu.matmul %317, %318, %cst_120 {dimension_numbers = #tpu.dot_dimension_numbers<[1], [0], [0], [1], [0, 0, 1, 1], [], []>} : vector<64x8xf32>, vector<8x32xf32>, vector<64x32xf32> -> vector<64x32xf32>
    %320 = arith.addf %295, %319 : vector<64x32xf32>
    %321 = vector.extract_strided_slice %271 {offsets = [0, 0, 16], sizes = [2, 32, 8], strides = [1, 1, 1]} : vector<2x32x32xf32> to vector<2x32x8xf32>
    %322 = vector.extract_strided_slice %13 {offsets = [0, 0, 16], sizes = [2, 32, 8], strides = [1, 1, 1]} : vector<2x32x32xf32> to vector<2x32x8xf32>
    "tpu.trace_start"() <{level = 10 : i32, message = "bqd,bkd->bqk"}> : () -> ()
    %cst_121 = arith.constant dense<0.000000e+00> : vector<2x32x32xf32>
    %323 = tpu.matmul %321, %322, %cst_121 {dimension_numbers = #tpu.dot_dimension_numbers<[2], [2], [1], [1], [0, 0, 0, 1, 1, 1], [0], [0]>} : vector<2x32x8xf32>, vector<2x32x8xf32>, vector<2x32x32xf32> -> vector<2x32x32xf32>
    "tpu.trace_stop"() : () -> ()
    %cst_122 = arith.constant 0.353553385 : f32
    %324 = vector.broadcast %cst_122 : f32 to vector<2x32x32xf32>
    %325 = arith.mulf %323, %324 : vector<2x32x32xf32>
    %cst_123 = arith.constant -1.000000e+30 : f32
    %326 = vector.shape_cast %22 : vector<1x1x32xi1> to vector<1x1x32xi1>
    %327 = vector.broadcast %326 : vector<1x1x32xi1> to vector<2x32x32xi1>
    %328 = vector.broadcast %cst_123 : f32 to vector<2x32x32xf32>
    %329 = arith.select %327, %325, %328 : vector<2x32x32xi1>, vector<2x32x32xf32>
    %cst_124 = arith.constant dense<0xFF800000> : vector<2x32xf32>
    %330 = vector.multi_reduction <maximumf>, %329, %cst_124 [2] : vector<2x32x32xf32> to vector<2x32xf32>
    %331 = vector.shape_cast %330 : vector<2x32xf32> to vector<2x32x1xf32>
    %332 = vector.broadcast %331 : vector<2x32x1xf32> to vector<2x32x32xf32>
    %333 = arith.subf %329, %332 : vector<2x32x32xf32>
    %334 = math.exp %333 : vector<2x32x32xf32>
    %cst_125 = arith.constant dense<0.000000e+00> : vector<2x32xf32>
    %335 = vector.multi_reduction <add>, %334, %cst_125 [2] : vector<2x32x32xf32> to vector<2x32xf32>
    %336 = vector.shape_cast %335 : vector<2x32xf32> to vector<2x32x1xf32>
    %337 = tpu.reciprocal %336 {approx = true} : vector<2x32x1xf32> -> vector<2x32x1xf32>
    %338 = vector.broadcast %337 : vector<2x32x1xf32> to vector<2x32x32xf32>
    %339 = arith.mulf %334, %338 : vector<2x32x32xf32>
    %340 = vector.extract_strided_slice %19 {offsets = [0, 0, 16], sizes = [2, 32, 8], strides = [1, 1, 1]} : vector<2x32x32xf32> to vector<2x32x8xf32>
    "tpu.trace_start"() <{level = 10 : i32, message = "bqk,bkd->bqd"}> : () -> ()
    %cst_126 = arith.constant dense<0.000000e+00> : vector<2x32x8xf32>
    %341 = tpu.matmul %339, %340, %cst_126 {dimension_numbers = #tpu.dot_dimension_numbers<[2], [1], [1], [2], [0, 0, 0, 1, 1, 2], [0], [0]>} : vector<2x32x32xf32>, vector<2x32x8xf32>, vector<2x32x8xf32> -> vector<2x32x8xf32>
    "tpu.trace_stop"() : () -> ()
    %342 = vector.shape_cast %341 : vector<2x32x8xf32> to vector<64x8xf32>
    %c112_127 = arith.constant 112 : index
    %c0_128 = arith.constant 0 : index
    %343 = vector.load %arg2[%c112_127, %c0_128] : memref<366x32xf32, #tpu.memory_space<vmem>>, vector<8x32xf32>
    %cst_129 = arith.constant dense<0.000000e+00> : vector<64x32xf32>
    %344 = tpu.matmul %342, %343, %cst_129 {dimension_numbers = #tpu.dot_dimension_numbers<[1], [0], [0], [1], [0, 0, 1, 1], [], []>} : vector<64x8xf32>, vector<8x32xf32>, vector<64x32xf32> -> vector<64x32xf32>
    %345 = arith.addf %320, %344 : vector<64x32xf32>
    %346 = vector.extract_strided_slice %271 {offsets = [0, 0, 24], sizes = [2, 32, 8], strides = [1, 1, 1]} : vector<2x32x32xf32> to vector<2x32x8xf32>
    %347 = vector.extract_strided_slice %13 {offsets = [0, 0, 24], sizes = [2, 32, 8], strides = [1, 1, 1]} : vector<2x32x32xf32> to vector<2x32x8xf32>
    "tpu.trace_start"() <{level = 10 : i32, message = "bqd,bkd->bqk"}> : () -> ()
    %cst_130 = arith.constant dense<0.000000e+00> : vector<2x32x32xf32>
    %348 = tpu.matmul %346, %347, %cst_130 {dimension_numbers = #tpu.dot_dimension_numbers<[2], [2], [1], [1], [0, 0, 0, 1, 1, 1], [0], [0]>} : vector<2x32x8xf32>, vector<2x32x8xf32>, vector<2x32x32xf32> -> vector<2x32x32xf32>
    "tpu.trace_stop"() : () -> ()
    %cst_131 = arith.constant 0.353553385 : f32
    %349 = vector.broadcast %cst_131 : f32 to vector<2x32x32xf32>
    %350 = arith.mulf %348, %349 : vector<2x32x32xf32>
    %cst_132 = arith.constant -1.000000e+30 : f32
    %351 = vector.shape_cast %22 : vector<1x1x32xi1> to vector<1x1x32xi1>
    %352 = vector.broadcast %351 : vector<1x1x32xi1> to vector<2x32x32xi1>
    %353 = vector.broadcast %cst_132 : f32 to vector<2x32x32xf32>
    %354 = arith.select %352, %350, %353 : vector<2x32x32xi1>, vector<2x32x32xf32>
    %cst_133 = arith.constant dense<0xFF800000> : vector<2x32xf32>
    %355 = vector.multi_reduction <maximumf>, %354, %cst_133 [2] : vector<2x32x32xf32> to vector<2x32xf32>
    %356 = vector.shape_cast %355 : vector<2x32xf32> to vector<2x32x1xf32>
    %357 = vector.broadcast %356 : vector<2x32x1xf32> to vector<2x32x32xf32>
    %358 = arith.subf %354, %357 : vector<2x32x32xf32>
    %359 = math.exp %358 : vector<2x32x32xf32>
    %cst_134 = arith.constant dense<0.000000e+00> : vector<2x32xf32>
    %360 = vector.multi_reduction <add>, %359, %cst_134 [2] : vector<2x32x32xf32> to vector<2x32xf32>
    %361 = vector.shape_cast %360 : vector<2x32xf32> to vector<2x32x1xf32>
    %362 = tpu.reciprocal %361 {approx = true} : vector<2x32x1xf32> -> vector<2x32x1xf32>
    %363 = vector.broadcast %362 : vector<2x32x1xf32> to vector<2x32x32xf32>
    %364 = arith.mulf %359, %363 : vector<2x32x32xf32>
    %365 = vector.extract_strided_slice %19 {offsets = [0, 0, 24], sizes = [2, 32, 8], strides = [1, 1, 1]} : vector<2x32x32xf32> to vector<2x32x8xf32>
    "tpu.trace_start"() <{level = 10 : i32, message = "bqk,bkd->bqd"}> : () -> ()
    %cst_135 = arith.constant dense<0.000000e+00> : vector<2x32x8xf32>
    %366 = tpu.matmul %364, %365, %cst_135 {dimension_numbers = #tpu.dot_dimension_numbers<[2], [1], [1], [2], [0, 0, 0, 1, 1, 2], [0], [0]>} : vector<2x32x32xf32>, vector<2x32x8xf32>, vector<2x32x8xf32> -> vector<2x32x8xf32>
    "tpu.trace_stop"() : () -> ()
    %367 = vector.shape_cast %366 : vector<2x32x8xf32> to vector<64x8xf32>
    %c120_136 = arith.constant 120 : index
    %c0_137 = arith.constant 0 : index
    %368 = vector.load %arg2[%c120_136, %c0_137] : memref<366x32xf32, #tpu.memory_space<vmem>>, vector<8x32xf32>
    %cst_138 = arith.constant dense<0.000000e+00> : vector<64x32xf32>
    %369 = tpu.matmul %367, %368, %cst_138 {dimension_numbers = #tpu.dot_dimension_numbers<[1], [0], [0], [1], [0, 0, 1, 1], [], []>} : vector<64x8xf32>, vector<8x32xf32>, vector<64x32xf32> -> vector<64x32xf32>
    %370 = arith.addf %345, %369 : vector<64x32xf32>
    %371 = arith.addf %262, %370 : vector<64x32xf32>
    %372 = vector.broadcast %48 : vector<1x32xf32> to vector<64x32xf32>
    %373 = arith.addf %371, %372 : vector<64x32xf32>
    %cst_139 = arith.constant dense<0.000000e+00> : vector<64xf32>
    %374 = vector.multi_reduction <add>, %373, %cst_139 [1] : vector<64x32xf32> to vector<64xf32>
    %375 = vector.shape_cast %374 : vector<64xf32> to vector<64x1xf32>
    %cst_140 = arith.constant 3.200000e+01 : f32
    %376 = vector.broadcast %cst_140 : f32 to vector<64x1xf32>
    %377 = arith.divf %375, %376 : vector<64x1xf32>
    %378 = vector.broadcast %377 : vector<64x1xf32> to vector<64x32xf32>
    %379 = arith.subf %373, %378 : vector<64x32xf32>
    %380 = arith.mulf %379, %379 : vector<64x32xf32>
    %cst_141 = arith.constant dense<0.000000e+00> : vector<64xf32>
    %381 = vector.multi_reduction <add>, %380, %cst_141 [1] : vector<64x32xf32> to vector<64xf32>
    %382 = vector.shape_cast %381 : vector<64xf32> to vector<64x1xf32>
    %cst_142 = arith.constant 3.200000e+01 : f32
    %383 = vector.broadcast %cst_142 : f32 to vector<64x1xf32>
    %384 = arith.divf %382, %383 : vector<64x1xf32>
    %385 = vector.broadcast %377 : vector<64x1xf32> to vector<64x32xf32>
    %386 = arith.subf %373, %385 : vector<64x32xf32>
    %cst_143 = arith.constant 9.99999974E-6 : f32
    %387 = vector.broadcast %cst_143 : f32 to vector<64x1xf32>
    %388 = arith.addf %384, %387 : vector<64x1xf32>
    %389 = math.rsqrt %388 : vector<64x1xf32>
    %390 = vector.broadcast %389 : vector<64x1xf32> to vector<64x32xf32>
    %391 = arith.mulf %386, %390 : vector<64x32xf32>
    %392 = vector.broadcast %51 : vector<1x32xf32> to vector<64x32xf32>
    %393 = arith.mulf %391, %392 : vector<64x32xf32>
    %394 = vector.broadcast %52 : vector<1x32xf32> to vector<64x32xf32>
    %395 = arith.addf %393, %394 : vector<64x32xf32>
    %396 = arith.addf %395, %3 : vector<64x32xf32>
    %c128_144 = arith.constant 128 : index
    %c0_145 = arith.constant 0 : index
    %397 = vector.load %arg2[%c128_144, %c0_145] : memref<366x32xf32, #tpu.memory_space<vmem>>, vector<32x32xf32>
    %cst_146 = arith.constant dense<0.000000e+00> : vector<64x32xf32>
    %398 = tpu.matmul %396, %397, %cst_146 {dimension_numbers = #tpu.dot_dimension_numbers<[1], [0], [0], [1], [0, 0, 1, 1], [], []>} : vector<64x32xf32>, vector<32x32xf32>, vector<64x32xf32> -> vector<64x32xf32>
    %399 = vector.broadcast %49 : vector<1x32xf32> to vector<64x32xf32>
    %400 = arith.addf %398, %399 : vector<64x32xf32>
    %cst_147 = arith.constant 0.176776692 : f32
    %401 = vector.broadcast %cst_147 : f32 to vector<64x32xf32>
    %402 = arith.mulf %400, %401 : vector<64x32xf32>
    %cst_148 = arith.constant dense<0xFF800000> : vector<64xf32>
    %403 = vector.multi_reduction <maximumf>, %402, %cst_148 [1] : vector<64x32xf32> to vector<64xf32>
    %404 = vector.shape_cast %403 : vector<64xf32> to vector<64x1xf32>
    %405 = vector.broadcast %404 : vector<64x1xf32> to vector<64x32xf32>
    %406 = arith.subf %402, %405 : vector<64x32xf32>
    %407 = math.exp %406 : vector<64x32xf32>
    %cst_149 = arith.constant dense<0.000000e+00> : vector<64xf32>
    %408 = vector.multi_reduction <add>, %407, %cst_149 [1] : vector<64x32xf32> to vector<64xf32>
    %409 = vector.shape_cast %408 : vector<64xf32> to vector<64x1xf32>
    %410 = tpu.reciprocal %409 {approx = true} : vector<64x1xf32> -> vector<64x1xf32>
    %411 = vector.broadcast %410 : vector<64x1xf32> to vector<64x32xf32>
    %412 = arith.mulf %407, %411 : vector<64x32xf32>
    %413 = vector.broadcast %46 : vector<1x32xf32> to vector<64x32xf32>
    %414 = arith.mulf %412, %413 : vector<64x32xf32>
    %415 = arith.addf %395, %414 : vector<64x32xf32>
    %cst_150 = arith.constant dense<0.000000e+00> : vector<64xf32>
    %416 = vector.multi_reduction <add>, %415, %cst_150 [1] : vector<64x32xf32> to vector<64xf32>
    %417 = vector.shape_cast %416 : vector<64xf32> to vector<64x1xf32>
    %cst_151 = arith.constant 3.200000e+01 : f32
    %418 = vector.broadcast %cst_151 : f32 to vector<64x1xf32>
    %419 = arith.divf %417, %418 : vector<64x1xf32>
    %420 = vector.broadcast %419 : vector<64x1xf32> to vector<64x32xf32>
    %421 = arith.subf %415, %420 : vector<64x32xf32>
    %422 = arith.mulf %421, %421 : vector<64x32xf32>
    %cst_152 = arith.constant dense<0.000000e+00> : vector<64xf32>
    %423 = vector.multi_reduction <add>, %422, %cst_152 [1] : vector<64x32xf32> to vector<64xf32>
    %424 = vector.shape_cast %423 : vector<64xf32> to vector<64x1xf32>
    %cst_153 = arith.constant 3.200000e+01 : f32
    %425 = vector.broadcast %cst_153 : f32 to vector<64x1xf32>
    %426 = arith.divf %424, %425 : vector<64x1xf32>
    %427 = vector.broadcast %419 : vector<64x1xf32> to vector<64x32xf32>
    %428 = arith.subf %415, %427 : vector<64x32xf32>
    %cst_154 = arith.constant 9.99999974E-6 : f32
    %429 = vector.broadcast %cst_154 : f32 to vector<64x1xf32>
    %430 = arith.addf %426, %429 : vector<64x1xf32>
    %431 = math.rsqrt %430 : vector<64x1xf32>
    %432 = vector.broadcast %431 : vector<64x1xf32> to vector<64x32xf32>
    %433 = arith.mulf %428, %432 : vector<64x32xf32>
    %434 = vector.broadcast %53 : vector<1x32xf32> to vector<64x32xf32>
    %435 = arith.mulf %433, %434 : vector<64x32xf32>
    %436 = vector.broadcast %54 : vector<1x32xf32> to vector<64x32xf32>
    %437 = arith.addf %435, %436 : vector<64x32xf32>
    %cst_155 = arith.constant dense<0.000000e+00> : vector<64x128xf32>
    %438 = tpu.matmul %437, %57, %cst_155 {dimension_numbers = #tpu.dot_dimension_numbers<[1], [0], [0], [1], [0, 0, 1, 1], [], []>} : vector<64x32xf32>, vector<32x128xf32>, vector<64x128xf32> -> vector<64x128xf32>
    %439 = vector.broadcast %58 : vector<1x128xf32> to vector<64x128xf32>
    %440 = arith.addf %438, %439 : vector<64x128xf32>
    %cst_156 = arith.constant 0.000000e+00 : f32
    %441 = vector.broadcast %cst_156 : f32 to vector<64x128xf32>
    %442 = arith.maximumf %440, %441 : vector<64x128xf32>
    %c224_157 = arith.constant 224 : index
    %c0_158 = arith.constant 0 : index
    %443 = vector.load %arg2[%c224_157, %c0_158] : memref<366x32xf32, #tpu.memory_space<vmem>>, vector<128x32xf32>
    %cst_159 = arith.constant dense<0.000000e+00> : vector<64x32xf32>
    %444 = tpu.matmul %442, %443, %cst_159 {dimension_numbers = #tpu.dot_dimension_numbers<[1], [0], [0], [1], [0, 0, 1, 1], [], []>} : vector<64x128xf32>, vector<128x32xf32>, vector<64x32xf32> -> vector<64x32xf32>
    %445 = vector.broadcast %50 : vector<1x32xf32> to vector<64x32xf32>
    %446 = arith.addf %444, %445 : vector<64x32xf32>
    %447 = arith.addf %437, %446 : vector<64x32xf32>
    %cst_160 = arith.constant dense<0.000000e+00> : vector<64xf32>
    %448 = vector.multi_reduction <add>, %447, %cst_160 [1] : vector<64x32xf32> to vector<64xf32>
    %449 = vector.shape_cast %448 : vector<64xf32> to vector<64x1xf32>
    %cst_161 = arith.constant 3.200000e+01 : f32
    %450 = vector.broadcast %cst_161 : f32 to vector<64x1xf32>
    %451 = arith.divf %449, %450 : vector<64x1xf32>
    %452 = vector.broadcast %451 : vector<64x1xf32> to vector<64x32xf32>
    %453 = arith.subf %447, %452 : vector<64x32xf32>
    %454 = arith.mulf %453, %453 : vector<64x32xf32>
    %cst_162 = arith.constant dense<0.000000e+00> : vector<64xf32>
    %455 = vector.multi_reduction <add>, %454, %cst_162 [1] : vector<64x32xf32> to vector<64xf32>
    %456 = vector.shape_cast %455 : vector<64xf32> to vector<64x1xf32>
    %cst_163 = arith.constant 3.200000e+01 : f32
    %457 = vector.broadcast %cst_163 : f32 to vector<64x1xf32>
    %458 = arith.divf %456, %457 : vector<64x1xf32>
    %459 = vector.broadcast %451 : vector<64x1xf32> to vector<64x32xf32>
    %460 = arith.subf %447, %459 : vector<64x32xf32>
    %cst_164 = arith.constant 9.99999974E-6 : f32
    %461 = vector.broadcast %cst_164 : f32 to vector<64x1xf32>
    %462 = arith.addf %458, %461 : vector<64x1xf32>
    %463 = math.rsqrt %462 : vector<64x1xf32>
    %464 = vector.broadcast %463 : vector<64x1xf32> to vector<64x32xf32>
    %465 = arith.mulf %460, %464 : vector<64x32xf32>
    %466 = vector.broadcast %55 : vector<1x32xf32> to vector<64x32xf32>
    %467 = arith.mulf %465, %466 : vector<64x32xf32>
    %468 = vector.broadcast %56 : vector<1x32xf32> to vector<64x32xf32>
    %469 = arith.addf %467, %468 : vector<64x32xf32>
    %c1_165 = arith.constant 1 : index
    %c0_166 = arith.constant 0 : index
    %c0_167 = arith.constant 0 : index
    %470 = vector.load %arg4[%c1_165, %c0_166, %c0_167] : memref<2x64x32xf32, #tpu.memory_space<vmem>>, vector<1x64x32xf32>
    %471 = vector.shape_cast %470 : vector<1x64x32xf32> to vector<64x32xf32>
    %472 = vector.shape_cast %469 : vector<64x32xf32> to vector<1x64x32xf32>
    tpu.vector_store %arg4[%c1_165, %c0_166, %c0_167], %472 {strides = array<i32>} : memref<2x64x32xf32, #tpu.memory_space<vmem>>, vector<1x64x32xf32>,
    return
  }
}

</mosaic_0001>

<llo_original>
// kernel: ielf_forward.1
$region0: #{ielf_forward.1}
  #allocation0 [shape = 'u32[]', space=smem, size = 0x4, offset = 0x4, fixed_abs, tag = 'smem constant byte address 0x4 - core index']
  #allocation1 [shape = 'u32[144,128]{1,0:T(1,128)}', space=vmem, size = 0x12000, scoped, tag = 'internal scratch']
  %s0 = inlined_call_operand.vmem [shape: f32[2,64,32], index: 0, kind: input, shape index: {}]
  %s1 = inlined_call_operand.vmem [shape: f32[2,128,32], index: 1, kind: input, shape index: {}]
  %s2 = inlined_call_operand.vmem [shape: f32[366,32], index: 2, kind: input, shape index: {}]
  %s3 = inlined_call_operand.vmem [shape: f32[33,128], index: 3, kind: input, shape index: {}]
  %s4 = inlined_call_operand.vmem [shape: f32[2,64,32], index: 4, kind: output, shape index: {}]
  %s5 = sld [smem:[#allocation0]]
  $region26: #{ielf_forward.1} parent=0
    _
  %s7 = ssub.s32 1, %s5
  %s8 = scalar_select 0, %s7, %s5
  // Predicated region
  $region2: #{ielf_forward.1} parent=0 // pred_check
    _
  $region3: #{ielf_forward.1} parent=0 // pred_check_branch
    %10 = sbr.rel (0) target = $region5
  $region4: #{ielf_forward.1} parent=0 // pred_region
    _
  $region5: #{ielf_forward.1} parent=0 // pred_fallthru
    _
  // Predicated region
  $region6: #{ielf_forward.1} parent=0 // pred_check
    _
  $region7: #{ielf_forward.1} parent=0 // pred_check_branch
    %12 = sbr.rel (0) target = $region9
  $region8: #{ielf_forward.1} parent=0 // pred_region
    _
  $region9: #{ielf_forward.1} parent=0 // pred_fallthru
    _
  // Predicated region
  $region10: #{ielf_forward.1} parent=0 // pred_check
    _
  $region11: #{ielf_forward.1} parent=0 // pred_check_branch
    %14 = sbr.rel (0) target = $region13
  $region12: #{ielf_forward.1} parent=0 // pred_region
    _
  $region13: #{ielf_forward.1} parent=0 // pred_fallthru
    _
  // Predicated region
  $region14: #{ielf_forward.1} parent=0 // pred_check
    _
  $region15: #{ielf_forward.1} parent=0 // pred_check_branch
    %16 = sbr.rel (0) target = $region17
  $region16: #{ielf_forward.1} parent=0 // pred_region
    _
  $region17: #{ielf_forward.1} parent=0 // pred_fallthru
    _
  %v17 = vld [vmem:[%s0] sm:$0xff]
  %v18 = vld [vmem:[%s0 + $0x8] sm:$0xff]
  %v19 = vld [vmem:[%s0 + $0x10] sm:$0xff]
  %v20 = vld [vmem:[%s0 + $0x18] sm:$0xff]
  %v21 = vld [vmem:[%s0 + $0x20] sm:$0xff]
  %v22 = vld [vmem:[%s0 + $0x28] sm:$0xff]
  %v23 = vld [vmem:[%s0 + $0x30] sm:$0xff]
  %v24 = vld [vmem:[%s0 + $0x38] sm:$0xff]
  %s25 = scalar_lea.vmem %s0, 64
  %v26 = vld [vmem:[%s25] sm:$0xff]
  %v27 = vld [vmem:[%s25 + $0x8] sm:$0xff]
  %v28 = vld [vmem:[%s25 + $0x10] sm:$0xff]
  %v29 = vld [vmem:[%s25 + $0x18] sm:$0xff]
  %v30 = vld [vmem:[%s25 + $0x20] sm:$0xff]
  %v31 = vld [vmem:[%s25 + $0x28] sm:$0xff]
  %v32 = vld [vmem:[%s25 + $0x30] sm:$0xff]
  %v33 = vld [vmem:[%s25 + $0x38] sm:$0xff]
  %v34 = vld [vmem:[%s1] sm:$0xff]
  %v35 = vld [vmem:[%s1 + $0x8] sm:$0xff]
  %v36 = vld [vmem:[%s1 + $0x10] sm:$0xff]
  %v37 = vld [vmem:[%s1 + $0x18] sm:$0xff]
  %v38 = vld [vmem:[%s1 + $0x20] sm:$0xff]
  %v39 = vld [vmem:[%s1 + $0x28] sm:$0xff]
  %v40 = vld [vmem:[%s1 + $0x30] sm:$0xff]
  %v41 = vld [vmem:[%s1 + $0x38] sm:$0xff]
  %v42 = vld [vmem:[%s1 + $0x40] sm:$0xff]
  %v43 = vld [vmem:[%s1 + $0x48] sm:$0xff]
  %v44 = vld [vmem:[%s1 + $0x50] sm:$0xff]
  %v45 = vld [vmem:[%s1 + $0x58] sm:$0xff]
  %v46 = vld [vmem:[%s1 + $0x60] sm:$0xff]
  %v47 = vld [vmem:[%s1 + $0x68] sm:$0xff]
  %v48 = vld [vmem:[%s1 + $0x70] sm:$0xff]
  %v49 = vld [vmem:[%s1 + $0x78] sm:$0xff]
  %s50 = scalar_lea.vmem %s1, 128
  %v51 = vld [vmem:[%s50] sm:$0xff]
  %v52 = vld [vmem:[%s50 + $0x8] sm:$0xff]
  %v53 = vld [vmem:[%s50 + $0x10] sm:$0xff]
  %v54 = vld [vmem:[%s50 + $0x18] sm:$0xff]
  %v55 = vld [vmem:[%s50 + $0x20] sm:$0xff]
  %v56 = vld [vmem:[%s50 + $0x28] sm:$0xff]
  %v57 = vld [vmem:[%s50 + $0x30] sm:$0xff]
  %v58 = vld [vmem:[%s50 + $0x38] sm:$0xff]
  %v59 = vld [vmem:[%s50 + $0x40] sm:$0xff]
  %v60 = vld [vmem:[%s50 + $0x48] sm:$0xff]
  %v61 = vld [vmem:[%s50 + $0x50] sm:$0xff]
  %v62 = vld [vmem:[%s50 + $0x58] sm:$0xff]
  %v63 = vld [vmem:[%s50 + $0x60] sm:$0xff]
  %v64 = vld [vmem:[%s50 + $0x68] sm:$0xff]
  %v65 = vld [vmem:[%s50 + $0x70] sm:$0xff]
  %v66 = vld [vmem:[%s50 + $0x78] sm:$0xff]
  %v67 = vld [vmem:[%s2 + $0x20] sm:$0xff]
  %v68 = vld [vmem:[%s2 + $0x28] sm:$0xff]
  %v69 = vld [vmem:[%s2 + $0x30] sm:$0xff]
  %v70 = vld [vmem:[%s2 + $0x38] sm:$0xff]
  %v71 = vld [vmem:[%s2 + $0x161] sm:$0x1]
  %v72 = vlaneseq
  %v73 = vshrl.u32 %v72, 7
  %v74 = vsub.s32 0, %v73
  %v75 = vrot.slane %v71, %v74
  %vm76 = vcmask 261120
  %v78 = vsel %vm76, %v17, 0
  %v81 = vsel %vm76, %v18, 0
  %v84 = vsel %vm76, %v19, 0
  %v87 = vsel %vm76, %v20, 0
  %v90 = vsel %vm76, %v21, 0
  %v93 = vsel %vm76, %v22, 0
  %v96 = vsel %vm76, %v23, 0
  %v99 = vsel %vm76, %v24, 0
  %101 = vmatprep.subr.mxu0 0.0
  %102 = vmatpush1.msra.mxu0 %v67
  %103 = vmatprep.subr.mxu0 0.0
  %104 = vmatpush1.msra.mxu0 %v68
  %105 = vmatprep.subr.mxu0 0.0
  %106 = vmatpush1.msra.mxu0 %v69
  %107 = vmatprep.subr.mxu0 0.0
  %108 = vmatpush1.msra.mxu0 %v70
  %109 = vmatprep.subr.mxu0 0.0
  %110 = vmatpush1.msra.mxu0 0.0
  %111 = vmatprep.subr.mxu0 0.0
  %112 = vmatpush1.msra.mxu0 0.0
  %113 = vmatprep.subr.mxu0 0.0
  %114 = vmatpush1.msra.mxu0 0.0
  %115 = vmatprep.subr.mxu0 0.0
  %116 = vmatpush1.msra.mxu0 0.0
  %117 = vmatprep.subr.mxu0 0.0
  %118 = vmatpush1.msra.mxu0 0.0
  %119 = vmatprep.subr.mxu0 0.0
  %120 = vmatpush1.msra.mxu0 0.0
  %121 = vmatprep.subr.mxu0 0.0
  %122 = vmatpush1.msra.mxu0 0.0
  %123 = vmatprep.subr.mxu0 0.0
  %124 = vmatpush1.msra.mxu0 0.0
  %125 = vmatprep.subr.mxu0 0.0
  %126 = vmatpush1.msra.mxu0 0.0
  %127 = vmatprep.subr.mxu0 0.0
  %128 = vmatpush1.msra.mxu0 0.0
  %129 = vmatprep.subr.mxu0 0.0
  %130 = vmatpush1.msra.mxu0 0.0
  %131 = vmatprep.subr.mxu0 0.0
  %132 = vmatpush1.msra.mxu0 0.0
  %133 = vmatprep.subr.mxu0 0.0
  %134 = vmatpush1.msra.mxu0 0.0
  %135 = vmatprep.subr.mxu0 0.0
  %136 = vmatpush1.msra.mxu0 0.0
  %137 = vmatprep.subr.mxu0 0.0
  %138 = vmatpush1.msra.mxu0 0.0
  %139 = vmatprep.subr.mxu0 0.0
  %140 = vmatpush1.msra.mxu0 0.0
  %141 = vmatprep.subr.mxu0 0.0
  %142 = vmatpush1.msra.mxu0 0.0
  %143 = vmatprep.subr.mxu0 0.0
  %144 = vmatpush1.msra.mxu0 0.0
  %145 = vmatprep.subr.mxu0 0.0
  %146 = vmatpush1.msra.mxu0 0.0
  %147 = vmatprep.subr.mxu0 0.0
  %148 = vmatpush1.msra.mxu0 0.0
  %149 = vmatprep.subr.mxu0 0.0
  %150 = vmatpush1.msra.mxu0 0.0
  %151 = vmatprep.subr.mxu0 0.0
  %152 = vmatpush1.msra.mxu0 0.0
  %153 = vmatprep.subr.mxu0 0.0
  %154 = vmatpush1.msra.mxu0 0.0
  %155 = vmatprep.subr.mxu0 0.0
  %156 = vmatpush1.msra.mxu0 0.0
  %157 = vmatprep.subr.mxu0 0.0
  %158 = vmatpush1.msra.mxu0 0.0
  %159 = vmatprep.subr.mxu0 0.0
  %160 = vmatpush1.msra.mxu0 0.0
  %161 = vmatprep.subr.mxu0 0.0
  %162 = vmatpush1.msra.mxu0 0.0
  %163 = vmatprep.subr.mxu0 0.0
  %164 = vmatpush1.msra.mxu0 0.0
  %165 = vmatprep.mubr.f32.mxu0 0.0
  %166 = vmatmul.mubr.f32.gmra.mrb[0].mxu0 %v78
  %v167 = vpop.f32.mrb[0].mxu0
  %v168 = vadd.f32 %v75, %v167
  %v169 = vpop.f32.mrb[0].mxu0
  %170 = vmatprep.mubr.f32.mxu0 0.0
  %171 = vmatmul.mubr.f32.gmra.mrb[0].mxu0 %v81
  %v172 = vpop.f32.mrb[0].mxu0
  %v173 = vadd.f32 %v75, %v172
  %v174 = vpop.f32.mrb[0].mxu0
  %175 = vmatprep.mubr.f32.mxu0 0.0
  %176 = vmatmul.mubr.f32.gmra.mrb[0].mxu0 %v84
  %v177 = vpop.f32.mrb[0].mxu0
  %v178 = vadd.f32 %v75, %v177
  %v179 = vpop.f32.mrb[0].mxu0
  %180 = vmatprep.mubr.f32.mxu0 0.0
  %181 = vmatmul.mubr.f32.gmra.mrb[0].mxu0 %v87
  %v182 = vpop.f32.mrb[0].mxu0
  %v183 = vadd.f32 %v75, %v182
  %v184 = vpop.f32.mrb[0].mxu0
  %185 = vmatprep.mubr.f32.mxu0 0.0
  %186 = vmatmul.mubr.f32.gmra.mrb[0].mxu0 %v90
  %v187 = vpop.f32.mrb[0].mxu0
  %v188 = vadd.f32 %v75, %v187
  %v189 = vpop.f32.mrb[0].mxu0
  %190 = vmatprep.mubr.f32.mxu0 0.0
  %191 = vmatmul.mubr.f32.gmra.mrb[0].mxu0 %v93
  %v192 = vpop.f32.mrb[0].mxu0
  %v193 = vadd.f32 %v75, %v192
  %v194 = vpop.f32.mrb[0].mxu0
  %195 = vmatprep.mubr.f32.mxu0 0.0
  %196 = vmatmul.mubr.f32.gmra.mrb[0].mxu0 %v96
  %v197 = vpop.f32.mrb[0].mxu0
  %v198 = vadd.f32 %v75, %v197
  %v199 = vpop.f32.mrb[0].mxu0
  %200 = vmatprep.mubr.f32.mxu0 0.0
  %201 = vmatmul.mubr.f32.gmra.mrb[0].mxu0 %v99
  %v202 = vpop.f32.mrb[0].mxu0
  %v203 = vadd.f32 %v75, %v202
  %v204 = vpop.f32.mrb[0].mxu0
  %205 = vdwg.mxu0
  %v206 = vld [vmem:[%s2 + $0x40] sm:$0xff]
  %v207 = vld [vmem:[%s2 + $0x48] sm:$0xff]
  %v208 = vld [vmem:[%s2 + $0x50] sm:$0xff]
  %v209 = vld [vmem:[%s2 + $0x58] sm:$0xff]
  %v210 = vld [vmem:[%s2 + $0x162] sm:$0x1]
  %v211 = vlaneseq
  %v212 = vshrl.u32 %v211, 7
  %v213 = vsub.s32 0, %v212
  %v214 = vrot.slane %v210, %v213
  %215 = vmatprep.subr.mxu0 0.0
  %216 = vmatpush1.msra.mxu0 %v206
  %217 = vmatprep.subr.mxu0 0.0
  %218 = vmatpush1.msra.mxu0 %v207
  %219 = vmatprep.subr.mxu0 0.0
  %220 = vmatpush1.msra.mxu0 %v208
  %221 = vmatprep.subr.mxu0 0.0
  %222 = vmatpush1.msra.mxu0 %v209
  %223 = vmatprep.subr.mxu0 0.0
  %224 = vmatpush1.msra.mxu0 0.0
  %225 = vmatprep.subr.mxu0 0.0
  %226 = vmatpush1.msra.mxu0 0.0
  %227 = vmatprep.subr.mxu0 0.0
  %228 = vmatpush1.msra.mxu0 0.0
  %229 = vmatprep.subr.mxu0 0.0
  %230 = vmatpush1.msra.mxu0 0.0
  %231 = vmatprep.subr.mxu0 0.0
  %232 = vmatpush1.msra.mxu0 0.0
  %233 = vmatprep.subr.mxu0 0.0
  %234 = vmatpush1.msra.mxu0 0.0
  %235 = vmatprep.subr.mxu0 0.0
  %236 = vmatpush1.msra.mxu0 0.0
  %237 = vmatprep.subr.mxu0 0.0
  %238 = vmatpush1.msra.mxu0 0.0
  %239 = vmatprep.subr.mxu0 0.0
  %240 = vmatpush1.msra.mxu0 0.0
  %241 = vmatprep.subr.mxu0 0.0
  %242 = vmatpush1.msra.mxu0 0.0
  %243 = vmatprep.subr.mxu0 0.0
  %244 = vmatpush1.msra.mxu0 0.0
  %245 = vmatprep.subr.mxu0 0.0
  %246 = vmatpush1.msra.mxu0 0.0
  %247 = vmatprep.subr.mxu0 0.0
  %248 = vmatpush1.msra.mxu0 0.0
  %249 = vmatprep.subr.mxu0 0.0
  %250 = vmatpush1.msra.mxu0 0.0
  %251 = vmatprep.subr.mxu0 0.0
  %252 = vmatpush1.msra.mxu0 0.0
  %253 = vmatprep.subr.mxu0 0.0
  %254 = vmatpush1.msra.mxu0 0.0
  %255 = vmatprep.subr.mxu0 0.0
  %256 = vmatpush1.msra.mxu0 0.0
  %257 = vmatprep.subr.mxu0 0.0
  %258 = vmatpush1.msra.mxu0 0.0
  %259 = vmatprep.subr.mxu0 0.0
  %260 = vmatpush1.msra.mxu0 0.0
  %261 = vmatprep.subr.mxu0 0.0
  %262 = vmatpush1.msra.mxu0 0.0
  %263 = vmatprep.subr.mxu0 0.0
  %264 = vmatpush1.msra.mxu0 0.0
  %265 = vmatprep.subr.mxu0 0.0
  %266 = vmatpush1.msra.mxu0 0.0
  %267 = vmatprep.subr.mxu0 0.0
  %268 = vmatpush1.msra.mxu0 0.0
  %269 = vmatprep.subr.mxu0 0.0
  %270 = vmatpush1.msra.mxu0 0.0
  %271 = vmatprep.subr.mxu0 0.0
  %272 = vmatpush1.msra.mxu0 0.0
  %273 = vmatprep.subr.mxu0 0.0
  %274 = vmatpush1.msra.mxu0 0.0
  %275 = vmatprep.subr.mxu0 0.0
  %276 = vmatpush1.msra.mxu0 0.0
  %277 = vmatprep.subr.mxu0 0.0
  %278 = vmatpush1.msra.mxu0 0.0
  %279 = vmatprep.mubr.f32.mxu0 0.0
  %280 = vmatmul.mubr.f32.gmra.mrb[0].mxu0 %v78
  %v281 = vpop.f32.mrb[0].mxu0
  %v282 = vadd.f32 %v214, %v281
  %v283 = vpop.f32.mrb[0].mxu0
  %284 = vmatprep.mubr.f32.mxu0 0.0
  %285 = vmatmul.mubr.f32.gmra.mrb[0].mxu0 %v81
  %v286 = vpop.f32.mrb[0].mxu0
  %v287 = vadd.f32 %v214, %v286
  %v288 = vpop.f32.mrb[0].mxu0
  %289 = vmatprep.mubr.f32.mxu0 0.0
  %290 = vmatmul.mubr.f32.gmra.mrb[0].mxu0 %v84
  %v291 = vpop.f32.mrb[0].mxu0
  %v292 = vadd.f32 %v214, %v291
  %v293 = vpop.f32.mrb[0].mxu0
  %294 = vmatprep.mubr.f32.mxu0 0.0
  %295 = vmatmul.mubr.f32.gmra.mrb[0].mxu0 %v87
  %v296 = vpop.f32.mrb[0].mxu0
  %v297 = vadd.f32 %v214, %v296
  %v298 = vpop.f32.mrb[0].mxu0
  %299 = vmatprep.mubr.f32.mxu0 0.0
  %300 = vmatmul.mubr.f32.gmra.mrb[0].mxu0 %v90
  %v301 = vpop.f32.mrb[0].mxu0
  %v302 = vadd.f32 %v214, %v301
  %v303 = vpop.f32.mrb[0].mxu0
  %304 = vmatprep.mubr.f32.mxu0 0.0
  %305 = vmatmul.mubr.f32.gmra.mrb[0].mxu0 %v93
  %v306 = vpop.f32.mrb[0].mxu0
  %v307 = vadd.f32 %v214, %v306
  %v308 = vpop.f32.mrb[0].mxu0
  %309 = vmatprep.mubr.f32.mxu0 0.0
  %310 = vmatmul.mubr.f32.gmra.mrb[0].mxu0 %v96
  %v311 = vpop.f32.mrb[0].mxu0
  %v312 = vadd.f32 %v214, %v311
  %v313 = vpop.f32.mrb[0].mxu0
  %314 = vmatprep.mubr.f32.mxu0 0.0
  %315 = vmatmul.mubr.f32.gmra.mrb[0].mxu0 %v99
  %v316 = vpop.f32.mrb[0].mxu0
  %v317 = vadd.f32 %v214, %v316
  %v318 = vpop.f32.mrb[0].mxu0
  %319 = vdwg.mxu0
  %v320 = vlaneseq
  %v321 = vand.u32 %v320, 127
  %vm322 = vcmp.lt.s32.totalorder %v321, 27
  %v323 = vadd.f32 %v34, %v51
  %v324 = vadd.f32 %v35, %v52
  %v325 = vadd.f32 %v36, %v53
  %v326 = vadd.f32 %v37, %v54
  %v327 = vadd.f32 %v38, %v55
  %v328 = vadd.f32 %v39, %v56
  %v329 = vadd.f32 %v40, %v57
  %v330 = vadd.f32 %v41, %v58
  %v331 = vadd.f32 %v42, %v59
  %v332 = vadd.f32 %v43, %v60
  %v333 = vadd.f32 %v44, %v61
  %v334 = vadd.f32 %v45, %v62
  %v335 = vadd.f32 %v46, %v63
  %v336 = vadd.f32 %v47, %v64
  %v337 = vadd.f32 %v48, %v65
  %v338 = vadd.f32 %v49, %v66
  %v339 = vld [vmem:[%s2 + $0xa0] sm:$0xff]
  %v340 = vld [vmem:[%s2 + $0xa8] sm:$0xff]
  %v341 = vld [vmem:[%s2 + $0xb0] sm:$0xff]
  %v342 = vld [vmem:[%s2 + $0xb8] sm:$0xff]
  %v343 = vld [vmem:[%s2 + $0x165] sm:$0x1]
  %v344 = vlaneseq
  %v345 = vshrl.u32 %v344, 7
  %v346 = vsub.s32 0, %v345
  %v347 = vrot.slane %v343, %v346
  %v349 = vsel %vm76, %v323, 0
  %v352 = vsel %vm76, %v324, 0
  %v355 = vsel %vm76, %v325, 0
  %v358 = vsel %vm76, %v326, 0
  %v361 = vsel %vm76, %v327, 0
  %v364 = vsel %vm76, %v328, 0
  %v367 = vsel %vm76, %v329, 0
  %v370 = vsel %vm76, %v330, 0
  %v373 = vsel %vm76, %v331, 0
  %v376 = vsel %vm76, %v332, 0
  %v379 = vsel %vm76, %v333, 0
  %v382 = vsel %vm76, %v334, 0
  %v385 = vsel %vm76, %v335, 0
  %v388 = vsel %vm76, %v336, 0
  %v391 = vsel %vm76, %v337, 0
  %v394 = vsel %vm76, %v338, 0
  %396 = vmatprep.subr.mxu0 0.0
  %397 = vmatpush1.msra.mxu0 %v339
  %398 = vmatprep.subr.mxu0 0.0
  %399 = vmatpush1.msra.mxu0 %v340
  %400 = vmatprep.subr.mxu0 0.0
  %401 = vmatpush1.msra.mxu0 %v341
  %402 = vmatprep.subr.mxu0 0.0
  %403 = vmatpush1.msra.mxu0 %v342
  %404 = vmatprep.subr.mxu0 0.0
  %405 = vmatpush1.msra.mxu0 0.0
  %406 = vmatprep.subr.mxu0 0.0
  %407 = vmatpush1.msra.mxu0 0.0
  %408 = vmatprep.subr.mxu0 0.0
  %409 = vmatpush1.msra.mxu0 0.0
  %410 = vmatprep.subr.mxu0 0.0
  %411 = vmatpush1.msra.mxu0 0.0
  %412 = vmatprep.subr.mxu0 0.0
  %413 = vmatpush1.msra.mxu0 0.0
  %414 = vmatprep.subr.mxu0 0.0
  %415 = vmatpush1.msra.mxu0 0.0
  %416 = vmatprep.subr.mxu0 0.0
  %417 = vmatpush1.msra.mxu0 0.0
  %418 = vmatprep.subr.mxu0 0.0
  %419 = vmatpush1.msra.mxu0 0.0
  %420 = vmatprep.subr.mxu0 0.0
  %421 = vmatpush1.msra.mxu0 0.0
  %422 = vmatprep.subr.mxu0 0.0
  %423 = vmatpush1.msra.mxu0 0.0
  %424 = vmatprep.subr.mxu0 0.0
  %425 = vmatpush1.msra.mxu0 0.0
  %426 = vmatprep.subr.mxu0 0.0
  %427 = vmatpush1.msra.mxu0 0.0
  %428 = vmatprep.subr.mxu0 0.0
  %429 = vmatpush1.msra.mxu0 0.0
  %430 = vmatprep.subr.mxu0 0.0
  %431 = vmatpush1.msra.mxu0 0.0
  %432 = vmatprep.subr.mxu0 0.0
  %433 = vmatpush1.msra.mxu0 0.0
  %434 = vmatprep.subr.mxu0 0.0
  %435 = vmatpush1.msra.mxu0 0.0
  %436 = vmatprep.subr.mxu0 0.0
  %437 = vmatpush1.msra.mxu0 0.0
  %438 = vmatprep.subr.mxu0 0.0
  %439 = vmatpush1.msra.mxu0 0.0
  %440 = vmatprep.subr.mxu0 0.0
  %441 = vmatpush1.msra.mxu0 0.0
  %442 = vmatprep.subr.mxu0 0.0
  %443 = vmatpush1.msra.mxu0 0.0
  %444 = vmatprep.subr.mxu0 0.0
  %445 = vmatpush1.msra.mxu0 0.0
  %446 = vmatprep.subr.mxu0 0.0
  %447 = vmatpush1.msra.mxu0 0.0
  %448 = vmatprep.subr.mxu0 0.0
  %449 = vmatpush1.msra.mxu0 0.0
  %450 = vmatprep.subr.mxu0 0.0
  %451 = vmatpush1.msra.mxu0 0.0
  %452 = vmatprep.subr.mxu0 0.0
  %453 = vmatpush1.msra.mxu0 0.0
  %454 = vmatprep.subr.mxu0 0.0
  %455 = vmatpush1.msra.mxu0 0.0
  %456 = vmatprep.subr.mxu0 0.0
  %457 = vmatpush1.msra.mxu0 0.0
  %458 = vmatprep.subr.mxu0 0.0
  %459 = vmatpush1.msra.mxu0 0.0
  %460 = vmatprep.mubr.f32.mxu0 0.0
  %461 = vmatmul.mubr.f32.gmra.mrb[0].mxu0 %v349
  %v462 = vpop.f32.mrb[0].mxu0
  %v463 = vadd.f32 %v347, %v462
  %v464 = vpop.f32.mrb[0].mxu0
  %465 = vmatprep.mubr.f32.mxu0 0.0
  %466 = vmatmul.mubr.f32.gmra.mrb[0].mxu0 %v352
  %v467 = vpop.f32.mrb[0].mxu0
  %v468 = vadd.f32 %v347, %v467
  %v469 = vpop.f32.mrb[0].mxu0
  %470 = vmatprep.mubr.f32.mxu0 0.0
  %471 = vmatmul.mubr.f32.gmra.mrb[0].mxu0 %v355
  %v472 = vpop.f32.mrb[0].mxu0
  %v473 = vadd.f32 %v347, %v472
  %v474 = vpop.f32.mrb[0].mxu0
  %475 = vmatprep.mubr.f32.mxu0 0.0
  %476 = vmatmul.mubr.f32.gmra.mrb[0].mxu0 %v358
  %v477 = vpop.f32.mrb[0].mxu0
  %v478 = vadd.f32 %v347, %v477
  %v479 = vpop.f32.mrb[0].mxu0
  %480 = vmatprep.mubr.f32.mxu0 0.0
  %481 = vmatmul.mubr.f32.gmra.mrb[0].mxu0 %v361
  %v482 = vpop.f32.mrb[0].mxu0
  %v483 = vadd.f32 %v347, %v482
  %v484 = vpop.f32.mrb[0].mxu0
  %485 = vmatprep.mubr.f32.mxu0 0.0
  %486 = vmatmul.mubr.f32.gmra.mrb[0].mxu0 %v364
  %v487 = vpop.f32.mrb[0].mxu0
  %v488 = vadd.f32 %v347, %v487
  %v489 = vpop.f32.mrb[0].mxu0
  %490 = vmatprep.mubr.f32.mxu0 0.0
  %491 = vmatmul.mubr.f32.gmra.mrb[0].mxu0 %v367
  %v492 = vpop.f32.mrb[0].mxu0
  %v493 = vadd.f32 %v347, %v492
  %v494 = vpop.f32.mrb[0].mxu0
  %495 = vmatprep.mubr.f32.mxu0 0.0
  %496 = vmatmul.mubr.f32.gmra.mrb[0].mxu0 %v370
  %v497 = vpop.f32.mrb[0].mxu0
  %v498 = vadd.f32 %v347, %v497
  %v499 = vpop.f32.mrb[0].mxu0
  %500 = vmatprep.mubr.f32.mxu0 0.0
  %501 = vmatmul.mubr.f32.gmra.mrb[0].mxu0 %v373
  %v502 = vpop.f32.mrb[0].mxu0
  %v503 = vadd.f32 %v347, %v502
  %v504 = vpop.f32.mrb[0].mxu0
  %505 = vmatprep.mubr.f32.mxu0 0.0
  %506 = vmatmul.mubr.f32.gmra.mrb[0].mxu0 %v376
  %v507 = vpop.f32.mrb[0].mxu0
  %v508 = vadd.f32 %v347, %v507
  %v509 = vpop.f32.mrb[0].mxu0
  %510 = vmatprep.mubr.f32.mxu0 0.0
  %511 = vmatmul.mubr.f32.gmra.mrb[0].mxu0 %v379
  %v512 = vpop.f32.mrb[0].mxu0
  %v513 = vadd.f32 %v347, %v512
  %v514 = vpop.f32.mrb[0].mxu0
  %515 = vmatprep.mubr.f32.mxu0 0.0
  %516 = vmatmul.mubr.f32.gmra.mrb[0].mxu0 %v382
  %v517 = vpop.f32.mrb[0].mxu0
  %v518 = vadd.f32 %v347, %v517
  %v519 = vpop.f32.mrb[0].mxu0
  %520 = vmatprep.mubr.f32.mxu0 0.0
  %521 = vmatmul.mubr.f32.gmra.mrb[0].mxu0 %v385
  %v522 = vpop.f32.mrb[0].mxu0
  %v523 = vadd.f32 %v347, %v522
  %v524 = vpop.f32.mrb[0].mxu0
  %525 = vmatprep.mubr.f32.mxu0 0.0
  %526 = vmatmul.mubr.f32.gmra.mrb[0].mxu0 %v388
  %v527 = vpop.f32.mrb[0].mxu0
  %v528 = vadd.f32 %v347, %v527
  %v529 = vpop.f32.mrb[0].mxu0
  %530 = vmatprep.mubr.f32.mxu0 0.0
  %531 = vmatmul.mubr.f32.gmra.mrb[0].mxu0 %v391
  %v532 = vpop.f32.mrb[0].mxu0
  %v533 = vadd.f32 %v347, %v532
  %v534 = vpop.f32.mrb[0].mxu0
  %535 = vmatprep.mubr.f32.mxu0 0.0
  %536 = vmatmul.mubr.f32.gmra.mrb[0].mxu0 %v394
  %v537 = vpop.f32.mrb[0].mxu0
  %v538 = vadd.f32 %v347, %v537
  %v539 = vpop.f32.mrb[0].mxu0
  %540 = vdwg.mxu0
  %v541 = vsel %vm76, %v463, -inf
  %v542 = vsel %vm76, %v468, -inf
  %v543 = vsel %vm76, %v473, -inf
  %v544 = vsel %vm76, %v478, -inf
  %v545 = vsel %vm76, %v483, -inf
  %v546 = vmax.f32 %v541, %v545
  %v547 = vsel %vm76, %v488, -inf
  %v548 = vmax.f32 %v542, %v547
  %v549 = vsel %vm76, %v493, -inf
  %v550 = vmax.f32 %v543, %v549
  %v551 = vsel %vm76, %v498, -inf
  %v552 = vmax.f32 %v544, %v551
  %v553 = vsel %vm76, %v503, -inf
  %v554 = vmax.f32 %v546, %v553
  %v555 = vsel %vm76, %v508, -inf
  %v556 = vmax.f32 %v548, %v555
  %v557 = vsel %vm76, %v513, -inf
  %v558 = vmax.f32 %v550, %v557
  %v559 = vsel %vm76, %v518, -inf
  %v560 = vmax.f32 %v552, %v559
  %v561 = vsel %vm76, %v523, -inf
  %v562 = vmax.f32 %v554, %v561
  %v563 = vsel %vm76, %v528, -inf
  %v564 = vmax.f32 %v556, %v563
  %v565 = vsel %vm76, %v533, -inf
  %v566 = vmax.f32 %v558, %v565
  %v567 = vsel %vm76, %v538, -inf
  %v568 = vmax.f32 %v560, %v567
  %v569 = vmax.f32 %v562, %v564
  %v570 = vmax.f32 %v566, %v568
  %v571 = vmax.f32 %v569, %v570
  %v572 = vrot.slane %v571, 4
  %v573 = vmax.f32 %v571, %v572
  %v574 = vrot.slane %v573, 2
  %v575 = vmax.f32 %v573, %v574
  %v576 = vrot.slane %v575, 1
  %v577 = vmax.f32 %v575, %v576
  %v578 = vsub.f32 %v463, %v577
  %v579 = vsub.f32 %v468, %v577
  %v580 = vsub.f32 %v473, %v577
  %v581 = vsub.f32 %v478, %v577
  %v582 = vsub.f32 %v483, %v577
  %v583 = vsub.f32 %v488, %v577
  %v584 = vsub.f32 %v493, %v577
  %v585 = vsub.f32 %v498, %v577
  %v586 = vsub.f32 %v503, %v577
  %v587 = vsub.f32 %v508, %v577
  %v588 = vsub.f32 %v513, %v577
  %v589 = vsub.f32 %v518, %v577
  %v590 = vsub.f32 %v523, %v577
  %v591 = vsub.f32 %v528, %v577
  %v592 = vsub.f32 %v533, %v577
  %v593 = vsub.f32 %v538, %v577
  %v594 = vmul.f32 %v578, 1.442695
  %v595 = vpow.pop %v594
  %v596 = vmul.f32 %v579, 1.442695
  %v597 = vpow.pop %v596
  %v598 = vmul.f32 %v580, 1.442695
  %v599 = vpow.pop %v598
  %v600 = vmul.f32 %v581, 1.442695
  %v601 = vpow.pop %v600
  %v602 = vmul.f32 %v582, 1.442695
  %v603 = vpow.pop %v602
  %v604 = vmul.f32 %v583, 1.442695
  %v605 = vpow.pop %v604
  %v606 = vmul.f32 %v584, 1.442695
  %v607 = vpow.pop %v606
  %v608 = vmul.f32 %v585, 1.442695
  %v609 = vpow.pop %v608
  %v610 = vmul.f32 %v586, 1.442695
  %v611 = vpow.pop %v610
  %v612 = vmul.f32 %v587, 1.442695
  %v613 = vpow.pop %v612
  %v614 = vmul.f32 %v588, 1.442695
  %v615 = vpow.pop %v614
  %v616 = vmul.f32 %v589, 1.442695
  %v617 = vpow.pop %v616
  %v618 = vmul.f32 %v590, 1.442695
  %v619 = vpow.pop %v618
  %v620 = vmul.f32 %v591, 1.442695
  %v621 = vpow.pop %v620
  %v622 = vmul.f32 %v592, 1.442695
  %v623 = vpow.pop %v622
  %v624 = vmul.f32 %v593, 1.442695
  %v625 = vpow.pop %v624
  %v626 = vsel %vm76, %v595, 0.0
  %v627 = vsel %vm76, %v597, 0.0
  %v628 = vadd.f32 %v626, %v627
  %v629 = vsel %vm76, %v599, 0.0
  %v630 = vadd.f32 %v628, %v629
  %v631 = vsel %vm76, %v601, 0.0
  %v632 = vadd.f32 %v630, %v631
  %v633 = vsel %vm76, %v603, 0.0
  %v634 = vadd.f32 %v632, %v633
  %v635 = vsel %vm76, %v605, 0.0
  %v636 = vadd.f32 %v634, %v635
  %v637 = vsel %vm76, %v607, 0.0
  %v638 = vadd.f32 %v636, %v637
  %v639 = vsel %vm76, %v609, 0.0
  %v640 = vadd.f32 %v638, %v639
  %v641 = vsel %vm76, %v611, 0.0
  %v642 = vadd.f32 %v640, %v641
  %v643 = vsel %vm76, %v613, 0.0
  %v644 = vadd.f32 %v642, %v643
  %v645 = vsel %vm76, %v615, 0.0
  %v646 = vadd.f32 %v644, %v645
  %v647 = vsel %vm76, %v617, 0.0
  %v648 = vadd.f32 %v646, %v647
  %v649 = vsel %vm76, %v619, 0.0
  %v650 = vadd.f32 %v648, %v649
  %v651 = vsel %vm76, %v621, 0.0
  %v652 = vadd.f32 %v650, %v651
  %v653 = vsel %vm76, %v623, 0.0
  %v654 = vadd.f32 %v652, %v653
  %v655 = vsel %vm76, %v625, 0.0
  %v656 = vadd.f32 %v654, %v655
  %v657 = vrot.slane %v656, 4
  %v658 = vadd.f32 %v656, %v657
  %v659 = vrot.slane %v658, 2
  %v660 = vadd.f32 %v658, %v659
  %v661 = vrot.slane %v660, 1
  %v662 = vadd.f32 %v660, %v661
  %v663 = vrcp.pop %v662
  %v664 = vmul.f32 %v595, %v663
  %v665 = vmul.f32 %v597, %v663
  %v666 = vmul.f32 %v599, %v663
  %v667 = vmul.f32 %v601, %v663
  %v668 = vmul.f32 %v603, %v663
  %v669 = vmul.f32 %v605, %v663
  %v670 = vmul.f32 %v607, %v663
  %v671 = vmul.f32 %v609, %v663
  %v672 = vmul.f32 %v611, %v663
  %v673 = vmul.f32 %v613, %v663
  %v674 = vmul.f32 %v615, %v663
  %v675 = vmul.f32 %v617, %v663
  %v676 = vmul.f32 %v619, %v663
  %v677 = vmul.f32 %v621, %v663
  %v678 = vmul.f32 %v623, %v663
  %v679 = vmul.f32 %v625, %v663
  %v680 = vld [vmem:[%s2 + $0xc0] sm:$0xff]
  %v681 = vld [vmem:[%s2 + $0xc8] sm:$0xff]
  %v682 = vld [vmem:[%s2 + $0xd0] sm:$0xff]
  %v683 = vld [vmem:[%s2 + $0xd8] sm:$0xff]
  %v684 = vld [vmem:[%s2 + $0x166] sm:$0x1]
  %v685 = vlaneseq
  %v686 = vshrl.u32 %v685, 7
  %v687 = vsub.s32 0, %v686
  %v688 = vrot.slane %v684, %v687
  %v690 = vsel %vm76, %v34, 0
  %v693 = vsel %vm76, %v35, 0
  %v696 = vsel %vm76, %v36, 0
  %v699 = vsel %vm76, %v37, 0
  %v702 = vsel %vm76, %v38, 0
  %v705 = vsel %vm76, %v39, 0
  %v708 = vsel %vm76, %v40, 0
  %v711 = vsel %vm76, %v41, 0
  %v714 = vsel %vm76, %v42, 0
  %v717 = vsel %vm76, %v43, 0
  %v720 = vsel %vm76, %v44, 0
  %v723 = vsel %vm76, %v45, 0
  %v726 = vsel %vm76, %v46, 0
  %v729 = vsel %vm76, %v47, 0
  %v732 = vsel %vm76, %v48, 0
  %v735 = vsel %vm76, %v49, 0
  %737 = vmatprep.subr.mxu0 0.0
  %738 = vmatpush1.msra.mxu0 %v680
  %739 = vmatprep.subr.mxu0 0.0
  %740 = vmatpush1.msra.mxu0 %v681
  %741 = vmatprep.subr.mxu0 0.0
  %742 = vmatpush1.msra.mxu0 %v682
  %743 = vmatprep.subr.mxu0 0.0
  %744 = vmatpush1.msra.mxu0 %v683
  %745 = vmatprep.subr.mxu0 0.0
  %746 = vmatpush1.msra.mxu0 0.0
  %747 = vmatprep.subr.mxu0 0.0
  %748 = vmatpush1.msra.mxu0 0.0
  %749 = vmatprep.subr.mxu0 0.0
  %750 = vmatpush1.msra.mxu0 0.0
  %751 = vmatprep.subr.mxu0 0.0
  %752 = vmatpush1.msra.mxu0 0.0
  %753 = vmatprep.subr.mxu0 0.0
  %754 = vmatpush1.msra.mxu0 0.0
  %755 = vmatprep.subr.mxu0 0.0
  %756 = vmatpush1.msra.mxu0 0.0
  %757 = vmatprep.subr.mxu0 0.0
  %758 = vmatpush1.msra.mxu0 0.0
  %759 = vmatprep.subr.mxu0 0.0
  %760 = vmatpush1.msra.mxu0 0.0
  %761 = vmatprep.subr.mxu0 0.0
  %762 = vmatpush1.msra.mxu0 0.0
  %763 = vmatprep.subr.mxu0 0.0
  %764 = vmatpush1.msra.mxu0 0.0
  %765 = vmatprep.subr.mxu0 0.0
  %766 = vmatpush1.msra.mxu0 0.0
  %767 = vmatprep.subr.mxu0 0.0
  %768 = vmatpush1.msra.mxu0 0.0
  %769 = vmatprep.subr.mxu0 0.0
  %770 = vmatpush1.msra.mxu0 0.0
  %771 = vmatprep.subr.mxu0 0.0
  %772 = vmatpush1.msra.mxu0 0.0
  %773 = vmatprep.subr.mxu0 0.0
  %774 = vmatpush1.msra.mxu0 0.0
  %775 = vmatprep.subr.mxu0 0.0
  %776 = vmatpush1.msra.mxu0 0.0
  %777 = vmatprep.subr.mxu0 0.0
  %778 = vmatpush1.msra.mxu0 0.0
  %779 = vmatprep.subr.mxu0 0.0
  %780 = vmatpush1.msra.mxu0 0.0
  %781 = vmatprep.subr.mxu0 0.0
  %782 = vmatpush1.msra.mxu0 0.0
  %783 = vmatprep.subr.mxu0 0.0
  %784 = vmatpush1.msra.mxu0 0.0
  %785 = vmatprep.subr.mxu0 0.0
  %786 = vmatpush1.msra.mxu0 0.0
  %787 = vmatprep.subr.mxu0 0.0
  %788 = vmatpush1.msra.mxu0 0.0
  %789 = vmatprep.subr.mxu0 0.0
  %790 = vmatpush1.msra.mxu0 0.0
  %791 = vmatprep.subr.mxu0 0.0
  %792 = vmatpush1.msra.mxu0 0.0
  %793 = vmatprep.subr.mxu0 0.0
  %794 = vmatpush1.msra.mxu0 0.0
  %795 = vmatprep.subr.mxu0 0.0
  %796 = vmatpush1.msra.mxu0 0.0
  %797 = vmatprep.subr.mxu0 0.0
  %798 = vmatpush1.msra.mxu0 0.0
  %799 = vmatprep.subr.mxu0 0.0
  %800 = vmatpush1.msra.mxu0 0.0
  %801 = vmatprep.mubr.f32.mxu0 0.0
  %802 = vmatmul.mubr.f32.gmra.mrb[0].mxu0 %v690
  %v803 = vpop.f32.mrb[0].mxu0
  %v804 = vadd.f32 %v688, %v803
  %v805 = vpop.f32.mrb[0].mxu0
  %806 = vmatprep.mubr.f32.mxu0 0.0
  %807 = vmatmul.mubr.f32.gmra.mrb[0].mxu0 %v693
  %v808 = vpop.f32.mrb[0].mxu0
  %v809 = vadd.f32 %v688, %v808
  %v810 = vpop.f32.mrb[0].mxu0
  %811 = vmatprep.mubr.f32.mxu0 0.0
  %812 = vmatmul.mubr.f32.gmra.mrb[0].mxu0 %v696
  %v813 = vpop.f32.mrb[0].mxu0
  %v814 = vadd.f32 %v688, %v813
  %v815 = vpop.f32.mrb[0].mxu0
  %816 = vmatprep.mubr.f32.mxu0 0.0
  %817 = vmatmul.mubr.f32.gmra.mrb[0].mxu0 %v699
  %v818 = vpop.f32.mrb[0].mxu0
  %v819 = vadd.f32 %v688, %v818
  %v820 = vpop.f32.mrb[0].mxu0
  %821 = vmatprep.mubr.f32.mxu0 0.0
  %822 = vmatmul.mubr.f32.gmra.mrb[0].mxu0 %v702
  %v823 = vpop.f32.mrb[0].mxu0
  %v824 = vadd.f32 %v688, %v823
  %v825 = vpop.f32.mrb[0].mxu0
  %826 = vmatprep.mubr.f32.mxu0 0.0
  %827 = vmatmul.mubr.f32.gmra.mrb[0].mxu0 %v705
  %v828 = vpop.f32.mrb[0].mxu0
  %v829 = vadd.f32 %v688, %v828
  %v830 = vpop.f32.mrb[0].mxu0
  %831 = vmatprep.mubr.f32.mxu0 0.0
  %832 = vmatmul.mubr.f32.gmra.mrb[0].mxu0 %v708
  %v833 = vpop.f32.mrb[0].mxu0
  %v834 = vadd.f32 %v688, %v833
  %v835 = vpop.f32.mrb[0].mxu0
  %836 = vmatprep.mubr.f32.mxu0 0.0
  %837 = vmatmul.mubr.f32.gmra.mrb[0].mxu0 %v711
  %v838 = vpop.f32.mrb[0].mxu0
  %v839 = vadd.f32 %v688, %v838
  %v840 = vpop.f32.mrb[0].mxu0
  %841 = vmatprep.mubr.f32.mxu0 0.0
  %842 = vmatmul.mubr.f32.gmra.mrb[0].mxu0 %v714
  %v843 = vpop.f32.mrb[0].mxu0
  %v844 = vadd.f32 %v688, %v843
  %v845 = vpop.f32.mrb[0].mxu0
  %846 = vmatprep.mubr.f32.mxu0 0.0
  %847 = vmatmul.mubr.f32.gmra.mrb[0].mxu0 %v717
  %v848 = vpop.f32.mrb[0].mxu0
  %v849 = vadd.f32 %v688, %v848
  %v850 = vpop.f32.mrb[0].mxu0
  %851 = vmatprep.mubr.f32.mxu0 0.0
  %852 = vmatmul.mubr.f32.gmra.mrb[0].mxu0 %v720
  %v853 = vpop.f32.mrb[0].mxu0
  %v854 = vadd.f32 %v688, %v853
  %v855 = vpop.f32.mrb[0].mxu0
  %856 = vmatprep.mubr.f32.mxu0 0.0
  %857 = vmatmul.mubr.f32.gmra.mrb[0].mxu0 %v723
  %v858 = vpop.f32.mrb[0].mxu0
  %v859 = vadd.f32 %v688, %v858
  %v860 = vpop.f32.mrb[0].mxu0
  %861 = vmatprep.mubr.f32.mxu0 0.0
  %862 = vmatmul.mubr.f32.gmra.mrb[0].mxu0 %v726
  %v863 = vpop.f32.mrb[0].mxu0
  %v864 = vadd.f32 %v688, %v863
  %v865 = vpop.f32.mrb[0].mxu0
  %866 = vmatprep.mubr.f32.mxu0 0.0
  %867 = vmatmul.mubr.f32.gmra.mrb[0].mxu0 %v729
  %v868 = vpop.f32.mrb[0].mxu0
  %v869 = vadd.f32 %v688, %v868
  %v870 = vpop.f32.mrb[0].mxu0
  %871 = vmatprep.mubr.f32.mxu0 0.0
  %872 = vmatmul.mubr.f32.gmra.mrb[0].mxu0 %v732
  %v873 = vpop.f32.mrb[0].mxu0
  %v874 = vadd.f32 %v688, %v873
  %v875 = vpop.f32.mrb[0].mxu0
  %876 = vmatprep.mubr.f32.mxu0 0.0
  %877 = vmatmul.mubr.f32.gmra.mrb[0].mxu0 %v735
  %v878 = vpop.f32.mrb[0].mxu0
  %v879 = vadd.f32 %v688, %v878
  %v880 = vpop.f32.mrb[0].mxu0
  %881 = vdwg.mxu0
  %v882 = vmul.f32 %v664, %v804
  %v883 = vmul.f32 %v665, %v809
  %v884 = vmul.f32 %v666, %v814
  %v885 = vmul.f32 %v667, %v819
  %v886 = vmul.f32 %v668, %v824
  %v887 = vmul.f32 %v669, %v829
  %v888 = vmul.f32 %v670, %v834
  %v889 = vmul.f32 %v671, %v839
  %v890 = vmul.f32 %v672, %v844
  %v891 = vmul.f32 %v673, %v849
  %v892 = vmul.f32 %v674, %v854
  %v893 = vmul.f32 %v675, %v859
  %v894 = vmul.f32 %v676, %v864
  %v895 = vmul.f32 %v677, %v869
  %v896 = vmul.f32 %v678, %v874
  %v897 = vmul.f32 %v679, %v879
  %v898 = vsel %vm76, %v882, 0.0
  %v899 = vsel %vm76, %v883, 0.0
  %v900 = vadd.f32 %v898, %v899
  %v901 = vsel %vm76, %v884, 0.0
  %v902 = vadd.f32 %v900, %v901
  %v903 = vsel %vm76, %v885, 0.0
  %v904 = vadd.f32 %v902, %v903
  %v905 = vsel %vm76, %v886, 0.0
  %v906 = vadd.f32 %v904, %v905
  %v907 = vsel %vm76, %v887, 0.0
  %v908 = vadd.f32 %v906, %v907
  %v909 = vsel %vm76, %v888, 0.0
  %v910 = vadd.f32 %v908, %v909
  %v911 = vsel %vm76, %v889, 0.0
  %v912 = vadd.f32 %v910, %v911
  %v913 = vsel %vm76, %v890, 0.0
  %v914 = vadd.f32 %v912, %v913
  %v915 = vsel %vm76, %v891, 0.0
  %v916 = vadd.f32 %v914, %v915
  %v917 = vsel %vm76, %v892, 0.0
  %v918 = vadd.f32 %v916, %v917
  %v919 = vsel %vm76, %v893, 0.0
  %v920 = vadd.f32 %v918, %v919
  %v921 = vsel %vm76, %v894, 0.0
  %v922 = vadd.f32 %v920, %v921
  %v923 = vsel %vm76, %v895, 0.0
  %v924 = vadd.f32 %v922, %v923
  %v925 = vsel %vm76, %v896, 0.0
  %v926 = vadd.f32 %v924, %v925
  %v927 = vsel %vm76, %v897, 0.0
  %v928 = vadd.f32 %v926, %v927
  %v929 = vrot.slane %v928, 4
  %v930 = vadd.f32 %v928, %v929
  %v931 = vrot.slane %v930, 2
  %v932 = vadd.f32 %v930, %v931
  %v933 = vrot.slane %v932, 1
  %v934 = vadd.f32 %v932, %v933
  %v935 = vld [vmem:[%s2 + $0x160] sm:$0x1]
  %v936 = vld [vmem:[%s2 + $0x163] sm:$0x1]
  %v937 = vld [vmem:[%s2 + $0x164] sm:$0x1]
  %v938 = vld [vmem:[%s2 + $0x167] sm:$0x1]
  %v939 = vld [vmem:[%s2 + $0x168] sm:$0x1]
  %v940 = vld [vmem:[%s2 + $0x169] sm:$0x1]
  %v941 = vld [vmem:[%s2 + $0x16a] sm:$0x1]
  %v942 = vld [vmem:[%s2 + $0x16b] sm:$0x1]
  %v943 = vld [vmem:[%s2 + $0x16c] sm:$0x1]
  %v944 = vld [vmem:[%s2 + $0x16d] sm:$0x1]
  %v945 = vld [vmem:[%s3] sm:$0xff]
  %v946 = vld [vmem:[%s3 + $0x8] sm:$0xff]
  %v947 = vld [vmem:[%s3 + $0x10] sm:$0xff]
  %v948 = vld [vmem:[%s3 + $0x18] sm:$0xff]
  %v949 = vld [vmem:[%s3 + $0x20] sm:$0x1]
  %v950 = vadd.f32 %v17, %v26
  %v951 = vadd.f32 %v18, %v27
  %v952 = vadd.f32 %v19, %v28
  %v953 = vadd.f32 %v20, %v29
  %v954 = vadd.f32 %v21, %v30
  %v955 = vadd.f32 %v22, %v31
  %v956 = vadd.f32 %v23, %v32
  %v957 = vadd.f32 %v24, %v33
  %v958 = vld [vmem:[%s2] sm:$0xff]
  %v959 = vld [vmem:[%s2 + $0x8] sm:$0xff]
  %v960 = vld [vmem:[%s2 + $0x10] sm:$0xff]
  %v961 = vld [vmem:[%s2 + $0x18] sm:$0xff]
  %v962 = vlaneseq
  %v963 = vshrl.u32 %v962, 7
  %v964 = vsub.s32 0, %v963
  %v965 = vrot.slane %v935, %v964
  %v967 = vsel %vm76, %v950, 0
  %v970 = vsel %vm76, %v951, 0
  %v973 = vsel %vm76, %v952, 0
  %v976 = vsel %vm76, %v953, 0
  %v979 = vsel %vm76, %v954, 0
  %v982 = vsel %vm76, %v955, 0
  %v985 = vsel %vm76, %v956, 0
  %v988 = vsel %vm76, %v957, 0
  %990 = vmatprep.subr.mxu0 0.0
  %991 = vmatpush1.msra.mxu0 %v958
  %992 = vmatprep.subr.mxu0 0.0
  %993 = vmatpush1.msra.mxu0 %v959
  %994 = vmatprep.subr.mxu0 0.0
  %995 = vmatpush1.msra.mxu0 %v960
  %996 = vmatprep.subr.mxu0 0.0
  %997 = vmatpush1.msra.mxu0 %v961
  %998 = vmatprep.subr.mxu0 0.0
  %999 = vmatpush1.msra.mxu0 0.0
  %1000 = vmatprep.subr.mxu0 0.0
  %1001 = vmatpush1.msra.mxu0 0.0
  %1002 = vmatprep.subr.mxu0 0.0
  %1003 = vmatpush1.msra.mxu0 0.0
  %1004 = vmatprep.subr.mxu0 0.0
  %1005 = vmatpush1.msra.mxu0 0.0
  %1006 = vmatprep.subr.mxu0 0.0
  %1007 = vmatpush1.msra.mxu0 0.0
  %1008 = vmatprep.subr.mxu0 0.0
  %1009 = vmatpush1.msra.mxu0 0.0
  %1010 = vmatprep.subr.mxu0 0.0
  %1011 = vmatpush1.msra.mxu0 0.0
  %1012 = vmatprep.subr.mxu0 0.0
  %1013 = vmatpush1.msra.mxu0 0.0
  %1014 = vmatprep.subr.mxu0 0.0
  %1015 = vmatpush1.msra.mxu0 0.0
  %1016 = vmatprep.subr.mxu0 0.0
  %1017 = vmatpush1.msra.mxu0 0.0
  %1018 = vmatprep.subr.mxu0 0.0
  %1019 = vmatpush1.msra.mxu0 0.0
  %1020 = vmatprep.subr.mxu0 0.0
  %1021 = vmatpush1.msra.mxu0 0.0
  %1022 = vmatprep.subr.mxu0 0.0
  %1023 = vmatpush1.msra.mxu0 0.0
  %1024 = vmatprep.subr.mxu0 0.0
  %1025 = vmatpush1.msra.mxu0 0.0
  %1026 = vmatprep.subr.mxu0 0.0
  %1027 = vmatpush1.msra.mxu0 0.0
  %1028 = vmatprep.subr.mxu0 0.0
  %1029 = vmatpush1.msra.mxu0 0.0
  %1030 = vmatprep.subr.mxu0 0.0
  %1031 = vmatpush1.msra.mxu0 0.0
  %1032 = vmatprep.subr.mxu0 0.0
  %1033 = vmatpush1.msra.mxu0 0.0
  %1034 = vmatprep.subr.mxu0 0.0
  %1035 = vmatpush1.msra.mxu0 0.0
  %1036 = vmatprep.subr.mxu0 0.0
  %1037 = vmatpush1.msra.mxu0 0.0
  %1038 = vmatprep.subr.mxu0 0.0
  %1039 = vmatpush1.msra.mxu0 0.0
  %1040 = vmatprep.subr.mxu0 0.0
  %1041 = vmatpush1.msra.mxu0 0.0
  %1042 = vmatprep.subr.mxu0 0.0
  %1043 = vmatpush1.msra.mxu0 0.0
  %1044 = vmatprep.subr.mxu0 0.0
  %1045 = vmatpush1.msra.mxu0 0.0
  %1046 = vmatprep.subr.mxu0 0.0
  %1047 = vmatpush1.msra.mxu0 0.0
  %1048 = vmatprep.subr.mxu0 0.0
  %1049 = vmatpush1.msra.mxu0 0.0
  %1050 = vmatprep.subr.mxu0 0.0
  %1051 = vmatpush1.msra.mxu0 0.0
  %1052 = vmatprep.subr.mxu0 0.0
  %1053 = vmatpush1.msra.mxu0 0.0
  %1054 = vmatprep.mubr.f32.mxu0 0.0
  %1055 = vmatmul.mubr.f32.gmra.mrb[0].mxu0 %v967
  %v1056 = vpop.f32.mrb[0].mxu0
  %v1057 = vadd.f32 %v965, %v1056
  %v1058 = vpop.f32.mrb[0].mxu0
  %1059 = vmatprep.mubr.f32.mxu0 0.0
  %1060 = vmatmul.mubr.f32.gmra.mrb[0].mxu0 %v970
  %v1061 = vpop.f32.mrb[0].mxu0
  %v1062 = vadd.f32 %v965, %v1061
  %v1063 = vpop.f32.mrb[0].mxu0
  %1064 = vmatprep.mubr.f32.mxu0 0.0
  %1065 = vmatmul.mubr.f32.gmra.mrb[0].mxu0 %v973
  %v1066 = vpop.f32.mrb[0].mxu0
  %v1067 = vadd.f32 %v965, %v1066
  %v1068 = vpop.f32.mrb[0].mxu0
  %1069 = vmatprep.mubr.f32.mxu0 0.0
  %1070 = vmatmul.mubr.f32.gmra.mrb[0].mxu0 %v976
  %v1071 = vpop.f32.mrb[0].mxu0
  %v1072 = vadd.f32 %v965, %v1071
  %v1073 = vpop.f32.mrb[0].mxu0
  %1074 = vmatprep.mubr.f32.mxu0 0.0
  %1075 = vmatmul.mubr.f32.gmra.mrb[0].mxu0 %v979
  %v1076 = vpop.f32.mrb[0].mxu0
  %v1077 = vadd.f32 %v965, %v1076
  %v1078 = vpop.f32.mrb[0].mxu0
  %1079 = vmatprep.mubr.f32.mxu0 0.0
  %1080 = vmatmul.mubr.f32.gmra.mrb[0].mxu0 %v982
  %v1081 = vpop.f32.mrb[0].mxu0
  %v1082 = vadd.f32 %v965, %v1081
  %v1083 = vpop.f32.mrb[0].mxu0
  %1084 = vmatprep.mubr.f32.mxu0 0.0
  %1085 = vmatmul.mubr.f32.gmra.mrb[0].mxu0 %v985
  %v1086 = vpop.f32.mrb[0].mxu0
  %v1087 = vadd.f32 %v965, %v1086
  %v1088 = vpop.f32.mrb[0].mxu0
  %1089 = vmatprep.mubr.f32.mxu0 0.0
  %1090 = vmatmul.mubr.f32.gmra.mrb[0].mxu0 %v988
  %v1091 = vpop.f32.mrb[0].mxu0
  %v1092 = vadd.f32 %v965, %v1091
  %v1093 = vpop.f32.mrb[0].mxu0
  %1094 = vdwg.mxu0
  %vm1095 = vcmask 64512
  %v1097 = vsel %vm1095, %v1057, 0
  %v1100 = vsel %vm1095, %v1062, 0
  %v1103 = vsel %vm1095, %v1067, 0
  %v1106 = vsel %vm1095, %v1072, 0
  %v1109 = vsel %vm1095, %v168, 0
  %v1112 = vsel %vm1095, %v173, 0
  %v1115 = vsel %vm1095, %v178, 0
  %v1118 = vsel %vm1095, %v183, 0
  %1120 = vmatprep.subr.mxu0 0.0
  %1121 = vmatpush1.xpose.msra.mxu0 %v1109
  %1122 = vmatprep.subr.mxu0 0.0
  %1123 = vmatpush1.xpose.msra.mxu0 %v1112
  %1124 = vmatprep.subr.mxu0 0.0
  %1125 = vmatpush1.xpose.msra.mxu0 %v1115
  %1126 = vmatprep.subr.mxu0 0.0
  %1127 = vmatpush1.xpose.msra.mxu0 %v1118
  %1128 = vmatprep.subr.mxu0 0.0
  %1129 = vmatpush1.xpose.msra.mxu0 0.0
  %1130 = vmatprep.subr.mxu0 0.0
  %1131 = vmatpush1.xpose.msra.mxu0 0.0
  %1132 = vmatprep.subr.mxu0 0.0
  %1133 = vmatpush1.xpose.msra.mxu0 0.0
  %1134 = vmatprep.subr.mxu0 0.0
  %1135 = vmatpush1.xpose.msra.mxu0 0.0
  %1136 = vmatprep.subr.mxu0 0.0
  %1137 = vmatpush1.xpose.msra.mxu0 0.0
  %1138 = vmatprep.subr.mxu0 0.0
  %1139 = vmatpush1.xpose.msra.mxu0 0.0
  %1140 = vmatprep.subr.mxu0 0.0
  %1141 = vmatpush1.xpose.msra.mxu0 0.0
  %1142 = vmatprep.subr.mxu0 0.0
  %1143 = vmatpush1.xpose.msra.mxu0 0.0
  %1144 = vmatprep.subr.mxu0 0.0
  %1145 = vmatpush1.xpose.msra.mxu0 0.0
  %1146 = vmatprep.subr.mxu0 0.0
  %1147 = vmatpush1.xpose.msra.mxu0 0.0
  %1148 = vmatprep.subr.mxu0 0.0
  %1149 = vmatpush1.xpose.msra.mxu0 0.0
  %1150 = vmatprep.subr.mxu0 0.0
  %1151 = vmatpush1.xpose.msra.mxu0 0.0
  %1152 = vmatprep.subr.mxu0 0.0
  %1153 = vmatpush1.xpose.msra.mxu0 0.0
  %1154 = vmatprep.subr.mxu0 0.0
  %1155 = vmatpush1.xpose.msra.mxu0 0.0
  %1156 = vmatprep.subr.mxu0 0.0
  %1157 = vmatpush1.xpose.msra.mxu0 0.0
  %1158 = vmatprep.subr.mxu0 0.0
  %1159 = vmatpush1.xpose.msra.mxu0 0.0
  %1160 = vmatprep.subr.mxu0 0.0
  %1161 = vmatpush1.xpose.msra.mxu0 0.0
  %1162 = vmatprep.subr.mxu0 0.0
  %1163 = vmatpush1.xpose.msra.mxu0 0.0
  %1164 = vmatprep.subr.mxu0 0.0
  %1165 = vmatpush1.xpose.msra.mxu0 0.0
  %1166 = vmatprep.subr.mxu0 0.0
  %1167 = vmatpush1.xpose.msra.mxu0 0.0
  %1168 = vmatprep.subr.mxu0 0.0
  %1169 = vmatpush1.xpose.msra.mxu0 0.0
  %1170 = vmatprep.subr.mxu0 0.0
  %1171 = vmatpush1.xpose.msra.mxu0 0.0
  %1172 = vmatprep.subr.mxu0 0.0
  %1173 = vmatpush1.xpose.msra.mxu0 0.0
  %1174 = vmatprep.subr.mxu0 0.0
  %1175 = vmatpush1.xpose.msra.mxu0 0.0
  %1176 = vmatprep.subr.mxu0 0.0
  %1177 = vmatpush1.xpose.msra.mxu0 0.0
  %1178 = vmatprep.subr.mxu0 0.0
  %1179 = vmatpush1.xpose.msra.mxu0 0.0
  %1180 = vmatprep.subr.mxu0 0.0
  %1181 = vmatpush1.xpose.msra.mxu0 0.0
  %1182 = vmatprep.subr.mxu0 0.0
  %1183 = vmatpush1.xpose.msra.mxu0 0.0
  %1184 = vmatprep.mubr.f32.mxu0 0.0
  %1185 = vmatmul.mubr.f32.gmra.mrb[0].mxu0 %v1097
  %v1186 = vpop.f32.mrb[0].mxu0
  %v1187 = vadd.f32 0.0, %v1186
  %v1188 = vpop.f32.mrb[0].mxu0
  %1189 = vmatprep.mubr.f32.mxu0 0.0
  %1190 = vmatmul.mubr.f32.gmra.mrb[0].mxu0 %v1100
  %v1191 = vpop.f32.mrb[0].mxu0
  %v1192 = vadd.f32 0.0, %v1191
  %v1193 = vpop.f32.mrb[0].mxu0
  %1194 = vmatprep.mubr.f32.mxu0 0.0
  %1195 = vmatmul.mubr.f32.gmra.mrb[0].mxu0 %v1103
  %v1196 = vpop.f32.mrb[0].mxu0
  %v1197 = vadd.f32 0.0, %v1196
  %v1198 = vpop.f32.mrb[0].mxu0
  %1199 = vmatprep.mubr.f32.mxu0 0.0
  %1200 = vmatmul.mubr.f32.gmra.mrb[0].mxu0 %v1106
  %v1201 = vpop.f32.mrb[0].mxu0
  %v1202 = vadd.f32 0.0, %v1201
  %v1203 = vpop.f32.mrb[0].mxu0
  %1204 = vdwg.mxu0
  %v1206 = vsel %vm1095, %v1077, 0
  %v1209 = vsel %vm1095, %v1082, 0
  %v1212 = vsel %vm1095, %v1087, 0
  %v1215 = vsel %vm1095, %v1092, 0
  %v1218 = vsel %vm1095, %v188, 0
  %v1221 = vsel %vm1095, %v193, 0
  %v1224 = vsel %vm1095, %v198, 0
  %v1227 = vsel %vm1095, %v203, 0
  %1229 = vmatprep.subr.mxu0 0.0
  %1230 = vmatpush1.xpose.msra.mxu0 %v1218
  %1231 = vmatprep.subr.mxu0 0.0
  %1232 = vmatpush1.xpose.msra.mxu0 %v1221
  %1233 = vmatprep.subr.mxu0 0.0
  %1234 = vmatpush1.xpose.msra.mxu0 %v1224
  %1235 = vmatprep.subr.mxu0 0.0
  %1236 = vmatpush1.xpose.msra.mxu0 %v1227
  %1237 = vmatprep.subr.mxu0 0.0
  %1238 = vmatpush1.xpose.msra.mxu0 0.0
  %1239 = vmatprep.subr.mxu0 0.0
  %1240 = vmatpush1.xpose.msra.mxu0 0.0
  %1241 = vmatprep.subr.mxu0 0.0
  %1242 = vmatpush1.xpose.msra.mxu0 0.0
  %1243 = vmatprep.subr.mxu0 0.0
  %1244 = vmatpush1.xpose.msra.mxu0 0.0
  %1245 = vmatprep.subr.mxu0 0.0
  %1246 = vmatpush1.xpose.msra.mxu0 0.0
  %1247 = vmatprep.subr.mxu0 0.0
  %1248 = vmatpush1.xpose.msra.mxu0 0.0
  %1249 = vmatprep.subr.mxu0 0.0
  %1250 = vmatpush1.xpose.msra.mxu0 0.0
  %1251 = vmatprep.subr.mxu0 0.0
  %1252 = vmatpush1.xpose.msra.mxu0 0.0
  %1253 = vmatprep.subr.mxu0 0.0
  %1254 = vmatpush1.xpose.msra.mxu0 0.0
  %1255 = vmatprep.subr.mxu0 0.0
  %1256 = vmatpush1.xpose.msra.mxu0 0.0
  %1257 = vmatprep.subr.mxu0 0.0
  %1258 = vmatpush1.xpose.msra.mxu0 0.0
  %1259 = vmatprep.subr.mxu0 0.0
  %1260 = vmatpush1.xpose.msra.mxu0 0.0
  %1261 = vmatprep.subr.mxu0 0.0
  %1262 = vmatpush1.xpose.msra.mxu0 0.0
  %1263 = vmatprep.subr.mxu0 0.0
  %1264 = vmatpush1.xpose.msra.mxu0 0.0
  %1265 = vmatprep.subr.mxu0 0.0
  %1266 = vmatpush1.xpose.msra.mxu0 0.0
  %1267 = vmatprep.subr.mxu0 0.0
  %1268 = vmatpush1.xpose.msra.mxu0 0.0
  %1269 = vmatprep.subr.mxu0 0.0
  %1270 = vmatpush1.xpose.msra.mxu0 0.0
  %1271 = vmatprep.subr.mxu0 0.0
  %1272 = vmatpush1.xpose.msra.mxu0 0.0
  %1273 = vmatprep.subr.mxu0 0.0
  %1274 = vmatpush1.xpose.msra.mxu0 0.0
  %1275 = vmatprep.subr.mxu0 0.0
  %1276 = vmatpush1.xpose.msra.mxu0 0.0
  %1277 = vmatprep.subr.mxu0 0.0
  %1278 = vmatpush1.xpose.msra.mxu0 0.0
  %1279 = vmatprep.subr.mxu0 0.0
  %1280 = vmatpush1.xpose.msra.mxu0 0.0
  %1281 = vmatprep.subr.mxu0 0.0
  %1282 = vmatpush1.xpose.msra.mxu0 0.0
  %1283 = vmatprep.subr.mxu0 0.0
  %1284 = vmatpush1.xpose.msra.mxu0 0.0
  %1285 = vmatprep.subr.mxu0 0.0
  %1286 = vmatpush1.xpose.msra.mxu0 0.0
  %1287 = vmatprep.subr.mxu0 0.0
  %1288 = vmatpush1.xpose.msra.mxu0 0.0
  %1289 = vmatprep.subr.mxu0 0.0
  %1290 = vmatpush1.xpose.msra.mxu0 0.0
  %1291 = vmatprep.subr.mxu0 0.0
  %1292 = vmatpush1.xpose.msra.mxu0 0.0
  %1293 = vmatprep.mubr.f32.mxu0 0.0
  %1294 = vmatmul.mubr.f32.gmra.mrb[0].mxu0 %v1206
  %v1295 = vpop.f32.mrb[0].mxu0
  %v1296 = vadd.f32 0.0, %v1295
  %v1297 = vpop.f32.mrb[0].mxu0
  %1298 = vmatprep.mubr.f32.mxu0 0.0
  %1299 = vmatmul.mubr.f32.gmra.mrb[0].mxu0 %v1209
  %v1300 = vpop.f32.mrb[0].mxu0
  %v1301 = vadd.f32 0.0, %v1300
  %v1302 = vpop.f32.mrb[0].mxu0
  %1303 = vmatprep.mubr.f32.mxu0 0.0
  %1304 = vmatmul.mubr.f32.gmra.mrb[0].mxu0 %v1212
  %v1305 = vpop.f32.mrb[0].mxu0
  %v1306 = vadd.f32 0.0, %v1305
  %v1307 = vpop.f32.mrb[0].mxu0
  %1308 = vmatprep.mubr.f32.mxu0 0.0
  %1309 = vmatmul.mubr.f32.gmra.mrb[0].mxu0 %v1215
  %v1310 = vpop.f32.mrb[0].mxu0
  %v1311 = vadd.f32 0.0, %v1310
  %v1312 = vpop.f32.mrb[0].mxu0
  %1313 = vdwg.mxu0
  %v1314 = vmul.f32 %v1187, 0.35355338
  %v1315 = vmul.f32 %v1192, 0.35355338
  %v1316 = vmul.f32 %v1197, 0.35355338
  %v1317 = vmul.f32 %v1202, 0.35355338
  %v1318 = vmul.f32 %v1296, 0.35355338
  %v1319 = vmul.f32 %v1301, 0.35355338
  %v1320 = vmul.f32 %v1306, 0.35355338
  %v1321 = vmul.f32 %v1311, 0.35355338
  %v1322 = vsel %vm322, 1, 0
  %vm1323 = vcmp.eq.s32.totalorder %v1322, 1
  %v1324 = vsel %vm1323, %v1314, -1e+30
  %v1325 = vsel %vm1323, %v1315, -1e+30
  %v1326 = vsel %vm1323, %v1316, -1e+30
  %v1327 = vsel %vm1323, %v1317, -1e+30
  %v1328 = vsel %vm1323, %v1318, -1e+30
  %v1329 = vsel %vm1323, %v1319, -1e+30
  %v1330 = vsel %vm1323, %v1320, -1e+30
  %v1331 = vsel %vm1323, %v1321, -1e+30
  %v1332 = vsel %vm76, %v1324, -inf
  %1333 = vmax.xlane.f32.xlu0 %v1332
  %v1334 = vpop.xlane.xlu0 %1333
  %v1335 = vsel %vm76, %v1325, -inf
  %1336 = vmax.xlane.f32.xlu0 %v1335
  %v1337 = vpop.xlane.xlu0 %1336
  %v1338 = vsel %vm76, %v1326, -inf
  %1339 = vmax.xlane.f32.xlu0 %v1338
  %v1340 = vpop.xlane.xlu0 %1339
  %v1341 = vsel %vm76, %v1327, -inf
  %1342 = vmax.xlane.f32.xlu0 %v1341
  %v1343 = vpop.xlane.xlu0 %1342
  %v1344 = vsel %vm76, %v1328, -inf
  %1345 = vmax.xlane.f32.xlu0 %v1344
  %v1346 = vpop.xlane.xlu0 %1345
  %v1347 = vsel %vm76, %v1329, -inf
  %1348 = vmax.xlane.f32.xlu0 %v1347
  %v1349 = vpop.xlane.xlu0 %1348
  %v1350 = vsel %vm76, %v1330, -inf
  %1351 = vmax.xlane.f32.xlu0 %v1350
  %v1352 = vpop.xlane.xlu0 %1351
  %v1353 = vsel %vm76, %v1331, -inf
  %1354 = vmax.xlane.f32.xlu0 %v1353
  %v1355 = vpop.xlane.xlu0 %1354
  %v1356 = vsub.f32 %v1324, %v1334
  %v1357 = vsub.f32 %v1325, %v1337
  %v1358 = vsub.f32 %v1326, %v1340
  %v1359 = vsub.f32 %v1327, %v1343
  %v1360 = vsub.f32 %v1328, %v1346
  %v1361 = vsub.f32 %v1329, %v1349
  %v1362 = vsub.f32 %v1330, %v1352
  %v1363 = vsub.f32 %v1331, %v1355
  %v1364 = vmul.f32 %v1356, 1.442695
  %v1365 = vpow.pop %v1364
  %v1366 = vmul.f32 %v1357, 1.442695
  %v1367 = vpow.pop %v1366
  %v1368 = vmul.f32 %v1358, 1.442695
  %v1369 = vpow.pop %v1368
  %v1370 = vmul.f32 %v1359, 1.442695
  %v1371 = vpow.pop %v1370
  %v1372 = vmul.f32 %v1360, 1.442695
  %v1373 = vpow.pop %v1372
  %v1374 = vmul.f32 %v1361, 1.442695
  %v1375 = vpow.pop %v1374
  %v1376 = vmul.f32 %v1362, 1.442695
  %v1377 = vpow.pop %v1376
  %v1378 = vmul.f32 %v1363, 1.442695
  %v1379 = vpow.pop %v1378
  %v1380 = vsel %vm76, %v1365, 0.0
  %1381 = vadd.xlane.f32.xlu0 %v1380
  %v1382 = vpop.xlane.xlu0 %1381
  %v1383 = vsel %vm76, %v1367, 0.0
  %1384 = vadd.xlane.f32.xlu0 %v1383
  %v1385 = vpop.xlane.xlu0 %1384
  %v1386 = vsel %vm76, %v1369, 0.0
  %1387 = vadd.xlane.f32.xlu0 %v1386
  %v1388 = vpop.xlane.xlu0 %1387
  %v1389 = vsel %vm76, %v1371, 0.0
  %1390 = vadd.xlane.f32.xlu0 %v1389
  %v1391 = vpop.xlane.xlu0 %1390
  %v1392 = vsel %vm76, %v1373, 0.0
  %1393 = vadd.xlane.f32.xlu0 %v1392
  %v1394 = vpop.xlane.xlu0 %1393
  %v1395 = vsel %vm76, %v1375, 0.0
  %1396 = vadd.xlane.f32.xlu0 %v1395
  %v1397 = vpop.xlane.xlu0 %1396
  %v1398 = vsel %vm76, %v1377, 0.0
  %1399 = vadd.xlane.f32.xlu0 %v1398
  %v1400 = vpop.xlane.xlu0 %1399
  %v1401 = vsel %vm76, %v1379, 0.0
  %1402 = vadd.xlane.f32.xlu0 %v1401
  %v1403 = vpop.xlane.xlu0 %1402
  %v1404 = vrcp.pop %v1382
  %v1405 = vrcp.pop %v1385
  %v1406 = vrcp.pop %v1388
  %v1407 = vrcp.pop %v1391
  %v1408 = vrcp.pop %v1394
  %v1409 = vrcp.pop %v1397
  %v1410 = vrcp.pop %v1400
  %v1411 = vrcp.pop %v1403
  %v1412 = vmul.f32 %v1365, %v1404
  %v1413 = vmul.f32 %v1367, %v1405
  %v1414 = vmul.f32 %v1369, %v1406
  %v1415 = vmul.f32 %v1371, %v1407
  %v1416 = vmul.f32 %v1373, %v1408
  %v1417 = vmul.f32 %v1375, %v1409
  %v1418 = vmul.f32 %v1377, %v1410
  %v1419 = vmul.f32 %v1379, %v1411
  %v1421 = vsel %vm76, %v1412, 0
  %v1424 = vsel %vm76, %v1413, 0
  %v1427 = vsel %vm76, %v1414, 0
  %v1430 = vsel %vm76, %v1415, 0
  %1432 = vmatprep.subr.mxu0 0.0
  %1433 = vmatpush1.msra.mxu0 %v282
  %1434 = vmatprep.subr.mxu0 0.0
  %1435 = vmatpush1.msra.mxu0 %v287
  %1436 = vmatprep.subr.mxu0 0.0
  %1437 = vmatpush1.msra.mxu0 %v292
  %1438 = vmatprep.subr.mxu0 0.0
  %1439 = vmatpush1.msra.mxu0 %v297
  %1440 = vmatprep.subr.mxu0 0.0
  %1441 = vmatpush1.msra.mxu0 0.0
  %1442 = vmatprep.subr.mxu0 0.0
  %1443 = vmatpush1.msra.mxu0 0.0
  %1444 = vmatprep.subr.mxu0 0.0
  %1445 = vmatpush1.msra.mxu0 0.0
  %1446 = vmatprep.subr.mxu0 0.0
  %1447 = vmatpush1.msra.mxu0 0.0
  %1448 = vmatprep.subr.mxu0 0.0
  %1449 = vmatpush1.msra.mxu0 0.0
  %1450 = vmatprep.subr.mxu0 0.0
  %1451 = vmatpush1.msra.mxu0 0.0
  %1452 = vmatprep.subr.mxu0 0.0
  %1453 = vmatpush1.msra.mxu0 0.0
  %1454 = vmatprep.subr.mxu0 0.0
  %1455 = vmatpush1.msra.mxu0 0.0
  %1456 = vmatprep.subr.mxu0 0.0
  %1457 = vmatpush1.msra.mxu0 0.0
  %1458 = vmatprep.subr.mxu0 0.0
  %1459 = vmatpush1.msra.mxu0 0.0
  %1460 = vmatprep.subr.mxu0 0.0
  %1461 = vmatpush1.msra.mxu0 0.0
  %1462 = vmatprep.subr.mxu0 0.0
  %1463 = vmatpush1.msra.mxu0 0.0
  %1464 = vmatprep.subr.mxu0 0.0
  %1465 = vmatpush1.msra.mxu0 0.0
  %1466 = vmatprep.subr.mxu0 0.0
  %1467 = vmatpush1.msra.mxu0 0.0
  %1468 = vmatprep.subr.mxu0 0.0
  %1469 = vmatpush1.msra.mxu0 0.0
  %1470 = vmatprep.subr.mxu0 0.0
  %1471 = vmatpush1.msra.mxu0 0.0
  %1472 = vmatprep.subr.mxu0 0.0
  %1473 = vmatpush1.msra.mxu0 0.0
  %1474 = vmatprep.subr.mxu0 0.0
  %1475 = vmatpush1.msra.mxu0 0.0
  %1476 = vmatprep.subr.mxu0 0.0
  %1477 = vmatpush1.msra.mxu0 0.0
  %1478 = vmatprep.subr.mxu0 0.0
  %1479 = vmatpush1.msra.mxu0 0.0
  %1480 = vmatprep.subr.mxu0 0.0
  %1481 = vmatpush1.msra.mxu0 0.0
  %1482 = vmatprep.subr.mxu0 0.0
  %1483 = vmatpush1.msra.mxu0 0.0
  %1484 = vmatprep.subr.mxu0 0.0
  %1485 = vmatpush1.msra.mxu0 0.0
  %1486 = vmatprep.subr.mxu0 0.0
  %1487 = vmatpush1.msra.mxu0 0.0
  %1488 = vmatprep.subr.mxu0 0.0
  %1489 = vmatpush1.msra.mxu0 0.0
  %1490 = vmatprep.subr.mxu0 0.0
  %1491 = vmatpush1.msra.mxu0 0.0
  %1492 = vmatprep.subr.mxu0 0.0
  %1493 = vmatpush1.msra.mxu0 0.0
  %1494 = vmatprep.subr.mxu0 0.0
  %1495 = vmatpush1.msra.mxu0 0.0
  %1496 = vmatprep.mubr.f32.mxu0 0.0
  %1497 = vmatmul.mubr.f32.gmra.mrb[0].mxu0 %v1421
  %v1498 = vpop.f32.mrb[0].mxu0
  %v1499 = vadd.f32 0.0, %v1498
  %v1500 = vpop.f32.mrb[0].mxu0
  %1501 = vmatprep.mubr.f32.mxu0 0.0
  %1502 = vmatmul.mubr.f32.gmra.mrb[0].mxu0 %v1424
  %v1503 = vpop.f32.mrb[0].mxu0
  %v1504 = vadd.f32 0.0, %v1503
  %v1505 = vpop.f32.mrb[0].mxu0
  %1506 = vmatprep.mubr.f32.mxu0 0.0
  %1507 = vmatmul.mubr.f32.gmra.mrb[0].mxu0 %v1427
  %v1508 = vpop.f32.mrb[0].mxu0
  %v1509 = vadd.f32 0.0, %v1508
  %v1510 = vpop.f32.mrb[0].mxu0
  %1511 = vmatprep.mubr.f32.mxu0 0.0
  %1512 = vmatmul.mubr.f32.gmra.mrb[0].mxu0 %v1430
  %v1513 = vpop.f32.mrb[0].mxu0
  %v1514 = vadd.f32 0.0, %v1513
  %v1515 = vpop.f32.mrb[0].mxu0
  %1516 = vdwg.mxu0
  %v1518 = vsel %vm76, %v1416, 0
  %v1521 = vsel %vm76, %v1417, 0
  %v1524 = vsel %vm76, %v1418, 0
  %v1527 = vsel %vm76, %v1419, 0
  %1529 = vmatprep.subr.mxu0 0.0
  %1530 = vmatpush1.msra.mxu0 %v302
  %1531 = vmatprep.subr.mxu0 0.0
  %1532 = vmatpush1.msra.mxu0 %v307
  %1533 = vmatprep.subr.mxu0 0.0
  %1534 = vmatpush1.msra.mxu0 %v312
  %1535 = vmatprep.subr.mxu0 0.0
  %1536 = vmatpush1.msra.mxu0 %v317
  %1537 = vmatprep.subr.mxu0 0.0
  %1538 = vmatpush1.msra.mxu0 0.0
  %1539 = vmatprep.subr.mxu0 0.0
  %1540 = vmatpush1.msra.mxu0 0.0
  %1541 = vmatprep.subr.mxu0 0.0
  %1542 = vmatpush1.msra.mxu0 0.0
  %1543 = vmatprep.subr.mxu0 0.0
  %1544 = vmatpush1.msra.mxu0 0.0
  %1545 = vmatprep.subr.mxu0 0.0
  %1546 = vmatpush1.msra.mxu0 0.0
  %1547 = vmatprep.subr.mxu0 0.0
  %1548 = vmatpush1.msra.mxu0 0.0
  %1549 = vmatprep.subr.mxu0 0.0
  %1550 = vmatpush1.msra.mxu0 0.0
  %1551 = vmatprep.subr.mxu0 0.0
  %1552 = vmatpush1.msra.mxu0 0.0
  %1553 = vmatprep.subr.mxu0 0.0
  %1554 = vmatpush1.msra.mxu0 0.0
  %1555 = vmatprep.subr.mxu0 0.0
  %1556 = vmatpush1.msra.mxu0 0.0
  %1557 = vmatprep.subr.mxu0 0.0
  %1558 = vmatpush1.msra.mxu0 0.0
  %1559 = vmatprep.subr.mxu0 0.0
  %1560 = vmatpush1.msra.mxu0 0.0
  %1561 = vmatprep.subr.mxu0 0.0
  %1562 = vmatpush1.msra.mxu0 0.0
  %1563 = vmatprep.subr.mxu0 0.0
  %1564 = vmatpush1.msra.mxu0 0.0
  %1565 = vmatprep.subr.mxu0 0.0
  %1566 = vmatpush1.msra.mxu0 0.0
  %1567 = vmatprep.subr.mxu0 0.0
  %1568 = vmatpush1.msra.mxu0 0.0
  %1569 = vmatprep.subr.mxu0 0.0
  %1570 = vmatpush1.msra.mxu0 0.0
  %1571 = vmatprep.subr.mxu0 0.0
  %1572 = vmatpush1.msra.mxu0 0.0
  %1573 = vmatprep.subr.mxu0 0.0
  %1574 = vmatpush1.msra.mxu0 0.0
  %1575 = vmatprep.subr.mxu0 0.0
  %1576 = vmatpush1.msra.mxu0 0.0
  %1577 = vmatprep.subr.mxu0 0.0
  %1578 = vmatpush1.msra.mxu0 0.0
  %1579 = vmatprep.subr.mxu0 0.0
  %1580 = vmatpush1.msra.mxu0 0.0
  %1581 = vmatprep.subr.mxu0 0.0
  %1582 = vmatpush1.msra.mxu0 0.0
  %1583 = vmatprep.subr.mxu0 0.0
  %1584 = vmatpush1.msra.mxu0 0.0
  %1585 = vmatprep.subr.mxu0 0.0
  %1586 = vmatpush1.msra.mxu0 0.0
  %1587 = vmatprep.subr.mxu0 0.0
  %1588 = vmatpush1.msra.mxu0 0.0
  %1589 = vmatprep.subr.mxu0 0.0
  %1590 = vmatpush1.msra.mxu0 0.0
  %1591 = vmatprep.subr.mxu0 0.0
  %1592 = vmatpush1.msra.mxu0 0.0
  %1593 = vmatprep.mubr.f32.mxu0 0.0
  %1594 = vmatmul.mubr.f32.gmra.mrb[0].mxu0 %v1518
  %v1595 = vpop.f32.mrb[0].mxu0
  %v1596 = vadd.f32 0.0, %v1595
  %v1597 = vpop.f32.mrb[0].mxu0
  %1598 = vmatprep.mubr.f32.mxu0 0.0
  %1599 = vmatmul.mubr.f32.gmra.mrb[0].mxu0 %v1521
  %v1600 = vpop.f32.mrb[0].mxu0
  %v1601 = vadd.f32 0.0, %v1600
  %v1602 = vpop.f32.mrb[0].mxu0
  %1603 = vmatprep.mubr.f32.mxu0 0.0
  %1604 = vmatmul.mubr.f32.gmra.mrb[0].mxu0 %v1524
  %v1605 = vpop.f32.mrb[0].mxu0
  %v1606 = vadd.f32 0.0, %v1605
  %v1607 = vpop.f32.mrb[0].mxu0
  %1608 = vmatprep.mubr.f32.mxu0 0.0
  %1609 = vmatmul.mubr.f32.gmra.mrb[0].mxu0 %v1527
  %v1610 = vpop.f32.mrb[0].mxu0
  %v1611 = vadd.f32 0.0, %v1610
  %v1612 = vpop.f32.mrb[0].mxu0
  %1613 = vdwg.mxu0
  %v1614 = vld [vmem:[%s2 + $0x60] sm:$0xff]
  %1615 = vrot.lane.b32.xlu0 %v1057, 120
  %v1616 = vpop.permute.xlu0 %1615
  %1617 = vrot.lane.b32.xlu0 %v1062, 120
  %v1618 = vpop.permute.xlu0 %1617
  %1619 = vrot.lane.b32.xlu0 %v1067, 120
  %v1620 = vpop.permute.xlu0 %1619
  %1621 = vrot.lane.b32.xlu0 %v1072, 120
  %v1622 = vpop.permute.xlu0 %1621
  %1623 = vrot.lane.b32.xlu0 %v168, 120
  %v1624 = vpop.permute.xlu0 %1623
  %1625 = vrot.lane.b32.xlu0 %v173, 120
  %v1626 = vpop.permute.xlu0 %1625
  %1627 = vrot.lane.b32.xlu0 %v178, 120
  %v1628 = vpop.permute.xlu0 %1627
  %1629 = vrot.lane.b32.xlu0 %v183, 120
  %v1630 = vpop.permute.xlu0 %1629
  %v1631 = vsel %vm1095, %v1616, 0
  %v1633 = vsel %vm1095, %v1618, 0
  %v1635 = vsel %vm1095, %v1620, 0
  %v1637 = vsel %vm1095, %v1622, 0
  %v1639 = vsel %vm1095, %v1624, 0
  %v1641 = vsel %vm1095, %v1626, 0
  %v1643 = vsel %vm1095, %v1628, 0
  %v1645 = vsel %vm1095, %v1630, 0
  %1647 = vmatprep.subr.mxu0 0.0
  %1648 = vmatpush1.xpose.msra.mxu0 %v1639
  %1649 = vmatprep.subr.mxu0 0.0
  %1650 = vmatpush1.xpose.msra.mxu0 %v1641
  %1651 = vmatprep.subr.mxu0 0.0
  %1652 = vmatpush1.xpose.msra.mxu0 %v1643
  %1653 = vmatprep.subr.mxu0 0.0
  %1654 = vmatpush1.xpose.msra.mxu0 %v1645
  %1655 = vmatprep.subr.mxu0 0.0
  %1656 = vmatpush1.xpose.msra.mxu0 0.0
  %1657 = vmatprep.subr.mxu0 0.0
  %1658 = vmatpush1.xpose.msra.mxu0 0.0
  %1659 = vmatprep.subr.mxu0 0.0
  %1660 = vmatpush1.xpose.msra.mxu0 0.0
  %1661 = vmatprep.subr.mxu0 0.0
  %1662 = vmatpush1.xpose.msra.mxu0 0.0
  %1663 = vmatprep.subr.mxu0 0.0
  %1664 = vmatpush1.xpose.msra.mxu0 0.0
  %1665 = vmatprep.subr.mxu0 0.0
  %1666 = vmatpush1.xpose.msra.mxu0 0.0
  %1667 = vmatprep.subr.mxu0 0.0
  %1668 = vmatpush1.xpose.msra.mxu0 0.0
  %1669 = vmatprep.subr.mxu0 0.0
  %1670 = vmatpush1.xpose.msra.mxu0 0.0
  %1671 = vmatprep.subr.mxu0 0.0
  %1672 = vmatpush1.xpose.msra.mxu0 0.0
  %1673 = vmatprep.subr.mxu0 0.0
  %1674 = vmatpush1.xpose.msra.mxu0 0.0
  %1675 = vmatprep.subr.mxu0 0.0
  %1676 = vmatpush1.xpose.msra.mxu0 0.0
  %1677 = vmatprep.subr.mxu0 0.0
  %1678 = vmatpush1.xpose.msra.mxu0 0.0
  %1679 = vmatprep.subr.mxu0 0.0
  %1680 = vmatpush1.xpose.msra.mxu0 0.0
  %1681 = vmatprep.subr.mxu0 0.0
  %1682 = vmatpush1.xpose.msra.mxu0 0.0
  %1683 = vmatprep.subr.mxu0 0.0
  %1684 = vmatpush1.xpose.msra.mxu0 0.0
  %1685 = vmatprep.subr.mxu0 0.0
  %1686 = vmatpush1.xpose.msra.mxu0 0.0
  %1687 = vmatprep.subr.mxu0 0.0
  %1688 = vmatpush1.xpose.msra.mxu0 0.0
  %1689 = vmatprep.subr.mxu0 0.0
  %1690 = vmatpush1.xpose.msra.mxu0 0.0
  %1691 = vmatprep.subr.mxu0 0.0
  %1692 = vmatpush1.xpose.msra.mxu0 0.0
  %1693 = vmatprep.subr.mxu0 0.0
  %1694 = vmatpush1.xpose.msra.mxu0 0.0
  %1695 = vmatprep.subr.mxu0 0.0
  %1696 = vmatpush1.xpose.msra.mxu0 0.0
  %1697 = vmatprep.subr.mxu0 0.0
  %1698 = vmatpush1.xpose.msra.mxu0 0.0
  %1699 = vmatprep.subr.mxu0 0.0
  %1700 = vmatpush1.xpose.msra.mxu0 0.0
  %1701 = vmatprep.subr.mxu0 0.0
  %1702 = vmatpush1.xpose.msra.mxu0 0.0
  %1703 = vmatprep.subr.mxu0 0.0
  %1704 = vmatpush1.xpose.msra.mxu0 0.0
  %1705 = vmatprep.subr.mxu0 0.0
  %1706 = vmatpush1.xpose.msra.mxu0 0.0
  %1707 = vmatprep.subr.mxu0 0.0
  %1708 = vmatpush1.xpose.msra.mxu0 0.0
  %1709 = vmatprep.subr.mxu0 0.0
  %1710 = vmatpush1.xpose.msra.mxu0 0.0
  %1711 = vmatprep.mubr.f32.mxu0 0.0
  %1712 = vmatmul.mubr.f32.gmra.mrb[0].mxu0 %v1631
  %v1713 = vpop.f32.mrb[0].mxu0
  %v1714 = vadd.f32 0.0, %v1713
  %v1715 = vpop.f32.mrb[0].mxu0
  %1716 = vmatprep.mubr.f32.mxu0 0.0
  %1717 = vmatmul.mubr.f32.gmra.mrb[0].mxu0 %v1633
  %v1718 = vpop.f32.mrb[0].mxu0
  %v1719 = vadd.f32 0.0, %v1718
  %v1720 = vpop.f32.mrb[0].mxu0
  %1721 = vmatprep.mubr.f32.mxu0 0.0
  %1722 = vmatmul.mubr.f32.gmra.mrb[0].mxu0 %v1635
  %v1723 = vpop.f32.mrb[0].mxu0
  %v1724 = vadd.f32 0.0, %v1723
  %v1725 = vpop.f32.mrb[0].mxu0
  %1726 = vmatprep.mubr.f32.mxu0 0.0
  %1727 = vmatmul.mubr.f32.gmra.mrb[0].mxu0 %v1637
  %v1728 = vpop.f32.mrb[0].mxu0
  %v1729 = vadd.f32 0.0, %v1728
  %v1730 = vpop.f32.mrb[0].mxu0
  %1731 = vdwg.mxu0
  %1732 = vrot.lane.b32.xlu0 %v1077, 120
  %v1733 = vpop.permute.xlu0 %1732
  %1734 = vrot.lane.b32.xlu0 %v1082, 120
  %v1735 = vpop.permute.xlu0 %1734
  %1736 = vrot.lane.b32.xlu0 %v1087, 120
  %v1737 = vpop.permute.xlu0 %1736
  %1738 = vrot.lane.b32.xlu0 %v1092, 120
  %v1739 = vpop.permute.xlu0 %1738
  %1740 = vrot.lane.b32.xlu0 %v188, 120
  %v1741 = vpop.permute.xlu0 %1740
  %1742 = vrot.lane.b32.xlu0 %v193, 120
  %v1743 = vpop.permute.xlu0 %1742
  %1744 = vrot.lane.b32.xlu0 %v198, 120
  %v1745 = vpop.permute.xlu0 %1744
  %1746 = vrot.lane.b32.xlu0 %v203, 120
  %v1747 = vpop.permute.xlu0 %1746
  %v1748 = vsel %vm1095, %v1733, 0
  %v1750 = vsel %vm1095, %v1735, 0
  %v1752 = vsel %vm1095, %v1737, 0
  %v1754 = vsel %vm1095, %v1739, 0
  %v1756 = vsel %vm1095, %v1741, 0
  %v1758 = vsel %vm1095, %v1743, 0
  %v1760 = vsel %vm1095, %v1745, 0
  %v1762 = vsel %vm1095, %v1747, 0
  %1764 = vmatprep.subr.mxu0 0.0
  %1765 = vmatpush1.xpose.msra.mxu0 %v1756
  %1766 = vmatprep.subr.mxu0 0.0
  %1767 = vmatpush1.xpose.msra.mxu0 %v1758
  %1768 = vmatprep.subr.mxu0 0.0
  %1769 = vmatpush1.xpose.msra.mxu0 %v1760
  %1770 = vmatprep.subr.mxu0 0.0
  %1771 = vmatpush1.xpose.msra.mxu0 %v1762
  %1772 = vmatprep.subr.mxu0 0.0
  %1773 = vmatpush1.xpose.msra.mxu0 0.0
  %1774 = vmatprep.subr.mxu0 0.0
  %1775 = vmatpush1.xpose.msra.mxu0 0.0
  %1776 = vmatprep.subr.mxu0 0.0
  %1777 = vmatpush1.xpose.msra.mxu0 0.0
  %1778 = vmatprep.subr.mxu0 0.0
  %1779 = vmatpush1.xpose.msra.mxu0 0.0
  %1780 = vmatprep.subr.mxu0 0.0
  %1781 = vmatpush1.xpose.msra.mxu0 0.0
  %1782 = vmatprep.subr.mxu0 0.0
  %1783 = vmatpush1.xpose.msra.mxu0 0.0
  %1784 = vmatprep.subr.mxu0 0.0
  %1785 = vmatpush1.xpose.msra.mxu0 0.0
  %1786 = vmatprep.subr.mxu0 0.0
  %1787 = vmatpush1.xpose.msra.mxu0 0.0
  %1788 = vmatprep.subr.mxu0 0.0
  %1789 = vmatpush1.xpose.msra.mxu0 0.0
  %1790 = vmatprep.subr.mxu0 0.0
  %1791 = vmatpush1.xpose.msra.mxu0 0.0
  %1792 = vmatprep.subr.mxu0 0.0
  %1793 = vmatpush1.xpose.msra.mxu0 0.0
  %1794 = vmatprep.subr.mxu0 0.0
  %1795 = vmatpush1.xpose.msra.mxu0 0.0
  %1796 = vmatprep.subr.mxu0 0.0
  %1797 = vmatpush1.xpose.msra.mxu0 0.0
  %1798 = vmatprep.subr.mxu0 0.0
  %1799 = vmatpush1.xpose.msra.mxu0 0.0
  %1800 = vmatprep.subr.mxu0 0.0
  %1801 = vmatpush1.xpose.msra.mxu0 0.0
  %1802 = vmatprep.subr.mxu0 0.0
  %1803 = vmatpush1.xpose.msra.mxu0 0.0
  %1804 = vmatprep.subr.mxu0 0.0
  %1805 = vmatpush1.xpose.msra.mxu0 0.0
  %1806 = vmatprep.subr.mxu0 0.0
  %1807 = vmatpush1.xpose.msra.mxu0 0.0
  %1808 = vmatprep.subr.mxu0 0.0
  %1809 = vmatpush1.xpose.msra.mxu0 0.0
  %1810 = vmatprep.subr.mxu0 0.0
  %1811 = vmatpush1.xpose.msra.mxu0 0.0
  %1812 = vmatprep.subr.mxu0 0.0
  %1813 = vmatpush1.xpose.msra.mxu0 0.0
  %1814 = vmatprep.subr.mxu0 0.0
  %1815 = vmatpush1.xpose.msra.mxu0 0.0
  %1816 = vmatprep.subr.mxu0 0.0
  %1817 = vmatpush1.xpose.msra.mxu0 0.0
  %1818 = vmatprep.subr.mxu0 0.0
  %1819 = vmatpush1.xpose.msra.mxu0 0.0
  %1820 = vmatprep.subr.mxu0 0.0
  %1821 = vmatpush1.xpose.msra.mxu0 0.0
  %1822 = vmatprep.subr.mxu0 0.0
  %1823 = vmatpush1.xpose.msra.mxu0 0.0
  %1824 = vmatprep.subr.mxu0 0.0
  %1825 = vmatpush1.xpose.msra.mxu0 0.0
  %1826 = vmatprep.subr.mxu0 0.0
  %1827 = vmatpush1.xpose.msra.mxu0 0.0
  %1828 = vmatprep.mubr.f32.mxu0 0.0
  %1829 = vmatmul.mubr.f32.gmra.mrb[0].mxu0 %v1748
  %v1830 = vpop.f32.mrb[0].mxu0
  %v1831 = vadd.f32 0.0, %v1830
  %v1832 = vpop.f32.mrb[0].mxu0
  %1833 = vmatprep.mubr.f32.mxu0 0.0
  %1834 = vmatmul.mubr.f32.gmra.mrb[0].mxu0 %v1750
  %v1835 = vpop.f32.mrb[0].mxu0
  %v1836 = vadd.f32 0.0, %v1835
  %v1837 = vpop.f32.mrb[0].mxu0
  %1838 = vmatprep.mubr.f32.mxu0 0.0
  %1839 = vmatmul.mubr.f32.gmra.mrb[0].mxu0 %v1752
  %v1840 = vpop.f32.mrb[0].mxu0
  %v1841 = vadd.f32 0.0, %v1840
  %v1842 = vpop.f32.mrb[0].mxu0
  %1843 = vmatprep.mubr.f32.mxu0 0.0
  %1844 = vmatmul.mubr.f32.gmra.mrb[0].mxu0 %v1754
  %v1845 = vpop.f32.mrb[0].mxu0
  %v1846 = vadd.f32 0.0, %v1845
  %v1847 = vpop.f32.mrb[0].mxu0
  %1848 = vdwg.mxu0
  %v1849 = vmul.f32 %v1714, 0.35355338
  %v1850 = vmul.f32 %v1719, 0.35355338
  %v1851 = vmul.f32 %v1724, 0.35355338
  %v1852 = vmul.f32 %v1729, 0.35355338
  %v1853 = vmul.f32 %v1831, 0.35355338
  %v1854 = vmul.f32 %v1836, 0.35355338
  %v1855 = vmul.f32 %v1841, 0.35355338
  %v1856 = vmul.f32 %v1846, 0.35355338
  %v1857 = vsel %vm1323, %v1849, -1e+30
  %v1858 = vsel %vm1323, %v1850, -1e+30
  %v1859 = vsel %vm1323, %v1851, -1e+30
  %v1860 = vsel %vm1323, %v1852, -1e+30
  %v1861 = vsel %vm1323, %v1853, -1e+30
  %v1862 = vsel %vm1323, %v1854, -1e+30
  %v1863 = vsel %vm1323, %v1855, -1e+30
  %v1864 = vsel %vm1323, %v1856, -1e+30
  %v1865 = vsel %vm76, %v1857, -inf
  %1866 = vmax.xlane.f32.xlu0 %v1865
  %v1867 = vpop.xlane.xlu0 %1866
  %v1868 = vsel %vm76, %v1858, -inf
  %1869 = vmax.xlane.f32.xlu0 %v1868
  %v1870 = vpop.xlane.xlu0 %1869
  %v1871 = vsel %vm76, %v1859, -inf
  %1872 = vmax.xlane.f32.xlu0 %v1871
  %v1873 = vpop.xlane.xlu0 %1872
  %v1874 = vsel %vm76, %v1860, -inf
  %1875 = vmax.xlane.f32.xlu0 %v1874
  %v1876 = vpop.xlane.xlu0 %1875
  %v1877 = vsel %vm76, %v1861, -inf
  %1878 = vmax.xlane.f32.xlu0 %v1877
  %v1879 = vpop.xlane.xlu0 %1878
  %v1880 = vsel %vm76, %v1862, -inf
  %1881 = vmax.xlane.f32.xlu0 %v1880
  %v1882 = vpop.xlane.xlu0 %1881
  %v1883 = vsel %vm76, %v1863, -inf
  %1884 = vmax.xlane.f32.xlu0 %v1883
  %v1885 = vpop.xlane.xlu0 %1884
  %v1886 = vsel %vm76, %v1864, -inf
  %1887 = vmax.xlane.f32.xlu0 %v1886
  %v1888 = vpop.xlane.xlu0 %1887
  %v1889 = vsub.f32 %v1857, %v1867
  %v1890 = vsub.f32 %v1858, %v1870
  %v1891 = vsub.f32 %v1859, %v1873
  %v1892 = vsub.f32 %v1860, %v1876
  %v1893 = vsub.f32 %v1861, %v1879
  %v1894 = vsub.f32 %v1862, %v1882
  %v1895 = vsub.f32 %v1863, %v1885
  %v1896 = vsub.f32 %v1864, %v1888
  %v1897 = vmul.f32 %v1889, 1.442695
  %v1898 = vpow.pop %v1897
  %v1899 = vmul.f32 %v1890, 1.442695
  %v1900 = vpow.pop %v1899
  %v1901 = vmul.f32 %v1891, 1.442695
  %v1902 = vpow.pop %v1901
  %v1903 = vmul.f32 %v1892, 1.442695
  %v1904 = vpow.pop %v1903
  %v1905 = vmul.f32 %v1893, 1.442695
  %v1906 = vpow.pop %v1905
  %v1907 = vmul.f32 %v1894, 1.442695
  %v1908 = vpow.pop %v1907
  %v1909 = vmul.f32 %v1895, 1.442695
  %v1910 = vpow.pop %v1909
  %v1911 = vmul.f32 %v1896, 1.442695
  %v1912 = vpow.pop %v1911
  %v1913 = vsel %vm76, %v1898, 0.0
  %1914 = vadd.xlane.f32.xlu0 %v1913
  %v1915 = vpop.xlane.xlu0 %1914
  %v1916 = vsel %vm76, %v1900, 0.0
  %1917 = vadd.xlane.f32.xlu0 %v1916
  %v1918 = vpop.xlane.xlu0 %1917
  %v1919 = vsel %vm76, %v1902, 0.0
  %1920 = vadd.xlane.f32.xlu0 %v1919
  %v1921 = vpop.xlane.xlu0 %1920
  %v1922 = vsel %vm76, %v1904, 0.0
  %1923 = vadd.xlane.f32.xlu0 %v1922
  %v1924 = vpop.xlane.xlu0 %1923
  %v1925 = vsel %vm76, %v1906, 0.0
  %1926 = vadd.xlane.f32.xlu0 %v1925
  %v1927 = vpop.xlane.xlu0 %1926
  %v1928 = vsel %vm76, %v1908, 0.0
  %1929 = vadd.xlane.f32.xlu0 %v1928
  %v1930 = vpop.xlane.xlu0 %1929
  %v1931 = vsel %vm76, %v1910, 0.0
  %1932 = vadd.xlane.f32.xlu0 %v1931
  %v1933 = vpop.xlane.xlu0 %1932
  %v1934 = vsel %vm76, %v1912, 0.0
  %1935 = vadd.xlane.f32.xlu0 %v1934
  %v1936 = vpop.xlane.xlu0 %1935
  %v1937 = vrcp.pop %v1915
  %v1938 = vrcp.pop %v1918
  %v1939 = vrcp.pop %v1921
  %v1940 = vrcp.pop %v1924
  %v1941 = vrcp.pop %v1927
  %v1942 = vrcp.pop %v1930
  %v1943 = vrcp.pop %v1933
  %v1944 = vrcp.pop %v1936
  %v1945 = vmul.f32 %v1898, %v1937
  %v1946 = vmul.f32 %v1900, %v1938
  %v1947 = vmul.f32 %v1902, %v1939
  %v1948 = vmul.f32 %v1904, %v1940
  %v1949 = vmul.f32 %v1906, %v1941
  %v1950 = vmul.f32 %v1908, %v1942
  %v1951 = vmul.f32 %v1910, %v1943
  %v1952 = vmul.f32 %v1912, %v1944
  %1957 = vrot.lane.b32.xlu0 %v282, 120
  %v1958 = vpop.permute.xlu0 %1957
  %1959 = vrot.lane.b32.xlu0 %v287, 120
  %v1960 = vpop.permute.xlu0 %1959
  %1961 = vrot.lane.b32.xlu0 %v292, 120
  %v1962 = vpop.permute.xlu0 %1961
  %1963 = vrot.lane.b32.xlu0 %v297, 120
  %v1964 = vpop.permute.xlu0 %1963
  %v1970 = vsel %vm76, %v1945, 0
  %v1973 = vsel %vm76, %v1946, 0
  %v1976 = vsel %vm76, %v1947, 0
  %v1979 = vsel %vm76, %v1948, 0
  %1981 = vmatprep.subr.mxu0 0.0
  %1982 = vmatpush1.msra.mxu0 %v1958
  %1983 = vmatprep.subr.mxu0 0.0
  %1984 = vmatpush1.msra.mxu0 %v1960
  %1985 = vmatprep.subr.mxu0 0.0
  %1986 = vmatpush1.msra.mxu0 %v1962
  %1987 = vmatprep.subr.mxu0 0.0
  %1988 = vmatpush1.msra.mxu0 %v1964
  %1989 = vmatprep.subr.mxu0 0.0
  %1990 = vmatpush1.msra.mxu0 0.0
  %1991 = vmatprep.subr.mxu0 0.0
  %1992 = vmatpush1.msra.mxu0 0.0
  %1993 = vmatprep.subr.mxu0 0.0
  %1994 = vmatpush1.msra.mxu0 0.0
  %1995 = vmatprep.subr.mxu0 0.0
  %1996 = vmatpush1.msra.mxu0 0.0
  %1997 = vmatprep.subr.mxu0 0.0
  %1998 = vmatpush1.msra.mxu0 0.0
  %1999 = vmatprep.subr.mxu0 0.0
  %2000 = vmatpush1.msra.mxu0 0.0
  %2001 = vmatprep.subr.mxu0 0.0
  %2002 = vmatpush1.msra.mxu0 0.0
  %2003 = vmatprep.subr.mxu0 0.0
  %2004 = vmatpush1.msra.mxu0 0.0
  %2005 = vmatprep.subr.mxu0 0.0
  %2006 = vmatpush1.msra.mxu0 0.0
  %2007 = vmatprep.subr.mxu0 0.0
  %2008 = vmatpush1.msra.mxu0 0.0
  %2009 = vmatprep.subr.mxu0 0.0
  %2010 = vmatpush1.msra.mxu0 0.0
  %2011 = vmatprep.subr.mxu0 0.0
  %2012 = vmatpush1.msra.mxu0 0.0
  %2013 = vmatprep.subr.mxu0 0.0
  %2014 = vmatpush1.msra.mxu0 0.0
  %2015 = vmatprep.subr.mxu0 0.0
  %2016 = vmatpush1.msra.mxu0 0.0
  %2017 = vmatprep.subr.mxu0 0.0
  %2018 = vmatpush1.msra.mxu0 0.0
  %2019 = vmatprep.subr.mxu0 0.0
  %2020 = vmatpush1.msra.mxu0 0.0
  %2021 = vmatprep.subr.mxu0 0.0
  %2022 = vmatpush1.msra.mxu0 0.0
  %2023 = vmatprep.subr.mxu0 0.0
  %2024 = vmatpush1.msra.mxu0 0.0
  %2025 = vmatprep.subr.mxu0 0.0
  %2026 = vmatpush1.msra.mxu0 0.0
  %2027 = vmatprep.subr.mxu0 0.0
  %2028 = vmatpush1.msra.mxu0 0.0
  %2029 = vmatprep.subr.mxu0 0.0
  %2030 = vmatpush1.msra.mxu0 0.0
  %2031 = vmatprep.subr.mxu0 0.0
  %2032 = vmatpush1.msra.mxu0 0.0
  %2033 = vmatprep.subr.mxu0 0.0
  %2034 = vmatpush1.msra.mxu0 0.0
  %2035 = vmatprep.subr.mxu0 0.0
  %2036 = vmatpush1.msra.mxu0 0.0
  %2037 = vmatprep.subr.mxu0 0.0
  %2038 = vmatpush1.msra.mxu0 0.0
  %2039 = vmatprep.subr.mxu0 0.0
  %2040 = vmatpush1.msra.mxu0 0.0
  %2041 = vmatprep.subr.mxu0 0.0
  %2042 = vmatpush1.msra.mxu0 0.0
  %2043 = vmatprep.subr.mxu0 0.0
  %2044 = vmatpush1.msra.mxu0 0.0
  %2045 = vmatprep.mubr.f32.mxu0 0.0
  %2046 = vmatmul.mubr.f32.gmra.mrb[0].mxu0 %v1970
  %v2047 = vpop.f32.mrb[0].mxu0
  %v2048 = vadd.f32 0.0, %v2047
  %v2049 = vpop.f32.mrb[0].mxu0
  %2050 = vmatprep.mubr.f32.mxu0 0.0
  %2051 = vmatmul.mubr.f32.gmra.mrb[0].mxu0 %v1973
  %v2052 = vpop.f32.mrb[0].mxu0
  %v2053 = vadd.f32 0.0, %v2052
  %v2054 = vpop.f32.mrb[0].mxu0
  %2055 = vmatprep.mubr.f32.mxu0 0.0
  %2056 = vmatmul.mubr.f32.gmra.mrb[0].mxu0 %v1976
  %v2057 = vpop.f32.mrb[0].mxu0
  %v2058 = vadd.f32 0.0, %v2057
  %v2059 = vpop.f32.mrb[0].mxu0
  %2060 = vmatprep.mubr.f32.mxu0 0.0
  %2061 = vmatmul.mubr.f32.gmra.mrb[0].mxu0 %v1979
  %v2062 = vpop.f32.mrb[0].mxu0
  %v2063 = vadd.f32 0.0, %v2062
  %v2064 = vpop.f32.mrb[0].mxu0
  %2065 = vdwg.mxu0
  %2070 = vrot.lane.b32.xlu0 %v302, 120
  %v2071 = vpop.permute.xlu0 %2070
  %2072 = vrot.lane.b32.xlu0 %v307, 120
  %v2073 = vpop.permute.xlu0 %2072
  %2074 = vrot.lane.b32.xlu0 %v312, 120
  %v2075 = vpop.permute.xlu0 %2074
  %2076 = vrot.lane.b32.xlu0 %v317, 120
  %v2077 = vpop.permute.xlu0 %2076
  %v2083 = vsel %vm76, %v1949, 0
  %v2086 = vsel %vm76, %v1950, 0
  %v2089 = vsel %vm76, %v1951, 0
  %v2092 = vsel %vm76, %v1952, 0
  %2094 = vmatprep.subr.mxu0 0.0
  %2095 = vmatpush1.msra.mxu0 %v2071
  %2096 = vmatprep.subr.mxu0 0.0
  %2097 = vmatpush1.msra.mxu0 %v2073
  %2098 = vmatprep.subr.mxu0 0.0
  %2099 = vmatpush1.msra.mxu0 %v2075
  %2100 = vmatprep.subr.mxu0 0.0
  %2101 = vmatpush1.msra.mxu0 %v2077
  %2102 = vmatprep.subr.mxu0 0.0
  %2103 = vmatpush1.msra.mxu0 0.0
  %2104 = vmatprep.subr.mxu0 0.0
  %2105 = vmatpush1.msra.mxu0 0.0
  %2106 = vmatprep.subr.mxu0 0.0
  %2107 = vmatpush1.msra.mxu0 0.0
  %2108 = vmatprep.subr.mxu0 0.0
  %2109 = vmatpush1.msra.mxu0 0.0
  %2110 = vmatprep.subr.mxu0 0.0
  %2111 = vmatpush1.msra.mxu0 0.0
  %2112 = vmatprep.subr.mxu0 0.0
  %2113 = vmatpush1.msra.mxu0 0.0
  %2114 = vmatprep.subr.mxu0 0.0
  %2115 = vmatpush1.msra.mxu0 0.0
  %2116 = vmatprep.subr.mxu0 0.0
  %2117 = vmatpush1.msra.mxu0 0.0
  %2118 = vmatprep.subr.mxu0 0.0
  %2119 = vmatpush1.msra.mxu0 0.0
  %2120 = vmatprep.subr.mxu0 0.0
  %2121 = vmatpush1.msra.mxu0 0.0
  %2122 = vmatprep.subr.mxu0 0.0
  %2123 = vmatpush1.msra.mxu0 0.0
  %2124 = vmatprep.subr.mxu0 0.0
  %2125 = vmatpush1.msra.mxu0 0.0
  %2126 = vmatprep.subr.mxu0 0.0
  %2127 = vmatpush1.msra.mxu0 0.0
  %2128 = vmatprep.subr.mxu0 0.0
  %2129 = vmatpush1.msra.mxu0 0.0
  %2130 = vmatprep.subr.mxu0 0.0
  %2131 = vmatpush1.msra.mxu0 0.0
  %2132 = vmatprep.subr.mxu0 0.0
  %2133 = vmatpush1.msra.mxu0 0.0
  %2134 = vmatprep.subr.mxu0 0.0
  %2135 = vmatpush1.msra.mxu0 0.0
  %2136 = vmatprep.subr.mxu0 0.0
  %2137 = vmatpush1.msra.mxu0 0.0
  %2138 = vmatprep.subr.mxu0 0.0
  %2139 = vmatpush1.msra.mxu0 0.0
  %2140 = vmatprep.subr.mxu0 0.0
  %2141 = vmatpush1.msra.mxu0 0.0
  %2142 = vmatprep.subr.mxu0 0.0
  %2143 = vmatpush1.msra.mxu0 0.0
  %2144 = vmatprep.subr.mxu0 0.0
  %2145 = vmatpush1.msra.mxu0 0.0
  %2146 = vmatprep.subr.mxu0 0.0
  %2147 = vmatpush1.msra.mxu0 0.0
  %2148 = vmatprep.subr.mxu0 0.0
  %2149 = vmatpush1.msra.mxu0 0.0
  %2150 = vmatprep.subr.mxu0 0.0
  %2151 = vmatpush1.msra.mxu0 0.0
  %2152 = vmatprep.subr.mxu0 0.0
  %2153 = vmatpush1.msra.mxu0 0.0
  %2154 = vmatprep.subr.mxu0 0.0
  %2155 = vmatpush1.msra.mxu0 0.0
  %2156 = vmatprep.subr.mxu0 0.0
  %2157 = vmatpush1.msra.mxu0 0.0
  %2158 = vmatprep.mubr.f32.mxu0 0.0
  %2159 = vmatmul.mubr.f32.gmra.mrb[0].mxu0 %v2083
  %v2160 = vpop.f32.mrb[0].mxu0
  %v2161 = vadd.f32 0.0, %v2160
  %v2162 = vpop.f32.mrb[0].mxu0
  %2163 = vmatprep.mubr.f32.mxu0 0.0
  %2164 = vmatmul.mubr.f32.gmra.mrb[0].mxu0 %v2086
  %v2165 = vpop.f32.mrb[0].mxu0
  %v2166 = vadd.f32 0.0, %v2165
  %v2167 = vpop.f32.mrb[0].mxu0
  %2168 = vmatprep.mubr.f32.mxu0 0.0
  %2169 = vmatmul.mubr.f32.gmra.mrb[0].mxu0 %v2089
  %v2170 = vpop.f32.mrb[0].mxu0
  %v2171 = vadd.f32 0.0, %v2170
  %v2172 = vpop.f32.mrb[0].mxu0
  %2173 = vmatprep.mubr.f32.mxu0 0.0
  %2174 = vmatmul.mubr.f32.gmra.mrb[0].mxu0 %v2092
  %v2175 = vpop.f32.mrb[0].mxu0
  %v2176 = vadd.f32 0.0, %v2175
  %v2177 = vpop.f32.mrb[0].mxu0
  %2178 = vdwg.mxu0
  %v2179 = vld [vmem:[%s2 + $0x68] sm:$0xff]
  %v2181 = vsel %vm1095, %v2048, 0
  %v2184 = vsel %vm1095, %v2053, 0
  %v2187 = vsel %vm1095, %v2058, 0
  %v2190 = vsel %vm1095, %v2063, 0
  %v2193 = vsel %vm1095, %v2161, 0
  %v2196 = vsel %vm1095, %v2166, 0
  %v2199 = vsel %vm1095, %v2171, 0
  %v2202 = vsel %vm1095, %v2176, 0
  %2204 = vmatprep.subr.mxu0 0.0
  %2205 = vmatpush1.msra.mxu0 %v2179
  %2206 = vmatprep.subr.mxu0 0.0
  %2207 = vmatpush1.msra.mxu0 0.0
  %2208 = vmatprep.subr.mxu0 0.0
  %2209 = vmatpush1.msra.mxu0 0.0
  %2210 = vmatprep.subr.mxu0 0.0
  %2211 = vmatpush1.msra.mxu0 0.0
  %2212 = vmatprep.subr.mxu0 0.0
  %2213 = vmatpush1.msra.mxu0 0.0
  %2214 = vmatprep.subr.mxu0 0.0
  %2215 = vmatpush1.msra.mxu0 0.0
  %2216 = vmatprep.subr.mxu0 0.0
  %2217 = vmatpush1.msra.mxu0 0.0
  %2218 = vmatprep.subr.mxu0 0.0
  %2219 = vmatpush1.msra.mxu0 0.0
  %2220 = vmatprep.subr.mxu0 0.0
  %2221 = vmatpush1.msra.mxu0 0.0
  %2222 = vmatprep.subr.mxu0 0.0
  %2223 = vmatpush1.msra.mxu0 0.0
  %2224 = vmatprep.subr.mxu0 0.0
  %2225 = vmatpush1.msra.mxu0 0.0
  %2226 = vmatprep.subr.mxu0 0.0
  %2227 = vmatpush1.msra.mxu0 0.0
  %2228 = vmatprep.subr.mxu0 0.0
  %2229 = vmatpush1.msra.mxu0 0.0
  %2230 = vmatprep.subr.mxu0 0.0
  %2231 = vmatpush1.msra.mxu0 0.0
  %2232 = vmatprep.subr.mxu0 0.0
  %2233 = vmatpush1.msra.mxu0 0.0
  %2234 = vmatprep.subr.mxu0 0.0
  %2235 = vmatpush1.msra.mxu0 0.0
  %2236 = vmatprep.subr.mxu0 0.0
  %2237 = vmatpush1.msra.mxu0 0.0
  %2238 = vmatprep.subr.mxu0 0.0
  %2239 = vmatpush1.msra.mxu0 0.0
  %2240 = vmatprep.subr.mxu0 0.0
  %2241 = vmatpush1.msra.mxu0 0.0
  %2242 = vmatprep.subr.mxu0 0.0
  %2243 = vmatpush1.msra.mxu0 0.0
  %2244 = vmatprep.subr.mxu0 0.0
  %2245 = vmatpush1.msra.mxu0 0.0
  %2246 = vmatprep.subr.mxu0 0.0
  %2247 = vmatpush1.msra.mxu0 0.0
  %2248 = vmatprep.subr.mxu0 0.0
  %2249 = vmatpush1.msra.mxu0 0.0
  %2250 = vmatprep.subr.mxu0 0.0
  %2251 = vmatpush1.msra.mxu0 0.0
  %2252 = vmatprep.subr.mxu0 0.0
  %2253 = vmatpush1.msra.mxu0 0.0
  %2254 = vmatprep.subr.mxu0 0.0
  %2255 = vmatpush1.msra.mxu0 0.0
  %2256 = vmatprep.subr.mxu0 0.0
  %2257 = vmatpush1.msra.mxu0 0.0
  %2258 = vmatprep.subr.mxu0 0.0
  %2259 = vmatpush1.msra.mxu0 0.0
  %2260 = vmatprep.subr.mxu0 0.0
  %2261 = vmatpush1.msra.mxu0 0.0
  %2262 = vmatprep.subr.mxu0 0.0
  %2263 = vmatpush1.msra.mxu0 0.0
  %2264 = vmatprep.subr.mxu0 0.0
  %2265 = vmatpush1.msra.mxu0 0.0
  %2266 = vmatprep.subr.mxu0 0.0
  %2267 = vmatpush1.msra.mxu0 0.0
  %2268 = vmatprep.mubr.f32.mxu0 0.0
  %2269 = vmatmul.mubr.f32.gmra.mrb[0].mxu0 %v2181
  %v2270 = vpop.f32.mrb[0].mxu0
  %v2271 = vadd.f32 0.0, %v2270
  %v2272 = vpop.f32.mrb[0].mxu0
  %2273 = vmatprep.mubr.f32.mxu0 0.0
  %2274 = vmatmul.mubr.f32.gmra.mrb[0].mxu0 %v2184
  %v2275 = vpop.f32.mrb[0].mxu0
  %v2276 = vadd.f32 0.0, %v2275
  %v2277 = vpop.f32.mrb[0].mxu0
  %2278 = vmatprep.mubr.f32.mxu0 0.0
  %2279 = vmatmul.mubr.f32.gmra.mrb[0].mxu0 %v2187
  %v2280 = vpop.f32.mrb[0].mxu0
  %v2281 = vadd.f32 0.0, %v2280
  %v2282 = vpop.f32.mrb[0].mxu0
  %2283 = vmatprep.mubr.f32.mxu0 0.0
  %2284 = vmatmul.mubr.f32.gmra.mrb[0].mxu0 %v2190
  %v2285 = vpop.f32.mrb[0].mxu0
  %v2286 = vadd.f32 0.0, %v2285
  %v2287 = vpop.f32.mrb[0].mxu0
  %2288 = vmatprep.mubr.f32.mxu0 0.0
  %2289 = vmatmul.mubr.f32.gmra.mrb[0].mxu0 %v2193
  %v2290 = vpop.f32.mrb[0].mxu0
  %v2291 = vadd.f32 0.0, %v2290
  %v2292 = vpop.f32.mrb[0].mxu0
  %2293 = vmatprep.mubr.f32.mxu0 0.0
  %2294 = vmatmul.mubr.f32.gmra.mrb[0].mxu0 %v2196
  %v2295 = vpop.f32.mrb[0].mxu0
  %v2296 = vadd.f32 0.0, %v2295
  %v2297 = vpop.f32.mrb[0].mxu0
  %2298 = vmatprep.mubr.f32.mxu0 0.0
  %2299 = vmatmul.mubr.f32.gmra.mrb[0].mxu0 %v2199
  %v2300 = vpop.f32.mrb[0].mxu0
  %v2301 = vadd.f32 0.0, %v2300
  %v2302 = vpop.f32.mrb[0].mxu0
  %2303 = vmatprep.mubr.f32.mxu0 0.0
  %2304 = vmatmul.mubr.f32.gmra.mrb[0].mxu0 %v2202
  %v2305 = vpop.f32.mrb[0].mxu0
  %v2306 = vadd.f32 0.0, %v2305
  %v2307 = vpop.f32.mrb[0].mxu0
  %2308 = vdwg.mxu0
  %v2310 = vsel %vm1095, %v1499, 0
  %v2313 = vsel %vm1095, %v1504, 0
  %v2316 = vsel %vm1095, %v1509, 0
  %v2319 = vsel %vm1095, %v1514, 0
  %v2322 = vsel %vm1095, %v1596, 0
  %v2325 = vsel %vm1095, %v1601, 0
  %v2328 = vsel %vm1095, %v1606, 0
  %v2331 = vsel %vm1095, %v1611, 0
  %2333 = vmatprep.subr.mxu0 0.0
  %2334 = vmatpush1.msra.mxu0 %v1614
  %2335 = vmatprep.subr.mxu0 0.0
  %2336 = vmatpush1.msra.mxu0 0.0
  %2337 = vmatprep.subr.mxu0 0.0
  %2338 = vmatpush1.msra.mxu0 0.0
  %2339 = vmatprep.subr.mxu0 0.0
  %2340 = vmatpush1.msra.mxu0 0.0
  %2341 = vmatprep.subr.mxu0 0.0
  %2342 = vmatpush1.msra.mxu0 0.0
  %2343 = vmatprep.subr.mxu0 0.0
  %2344 = vmatpush1.msra.mxu0 0.0
  %2345 = vmatprep.subr.mxu0 0.0
  %2346 = vmatpush1.msra.mxu0 0.0
  %2347 = vmatprep.subr.mxu0 0.0
  %2348 = vmatpush1.msra.mxu0 0.0
  %2349 = vmatprep.subr.mxu0 0.0
  %2350 = vmatpush1.msra.mxu0 0.0
  %2351 = vmatprep.subr.mxu0 0.0
  %2352 = vmatpush1.msra.mxu0 0.0
  %2353 = vmatprep.subr.mxu0 0.0
  %2354 = vmatpush1.msra.mxu0 0.0
  %2355 = vmatprep.subr.mxu0 0.0
  %2356 = vmatpush1.msra.mxu0 0.0
  %2357 = vmatprep.subr.mxu0 0.0
  %2358 = vmatpush1.msra.mxu0 0.0
  %2359 = vmatprep.subr.mxu0 0.0
  %2360 = vmatpush1.msra.mxu0 0.0
  %2361 = vmatprep.subr.mxu0 0.0
  %2362 = vmatpush1.msra.mxu0 0.0
  %2363 = vmatprep.subr.mxu0 0.0
  %2364 = vmatpush1.msra.mxu0 0.0
  %2365 = vmatprep.subr.mxu0 0.0
  %2366 = vmatpush1.msra.mxu0 0.0
  %2367 = vmatprep.subr.mxu0 0.0
  %2368 = vmatpush1.msra.mxu0 0.0
  %2369 = vmatprep.subr.mxu0 0.0
  %2370 = vmatpush1.msra.mxu0 0.0
  %2371 = vmatprep.subr.mxu0 0.0
  %2372 = vmatpush1.msra.mxu0 0.0
  %2373 = vmatprep.subr.mxu0 0.0
  %2374 = vmatpush1.msra.mxu0 0.0
  %2375 = vmatprep.subr.mxu0 0.0
  %2376 = vmatpush1.msra.mxu0 0.0
  %2377 = vmatprep.subr.mxu0 0.0
  %2378 = vmatpush1.msra.mxu0 0.0
  %2379 = vmatprep.subr.mxu0 0.0
  %2380 = vmatpush1.msra.mxu0 0.0
  %2381 = vmatprep.subr.mxu0 0.0
  %2382 = vmatpush1.msra.mxu0 0.0
  %2383 = vmatprep.subr.mxu0 0.0
  %2384 = vmatpush1.msra.mxu0 0.0
  %2385 = vmatprep.subr.mxu0 0.0
  %2386 = vmatpush1.msra.mxu0 0.0
  %2387 = vmatprep.subr.mxu0 0.0
  %2388 = vmatpush1.msra.mxu0 0.0
  %2389 = vmatprep.subr.mxu0 0.0
  %2390 = vmatpush1.msra.mxu0 0.0
  %2391 = vmatprep.subr.mxu0 0.0
  %2392 = vmatpush1.msra.mxu0 0.0
  %2393 = vmatprep.subr.mxu0 0.0
  %2394 = vmatpush1.msra.mxu0 0.0
  %2395 = vmatprep.subr.mxu0 0.0
  %2396 = vmatpush1.msra.mxu0 0.0
  %2397 = vmatprep.mubr.f32.mxu0 0.0
  %2398 = vmatmul.mubr.f32.gmra.mrb[0].mxu0 %v2310
  %v2399 = vpop.f32.mrb[0].mxu0
  %v2400 = vadd.f32 %v2271, %v2399
  %v2401 = vpop.f32.mrb[0].mxu0
  %2402 = vmatprep.mubr.f32.mxu0 0.0
  %2403 = vmatmul.mubr.f32.gmra.mrb[0].mxu0 %v2313
  %v2404 = vpop.f32.mrb[0].mxu0
  %v2405 = vadd.f32 %v2276, %v2404
  %v2406 = vpop.f32.mrb[0].mxu0
  %2407 = vmatprep.mubr.f32.mxu0 0.0
  %2408 = vmatmul.mubr.f32.gmra.mrb[0].mxu0 %v2316
  %v2409 = vpop.f32.mrb[0].mxu0
  %v2410 = vadd.f32 %v2281, %v2409
  %v2411 = vpop.f32.mrb[0].mxu0
  %2412 = vmatprep.mubr.f32.mxu0 0.0
  %2413 = vmatmul.mubr.f32.gmra.mrb[0].mxu0 %v2319
  %v2414 = vpop.f32.mrb[0].mxu0
  %v2415 = vadd.f32 %v2286, %v2414
  %v2416 = vpop.f32.mrb[0].mxu0
  %2417 = vmatprep.mubr.f32.mxu0 0.0
  %2418 = vmatmul.mubr.f32.gmra.mrb[0].mxu0 %v2322
  %v2419 = vpop.f32.mrb[0].mxu0
  %v2420 = vadd.f32 %v2291, %v2419
  %v2421 = vpop.f32.mrb[0].mxu0
  %2422 = vmatprep.mubr.f32.mxu0 0.0
  %2423 = vmatmul.mubr.f32.gmra.mrb[0].mxu0 %v2325
  %v2424 = vpop.f32.mrb[0].mxu0
  %v2425 = vadd.f32 %v2296, %v2424
  %v2426 = vpop.f32.mrb[0].mxu0
  %2427 = vmatprep.mubr.f32.mxu0 0.0
  %2428 = vmatmul.mubr.f32.gmra.mrb[0].mxu0 %v2328
  %v2429 = vpop.f32.mrb[0].mxu0
  %v2430 = vadd.f32 %v2301, %v2429
  %v2431 = vpop.f32.mrb[0].mxu0
  %2432 = vmatprep.mubr.f32.mxu0 0.0
  %2433 = vmatmul.mubr.f32.gmra.mrb[0].mxu0 %v2331
  %v2434 = vpop.f32.mrb[0].mxu0
  %v2435 = vadd.f32 %v2306, %v2434
  %v2436 = vpop.f32.mrb[0].mxu0
  %2437 = vdwg.mxu0
  %2438 = vrot.lane.b32.xlu0 %v1057, 112
  %v2439 = vpop.permute.xlu0 %2438
  %2440 = vrot.lane.b32.xlu0 %v1062, 112
  %v2441 = vpop.permute.xlu0 %2440
  %2442 = vrot.lane.b32.xlu0 %v1067, 112
  %v2443 = vpop.permute.xlu0 %2442
  %2444 = vrot.lane.b32.xlu0 %v1072, 112
  %v2445 = vpop.permute.xlu0 %2444
  %2446 = vrot.lane.b32.xlu0 %v168, 112
  %v2447 = vpop.permute.xlu0 %2446
  %2448 = vrot.lane.b32.xlu0 %v173, 112
  %v2449 = vpop.permute.xlu0 %2448
  %2450 = vrot.lane.b32.xlu0 %v178, 112
  %v2451 = vpop.permute.xlu0 %2450
  %2452 = vrot.lane.b32.xlu0 %v183, 112
  %v2453 = vpop.permute.xlu0 %2452
  %v2454 = vsel %vm1095, %v2439, 0
  %v2456 = vsel %vm1095, %v2441, 0
  %v2458 = vsel %vm1095, %v2443, 0
  %v2460 = vsel %vm1095, %v2445, 0
  %v2462 = vsel %vm1095, %v2447, 0
  %v2464 = vsel %vm1095, %v2449, 0
  %v2466 = vsel %vm1095, %v2451, 0
  %v2468 = vsel %vm1095, %v2453, 0
  %2470 = vmatprep.subr.mxu0 0.0
  %2471 = vmatpush1.xpose.msra.mxu0 %v2462
  %2472 = vmatprep.subr.mxu0 0.0
  %2473 = vmatpush1.xpose.msra.mxu0 %v2464
  %2474 = vmatprep.subr.mxu0 0.0
  %2475 = vmatpush1.xpose.msra.mxu0 %v2466
  %2476 = vmatprep.subr.mxu0 0.0
  %2477 = vmatpush1.xpose.msra.mxu0 %v2468
  %2478 = vmatprep.subr.mxu0 0.0
  %2479 = vmatpush1.xpose.msra.mxu0 0.0
  %2480 = vmatprep.subr.mxu0 0.0
  %2481 = vmatpush1.xpose.msra.mxu0 0.0
  %2482 = vmatprep.subr.mxu0 0.0
  %2483 = vmatpush1.xpose.msra.mxu0 0.0
  %2484 = vmatprep.subr.mxu0 0.0
  %2485 = vmatpush1.xpose.msra.mxu0 0.0
  %2486 = vmatprep.subr.mxu0 0.0
  %2487 = vmatpush1.xpose.msra.mxu0 0.0
  %2488 = vmatprep.subr.mxu0 0.0
  %2489 = vmatpush1.xpose.msra.mxu0 0.0
  %2490 = vmatprep.subr.mxu0 0.0
  %2491 = vmatpush1.xpose.msra.mxu0 0.0
  %2492 = vmatprep.subr.mxu0 0.0
  %2493 = vmatpush1.xpose.msra.mxu0 0.0
  %2494 = vmatprep.subr.mxu0 0.0
  %2495 = vmatpush1.xpose.msra.mxu0 0.0
  %2496 = vmatprep.subr.mxu0 0.0
  %2497 = vmatpush1.xpose.msra.mxu0 0.0
  %2498 = vmatprep.subr.mxu0 0.0
  %2499 = vmatpush1.xpose.msra.mxu0 0.0
  %2500 = vmatprep.subr.mxu0 0.0
  %2501 = vmatpush1.xpose.msra.mxu0 0.0
  %2502 = vmatprep.subr.mxu0 0.0
  %2503 = vmatpush1.xpose.msra.mxu0 0.0
  %2504 = vmatprep.subr.mxu0 0.0
  %2505 = vmatpush1.xpose.msra.mxu0 0.0
  %2506 = vmatprep.subr.mxu0 0.0
  %2507 = vmatpush1.xpose.msra.mxu0 0.0
  %2508 = vmatprep.subr.mxu0 0.0
  %2509 = vmatpush1.xpose.msra.mxu0 0.0
  %2510 = vmatprep.subr.mxu0 0.0
  %2511 = vmatpush1.xpose.msra.mxu0 0.0
  %2512 = vmatprep.subr.mxu0 0.0
  %2513 = vmatpush1.xpose.msra.mxu0 0.0
  %2514 = vmatprep.subr.mxu0 0.0
  %2515 = vmatpush1.xpose.msra.mxu0 0.0
  %2516 = vmatprep.subr.mxu0 0.0
  %2517 = vmatpush1.xpose.msra.mxu0 0.0
  %2518 = vmatprep.subr.mxu0 0.0
  %2519 = vmatpush1.xpose.msra.mxu0 0.0
  %2520 = vmatprep.subr.mxu0 0.0
  %2521 = vmatpush1.xpose.msra.mxu0 0.0
  %2522 = vmatprep.subr.mxu0 0.0
  %2523 = vmatpush1.xpose.msra.mxu0 0.0
  %2524 = vmatprep.subr.mxu0 0.0
  %2525 = vmatpush1.xpose.msra.mxu0 0.0
  %2526 = vmatprep.subr.mxu0 0.0
  %2527 = vmatpush1.xpose.msra.mxu0 0.0
  %2528 = vmatprep.subr.mxu0 0.0
  %2529 = vmatpush1.xpose.msra.mxu0 0.0
  %2530 = vmatprep.subr.mxu0 0.0
  %2531 = vmatpush1.xpose.msra.mxu0 0.0
  %2532 = vmatprep.subr.mxu0 0.0
  %2533 = vmatpush1.xpose.msra.mxu0 0.0
  %2534 = vmatprep.mubr.f32.mxu0 0.0
  %2535 = vmatmul.mubr.f32.gmra.mrb[0].mxu0 %v2454
  %v2536 = vpop.f32.mrb[0].mxu0
  %v2537 = vadd.f32 0.0, %v2536
  %v2538 = vpop.f32.mrb[0].mxu0
  %2539 = vmatprep.mubr.f32.mxu0 0.0
  %2540 = vmatmul.mubr.f32.gmra.mrb[0].mxu0 %v2456
  %v2541 = vpop.f32.mrb[0].mxu0
  %v2542 = vadd.f32 0.0, %v2541
  %v2543 = vpop.f32.mrb[0].mxu0
  %2544 = vmatprep.mubr.f32.mxu0 0.0
  %2545 = vmatmul.mubr.f32.gmra.mrb[0].mxu0 %v2458
  %v2546 = vpop.f32.mrb[0].mxu0
  %v2547 = vadd.f32 0.0, %v2546
  %v2548 = vpop.f32.mrb[0].mxu0
  %2549 = vmatprep.mubr.f32.mxu0 0.0
  %2550 = vmatmul.mubr.f32.gmra.mrb[0].mxu0 %v2460
  %v2551 = vpop.f32.mrb[0].mxu0
  %v2552 = vadd.f32 0.0, %v2551
  %v2553 = vpop.f32.mrb[0].mxu0
  %2554 = vdwg.mxu0
  %2555 = vrot.lane.b32.xlu0 %v1077, 112
  %v2556 = vpop.permute.xlu0 %2555
  %2557 = vrot.lane.b32.xlu0 %v1082, 112
  %v2558 = vpop.permute.xlu0 %2557
  %2559 = vrot.lane.b32.xlu0 %v1087, 112
  %v2560 = vpop.permute.xlu0 %2559
  %2561 = vrot.lane.b32.xlu0 %v1092, 112
  %v2562 = vpop.permute.xlu0 %2561
  %2563 = vrot.lane.b32.xlu0 %v188, 112
  %v2564 = vpop.permute.xlu0 %2563
  %2565 = vrot.lane.b32.xlu0 %v193, 112
  %v2566 = vpop.permute.xlu0 %2565
  %2567 = vrot.lane.b32.xlu0 %v198, 112
  %v2568 = vpop.permute.xlu0 %2567
  %2569 = vrot.lane.b32.xlu0 %v203, 112
  %v2570 = vpop.permute.xlu0 %2569
  %v2571 = vsel %vm1095, %v2556, 0
  %v2573 = vsel %vm1095, %v2558, 0
  %v2575 = vsel %vm1095, %v2560, 0
  %v2577 = vsel %vm1095, %v2562, 0
  %v2579 = vsel %vm1095, %v2564, 0
  %v2581 = vsel %vm1095, %v2566, 0
  %v2583 = vsel %vm1095, %v2568, 0
  %v2585 = vsel %vm1095, %v2570, 0
  %2587 = vmatprep.subr.mxu0 0.0
  %2588 = vmatpush1.xpose.msra.mxu0 %v2579
  %2589 = vmatprep.subr.mxu0 0.0
  %2590 = vmatpush1.xpose.msra.mxu0 %v2581
  %2591 = vmatprep.subr.mxu0 0.0
  %2592 = vmatpush1.xpose.msra.mxu0 %v2583
  %2593 = vmatprep.subr.mxu0 0.0
  %2594 = vmatpush1.xpose.msra.mxu0 %v2585
  %2595 = vmatprep.subr.mxu0 0.0
  %2596 = vmatpush1.xpose.msra.mxu0 0.0
  %2597 = vmatprep.subr.mxu0 0.0
  %2598 = vmatpush1.xpose.msra.mxu0 0.0
  %2599 = vmatprep.subr.mxu0 0.0
  %2600 = vmatpush1.xpose.msra.mxu0 0.0
  %2601 = vmatprep.subr.mxu0 0.0
  %2602 = vmatpush1.xpose.msra.mxu0 0.0
  %2603 = vmatprep.subr.mxu0 0.0
  %2604 = vmatpush1.xpose.msra.mxu0 0.0
  %2605 = vmatprep.subr.mxu0 0.0
  %2606 = vmatpush1.xpose.msra.mxu0 0.0
  %2607 = vmatprep.subr.mxu0 0.0
  %2608 = vmatpush1.xpose.msra.mxu0 0.0
  %2609 = vmatprep.subr.mxu0 0.0
  %2610 = vmatpush1.xpose.msra.mxu0 0.0
  %2611 = vmatprep.subr.mxu0 0.0
  %2612 = vmatpush1.xpose.msra.mxu0 0.0
  %2613 = vmatprep.subr.mxu0 0.0
  %2614 = vmatpush1.xpose.msra.mxu0 0.0
  %2615 = vmatprep.subr.mxu0 0.0
  %2616 = vmatpush1.xpose.msra.mxu0 0.0
  %2617 = vmatprep.subr.mxu0 0.0
  %2618 = vmatpush1.xpose.msra.mxu0 0.0
  %2619 = vmatprep.subr.mxu0 0.0
  %2620 = vmatpush1.xpose.msra.mxu0 0.0
  %2621 = vmatprep.subr.mxu0 0.0
  %2622 = vmatpush1.xpose.msra.mxu0 0.0
  %2623 = vmatprep.subr.mxu0 0.0
  %2624 = vmatpush1.xpose.msra.mxu0 0.0
  %2625 = vmatprep.subr.mxu0 0.0
  %2626 = vmatpush1.xpose.msra.mxu0 0.0
  %2627 = vmatprep.subr.mxu0 0.0
  %2628 = vmatpush1.xpose.msra.mxu0 0.0
  %2629 = vmatprep.subr.mxu0 0.0
  %2630 = vmatpush1.xpose.msra.mxu0 0.0
  %2631 = vmatprep.subr.mxu0 0.0
  %2632 = vmatpush1.xpose.msra.mxu0 0.0
  %2633 = vmatprep.subr.mxu0 0.0
  %2634 = vmatpush1.xpose.msra.mxu0 0.0
  %2635 = vmatprep.subr.mxu0 0.0
  %2636 = vmatpush1.xpose.msra.mxu0 0.0
  %2637 = vmatprep.subr.mxu0 0.0
  %2638 = vmatpush1.xpose.msra.mxu0 0.0
  %2639 = vmatprep.subr.mxu0 0.0
  %2640 = vmatpush1.xpose.msra.mxu0 0.0
  %2641 = vmatprep.subr.mxu0 0.0
  %2642 = vmatpush1.xpose.msra.mxu0 0.0
  %2643 = vmatprep.subr.mxu0 0.0
  %2644 = vmatpush1.xpose.msra.mxu0 0.0
  %2645 = vmatprep.subr.mxu0 0.0
  %2646 = vmatpush1.xpose.msra.mxu0 0.0
  %2647 = vmatprep.subr.mxu0 0.0
  %2648 = vmatpush1.xpose.msra.mxu0 0.0
  %2649 = vmatprep.subr.mxu0 0.0
  %2650 = vmatpush1.xpose.msra.mxu0 0.0
  %2651 = vmatprep.mubr.f32.mxu0 0.0
  %2652 = vmatmul.mubr.f32.gmra.mrb[0].mxu0 %v2571
  %v2653 = vpop.f32.mrb[0].mxu0
  %v2654 = vadd.f32 0.0, %v2653
  %v2655 = vpop.f32.mrb[0].mxu0
  %2656 = vmatprep.mubr.f32.mxu0 0.0
  %2657 = vmatmul.mubr.f32.gmra.mrb[0].mxu0 %v2573
  %v2658 = vpop.f32.mrb[0].mxu0
  %v2659 = vadd.f32 0.0, %v2658
  %v2660 = vpop.f32.mrb[0].mxu0
  %2661 = vmatprep.mubr.f32.mxu0 0.0
  %2662 = vmatmul.mubr.f32.gmra.mrb[0].mxu0 %v2575
  %v2663 = vpop.f32.mrb[0].mxu0
  %v2664 = vadd.f32 0.0, %v2663
  %v2665 = vpop.f32.mrb[0].mxu0
  %2666 = vmatprep.mubr.f32.mxu0 0.0
  %2667 = vmatmul.mubr.f32.gmra.mrb[0].mxu0 %v2577
  %v2668 = vpop.f32.mrb[0].mxu0
  %v2669 = vadd.f32 0.0, %v2668
  %v2670 = vpop.f32.mrb[0].mxu0
  %2671 = vdwg.mxu0
  %v2672 = vmul.f32 %v2537, 0.35355338
  %v2673 = vmul.f32 %v2542, 0.35355338
  %v2674 = vmul.f32 %v2547, 0.35355338
  %v2675 = vmul.f32 %v2552, 0.35355338
  %v2676 = vmul.f32 %v2654, 0.35355338
  %v2677 = vmul.f32 %v2659, 0.35355338
  %v2678 = vmul.f32 %v2664, 0.35355338
  %v2679 = vmul.f32 %v2669, 0.35355338
  %v2680 = vsel %vm1323, %v2672, -1e+30
  %v2681 = vsel %vm1323, %v2673, -1e+30
  %v2682 = vsel %vm1323, %v2674, -1e+30
  %v2683 = vsel %vm1323, %v2675, -1e+30
  %v2684 = vsel %vm1323, %v2676, -1e+30
  %v2685 = vsel %vm1323, %v2677, -1e+30
  %v2686 = vsel %vm1323, %v2678, -1e+30
  %v2687 = vsel %vm1323, %v2679, -1e+30
  %v2688 = vsel %vm76, %v2680, -inf
  %2689 = vmax.xlane.f32.xlu0 %v2688
  %v2690 = vpop.xlane.xlu0 %2689
  %v2691 = vsel %vm76, %v2681, -inf
  %2692 = vmax.xlane.f32.xlu0 %v2691
  %v2693 = vpop.xlane.xlu0 %2692
  %v2694 = vsel %vm76, %v2682, -inf
  %2695 = vmax.xlane.f32.xlu0 %v2694
  %v2696 = vpop.xlane.xlu0 %2695
  %v2697 = vsel %vm76, %v2683, -inf
  %2698 = vmax.xlane.f32.xlu0 %v2697
  %v2699 = vpop.xlane.xlu0 %2698
  %v2700 = vsel %vm76, %v2684, -inf
  %2701 = vmax.xlane.f32.xlu0 %v2700
  %v2702 = vpop.xlane.xlu0 %2701
  %v2703 = vsel %vm76, %v2685, -inf
  %2704 = vmax.xlane.f32.xlu0 %v2703
  %v2705 = vpop.xlane.xlu0 %2704
  %v2706 = vsel %vm76, %v2686, -inf
  %2707 = vmax.xlane.f32.xlu0 %v2706
  %v2708 = vpop.xlane.xlu0 %2707
  %v2709 = vsel %vm76, %v2687, -inf
  %2710 = vmax.xlane.f32.xlu0 %v2709
  %v2711 = vpop.xlane.xlu0 %2710
  %v2712 = vsub.f32 %v2680, %v2690
  %v2713 = vsub.f32 %v2681, %v2693
  %v2714 = vsub.f32 %v2682, %v2696
  %v2715 = vsub.f32 %v2683, %v2699
  %v2716 = vsub.f32 %v2684, %v2702
  %v2717 = vsub.f32 %v2685, %v2705
  %v2718 = vsub.f32 %v2686, %v2708
  %v2719 = vsub.f32 %v2687, %v2711
  %v2720 = vmul.f32 %v2712, 1.442695
  %v2721 = vpow.pop %v2720
  %v2722 = vmul.f32 %v2713, 1.442695
  %v2723 = vpow.pop %v2722
  %v2724 = vmul.f32 %v2714, 1.442695
  %v2725 = vpow.pop %v2724
  %v2726 = vmul.f32 %v2715, 1.442695
  %v2727 = vpow.pop %v2726
  %v2728 = vmul.f32 %v2716, 1.442695
  %v2729 = vpow.pop %v2728
  %v2730 = vmul.f32 %v2717, 1.442695
  %v2731 = vpow.pop %v2730
  %v2732 = vmul.f32 %v2718, 1.442695
  %v2733 = vpow.pop %v2732
  %v2734 = vmul.f32 %v2719, 1.442695
  %v2735 = vpow.pop %v2734
  %v2736 = vsel %vm76, %v2721, 0.0
  %2737 = vadd.xlane.f32.xlu0 %v2736
  %v2738 = vpop.xlane.xlu0 %2737
  %v2739 = vsel %vm76, %v2723, 0.0
  %2740 = vadd.xlane.f32.xlu0 %v2739
  %v2741 = vpop.xlane.xlu0 %2740
  %v2742 = vsel %vm76, %v2725, 0.0
  %2743 = vadd.xlane.f32.xlu0 %v2742
  %v2744 = vpop.xlane.xlu0 %2743
  %v2745 = vsel %vm76, %v2727, 0.0
  %2746 = vadd.xlane.f32.xlu0 %v2745
  %v2747 = vpop.xlane.xlu0 %2746
  %v2748 = vsel %vm76, %v2729, 0.0
  %2749 = vadd.xlane.f32.xlu0 %v2748
  %v2750 = vpop.xlane.xlu0 %2749
  %v2751 = vsel %vm76, %v2731, 0.0
  %2752 = vadd.xlane.f32.xlu0 %v2751
  %v2753 = vpop.xlane.xlu0 %2752
  %v2754 = vsel %vm76, %v2733, 0.0
  %2755 = vadd.xlane.f32.xlu0 %v2754
  %v2756 = vpop.xlane.xlu0 %2755
  %v2757 = vsel %vm76, %v2735, 0.0
  %2758 = vadd.xlane.f32.xlu0 %v2757
  %v2759 = vpop.xlane.xlu0 %2758
  %v2760 = vrcp.pop %v2738
  %v2761 = vrcp.pop %v2741
  %v2762 = vrcp.pop %v2744
  %v2763 = vrcp.pop %v2747
  %v2764 = vrcp.pop %v2750
  %v2765 = vrcp.pop %v2753
  %v2766 = vrcp.pop %v2756
  %v2767 = vrcp.pop %v2759
  %v2768 = vmul.f32 %v2721, %v2760
  %v2769 = vmul.f32 %v2723, %v2761
  %v2770 = vmul.f32 %v2725, %v2762
  %v2771 = vmul.f32 %v2727, %v2763
  %v2772 = vmul.f32 %v2729, %v2764
  %v2773 = vmul.f32 %v2731, %v2765
  %v2774 = vmul.f32 %v2733, %v2766
  %v2775 = vmul.f32 %v2735, %v2767
  %2776 = vrot.lane.b32.xlu0 %v282, 112
  %v2777 = vpop.permute.xlu0 %2776
  %2778 = vrot.lane.b32.xlu0 %v287, 112
  %v2779 = vpop.permute.xlu0 %2778
  %2780 = vrot.lane.b32.xlu0 %v292, 112
  %v2781 = vpop.permute.xlu0 %2780
  %2782 = vrot.lane.b32.xlu0 %v297, 112
  %v2783 = vpop.permute.xlu0 %2782
  %v2789 = vsel %vm76, %v2768, 0
  %v2792 = vsel %vm76, %v2769, 0
  %v2795 = vsel %vm76, %v2770, 0
  %v2798 = vsel %vm76, %v2771, 0
  %2800 = vmatprep.subr.mxu0 0.0
  %2801 = vmatpush1.msra.mxu0 %v2777
  %2802 = vmatprep.subr.mxu0 0.0
  %2803 = vmatpush1.msra.mxu0 %v2779
  %2804 = vmatprep.subr.mxu0 0.0
  %2805 = vmatpush1.msra.mxu0 %v2781
  %2806 = vmatprep.subr.mxu0 0.0
  %2807 = vmatpush1.msra.mxu0 %v2783
  %2808 = vmatprep.subr.mxu0 0.0
  %2809 = vmatpush1.msra.mxu0 0.0
  %2810 = vmatprep.subr.mxu0 0.0
  %2811 = vmatpush1.msra.mxu0 0.0
  %2812 = vmatprep.subr.mxu0 0.0
  %2813 = vmatpush1.msra.mxu0 0.0
  %2814 = vmatprep.subr.mxu0 0.0
  %2815 = vmatpush1.msra.mxu0 0.0
  %2816 = vmatprep.subr.mxu0 0.0
  %2817 = vmatpush1.msra.mxu0 0.0
  %2818 = vmatprep.subr.mxu0 0.0
  %2819 = vmatpush1.msra.mxu0 0.0
  %2820 = vmatprep.subr.mxu0 0.0
  %2821 = vmatpush1.msra.mxu0 0.0
  %2822 = vmatprep.subr.mxu0 0.0
  %2823 = vmatpush1.msra.mxu0 0.0
  %2824 = vmatprep.subr.mxu0 0.0
  %2825 = vmatpush1.msra.mxu0 0.0
  %2826 = vmatprep.subr.mxu0 0.0
  %2827 = vmatpush1.msra.mxu0 0.0
  %2828 = vmatprep.subr.mxu0 0.0
  %2829 = vmatpush1.msra.mxu0 0.0
  %2830 = vmatprep.subr.mxu0 0.0
  %2831 = vmatpush1.msra.mxu0 0.0
  %2832 = vmatprep.subr.mxu0 0.0
  %2833 = vmatpush1.msra.mxu0 0.0
  %2834 = vmatprep.subr.mxu0 0.0
  %2835 = vmatpush1.msra.mxu0 0.0
  %2836 = vmatprep.subr.mxu0 0.0
  %2837 = vmatpush1.msra.mxu0 0.0
  %2838 = vmatprep.subr.mxu0 0.0
  %2839 = vmatpush1.msra.mxu0 0.0
  %2840 = vmatprep.subr.mxu0 0.0
  %2841 = vmatpush1.msra.mxu0 0.0
  %2842 = vmatprep.subr.mxu0 0.0
  %2843 = vmatpush1.msra.mxu0 0.0
  %2844 = vmatprep.subr.mxu0 0.0
  %2845 = vmatpush1.msra.mxu0 0.0
  %2846 = vmatprep.subr.mxu0 0.0
  %2847 = vmatpush1.msra.mxu0 0.0
  %2848 = vmatprep.subr.mxu0 0.0
  %2849 = vmatpush1.msra.mxu0 0.0
  %2850 = vmatprep.subr.mxu0 0.0
  %2851 = vmatpush1.msra.mxu0 0.0
  %2852 = vmatprep.subr.mxu0 0.0
  %2853 = vmatpush1.msra.mxu0 0.0
  %2854 = vmatprep.subr.mxu0 0.0
  %2855 = vmatpush1.msra.mxu0 0.0
  %2856 = vmatprep.subr.mxu0 0.0
  %2857 = vmatpush1.msra.mxu0 0.0
  %2858 = vmatprep.subr.mxu0 0.0
  %2859 = vmatpush1.msra.mxu0 0.0
  %2860 = vmatprep.subr.mxu0 0.0
  %2861 = vmatpush1.msra.mxu0 0.0
  %2862 = vmatprep.subr.mxu0 0.0
  %2863 = vmatpush1.msra.mxu0 0.0
  %2864 = vmatprep.mubr.f32.mxu0 0.0
  %2865 = vmatmul.mubr.f32.gmra.mrb[0].mxu0 %v2789
  %v2866 = vpop.f32.mrb[0].mxu0
  %v2867 = vadd.f32 0.0, %v2866
  %v2868 = vpop.f32.mrb[0].mxu0
  %2869 = vmatprep.mubr.f32.mxu0 0.0
  %2870 = vmatmul.mubr.f32.gmra.mrb[0].mxu0 %v2792
  %v2871 = vpop.f32.mrb[0].mxu0
  %v2872 = vadd.f32 0.0, %v2871
  %v2873 = vpop.f32.mrb[0].mxu0
  %2874 = vmatprep.mubr.f32.mxu0 0.0
  %2875 = vmatmul.mubr.f32.gmra.mrb[0].mxu0 %v2795
  %v2876 = vpop.f32.mrb[0].mxu0
  %v2877 = vadd.f32 0.0, %v2876
  %v2878 = vpop.f32.mrb[0].mxu0
  %2879 = vmatprep.mubr.f32.mxu0 0.0
  %2880 = vmatmul.mubr.f32.gmra.mrb[0].mxu0 %v2798
  %v2881 = vpop.f32.mrb[0].mxu0
  %v2882 = vadd.f32 0.0, %v2881
  %v2883 = vpop.f32.mrb[0].mxu0
  %2884 = vdwg.mxu0
  %2885 = vrot.lane.b32.xlu0 %v302, 112
  %v2886 = vpop.permute.xlu0 %2885
  %2887 = vrot.lane.b32.xlu0 %v307, 112
  %v2888 = vpop.permute.xlu0 %2887
  %2889 = vrot.lane.b32.xlu0 %v312, 112
  %v2890 = vpop.permute.xlu0 %2889
  %2891 = vrot.lane.b32.xlu0 %v317, 112
  %v2892 = vpop.permute.xlu0 %2891
  %v2898 = vsel %vm76, %v2772, 0
  %v2901 = vsel %vm76, %v2773, 0
  %v2904 = vsel %vm76, %v2774, 0
  %v2907 = vsel %vm76, %v2775, 0
  %2909 = vmatprep.subr.mxu0 0.0
  %2910 = vmatpush1.msra.mxu0 %v2886
  %2911 = vmatprep.subr.mxu0 0.0
  %2912 = vmatpush1.msra.mxu0 %v2888
  %2913 = vmatprep.subr.mxu0 0.0
  %2914 = vmatpush1.msra.mxu0 %v2890
  %2915 = vmatprep.subr.mxu0 0.0
  %2916 = vmatpush1.msra.mxu0 %v2892
  %2917 = vmatprep.subr.mxu0 0.0
  %2918 = vmatpush1.msra.mxu0 0.0
  %2919 = vmatprep.subr.mxu0 0.0
  %2920 = vmatpush1.msra.mxu0 0.0
  %2921 = vmatprep.subr.mxu0 0.0
  %2922 = vmatpush1.msra.mxu0 0.0
  %2923 = vmatprep.subr.mxu0 0.0
  %2924 = vmatpush1.msra.mxu0 0.0
  %2925 = vmatprep.subr.mxu0 0.0
  %2926 = vmatpush1.msra.mxu0 0.0
  %2927 = vmatprep.subr.mxu0 0.0
  %2928 = vmatpush1.msra.mxu0 0.0
  %2929 = vmatprep.subr.mxu0 0.0
  %2930 = vmatpush1.msra.mxu0 0.0
  %2931 = vmatprep.subr.mxu0 0.0
  %2932 = vmatpush1.msra.mxu0 0.0
  %2933 = vmatprep.subr.mxu0 0.0
  %2934 = vmatpush1.msra.mxu0 0.0
  %2935 = vmatprep.subr.mxu0 0.0
  %2936 = vmatpush1.msra.mxu0 0.0
  %2937 = vmatprep.subr.mxu0 0.0
  %2938 = vmatpush1.msra.mxu0 0.0
  %2939 = vmatprep.subr.mxu0 0.0
  %2940 = vmatpush1.msra.mxu0 0.0
  %2941 = vmatprep.subr.mxu0 0.0
  %2942 = vmatpush1.msra.mxu0 0.0
  %2943 = vmatprep.subr.mxu0 0.0
  %2944 = vmatpush1.msra.mxu0 0.0
  %2945 = vmatprep.subr.mxu0 0.0
  %2946 = vmatpush1.msra.mxu0 0.0
  %2947 = vmatprep.subr.mxu0 0.0
  %2948 = vmatpush1.msra.mxu0 0.0
  %2949 = vmatprep.subr.mxu0 0.0
  %2950 = vmatpush1.msra.mxu0 0.0
  %2951 = vmatprep.subr.mxu0 0.0
  %2952 = vmatpush1.msra.mxu0 0.0
  %2953 = vmatprep.subr.mxu0 0.0
  %2954 = vmatpush1.msra.mxu0 0.0
  %2955 = vmatprep.subr.mxu0 0.0
  %2956 = vmatpush1.msra.mxu0 0.0
  %2957 = vmatprep.subr.mxu0 0.0
  %2958 = vmatpush1.msra.mxu0 0.0
  %2959 = vmatprep.subr.mxu0 0.0
  %2960 = vmatpush1.msra.mxu0 0.0
  %2961 = vmatprep.subr.mxu0 0.0
  %2962 = vmatpush1.msra.mxu0 0.0
  %2963 = vmatprep.subr.mxu0 0.0
  %2964 = vmatpush1.msra.mxu0 0.0
  %2965 = vmatprep.subr.mxu0 0.0
  %2966 = vmatpush1.msra.mxu0 0.0
  %2967 = vmatprep.subr.mxu0 0.0
  %2968 = vmatpush1.msra.mxu0 0.0
  %2969 = vmatprep.subr.mxu0 0.0
  %2970 = vmatpush1.msra.mxu0 0.0
  %2971 = vmatprep.subr.mxu0 0.0
  %2972 = vmatpush1.msra.mxu0 0.0
  %2973 = vmatprep.mubr.f32.mxu0 0.0
  %2974 = vmatmul.mubr.f32.gmra.mrb[0].mxu0 %v2898
  %v2975 = vpop.f32.mrb[0].mxu0
  %v2976 = vadd.f32 0.0, %v2975
  %v2977 = vpop.f32.mrb[0].mxu0
  %2978 = vmatprep.mubr.f32.mxu0 0.0
  %2979 = vmatmul.mubr.f32.gmra.mrb[0].mxu0 %v2901
  %v2980 = vpop.f32.mrb[0].mxu0
  %v2981 = vadd.f32 0.0, %v2980
  %v2982 = vpop.f32.mrb[0].mxu0
  %2983 = vmatprep.mubr.f32.mxu0 0.0
  %2984 = vmatmul.mubr.f32.gmra.mrb[0].mxu0 %v2904
  %v2985 = vpop.f32.mrb[0].mxu0
  %v2986 = vadd.f32 0.0, %v2985
  %v2987 = vpop.f32.mrb[0].mxu0
  %2988 = vmatprep.mubr.f32.mxu0 0.0
  %2989 = vmatmul.mubr.f32.gmra.mrb[0].mxu0 %v2907
  %v2990 = vpop.f32.mrb[0].mxu0
  %v2991 = vadd.f32 0.0, %v2990
  %v2992 = vpop.f32.mrb[0].mxu0
  %2993 = vdwg.mxu0
  %v2994 = vld [vmem:[%s2 + $0x70] sm:$0xff]
  %v2996 = vsel %vm1095, %v2867, 0
  %v2999 = vsel %vm1095, %v2872, 0
  %v3002 = vsel %vm1095, %v2877, 0
  %v3005 = vsel %vm1095, %v2882, 0
  %v3008 = vsel %vm1095, %v2976, 0
  %v3011 = vsel %vm1095, %v2981, 0
  %v3014 = vsel %vm1095, %v2986, 0
  %v3017 = vsel %vm1095, %v2991, 0
  %3019 = vmatprep.subr.mxu0 0.0
  %3020 = vmatpush1.msra.mxu0 %v2994
  %3021 = vmatprep.subr.mxu0 0.0
  %3022 = vmatpush1.msra.mxu0 0.0
  %3023 = vmatprep.subr.mxu0 0.0
  %3024 = vmatpush1.msra.mxu0 0.0
  %3025 = vmatprep.subr.mxu0 0.0
  %3026 = vmatpush1.msra.mxu0 0.0
  %3027 = vmatprep.subr.mxu0 0.0
  %3028 = vmatpush1.msra.mxu0 0.0
  %3029 = vmatprep.subr.mxu0 0.0
  %3030 = vmatpush1.msra.mxu0 0.0
  %3031 = vmatprep.subr.mxu0 0.0
  %3032 = vmatpush1.msra.mxu0 0.0
  %3033 = vmatprep.subr.mxu0 0.0
  %3034 = vmatpush1.msra.mxu0 0.0
  %3035 = vmatprep.subr.mxu0 0.0
  %3036 = vmatpush1.msra.mxu0 0.0
  %3037 = vmatprep.subr.mxu0 0.0
  %3038 = vmatpush1.msra.mxu0 0.0
  %3039 = vmatprep.subr.mxu0 0.0
  %3040 = vmatpush1.msra.mxu0 0.0
  %3041 = vmatprep.subr.mxu0 0.0
  %3042 = vmatpush1.msra.mxu0 0.0
  %3043 = vmatprep.subr.mxu0 0.0
  %3044 = vmatpush1.msra.mxu0 0.0
  %3045 = vmatprep.subr.mxu0 0.0
  %3046 = vmatpush1.msra.mxu0 0.0
  %3047 = vmatprep.subr.mxu0 0.0
  %3048 = vmatpush1.msra.mxu0 0.0
  %3049 = vmatprep.subr.mxu0 0.0
  %3050 = vmatpush1.msra.mxu0 0.0
  %3051 = vmatprep.subr.mxu0 0.0
  %3052 = vmatpush1.msra.mxu0 0.0
  %3053 = vmatprep.subr.mxu0 0.0
  %3054 = vmatpush1.msra.mxu0 0.0
  %3055 = vmatprep.subr.mxu0 0.0
  %3056 = vmatpush1.msra.mxu0 0.0
  %3057 = vmatprep.subr.mxu0 0.0
  %3058 = vmatpush1.msra.mxu0 0.0
  %3059 = vmatprep.subr.mxu0 0.0
  %3060 = vmatpush1.msra.mxu0 0.0
  %3061 = vmatprep.subr.mxu0 0.0
  %3062 = vmatpush1.msra.mxu0 0.0
  %3063 = vmatprep.subr.mxu0 0.0
  %3064 = vmatpush1.msra.mxu0 0.0
  %3065 = vmatprep.subr.mxu0 0.0
  %3066 = vmatpush1.msra.mxu0 0.0
  %3067 = vmatprep.subr.mxu0 0.0
  %3068 = vmatpush1.msra.mxu0 0.0
  %3069 = vmatprep.subr.mxu0 0.0
  %3070 = vmatpush1.msra.mxu0 0.0
  %3071 = vmatprep.subr.mxu0 0.0
  %3072 = vmatpush1.msra.mxu0 0.0
  %3073 = vmatprep.subr.mxu0 0.0
  %3074 = vmatpush1.msra.mxu0 0.0
  %3075 = vmatprep.subr.mxu0 0.0
  %3076 = vmatpush1.msra.mxu0 0.0
  %3077 = vmatprep.subr.mxu0 0.0
  %3078 = vmatpush1.msra.mxu0 0.0
  %3079 = vmatprep.subr.mxu0 0.0
  %3080 = vmatpush1.msra.mxu0 0.0
  %3081 = vmatprep.subr.mxu0 0.0
  %3082 = vmatpush1.msra.mxu0 0.0
  %3083 = vmatprep.mubr.f32.mxu0 0.0
  %3084 = vmatmul.mubr.f32.gmra.mrb[0].mxu0 %v2996
  %v3085 = vpop.f32.mrb[0].mxu0
  %v3086 = vadd.f32 0.0, %v3085
  %v3087 = vpop.f32.mrb[0].mxu0
  %3088 = vmatprep.mubr.f32.mxu0 0.0
  %3089 = vmatmul.mubr.f32.gmra.mrb[0].mxu0 %v2999
  %v3090 = vpop.f32.mrb[0].mxu0
  %v3091 = vadd.f32 0.0, %v3090
  %v3092 = vpop.f32.mrb[0].mxu0
  %3093 = vmatprep.mubr.f32.mxu0 0.0
  %3094 = vmatmul.mubr.f32.gmra.mrb[0].mxu0 %v3002
  %v3095 = vpop.f32.mrb[0].mxu0
  %v3096 = vadd.f32 0.0, %v3095
  %v3097 = vpop.f32.mrb[0].mxu0
  %3098 = vmatprep.mubr.f32.mxu0 0.0
  %3099 = vmatmul.mubr.f32.gmra.mrb[0].mxu0 %v3005
  %v3100 = vpop.f32.mrb[0].mxu0
  %v3101 = vadd.f32 0.0, %v3100
  %v3102 = vpop.f32.mrb[0].mxu0
  %3103 = vmatprep.mubr.f32.mxu0 0.0
  %3104 = vmatmul.mubr.f32.gmra.mrb[0].mxu0 %v3008
  %v3105 = vpop.f32.mrb[0].mxu0
  %v3106 = vadd.f32 0.0, %v3105
  %v3107 = vpop.f32.mrb[0].mxu0
  %3108 = vmatprep.mubr.f32.mxu0 0.0
  %3109 = vmatmul.mubr.f32.gmra.mrb[0].mxu0 %v3011
  %v3110 = vpop.f32.mrb[0].mxu0
  %v3111 = vadd.f32 0.0, %v3110
  %v3112 = vpop.f32.mrb[0].mxu0
  %3113 = vmatprep.mubr.f32.mxu0 0.0
  %3114 = vmatmul.mubr.f32.gmra.mrb[0].mxu0 %v3014
  %v3115 = vpop.f32.mrb[0].mxu0
  %v3116 = vadd.f32 0.0, %v3115
  %v3117 = vpop.f32.mrb[0].mxu0
  %3118 = vmatprep.mubr.f32.mxu0 0.0
  %3119 = vmatmul.mubr.f32.gmra.mrb[0].mxu0 %v3017
  %v3120 = vpop.f32.mrb[0].mxu0
  %v3121 = vadd.f32 0.0, %v3120
  %v3122 = vpop.f32.mrb[0].mxu0
  %3123 = vdwg.mxu0
  %v3124 = vadd.f32 %v2400, %v3086
  %v3125 = vadd.f32 %v2405, %v3091
  %v3126 = vadd.f32 %v2410, %v3096
  %v3127 = vadd.f32 %v2415, %v3101
  %v3128 = vadd.f32 %v2420, %v3106
  %v3129 = vadd.f32 %v2425, %v3111
  %v3130 = vadd.f32 %v2430, %v3116
  %v3131 = vadd.f32 %v2435, %v3121
  %3132 = vrot.lane.b32.xlu0 %v1057, 104
  %v3133 = vpop.permute.xlu0 %3132
  %3134 = vrot.lane.b32.xlu0 %v1062, 104
  %v3135 = vpop.permute.xlu0 %3134
  %3136 = vrot.lane.b32.xlu0 %v1067, 104
  %v3137 = vpop.permute.xlu0 %3136
  %3138 = vrot.lane.b32.xlu0 %v1072, 104
  %v3139 = vpop.permute.xlu0 %3138
  %3140 = vrot.lane.b32.xlu0 %v168, 104
  %v3141 = vpop.permute.xlu0 %3140
  %3142 = vrot.lane.b32.xlu0 %v173, 104
  %v3143 = vpop.permute.xlu0 %3142
  %3144 = vrot.lane.b32.xlu0 %v178, 104
  %v3145 = vpop.permute.xlu0 %3144
  %3146 = vrot.lane.b32.xlu0 %v183, 104
  %v3147 = vpop.permute.xlu0 %3146
  %v3148 = vsel %vm1095, %v3133, 0
  %v3150 = vsel %vm1095, %v3135, 0
  %v3152 = vsel %vm1095, %v3137, 0
  %v3154 = vsel %vm1095, %v3139, 0
  %v3156 = vsel %vm1095, %v3141, 0
  %v3158 = vsel %vm1095, %v3143, 0
  %v3160 = vsel %vm1095, %v3145, 0
  %v3162 = vsel %vm1095, %v3147, 0
  %3164 = vmatprep.subr.mxu0 0.0
  %3165 = vmatpush1.xpose.msra.mxu0 %v3156
  %3166 = vmatprep.subr.mxu0 0.0
  %3167 = vmatpush1.xpose.msra.mxu0 %v3158
  %3168 = vmatprep.subr.mxu0 0.0
  %3169 = vmatpush1.xpose.msra.mxu0 %v3160
  %3170 = vmatprep.subr.mxu0 0.0
  %3171 = vmatpush1.xpose.msra.mxu0 %v3162
  %3172 = vmatprep.subr.mxu0 0.0
  %3173 = vmatpush1.xpose.msra.mxu0 0.0
  %3174 = vmatprep.subr.mxu0 0.0
  %3175 = vmatpush1.xpose.msra.mxu0 0.0
  %3176 = vmatprep.subr.mxu0 0.0
  %3177 = vmatpush1.xpose.msra.mxu0 0.0
  %3178 = vmatprep.subr.mxu0 0.0
  %3179 = vmatpush1.xpose.msra.mxu0 0.0
  %3180 = vmatprep.subr.mxu0 0.0
  %3181 = vmatpush1.xpose.msra.mxu0 0.0
  %3182 = vmatprep.subr.mxu0 0.0
  %3183 = vmatpush1.xpose.msra.mxu0 0.0
  %3184 = vmatprep.subr.mxu0 0.0
  %3185 = vmatpush1.xpose.msra.mxu0 0.0
  %3186 = vmatprep.subr.mxu0 0.0
  %3187 = vmatpush1.xpose.msra.mxu0 0.0
  %3188 = vmatprep.subr.mxu0 0.0
  %3189 = vmatpush1.xpose.msra.mxu0 0.0
  %3190 = vmatprep.subr.mxu0 0.0
  %3191 = vmatpush1.xpose.msra.mxu0 0.0
  %3192 = vmatprep.subr.mxu0 0.0
  %3193 = vmatpush1.xpose.msra.mxu0 0.0
  %3194 = vmatprep.subr.mxu0 0.0
  %3195 = vmatpush1.xpose.msra.mxu0 0.0
  %3196 = vmatprep.subr.mxu0 0.0
  %3197 = vmatpush1.xpose.msra.mxu0 0.0
  %3198 = vmatprep.subr.mxu0 0.0
  %3199 = vmatpush1.xpose.msra.mxu0 0.0
  %3200 = vmatprep.subr.mxu0 0.0
  %3201 = vmatpush1.xpose.msra.mxu0 0.0
  %3202 = vmatprep.subr.mxu0 0.0
  %3203 = vmatpush1.xpose.msra.mxu0 0.0
  %3204 = vmatprep.subr.mxu0 0.0
  %3205 = vmatpush1.xpose.msra.mxu0 0.0
  %3206 = vmatprep.subr.mxu0 0.0
  %3207 = vmatpush1.xpose.msra.mxu0 0.0
  %3208 = vmatprep.subr.mxu0 0.0
  %3209 = vmatpush1.xpose.msra.mxu0 0.0
  %3210 = vmatprep.subr.mxu0 0.0
  %3211 = vmatpush1.xpose.msra.mxu0 0.0
  %3212 = vmatprep.subr.mxu0 0.0
  %3213 = vmatpush1.xpose.msra.mxu0 0.0
  %3214 = vmatprep.subr.mxu0 0.0
  %3215 = vmatpush1.xpose.msra.mxu0 0.0
  %3216 = vmatprep.subr.mxu0 0.0
  %3217 = vmatpush1.xpose.msra.mxu0 0.0
  %3218 = vmatprep.subr.mxu0 0.0
  %3219 = vmatpush1.xpose.msra.mxu0 0.0
  %3220 = vmatprep.subr.mxu0 0.0
  %3221 = vmatpush1.xpose.msra.mxu0 0.0
  %3222 = vmatprep.subr.mxu0 0.0
  %3223 = vmatpush1.xpose.msra.mxu0 0.0
  %3224 = vmatprep.subr.mxu0 0.0
  %3225 = vmatpush1.xpose.msra.mxu0 0.0
  %3226 = vmatprep.subr.mxu0 0.0
  %3227 = vmatpush1.xpose.msra.mxu0 0.0
  %3228 = vmatprep.mubr.f32.mxu0 0.0
  %3229 = vmatmul.mubr.f32.gmra.mrb[0].mxu0 %v3148
  %v3230 = vpop.f32.mrb[0].mxu0
  %v3231 = vadd.f32 0.0, %v3230
  %v3232 = vpop.f32.mrb[0].mxu0
  %3233 = vmatprep.mubr.f32.mxu0 0.0
  %3234 = vmatmul.mubr.f32.gmra.mrb[0].mxu0 %v3150
  %v3235 = vpop.f32.mrb[0].mxu0
  %v3236 = vadd.f32 0.0, %v3235
  %v3237 = vpop.f32.mrb[0].mxu0
  %3238 = vmatprep.mubr.f32.mxu0 0.0
  %3239 = vmatmul.mubr.f32.gmra.mrb[0].mxu0 %v3152
  %v3240 = vpop.f32.mrb[0].mxu0
  %v3241 = vadd.f32 0.0, %v3240
  %v3242 = vpop.f32.mrb[0].mxu0
  %3243 = vmatprep.mubr.f32.mxu0 0.0
  %3244 = vmatmul.mubr.f32.gmra.mrb[0].mxu0 %v3154
  %v3245 = vpop.f32.mrb[0].mxu0
  %v3246 = vadd.f32 0.0, %v3245
  %v3247 = vpop.f32.mrb[0].mxu0
  %3248 = vdwg.mxu0
  %3249 = vrot.lane.b32.xlu0 %v1077, 104
  %v3250 = vpop.permute.xlu0 %3249
  %3251 = vrot.lane.b32.xlu0 %v1082, 104
  %v3252 = vpop.permute.xlu0 %3251
  %3253 = vrot.lane.b32.xlu0 %v1087, 104
  %v3254 = vpop.permute.xlu0 %3253
  %3255 = vrot.lane.b32.xlu0 %v1092, 104
  %v3256 = vpop.permute.xlu0 %3255
  %3257 = vrot.lane.b32.xlu0 %v188, 104
  %v3258 = vpop.permute.xlu0 %3257
  %3259 = vrot.lane.b32.xlu0 %v193, 104
  %v3260 = vpop.permute.xlu0 %3259
  %3261 = vrot.lane.b32.xlu0 %v198, 104
  %v3262 = vpop.permute.xlu0 %3261
  %3263 = vrot.lane.b32.xlu0 %v203, 104
  %v3264 = vpop.permute.xlu0 %3263
  %v3265 = vsel %vm1095, %v3250, 0
  %v3267 = vsel %vm1095, %v3252, 0
  %v3269 = vsel %vm1095, %v3254, 0
  %v3271 = vsel %vm1095, %v3256, 0
  %v3273 = vsel %vm1095, %v3258, 0
  %v3275 = vsel %vm1095, %v3260, 0
  %v3277 = vsel %vm1095, %v3262, 0
  %v3279 = vsel %vm1095, %v3264, 0
  %3281 = vmatprep.subr.mxu0 0.0
  %3282 = vmatpush1.xpose.msra.mxu0 %v3273
  %3283 = vmatprep.subr.mxu0 0.0
  %3284 = vmatpush1.xpose.msra.mxu0 %v3275
  %3285 = vmatprep.subr.mxu0 0.0
  %3286 = vmatpush1.xpose.msra.mxu0 %v3277
  %3287 = vmatprep.subr.mxu0 0.0
  %3288 = vmatpush1.xpose.msra.mxu0 %v3279
  %3289 = vmatprep.subr.mxu0 0.0
  %3290 = vmatpush1.xpose.msra.mxu0 0.0
  %3291 = vmatprep.subr.mxu0 0.0
  %3292 = vmatpush1.xpose.msra.mxu0 0.0
  %3293 = vmatprep.subr.mxu0 0.0
  %3294 = vmatpush1.xpose.msra.mxu0 0.0
  %3295 = vmatprep.subr.mxu0 0.0
  %3296 = vmatpush1.xpose.msra.mxu0 0.0
  %3297 = vmatprep.subr.mxu0 0.0
  %3298 = vmatpush1.xpose.msra.mxu0 0.0
  %3299 = vmatprep.subr.mxu0 0.0
  %3300 = vmatpush1.xpose.msra.mxu0 0.0
  %3301 = vmatprep.subr.mxu0 0.0
  %3302 = vmatpush1.xpose.msra.mxu0 0.0
  %3303 = vmatprep.subr.mxu0 0.0
  %3304 = vmatpush1.xpose.msra.mxu0 0.0
  %3305 = vmatprep.subr.mxu0 0.0
  %3306 = vmatpush1.xpose.msra.mxu0 0.0
  %3307 = vmatprep.subr.mxu0 0.0
  %3308 = vmatpush1.xpose.msra.mxu0 0.0
  %3309 = vmatprep.subr.mxu0 0.0
  %3310 = vmatpush1.xpose.msra.mxu0 0.0
  %3311 = vmatprep.subr.mxu0 0.0
  %3312 = vmatpush1.xpose.msra.mxu0 0.0
  %3313 = vmatprep.subr.mxu0 0.0
  %3314 = vmatpush1.xpose.msra.mxu0 0.0
  %3315 = vmatprep.subr.mxu0 0.0
  %3316 = vmatpush1.xpose.msra.mxu0 0.0
  %3317 = vmatprep.subr.mxu0 0.0
  %3318 = vmatpush1.xpose.msra.mxu0 0.0
  %3319 = vmatprep.subr.mxu0 0.0
  %3320 = vmatpush1.xpose.msra.mxu0 0.0
  %3321 = vmatprep.subr.mxu0 0.0
  %3322 = vmatpush1.xpose.msra.mxu0 0.0
  %3323 = vmatprep.subr.mxu0 0.0
  %3324 = vmatpush1.xpose.msra.mxu0 0.0
  %3325 = vmatprep.subr.mxu0 0.0
  %3326 = vmatpush1.xpose.msra.mxu0 0.0
  %3327 = vmatprep.subr.mxu0 0.0
  %3328 = vmatpush1.xpose.msra.mxu0 0.0
  %3329 = vmatprep.subr.mxu0 0.0
  %3330 = vmatpush1.xpose.msra.mxu0 0.0
  %3331 = vmatprep.subr.mxu0 0.0
  %3332 = vmatpush1.xpose.msra.mxu0 0.0
  %3333 = vmatprep.subr.mxu0 0.0
  %3334 = vmatpush1.xpose.msra.mxu0 0.0
  %3335 = vmatprep.subr.mxu0 0.0
  %3336 = vmatpush1.xpose.msra.mxu0 0.0
  %3337 = vmatprep.subr.mxu0 0.0
  %3338 = vmatpush1.xpose.msra.mxu0 0.0
  %3339 = vmatprep.subr.mxu0 0.0
  %3340 = vmatpush1.xpose.msra.mxu0 0.0
  %3341 = vmatprep.subr.mxu0 0.0
  %3342 = vmatpush1.xpose.msra.mxu0 0.0
  %3343 = vmatprep.subr.mxu0 0.0
  %3344 = vmatpush1.xpose.msra.mxu0 0.0
  %3345 = vmatprep.mubr.f32.mxu0 0.0
  %3346 = vmatmul.mubr.f32.gmra.mrb[0].mxu0 %v3265
  %v3347 = vpop.f32.mrb[0].mxu0
  %v3348 = vadd.f32 0.0, %v3347
  %v3349 = vpop.f32.mrb[0].mxu0
  %3350 = vmatprep.mubr.f32.mxu0 0.0
  %3351 = vmatmul.mubr.f32.gmra.mrb[0].mxu0 %v3267
  %v3352 = vpop.f32.mrb[0].mxu0
  %v3353 = vadd.f32 0.0, %v3352
  %v3354 = vpop.f32.mrb[0].mxu0
  %3355 = vmatprep.mubr.f32.mxu0 0.0
  %3356 = vmatmul.mubr.f32.gmra.mrb[0].mxu0 %v3269
  %v3357 = vpop.f32.mrb[0].mxu0
  %v3358 = vadd.f32 0.0, %v3357
  %v3359 = vpop.f32.mrb[0].mxu0
  %3360 = vmatprep.mubr.f32.mxu0 0.0
  %3361 = vmatmul.mubr.f32.gmra.mrb[0].mxu0 %v3271
  %v3362 = vpop.f32.mrb[0].mxu0
  %v3363 = vadd.f32 0.0, %v3362
  %v3364 = vpop.f32.mrb[0].mxu0
  %3365 = vdwg.mxu0
  %v3366 = vmul.f32 %v3231, 0.35355338
  %v3367 = vmul.f32 %v3236, 0.35355338
  %v3368 = vmul.f32 %v3241, 0.35355338
  %v3369 = vmul.f32 %v3246, 0.35355338
  %v3370 = vmul.f32 %v3348, 0.35355338
  %v3371 = vmul.f32 %v3353, 0.35355338
  %v3372 = vmul.f32 %v3358, 0.35355338
  %v3373 = vmul.f32 %v3363, 0.35355338
  %v3374 = vsel %vm1323, %v3366, -1e+30
  %v3375 = vsel %vm1323, %v3367, -1e+30
  %v3376 = vsel %vm1323, %v3368, -1e+30
  %v3377 = vsel %vm1323, %v3369, -1e+30
  %v3378 = vsel %vm1323, %v3370, -1e+30
  %v3379 = vsel %vm1323, %v3371, -1e+30
  %v3380 = vsel %vm1323, %v3372, -1e+30
  %v3381 = vsel %vm1323, %v3373, -1e+30
  %v3382 = vsel %vm76, %v3374, -inf
  %3383 = vmax.xlane.f32.xlu0 %v3382
  %v3384 = vpop.xlane.xlu0 %3383
  %v3385 = vsel %vm76, %v3375, -inf
  %3386 = vmax.xlane.f32.xlu0 %v3385
  %v3387 = vpop.xlane.xlu0 %3386
  %v3388 = vsel %vm76, %v3376, -inf
  %3389 = vmax.xlane.f32.xlu0 %v3388
  %v3390 = vpop.xlane.xlu0 %3389
  %v3391 = vsel %vm76, %v3377, -inf
  %3392 = vmax.xlane.f32.xlu0 %v3391
  %v3393 = vpop.xlane.xlu0 %3392
  %v3394 = vsel %vm76, %v3378, -inf
  %3395 = vmax.xlane.f32.xlu0 %v3394
  %v3396 = vpop.xlane.xlu0 %3395
  %v3397 = vsel %vm76, %v3379, -inf
  %3398 = vmax.xlane.f32.xlu0 %v3397
  %v3399 = vpop.xlane.xlu0 %3398
  %v3400 = vsel %vm76, %v3380, -inf
  %3401 = vmax.xlane.f32.xlu0 %v3400
  %v3402 = vpop.xlane.xlu0 %3401
  %v3403 = vsel %vm76, %v3381, -inf
  %3404 = vmax.xlane.f32.xlu0 %v3403
  %v3405 = vpop.xlane.xlu0 %3404
  %v3406 = vsub.f32 %v3374, %v3384
  %v3407 = vsub.f32 %v3375, %v3387
  %v3408 = vsub.f32 %v3376, %v3390
  %v3409 = vsub.f32 %v3377, %v3393
  %v3410 = vsub.f32 %v3378, %v3396
  %v3411 = vsub.f32 %v3379, %v3399
  %v3412 = vsub.f32 %v3380, %v3402
  %v3413 = vsub.f32 %v3381, %v3405
  %v3414 = vmul.f32 %v3406, 1.442695
  %v3415 = vpow.pop %v3414
  %v3416 = vmul.f32 %v3407, 1.442695
  %v3417 = vpow.pop %v3416
  %v3418 = vmul.f32 %v3408, 1.442695
  %v3419 = vpow.pop %v3418
  %v3420 = vmul.f32 %v3409, 1.442695
  %v3421 = vpow.pop %v3420
  %v3422 = vmul.f32 %v3410, 1.442695
  %v3423 = vpow.pop %v3422
  %v3424 = vmul.f32 %v3411, 1.442695
  %v3425 = vpow.pop %v3424
  %v3426 = vmul.f32 %v3412, 1.442695
  %v3427 = vpow.pop %v3426
  %v3428 = vmul.f32 %v3413, 1.442695
  %v3429 = vpow.pop %v3428
  %v3430 = vsel %vm76, %v3415, 0.0
  %3431 = vadd.xlane.f32.xlu0 %v3430
  %v3432 = vpop.xlane.xlu0 %3431
  %v3433 = vsel %vm76, %v3417, 0.0
  %3434 = vadd.xlane.f32.xlu0 %v3433
  %v3435 = vpop.xlane.xlu0 %3434
  %v3436 = vsel %vm76, %v3419, 0.0
  %3437 = vadd.xlane.f32.xlu0 %v3436
  %v3438 = vpop.xlane.xlu0 %3437
  %v3439 = vsel %vm76, %v3421, 0.0
  %3440 = vadd.xlane.f32.xlu0 %v3439
  %v3441 = vpop.xlane.xlu0 %3440
  %v3442 = vsel %vm76, %v3423, 0.0
  %3443 = vadd.xlane.f32.xlu0 %v3442
  %v3444 = vpop.xlane.xlu0 %3443
  %v3445 = vsel %vm76, %v3425, 0.0
  %3446 = vadd.xlane.f32.xlu0 %v3445
  %v3447 = vpop.xlane.xlu0 %3446
  %v3448 = vsel %vm76, %v3427, 0.0
  %3449 = vadd.xlane.f32.xlu0 %v3448
  %v3450 = vpop.xlane.xlu0 %3449
  %v3451 = vsel %vm76, %v3429, 0.0
  %3452 = vadd.xlane.f32.xlu0 %v3451
  %v3453 = vpop.xlane.xlu0 %3452
  %v3454 = vrcp.pop %v3432
  %v3455 = vrcp.pop %v3435
  %v3456 = vrcp.pop %v3438
  %v3457 = vrcp.pop %v3441
  %v3458 = vrcp.pop %v3444
  %v3459 = vrcp.pop %v3447
  %v3460 = vrcp.pop %v3450
  %v3461 = vrcp.pop %v3453
  %v3462 = vmul.f32 %v3415, %v3454
  %v3463 = vmul.f32 %v3417, %v3455
  %v3464 = vmul.f32 %v3419, %v3456
  %v3465 = vmul.f32 %v3421, %v3457
  %v3466 = vmul.f32 %v3423, %v3458
  %v3467 = vmul.f32 %v3425, %v3459
  %v3468 = vmul.f32 %v3427, %v3460
  %v3469 = vmul.f32 %v3429, %v3461
  %3470 = vrot.lane.b32.xlu0 %v282, 104
  %v3471 = vpop.permute.xlu0 %3470
  %3472 = vrot.lane.b32.xlu0 %v287, 104
  %v3473 = vpop.permute.xlu0 %3472
  %3474 = vrot.lane.b32.xlu0 %v292, 104
  %v3475 = vpop.permute.xlu0 %3474
  %3476 = vrot.lane.b32.xlu0 %v297, 104
  %v3477 = vpop.permute.xlu0 %3476
  %v3483 = vsel %vm76, %v3462, 0
  %v3486 = vsel %vm76, %v3463, 0
  %v3489 = vsel %vm76, %v3464, 0
  %v3492 = vsel %vm76, %v3465, 0
  %3494 = vmatprep.subr.mxu0 0.0
  %3495 = vmatpush1.msra.mxu0 %v3471
  %3496 = vmatprep.subr.mxu0 0.0
  %3497 = vmatpush1.msra.mxu0 %v3473
  %3498 = vmatprep.subr.mxu0 0.0
  %3499 = vmatpush1.msra.mxu0 %v3475
  %3500 = vmatprep.subr.mxu0 0.0
  %3501 = vmatpush1.msra.mxu0 %v3477
  %3502 = vmatprep.subr.mxu0 0.0
  %3503 = vmatpush1.msra.mxu0 0.0
  %3504 = vmatprep.subr.mxu0 0.0
  %3505 = vmatpush1.msra.mxu0 0.0
  %3506 = vmatprep.subr.mxu0 0.0
  %3507 = vmatpush1.msra.mxu0 0.0
  %3508 = vmatprep.subr.mxu0 0.0
  %3509 = vmatpush1.msra.mxu0 0.0
  %3510 = vmatprep.subr.mxu0 0.0
  %3511 = vmatpush1.msra.mxu0 0.0
  %3512 = vmatprep.subr.mxu0 0.0
  %3513 = vmatpush1.msra.mxu0 0.0
  %3514 = vmatprep.subr.mxu0 0.0
  %3515 = vmatpush1.msra.mxu0 0.0
  %3516 = vmatprep.subr.mxu0 0.0
  %3517 = vmatpush1.msra.mxu0 0.0
  %3518 = vmatprep.subr.mxu0 0.0
  %3519 = vmatpush1.msra.mxu0 0.0
  %3520 = vmatprep.subr.mxu0 0.0
  %3521 = vmatpush1.msra.mxu0 0.0
  %3522 = vmatprep.subr.mxu0 0.0
  %3523 = vmatpush1.msra.mxu0 0.0
  %3524 = vmatprep.subr.mxu0 0.0
  %3525 = vmatpush1.msra.mxu0 0.0
  %3526 = vmatprep.subr.mxu0 0.0
  %3527 = vmatpush1.msra.mxu0 0.0
  %3528 = vmatprep.subr.mxu0 0.0
  %3529 = vmatpush1.msra.mxu0 0.0
  %3530 = vmatprep.subr.mxu0 0.0
  %3531 = vmatpush1.msra.mxu0 0.0
  %3532 = vmatprep.subr.mxu0 0.0
  %3533 = vmatpush1.msra.mxu0 0.0
  %3534 = vmatprep.subr.mxu0 0.0
  %3535 = vmatpush1.msra.mxu0 0.0
  %3536 = vmatprep.subr.mxu0 0.0
  %3537 = vmatpush1.msra.mxu0 0.0
  %3538 = vmatprep.subr.mxu0 0.0
  %3539 = vmatpush1.msra.mxu0 0.0
  %3540 = vmatprep.subr.mxu0 0.0
  %3541 = vmatpush1.msra.mxu0 0.0
  %3542 = vmatprep.subr.mxu0 0.0
  %3543 = vmatpush1.msra.mxu0 0.0
  %3544 = vmatprep.subr.mxu0 0.0
  %3545 = vmatpush1.msra.mxu0 0.0
  %3546 = vmatprep.subr.mxu0 0.0
  %3547 = vmatpush1.msra.mxu0 0.0
  %3548 = vmatprep.subr.mxu0 0.0
  %3549 = vmatpush1.msra.mxu0 0.0
  %3550 = vmatprep.subr.mxu0 0.0
  %3551 = vmatpush1.msra.mxu0 0.0
  %3552 = vmatprep.subr.mxu0 0.0
  %3553 = vmatpush1.msra.mxu0 0.0
  %3554 = vmatprep.subr.mxu0 0.0
  %3555 = vmatpush1.msra.mxu0 0.0
  %3556 = vmatprep.subr.mxu0 0.0
  %3557 = vmatpush1.msra.mxu0 0.0
  %3558 = vmatprep.mubr.f32.mxu0 0.0
  %3559 = vmatmul.mubr.f32.gmra.mrb[0].mxu0 %v3483
  %v3560 = vpop.f32.mrb[0].mxu0
  %v3561 = vadd.f32 0.0, %v3560
  %v3562 = vpop.f32.mrb[0].mxu0
  %3563 = vmatprep.mubr.f32.mxu0 0.0
  %3564 = vmatmul.mubr.f32.gmra.mrb[0].mxu0 %v3486
  %v3565 = vpop.f32.mrb[0].mxu0
  %v3566 = vadd.f32 0.0, %v3565
  %v3567 = vpop.f32.mrb[0].mxu0
  %3568 = vmatprep.mubr.f32.mxu0 0.0
  %3569 = vmatmul.mubr.f32.gmra.mrb[0].mxu0 %v3489
  %v3570 = vpop.f32.mrb[0].mxu0
  %v3571 = vadd.f32 0.0, %v3570
  %v3572 = vpop.f32.mrb[0].mxu0
  %3573 = vmatprep.mubr.f32.mxu0 0.0
  %3574 = vmatmul.mubr.f32.gmra.mrb[0].mxu0 %v3492
  %v3575 = vpop.f32.mrb[0].mxu0
  %v3576 = vadd.f32 0.0, %v3575
  %v3577 = vpop.f32.mrb[0].mxu0
  %3578 = vdwg.mxu0
  %3579 = vrot.lane.b32.xlu0 %v302, 104
  %v3580 = vpop.permute.xlu0 %3579
  %3581 = vrot.lane.b32.xlu0 %v307, 104
  %v3582 = vpop.permute.xlu0 %3581
  %3583 = vrot.lane.b32.xlu0 %v312, 104
  %v3584 = vpop.permute.xlu0 %3583
  %3585 = vrot.lane.b32.xlu0 %v317, 104
  %v3586 = vpop.permute.xlu0 %3585
  %v3592 = vsel %vm76, %v3466, 0
  %v3595 = vsel %vm76, %v3467, 0
  %v3598 = vsel %vm76, %v3468, 0
  %v3601 = vsel %vm76, %v3469, 0
  %3603 = vmatprep.subr.mxu0 0.0
  %3604 = vmatpush1.msra.mxu0 %v3580
  %3605 = vmatprep.subr.mxu0 0.0
  %3606 = vmatpush1.msra.mxu0 %v3582
  %3607 = vmatprep.subr.mxu0 0.0
  %3608 = vmatpush1.msra.mxu0 %v3584
  %3609 = vmatprep.subr.mxu0 0.0
  %3610 = vmatpush1.msra.mxu0 %v3586
  %3611 = vmatprep.subr.mxu0 0.0
  %3612 = vmatpush1.msra.mxu0 0.0
  %3613 = vmatprep.subr.mxu0 0.0
  %3614 = vmatpush1.msra.mxu0 0.0
  %3615 = vmatprep.subr.mxu0 0.0
  %3616 = vmatpush1.msra.mxu0 0.0
  %3617 = vmatprep.subr.mxu0 0.0
  %3618 = vmatpush1.msra.mxu0 0.0
  %3619 = vmatprep.subr.mxu0 0.0
  %3620 = vmatpush1.msra.mxu0 0.0
  %3621 = vmatprep.subr.mxu0 0.0
  %3622 = vmatpush1.msra.mxu0 0.0
  %3623 = vmatprep.subr.mxu0 0.0
  %3624 = vmatpush1.msra.mxu0 0.0
  %3625 = vmatprep.subr.mxu0 0.0
  %3626 = vmatpush1.msra.mxu0 0.0
  %3627 = vmatprep.subr.mxu0 0.0
  %3628 = vmatpush1.msra.mxu0 0.0
  %3629 = vmatprep.subr.mxu0 0.0
  %3630 = vmatpush1.msra.mxu0 0.0
  %3631 = vmatprep.subr.mxu0 0.0
  %3632 = vmatpush1.msra.mxu0 0.0
  %3633 = vmatprep.subr.mxu0 0.0
  %3634 = vmatpush1.msra.mxu0 0.0
  %3635 = vmatprep.subr.mxu0 0.0
  %3636 = vmatpush1.msra.mxu0 0.0
  %3637 = vmatprep.subr.mxu0 0.0
  %3638 = vmatpush1.msra.mxu0 0.0
  %3639 = vmatprep.subr.mxu0 0.0
  %3640 = vmatpush1.msra.mxu0 0.0
  %3641 = vmatprep.subr.mxu0 0.0
  %3642 = vmatpush1.msra.mxu0 0.0
  %3643 = vmatprep.subr.mxu0 0.0
  %3644 = vmatpush1.msra.mxu0 0.0
  %3645 = vmatprep.subr.mxu0 0.0
  %3646 = vmatpush1.msra.mxu0 0.0
  %3647 = vmatprep.subr.mxu0 0.0
  %3648 = vmatpush1.msra.mxu0 0.0
  %3649 = vmatprep.subr.mxu0 0.0
  %3650 = vmatpush1.msra.mxu0 0.0
  %3651 = vmatprep.subr.mxu0 0.0
  %3652 = vmatpush1.msra.mxu0 0.0
  %3653 = vmatprep.subr.mxu0 0.0
  %3654 = vmatpush1.msra.mxu0 0.0
  %3655 = vmatprep.subr.mxu0 0.0
  %3656 = vmatpush1.msra.mxu0 0.0
  %3657 = vmatprep.subr.mxu0 0.0
  %3658 = vmatpush1.msra.mxu0 0.0
  %3659 = vmatprep.subr.mxu0 0.0
  %3660 = vmatpush1.msra.mxu0 0.0
  %3661 = vmatprep.subr.mxu0 0.0
  %3662 = vmatpush1.msra.mxu0 0.0
  %3663 = vmatprep.subr.mxu0 0.0
  %3664 = vmatpush1.msra.mxu0 0.0
  %3665 = vmatprep.subr.mxu0 0.0
  %3666 = vmatpush1.msra.mxu0 0.0
  %3667 = vmatprep.mubr.f32.mxu0 0.0
  %3668 = vmatmul.mubr.f32.gmra.mrb[0].mxu0 %v3592
  %v3669 = vpop.f32.mrb[0].mxu0
  %v3670 = vadd.f32 0.0, %v3669
  %v3671 = vpop.f32.mrb[0].mxu0
  %3672 = vmatprep.mubr.f32.mxu0 0.0
  %3673 = vmatmul.mubr.f32.gmra.mrb[0].mxu0 %v3595
  %v3674 = vpop.f32.mrb[0].mxu0
  %v3675 = vadd.f32 0.0, %v3674
  %v3676 = vpop.f32.mrb[0].mxu0
  %3677 = vmatprep.mubr.f32.mxu0 0.0
  %3678 = vmatmul.mubr.f32.gmra.mrb[0].mxu0 %v3598
  %v3679 = vpop.f32.mrb[0].mxu0
  %v3680 = vadd.f32 0.0, %v3679
  %v3681 = vpop.f32.mrb[0].mxu0
  %3682 = vmatprep.mubr.f32.mxu0 0.0
  %3683 = vmatmul.mubr.f32.gmra.mrb[0].mxu0 %v3601
  %v3684 = vpop.f32.mrb[0].mxu0
  %v3685 = vadd.f32 0.0, %v3684
  %v3686 = vpop.f32.mrb[0].mxu0
  %3687 = vdwg.mxu0
  %v3688 = vld [vmem:[%s2 + $0x78] sm:$0xff]
  %v3690 = vsel %vm1095, %v3561, 0
  %v3693 = vsel %vm1095, %v3566, 0
  %v3696 = vsel %vm1095, %v3571, 0
  %v3699 = vsel %vm1095, %v3576, 0
  %v3702 = vsel %vm1095, %v3670, 0
  %v3705 = vsel %vm1095, %v3675, 0
  %v3708 = vsel %vm1095, %v3680, 0
  %v3711 = vsel %vm1095, %v3685, 0
  %3713 = vmatprep.subr.mxu0 0.0
  %3714 = vmatpush1.msra.mxu0 %v3688
  %3715 = vmatprep.subr.mxu0 0.0
  %3716 = vmatpush1.msra.mxu0 0.0
  %3717 = vmatprep.subr.mxu0 0.0
  %3718 = vmatpush1.msra.mxu0 0.0
  %3719 = vmatprep.subr.mxu0 0.0
  %3720 = vmatpush1.msra.mxu0 0.0
  %3721 = vmatprep.subr.mxu0 0.0
  %3722 = vmatpush1.msra.mxu0 0.0
  %3723 = vmatprep.subr.mxu0 0.0
  %3724 = vmatpush1.msra.mxu0 0.0
  %3725 = vmatprep.subr.mxu0 0.0
  %3726 = vmatpush1.msra.mxu0 0.0
  %3727 = vmatprep.subr.mxu0 0.0
  %3728 = vmatpush1.msra.mxu0 0.0
  %3729 = vmatprep.subr.mxu0 0.0
  %3730 = vmatpush1.msra.mxu0 0.0
  %3731 = vmatprep.subr.mxu0 0.0
  %3732 = vmatpush1.msra.mxu0 0.0
  %3733 = vmatprep.subr.mxu0 0.0
  %3734 = vmatpush1.msra.mxu0 0.0
  %3735 = vmatprep.subr.mxu0 0.0
  %3736 = vmatpush1.msra.mxu0 0.0
  %3737 = vmatprep.subr.mxu0 0.0
  %3738 = vmatpush1.msra.mxu0 0.0
  %3739 = vmatprep.subr.mxu0 0.0
  %3740 = vmatpush1.msra.mxu0 0.0
  %3741 = vmatprep.subr.mxu0 0.0
  %3742 = vmatpush1.msra.mxu0 0.0
  %3743 = vmatprep.subr.mxu0 0.0
  %3744 = vmatpush1.msra.mxu0 0.0
  %3745 = vmatprep.subr.mxu0 0.0
  %3746 = vmatpush1.msra.mxu0 0.0
  %3747 = vmatprep.subr.mxu0 0.0
  %3748 = vmatpush1.msra.mxu0 0.0
  %3749 = vmatprep.subr.mxu0 0.0
  %3750 = vmatpush1.msra.mxu0 0.0
  %3751 = vmatprep.subr.mxu0 0.0
  %3752 = vmatpush1.msra.mxu0 0.0
  %3753 = vmatprep.subr.mxu0 0.0
  %3754 = vmatpush1.msra.mxu0 0.0
  %3755 = vmatprep.subr.mxu0 0.0
  %3756 = vmatpush1.msra.mxu0 0.0
  %3757 = vmatprep.subr.mxu0 0.0
  %3758 = vmatpush1.msra.mxu0 0.0
  %3759 = vmatprep.subr.mxu0 0.0
  %3760 = vmatpush1.msra.mxu0 0.0
  %3761 = vmatprep.subr.mxu0 0.0
  %3762 = vmatpush1.msra.mxu0 0.0
  %3763 = vmatprep.subr.mxu0 0.0
  %3764 = vmatpush1.msra.mxu0 0.0
  %3765 = vmatprep.subr.mxu0 0.0
  %3766 = vmatpush1.msra.mxu0 0.0
  %3767 = vmatprep.subr.mxu0 0.0
  %3768 = vmatpush1.msra.mxu0 0.0
  %3769 = vmatprep.subr.mxu0 0.0
  %3770 = vmatpush1.msra.mxu0 0.0
  %3771 = vmatprep.subr.mxu0 0.0
  %3772 = vmatpush1.msra.mxu0 0.0
  %3773 = vmatprep.subr.mxu0 0.0
  %3774 = vmatpush1.msra.mxu0 0.0
  %3775 = vmatprep.subr.mxu0 0.0
  %3776 = vmatpush1.msra.mxu0 0.0
  %3777 = vmatprep.mubr.f32.mxu0 0.0
  %3778 = vmatmul.mubr.f32.gmra.mrb[0].mxu0 %v3690
  %v3779 = vpop.f32.mrb[0].mxu0
  %v3780 = vadd.f32 0.0, %v3779
  %v3781 = vpop.f32.mrb[0].mxu0
  %3782 = vmatprep.mubr.f32.mxu0 0.0
  %3783 = vmatmul.mubr.f32.gmra.mrb[0].mxu0 %v3693
  %v3784 = vpop.f32.mrb[0].mxu0
  %v3785 = vadd.f32 0.0, %v3784
  %v3786 = vpop.f32.mrb[0].mxu0
  %3787 = vmatprep.mubr.f32.mxu0 0.0
  %3788 = vmatmul.mubr.f32.gmra.mrb[0].mxu0 %v3696
  %v3789 = vpop.f32.mrb[0].mxu0
  %v3790 = vadd.f32 0.0, %v3789
  %v3791 = vpop.f32.mrb[0].mxu0
  %3792 = vmatprep.mubr.f32.mxu0 0.0
  %3793 = vmatmul.mubr.f32.gmra.mrb[0].mxu0 %v3699
  %v3794 = vpop.f32.mrb[0].mxu0
  %v3795 = vadd.f32 0.0, %v3794
  %v3796 = vpop.f32.mrb[0].mxu0
  %3797 = vmatprep.mubr.f32.mxu0 0.0
  %3798 = vmatmul.mubr.f32.gmra.mrb[0].mxu0 %v3702
  %v3799 = vpop.f32.mrb[0].mxu0
  %v3800 = vadd.f32 0.0, %v3799
  %v3801 = vpop.f32.mrb[0].mxu0
  %3802 = vmatprep.mubr.f32.mxu0 0.0
  %3803 = vmatmul.mubr.f32.gmra.mrb[0].mxu0 %v3705
  %v3804 = vpop.f32.mrb[0].mxu0
  %v3805 = vadd.f32 0.0, %v3804
  %v3806 = vpop.f32.mrb[0].mxu0
  %3807 = vmatprep.mubr.f32.mxu0 0.0
  %3808 = vmatmul.mubr.f32.gmra.mrb[0].mxu0 %v3708
  %v3809 = vpop.f32.mrb[0].mxu0
  %v3810 = vadd.f32 0.0, %v3809
  %v3811 = vpop.f32.mrb[0].mxu0
  %3812 = vmatprep.mubr.f32.mxu0 0.0
  %3813 = vmatmul.mubr.f32.gmra.mrb[0].mxu0 %v3711
  %v3814 = vpop.f32.mrb[0].mxu0
  %v3815 = vadd.f32 0.0, %v3814
  %v3816 = vpop.f32.mrb[0].mxu0
  %3817 = vdwg.mxu0
  %v3818 = vadd.f32 %v3124, %v3780
  %v3819 = vadd.f32 %v3125, %v3785
  %v3820 = vadd.f32 %v3126, %v3790
  %v3821 = vadd.f32 %v3127, %v3795
  %v3822 = vadd.f32 %v3128, %v3800
  %v3823 = vadd.f32 %v3129, %v3805
  %v3824 = vadd.f32 %v3130, %v3810
  %v3825 = vadd.f32 %v3131, %v3815
  %v3826 = vadd.f32 %v17, %v3818
  %v3827 = vadd.f32 %v18, %v3819
  %v3828 = vadd.f32 %v19, %v3820
  %v3829 = vadd.f32 %v20, %v3821
  %v3830 = vadd.f32 %v21, %v3822
  %v3831 = vadd.f32 %v22, %v3823
  %v3832 = vadd.f32 %v23, %v3824
  %v3833 = vadd.f32 %v24, %v3825
  %v3834 = vlaneseq
  %v3835 = vshrl.u32 %v3834, 7
  %v3836 = vsub.s32 0, %v3835
  %v3837 = vrot.slane %v936, %v3836
  %v3838 = vadd.f32 %v3826, %v3837
  %v3839 = vadd.f32 %v3827, %v3837
  %v3840 = vadd.f32 %v3828, %v3837
  %v3841 = vadd.f32 %v3829, %v3837
  %v3842 = vadd.f32 %v3830, %v3837
  %v3843 = vadd.f32 %v3831, %v3837
  %v3844 = vadd.f32 %v3832, %v3837
  %v3845 = vadd.f32 %v3833, %v3837
  %v3846 = vsel %vm76, %v3838, 0.0
  %3847 = vadd.xlane.f32.xlu0 %v3846
  %v3848 = vpop.xlane.xlu0 %3847
  %v3849 = vsel %vm76, %v3839, 0.0
  %3850 = vadd.xlane.f32.xlu0 %v3849
  %v3851 = vpop.xlane.xlu0 %3850
  %v3852 = vsel %vm76, %v3840, 0.0
  %3853 = vadd.xlane.f32.xlu0 %v3852
  %v3854 = vpop.xlane.xlu0 %3853
  %v3855 = vsel %vm76, %v3841, 0.0
  %3856 = vadd.xlane.f32.xlu0 %v3855
  %v3857 = vpop.xlane.xlu0 %3856
  %v3858 = vsel %vm76, %v3842, 0.0
  %3859 = vadd.xlane.f32.xlu0 %v3858
  %v3860 = vpop.xlane.xlu0 %3859
  %v3861 = vsel %vm76, %v3843, 0.0
  %3862 = vadd.xlane.f32.xlu0 %v3861
  %v3863 = vpop.xlane.xlu0 %3862
  %v3864 = vsel %vm76, %v3844, 0.0
  %3865 = vadd.xlane.f32.xlu0 %v3864
  %v3866 = vpop.xlane.xlu0 %3865
  %v3867 = vsel %vm76, %v3845, 0.0
  %3868 = vadd.xlane.f32.xlu0 %v3867
  %v3869 = vpop.xlane.xlu0 %3868
  %v3870 = vrcp.pop 32.0
  %v3871 = vmul.f32 %v3848, %v3870
  %v3872 = vmul.f32 %v3851, %v3870
  %v3873 = vmul.f32 %v3854, %v3870
  %v3874 = vmul.f32 %v3857, %v3870
  %v3875 = vmul.f32 %v3860, %v3870
  %v3876 = vmul.f32 %v3863, %v3870
  %v3877 = vmul.f32 %v3866, %v3870
  %v3878 = vmul.f32 %v3869, %v3870
  %v3879 = vsub.f32 %v3838, %v3871
  %v3880 = vsub.f32 %v3839, %v3872
  %v3881 = vsub.f32 %v3840, %v3873
  %v3882 = vsub.f32 %v3841, %v3874
  %v3883 = vsub.f32 %v3842, %v3875
  %v3884 = vsub.f32 %v3843, %v3876
  %v3885 = vsub.f32 %v3844, %v3877
  %v3886 = vsub.f32 %v3845, %v3878
  %v3887 = vmul.f32 %v3879, %v3879
  %v3888 = vmul.f32 %v3880, %v3880
  %v3889 = vmul.f32 %v3881, %v3881
  %v3890 = vmul.f32 %v3882, %v3882
  %v3891 = vmul.f32 %v3883, %v3883
  %v3892 = vmul.f32 %v3884, %v3884
  %v3893 = vmul.f32 %v3885, %v3885
  %v3894 = vmul.f32 %v3886, %v3886
  %v3895 = vsel %vm76, %v3887, 0.0
  %3896 = vadd.xlane.f32.xlu0 %v3895
  %v3897 = vpop.xlane.xlu0 %3896
  %v3898 = vsel %vm76, %v3888, 0.0
  %3899 = vadd.xlane.f32.xlu0 %v3898
  %v3900 = vpop.xlane.xlu0 %3899
  %v3901 = vsel %vm76, %v3889, 0.0
  %3902 = vadd.xlane.f32.xlu0 %v3901
  %v3903 = vpop.xlane.xlu0 %3902
  %v3904 = vsel %vm76, %v3890, 0.0
  %3905 = vadd.xlane.f32.xlu0 %v3904
  %v3906 = vpop.xlane.xlu0 %3905
  %v3907 = vsel %vm76, %v3891, 0.0
  %3908 = vadd.xlane.f32.xlu0 %v3907
  %v3909 = vpop.xlane.xlu0 %3908
  %v3910 = vsel %vm76, %v3892, 0.0
  %3911 = vadd.xlane.f32.xlu0 %v3910
  %v3912 = vpop.xlane.xlu0 %3911
  %v3913 = vsel %vm76, %v3893, 0.0
  %3914 = vadd.xlane.f32.xlu0 %v3913
  %v3915 = vpop.xlane.xlu0 %3914
  %v3916 = vsel %vm76, %v3894, 0.0
  %3917 = vadd.xlane.f32.xlu0 %v3916
  %v3918 = vpop.xlane.xlu0 %3917
  %v3919 = vmul.f32 %v3897, %v3870
  %v3920 = vmul.f32 %v3900, %v3870
  %v3921 = vmul.f32 %v3903, %v3870
  %v3922 = vmul.f32 %v3906, %v3870
  %v3923 = vmul.f32 %v3909, %v3870
  %v3924 = vmul.f32 %v3912, %v3870
  %v3925 = vmul.f32 %v3915, %v3870
  %v3926 = vmul.f32 %v3918, %v3870
  %v3927 = vadd.f32 %v3919, 1e-05
  %v3928 = vadd.f32 %v3920, 1e-05
  %v3929 = vadd.f32 %v3921, 1e-05
  %v3930 = vadd.f32 %v3922, 1e-05
  %v3931 = vadd.f32 %v3923, 1e-05
  %v3932 = vadd.f32 %v3924, 1e-05
  %v3933 = vadd.f32 %v3925, 1e-05
  %v3934 = vadd.f32 %v3926, 1e-05
  %v3935 = vrsqrt.pop %v3927
  %v3936 = vrsqrt.pop %v3928
  %v3937 = vrsqrt.pop %v3929
  %v3938 = vrsqrt.pop %v3930
  %v3939 = vrsqrt.pop %v3931
  %v3940 = vrsqrt.pop %v3932
  %v3941 = vrsqrt.pop %v3933
  %v3942 = vrsqrt.pop %v3934
  %v3943 = vmul.f32 %v3879, %v3935
  %v3944 = vmul.f32 %v3880, %v3936
  %v3945 = vmul.f32 %v3881, %v3937
  %v3946 = vmul.f32 %v3882, %v3938
  %v3947 = vmul.f32 %v3883, %v3939
  %v3948 = vmul.f32 %v3884, %v3940
  %v3949 = vmul.f32 %v3885, %v3941
  %v3950 = vmul.f32 %v3886, %v3942
  %v3951 = vlaneseq
  %v3952 = vshrl.u32 %v3951, 7
  %v3953 = vsub.s32 0, %v3952
  %v3954 = vrot.slane %v939, %v3953
  %v3955 = vmul.f32 %v3943, %v3954
  %v3956 = vmul.f32 %v3944, %v3954
  %v3957 = vmul.f32 %v3945, %v3954
  %v3958 = vmul.f32 %v3946, %v3954
  %v3959 = vmul.f32 %v3947, %v3954
  %v3960 = vmul.f32 %v3948, %v3954
  %v3961 = vmul.f32 %v3949, %v3954
  %v3962 = vmul.f32 %v3950, %v3954
  %v3963 = vlaneseq
  %v3964 = vshrl.u32 %v3963, 7
  %v3965 = vsub.s32 0, %v3964
  %v3966 = vrot.slane %v940, %v3965
  %v3967 = vadd.f32 %v3955, %v3966
  %v3968 = vadd.f32 %v3956, %v3966
  %v3969 = vadd.f32 %v3957, %v3966
  %v3970 = vadd.f32 %v3958, %v3966
  %v3971 = vadd.f32 %v3959, %v3966
  %v3972 = vadd.f32 %v3960, %v3966
  %v3973 = vadd.f32 %v3961, %v3966
  %v3974 = vadd.f32 %v3962, %v3966
  %v3975 = vadd.f32 %v3967, %v26
  %v3976 = vadd.f32 %v3968, %v27
  %v3977 = vadd.f32 %v3969, %v28
  %v3978 = vadd.f32 %v3970, %v29
  %v3979 = vadd.f32 %v3971, %v30
  %v3980 = vadd.f32 %v3972, %v31
  %v3981 = vadd.f32 %v3973, %v32
  %v3982 = vadd.f32 %v3974, %v33
  %v3983 = vld [vmem:[%s2 + $0x80] sm:$0xff]
  %v3984 = vld [vmem:[%s2 + $0x88] sm:$0xff]
  %v3985 = vld [vmem:[%s2 + $0x90] sm:$0xff]
  %v3986 = vld [vmem:[%s2 + $0x98] sm:$0xff]
  %v3987 = vlaneseq
  %v3988 = vshrl.u32 %v3987, 7
  %v3989 = vsub.s32 0, %v3988
  %v3990 = vrot.slane %v937, %v3989
  %v3992 = vsel %vm76, %v3975, 0
  %v3995 = vsel %vm76, %v3976, 0
  %v3998 = vsel %vm76, %v3977, 0
  %v4001 = vsel %vm76, %v3978, 0
  %v4004 = vsel %vm76, %v3979, 0
  %v4007 = vsel %vm76, %v3980, 0
  %v4010 = vsel %vm76, %v3981, 0
  %v4013 = vsel %vm76, %v3982, 0
  %4015 = vmatprep.subr.mxu0 0.0
  %4016 = vmatpush1.msra.mxu0 %v3983
  %4017 = vmatprep.subr.mxu0 0.0
  %4018 = vmatpush1.msra.mxu0 %v3984
  %4019 = vmatprep.subr.mxu0 0.0
  %4020 = vmatpush1.msra.mxu0 %v3985
  %4021 = vmatprep.subr.mxu0 0.0
  %4022 = vmatpush1.msra.mxu0 %v3986
  %4023 = vmatprep.subr.mxu0 0.0
  %4024 = vmatpush1.msra.mxu0 0.0
  %4025 = vmatprep.subr.mxu0 0.0
  %4026 = vmatpush1.msra.mxu0 0.0
  %4027 = vmatprep.subr.mxu0 0.0
  %4028 = vmatpush1.msra.mxu0 0.0
  %4029 = vmatprep.subr.mxu0 0.0
  %4030 = vmatpush1.msra.mxu0 0.0
  %4031 = vmatprep.subr.mxu0 0.0
  %4032 = vmatpush1.msra.mxu0 0.0
  %4033 = vmatprep.subr.mxu0 0.0
  %4034 = vmatpush1.msra.mxu0 0.0
  %4035 = vmatprep.subr.mxu0 0.0
  %4036 = vmatpush1.msra.mxu0 0.0
  %4037 = vmatprep.subr.mxu0 0.0
  %4038 = vmatpush1.msra.mxu0 0.0
  %4039 = vmatprep.subr.mxu0 0.0
  %4040 = vmatpush1.msra.mxu0 0.0
  %4041 = vmatprep.subr.mxu0 0.0
  %4042 = vmatpush1.msra.mxu0 0.0
  %4043 = vmatprep.subr.mxu0 0.0
  %4044 = vmatpush1.msra.mxu0 0.0
  %4045 = vmatprep.subr.mxu0 0.0
  %4046 = vmatpush1.msra.mxu0 0.0
  %4047 = vmatprep.subr.mxu0 0.0
  %4048 = vmatpush1.msra.mxu0 0.0
  %4049 = vmatprep.subr.mxu0 0.0
  %4050 = vmatpush1.msra.mxu0 0.0
  %4051 = vmatprep.subr.mxu0 0.0
  %4052 = vmatpush1.msra.mxu0 0.0
  %4053 = vmatprep.subr.mxu0 0.0
  %4054 = vmatpush1.msra.mxu0 0.0
  %4055 = vmatprep.subr.mxu0 0.0
  %4056 = vmatpush1.msra.mxu0 0.0
  %4057 = vmatprep.subr.mxu0 0.0
  %4058 = vmatpush1.msra.mxu0 0.0
  %4059 = vmatprep.subr.mxu0 0.0
  %4060 = vmatpush1.msra.mxu0 0.0
  %4061 = vmatprep.subr.mxu0 0.0
  %4062 = vmatpush1.msra.mxu0 0.0
  %4063 = vmatprep.subr.mxu0 0.0
  %4064 = vmatpush1.msra.mxu0 0.0
  %4065 = vmatprep.subr.mxu0 0.0
  %4066 = vmatpush1.msra.mxu0 0.0
  %4067 = vmatprep.subr.mxu0 0.0
  %4068 = vmatpush1.msra.mxu0 0.0
  %4069 = vmatprep.subr.mxu0 0.0
  %4070 = vmatpush1.msra.mxu0 0.0
  %4071 = vmatprep.subr.mxu0 0.0
  %4072 = vmatpush1.msra.mxu0 0.0
  %4073 = vmatprep.subr.mxu0 0.0
  %4074 = vmatpush1.msra.mxu0 0.0
  %4075 = vmatprep.subr.mxu0 0.0
  %4076 = vmatpush1.msra.mxu0 0.0
  %4077 = vmatprep.subr.mxu0 0.0
  %4078 = vmatpush1.msra.mxu0 0.0
  %4079 = vmatprep.mubr.f32.mxu0 0.0
  %4080 = vmatmul.mubr.f32.gmra.mrb[0].mxu0 %v3992
  %v4081 = vpop.f32.mrb[0].mxu0
  %v4082 = vadd.f32 %v3990, %v4081
  %v4083 = vpop.f32.mrb[0].mxu0
  %4084 = vmatprep.mubr.f32.mxu0 0.0
  %4085 = vmatmul.mubr.f32.gmra.mrb[0].mxu0 %v3995
  %v4086 = vpop.f32.mrb[0].mxu0
  %v4087 = vadd.f32 %v3990, %v4086
  %v4088 = vpop.f32.mrb[0].mxu0
  %4089 = vmatprep.mubr.f32.mxu0 0.0
  %4090 = vmatmul.mubr.f32.gmra.mrb[0].mxu0 %v3998
  %v4091 = vpop.f32.mrb[0].mxu0
  %v4092 = vadd.f32 %v3990, %v4091
  %v4093 = vpop.f32.mrb[0].mxu0
  %4094 = vmatprep.mubr.f32.mxu0 0.0
  %4095 = vmatmul.mubr.f32.gmra.mrb[0].mxu0 %v4001
  %v4096 = vpop.f32.mrb[0].mxu0
  %v4097 = vadd.f32 %v3990, %v4096
  %v4098 = vpop.f32.mrb[0].mxu0
  %4099 = vmatprep.mubr.f32.mxu0 0.0
  %4100 = vmatmul.mubr.f32.gmra.mrb[0].mxu0 %v4004
  %v4101 = vpop.f32.mrb[0].mxu0
  %v4102 = vadd.f32 %v3990, %v4101
  %v4103 = vpop.f32.mrb[0].mxu0
  %4104 = vmatprep.mubr.f32.mxu0 0.0
  %4105 = vmatmul.mubr.f32.gmra.mrb[0].mxu0 %v4007
  %v4106 = vpop.f32.mrb[0].mxu0
  %v4107 = vadd.f32 %v3990, %v4106
  %v4108 = vpop.f32.mrb[0].mxu0
  %4109 = vmatprep.mubr.f32.mxu0 0.0
  %4110 = vmatmul.mubr.f32.gmra.mrb[0].mxu0 %v4010
  %v4111 = vpop.f32.mrb[0].mxu0
  %v4112 = vadd.f32 %v3990, %v4111
  %v4113 = vpop.f32.mrb[0].mxu0
  %4114 = vmatprep.mubr.f32.mxu0 0.0
  %4115 = vmatmul.mubr.f32.gmra.mrb[0].mxu0 %v4013
  %v4116 = vpop.f32.mrb[0].mxu0
  %v4117 = vadd.f32 %v3990, %v4116
  %v4118 = vpop.f32.mrb[0].mxu0
  %4119 = vdwg.mxu0
  %v4120 = vmul.f32 %v4082, 0.17677669
  %v4121 = vmul.f32 %v4087, 0.17677669
  %v4122 = vmul.f32 %v4092, 0.17677669
  %v4123 = vmul.f32 %v4097, 0.17677669
  %v4124 = vmul.f32 %v4102, 0.17677669
  %v4125 = vmul.f32 %v4107, 0.17677669
  %v4126 = vmul.f32 %v4112, 0.17677669
  %v4127 = vmul.f32 %v4117, 0.17677669
  %v4128 = vsel %vm76, %v4120, -inf
  %4129 = vmax.xlane.f32.xlu0 %v4128
  %v4130 = vpop.xlane.xlu0 %4129
  %v4131 = vsel %vm76, %v4121, -inf
  %4132 = vmax.xlane.f32.xlu0 %v4131
  %v4133 = vpop.xlane.xlu0 %4132
  %v4134 = vsel %vm76, %v4122, -inf
  %4135 = vmax.xlane.f32.xlu0 %v4134
  %v4136 = vpop.xlane.xlu0 %4135
  %v4137 = vsel %vm76, %v4123, -inf
  %4138 = vmax.xlane.f32.xlu0 %v4137
  %v4139 = vpop.xlane.xlu0 %4138
  %v4140 = vsel %vm76, %v4124, -inf
  %4141 = vmax.xlane.f32.xlu0 %v4140
  %v4142 = vpop.xlane.xlu0 %4141
  %v4143 = vsel %vm76, %v4125, -inf
  %4144 = vmax.xlane.f32.xlu0 %v4143
  %v4145 = vpop.xlane.xlu0 %4144
  %v4146 = vsel %vm76, %v4126, -inf
  %4147 = vmax.xlane.f32.xlu0 %v4146
  %v4148 = vpop.xlane.xlu0 %4147
  %v4149 = vsel %vm76, %v4127, -inf
  %4150 = vmax.xlane.f32.xlu0 %v4149
  %v4151 = vpop.xlane.xlu0 %4150
  %v4152 = vsub.f32 %v4120, %v4130
  %v4153 = vsub.f32 %v4121, %v4133
  %v4154 = vsub.f32 %v4122, %v4136
  %v4155 = vsub.f32 %v4123, %v4139
  %v4156 = vsub.f32 %v4124, %v4142
  %v4157 = vsub.f32 %v4125, %v4145
  %v4158 = vsub.f32 %v4126, %v4148
  %v4159 = vsub.f32 %v4127, %v4151
  %v4160 = vmul.f32 %v4152, 1.442695
  %v4161 = vpow.pop %v4160
  %v4162 = vmul.f32 %v4153, 1.442695
  %v4163 = vpow.pop %v4162
  %v4164 = vmul.f32 %v4154, 1.442695
  %v4165 = vpow.pop %v4164
  %v4166 = vmul.f32 %v4155, 1.442695
  %v4167 = vpow.pop %v4166
  %v4168 = vmul.f32 %v4156, 1.442695
  %v4169 = vpow.pop %v4168
  %v4170 = vmul.f32 %v4157, 1.442695
  %v4171 = vpow.pop %v4170
  %v4172 = vmul.f32 %v4158, 1.442695
  %v4173 = vpow.pop %v4172
  %v4174 = vmul.f32 %v4159, 1.442695
  %v4175 = vpow.pop %v4174
  %v4176 = vsel %vm76, %v4161, 0.0
  %4177 = vadd.xlane.f32.xlu0 %v4176
  %v4178 = vpop.xlane.xlu0 %4177
  %v4179 = vsel %vm76, %v4163, 0.0
  %4180 = vadd.xlane.f32.xlu0 %v4179
  %v4181 = vpop.xlane.xlu0 %4180
  %v4182 = vsel %vm76, %v4165, 0.0
  %4183 = vadd.xlane.f32.xlu0 %v4182
  %v4184 = vpop.xlane.xlu0 %4183
  %v4185 = vsel %vm76, %v4167, 0.0
  %4186 = vadd.xlane.f32.xlu0 %v4185
  %v4187 = vpop.xlane.xlu0 %4186
  %v4188 = vsel %vm76, %v4169, 0.0
  %4189 = vadd.xlane.f32.xlu0 %v4188
  %v4190 = vpop.xlane.xlu0 %4189
  %v4191 = vsel %vm76, %v4171, 0.0
  %4192 = vadd.xlane.f32.xlu0 %v4191
  %v4193 = vpop.xlane.xlu0 %4192
  %v4194 = vsel %vm76, %v4173, 0.0
  %4195 = vadd.xlane.f32.xlu0 %v4194
  %v4196 = vpop.xlane.xlu0 %4195
  %v4197 = vsel %vm76, %v4175, 0.0
  %4198 = vadd.xlane.f32.xlu0 %v4197
  %v4199 = vpop.xlane.xlu0 %4198
  %v4200 = vrcp.pop %v4178
  %v4201 = vrcp.pop %v4181
  %v4202 = vrcp.pop %v4184
  %v4203 = vrcp.pop %v4187
  %v4204 = vrcp.pop %v4190
  %v4205 = vrcp.pop %v4193
  %v4206 = vrcp.pop %v4196
  %v4207 = vrcp.pop %v4199
  %v4208 = vmul.f32 %v4161, %v4200
  %v4209 = vmul.f32 %v4163, %v4201
  %v4210 = vmul.f32 %v4165, %v4202
  %v4211 = vmul.f32 %v4167, %v4203
  %v4212 = vmul.f32 %v4169, %v4204
  %v4213 = vmul.f32 %v4171, %v4205
  %v4214 = vmul.f32 %v4173, %v4206
  %v4215 = vmul.f32 %v4175, %v4207
  %v4216 = vmul.f32 %v4208, %v934
  %v4217 = vmul.f32 %v4209, %v934
  %v4218 = vmul.f32 %v4210, %v934
  %v4219 = vmul.f32 %v4211, %v934
  %v4220 = vmul.f32 %v4212, %v934
  %v4221 = vmul.f32 %v4213, %v934
  %v4222 = vmul.f32 %v4214, %v934
  %v4223 = vmul.f32 %v4215, %v934
  %v4224 = vadd.f32 %v3967, %v4216
  %v4225 = vadd.f32 %v3968, %v4217
  %v4226 = vadd.f32 %v3969, %v4218
  %v4227 = vadd.f32 %v3970, %v4219
  %v4228 = vadd.f32 %v3971, %v4220
  %v4229 = vadd.f32 %v3972, %v4221
  %v4230 = vadd.f32 %v3973, %v4222
  %v4231 = vadd.f32 %v3974, %v4223
  %v4232 = vsel %vm76, %v4224, 0.0
  %4233 = vadd.xlane.f32.xlu0 %v4232
  %v4234 = vpop.xlane.xlu0 %4233
  %v4235 = vsel %vm76, %v4225, 0.0
  %4236 = vadd.xlane.f32.xlu0 %v4235
  %v4237 = vpop.xlane.xlu0 %4236
  %v4238 = vsel %vm76, %v4226, 0.0
  %4239 = vadd.xlane.f32.xlu0 %v4238
  %v4240 = vpop.xlane.xlu0 %4239
  %v4241 = vsel %vm76, %v4227, 0.0
  %4242 = vadd.xlane.f32.xlu0 %v4241
  %v4243 = vpop.xlane.xlu0 %4242
  %v4244 = vsel %vm76, %v4228, 0.0
  %4245 = vadd.xlane.f32.xlu0 %v4244
  %v4246 = vpop.xlane.xlu0 %4245
  %v4247 = vsel %vm76, %v4229, 0.0
  %4248 = vadd.xlane.f32.xlu0 %v4247
  %v4249 = vpop.xlane.xlu0 %4248
  %v4250 = vsel %vm76, %v4230, 0.0
  %4251 = vadd.xlane.f32.xlu0 %v4250
  %v4252 = vpop.xlane.xlu0 %4251
  %v4253 = vsel %vm76, %v4231, 0.0
  %4254 = vadd.xlane.f32.xlu0 %v4253
  %v4255 = vpop.xlane.xlu0 %4254
  %v4256 = vmul.f32 %v4234, %v3870
  %v4257 = vmul.f32 %v4237, %v3870
  %v4258 = vmul.f32 %v4240, %v3870
  %v4259 = vmul.f32 %v4243, %v3870
  %v4260 = vmul.f32 %v4246, %v3870
  %v4261 = vmul.f32 %v4249, %v3870
  %v4262 = vmul.f32 %v4252, %v3870
  %v4263 = vmul.f32 %v4255, %v3870
  %v4264 = vsub.f32 %v4224, %v4256
  %v4265 = vsub.f32 %v4225, %v4257
  %v4266 = vsub.f32 %v4226, %v4258
  %v4267 = vsub.f32 %v4227, %v4259
  %v4268 = vsub.f32 %v4228, %v4260
  %v4269 = vsub.f32 %v4229, %v4261
  %v4270 = vsub.f32 %v4230, %v4262
  %v4271 = vsub.f32 %v4231, %v4263
  %v4272 = vmul.f32 %v4264, %v4264
  %v4273 = vmul.f32 %v4265, %v4265
  %v4274 = vmul.f32 %v4266, %v4266
  %v4275 = vmul.f32 %v4267, %v4267
  %v4276 = vmul.f32 %v4268, %v4268
  %v4277 = vmul.f32 %v4269, %v4269
  %v4278 = vmul.f32 %v4270, %v4270
  %v4279 = vmul.f32 %v4271, %v4271
  %v4280 = vsel %vm76, %v4272, 0.0
  %4281 = vadd.xlane.f32.xlu0 %v4280
  %v4282 = vpop.xlane.xlu0 %4281
  %v4283 = vsel %vm76, %v4273, 0.0
  %4284 = vadd.xlane.f32.xlu0 %v4283
  %v4285 = vpop.xlane.xlu0 %4284
  %v4286 = vsel %vm76, %v4274, 0.0
  %4287 = vadd.xlane.f32.xlu0 %v4286
  %v4288 = vpop.xlane.xlu0 %4287
  %v4289 = vsel %vm76, %v4275, 0.0
  %4290 = vadd.xlane.f32.xlu0 %v4289
  %v4291 = vpop.xlane.xlu0 %4290
  %v4292 = vsel %vm76, %v4276, 0.0
  %4293 = vadd.xlane.f32.xlu0 %v4292
  %v4294 = vpop.xlane.xlu0 %4293
  %v4295 = vsel %vm76, %v4277, 0.0
  %4296 = vadd.xlane.f32.xlu0 %v4295
  %v4297 = vpop.xlane.xlu0 %4296
  %v4298 = vsel %vm76, %v4278, 0.0
  %4299 = vadd.xlane.f32.xlu0 %v4298
  %v4300 = vpop.xlane.xlu0 %4299
  %v4301 = vsel %vm76, %v4279, 0.0
  %4302 = vadd.xlane.f32.xlu0 %v4301
  %v4303 = vpop.xlane.xlu0 %4302
  %v4304 = vmul.f32 %v4282, %v3870
  %v4305 = vmul.f32 %v4285, %v3870
  %v4306 = vmul.f32 %v4288, %v3870
  %v4307 = vmul.f32 %v4291, %v3870
  %v4308 = vmul.f32 %v4294, %v3870
  %v4309 = vmul.f32 %v4297, %v3870
  %v4310 = vmul.f32 %v4300, %v3870
  %v4311 = vmul.f32 %v4303, %v3870
  %v4312 = vadd.f32 %v4304, 1e-05
  %v4313 = vadd.f32 %v4305, 1e-05
  %v4314 = vadd.f32 %v4306, 1e-05
  %v4315 = vadd.f32 %v4307, 1e-05
  %v4316 = vadd.f32 %v4308, 1e-05
  %v4317 = vadd.f32 %v4309, 1e-05
  %v4318 = vadd.f32 %v4310, 1e-05
  %v4319 = vadd.f32 %v4311, 1e-05
  %v4320 = vrsqrt.pop %v4312
  %v4321 = vrsqrt.pop %v4313
  %v4322 = vrsqrt.pop %v4314
  %v4323 = vrsqrt.pop %v4315
  %v4324 = vrsqrt.pop %v4316
  %v4325 = vrsqrt.pop %v4317
  %v4326 = vrsqrt.pop %v4318
  %v4327 = vrsqrt.pop %v4319
  %v4328 = vmul.f32 %v4264, %v4320
  %v4329 = vmul.f32 %v4265, %v4321
  %v4330 = vmul.f32 %v4266, %v4322
  %v4331 = vmul.f32 %v4267, %v4323
  %v4332 = vmul.f32 %v4268, %v4324
  %v4333 = vmul.f32 %v4269, %v4325
  %v4334 = vmul.f32 %v4270, %v4326
  %v4335 = vmul.f32 %v4271, %v4327
  %v4336 = vlaneseq
  %v4337 = vshrl.u32 %v4336, 7
  %v4338 = vsub.s32 0, %v4337
  %v4339 = vrot.slane %v941, %v4338
  %v4340 = vmul.f32 %v4328, %v4339
  %v4341 = vmul.f32 %v4329, %v4339
  %v4342 = vmul.f32 %v4330, %v4339
  %v4343 = vmul.f32 %v4331, %v4339
  %v4344 = vmul.f32 %v4332, %v4339
  %v4345 = vmul.f32 %v4333, %v4339
  %v4346 = vmul.f32 %v4334, %v4339
  %v4347 = vmul.f32 %v4335, %v4339
  %v4348 = vlaneseq
  %v4349 = vshrl.u32 %v4348, 7
  %v4350 = vsub.s32 0, %v4349
  %v4351 = vrot.slane %v942, %v4350
  %v4352 = vadd.f32 %v4340, %v4351
  %v4353 = vadd.f32 %v4341, %v4351
  %v4354 = vadd.f32 %v4342, %v4351
  %v4355 = vadd.f32 %v4343, %v4351
  %v4356 = vadd.f32 %v4344, %v4351
  %v4357 = vadd.f32 %v4345, %v4351
  %v4358 = vadd.f32 %v4346, %v4351
  %v4359 = vadd.f32 %v4347, %v4351
  %v4360 = vlaneseq
  %v4361 = vshrl.u32 %v4360, 7
  %v4362 = vsub.s32 0, %v4361
  %v4363 = vrot.slane %v949, %v4362
  %v4365 = vsel %vm76, %v4352, 0
  %v4368 = vsel %vm76, %v4353, 0
  %v4371 = vsel %vm76, %v4354, 0
  %v4374 = vsel %vm76, %v4355, 0
  %v4377 = vsel %vm76, %v4356, 0
  %v4380 = vsel %vm76, %v4357, 0
  %v4383 = vsel %vm76, %v4358, 0
  %v4386 = vsel %vm76, %v4359, 0
  %4388 = vmatprep.subr.mxu0 0.0
  %4389 = vmatpush1.msra.mxu0 %v945
  %4390 = vmatprep.subr.mxu0 0.0
  %4391 = vmatpush1.msra.mxu0 %v946
  %4392 = vmatprep.subr.mxu0 0.0
  %4393 = vmatpush1.msra.mxu0 %v947
  %4394 = vmatprep.subr.mxu0 0.0
  %4395 = vmatpush1.msra.mxu0 %v948
  %4396 = vmatprep.subr.mxu0 0.0
  %4397 = vmatpush1.msra.mxu0 0.0
  %4398 = vmatprep.subr.mxu0 0.0
  %4399 = vmatpush1.msra.mxu0 0.0
  %4400 = vmatprep.subr.mxu0 0.0
  %4401 = vmatpush1.msra.mxu0 0.0
  %4402 = vmatprep.subr.mxu0 0.0
  %4403 = vmatpush1.msra.mxu0 0.0
  %4404 = vmatprep.subr.mxu0 0.0
  %4405 = vmatpush1.msra.mxu0 0.0
  %4406 = vmatprep.subr.mxu0 0.0
  %4407 = vmatpush1.msra.mxu0 0.0
  %4408 = vmatprep.subr.mxu0 0.0
  %4409 = vmatpush1.msra.mxu0 0.0
  %4410 = vmatprep.subr.mxu0 0.0
  %4411 = vmatpush1.msra.mxu0 0.0
  %4412 = vmatprep.subr.mxu0 0.0
  %4413 = vmatpush1.msra.mxu0 0.0
  %4414 = vmatprep.subr.mxu0 0.0
  %4415 = vmatpush1.msra.mxu0 0.0
  %4416 = vmatprep.subr.mxu0 0.0
  %4417 = vmatpush1.msra.mxu0 0.0
  %4418 = vmatprep.subr.mxu0 0.0
  %4419 = vmatpush1.msra.mxu0 0.0
  %4420 = vmatprep.subr.mxu0 0.0
  %4421 = vmatpush1.msra.mxu0 0.0
  %4422 = vmatprep.subr.mxu0 0.0
  %4423 = vmatpush1.msra.mxu0 0.0
  %4424 = vmatprep.subr.mxu0 0.0
  %4425 = vmatpush1.msra.mxu0 0.0
  %4426 = vmatprep.subr.mxu0 0.0
  %4427 = vmatpush1.msra.mxu0 0.0
  %4428 = vmatprep.subr.mxu0 0.0
  %4429 = vmatpush1.msra.mxu0 0.0
  %4430 = vmatprep.subr.mxu0 0.0
  %4431 = vmatpush1.msra.mxu0 0.0
  %4432 = vmatprep.subr.mxu0 0.0
  %4433 = vmatpush1.msra.mxu0 0.0
  %4434 = vmatprep.subr.mxu0 0.0
  %4435 = vmatpush1.msra.mxu0 0.0
  %4436 = vmatprep.subr.mxu0 0.0
  %4437 = vmatpush1.msra.mxu0 0.0
  %4438 = vmatprep.subr.mxu0 0.0
  %4439 = vmatpush1.msra.mxu0 0.0
  %4440 = vmatprep.subr.mxu0 0.0
  %4441 = vmatpush1.msra.mxu0 0.0
  %4442 = vmatprep.subr.mxu0 0.0
  %4443 = vmatpush1.msra.mxu0 0.0
  %4444 = vmatprep.subr.mxu0 0.0
  %4445 = vmatpush1.msra.mxu0 0.0
  %4446 = vmatprep.subr.mxu0 0.0
  %4447 = vmatpush1.msra.mxu0 0.0
  %4448 = vmatprep.subr.mxu0 0.0
  %4449 = vmatpush1.msra.mxu0 0.0
  %4450 = vmatprep.subr.mxu0 0.0
  %4451 = vmatpush1.msra.mxu0 0.0
  %4452 = vmatprep.mubr.f32.mxu0 0.0
  %4453 = vmatmul.mubr.f32.gmra.mrb[0].mxu0 %v4365
  %v4454 = vpop.f32.mrb[0].mxu0
  %v4455 = vadd.f32 %v4363, %v4454
  %v4456 = vpop.f32.mrb[0].mxu0
  %4457 = vmatprep.mubr.f32.mxu0 0.0
  %4458 = vmatmul.mubr.f32.gmra.mrb[0].mxu0 %v4368
  %v4459 = vpop.f32.mrb[0].mxu0
  %v4460 = vadd.f32 %v4363, %v4459
  %v4461 = vpop.f32.mrb[0].mxu0
  %4462 = vmatprep.mubr.f32.mxu0 0.0
  %4463 = vmatmul.mubr.f32.gmra.mrb[0].mxu0 %v4371
  %v4464 = vpop.f32.mrb[0].mxu0
  %v4465 = vadd.f32 %v4363, %v4464
  %v4466 = vpop.f32.mrb[0].mxu0
  %4467 = vmatprep.mubr.f32.mxu0 0.0
  %4468 = vmatmul.mubr.f32.gmra.mrb[0].mxu0 %v4374
  %v4469 = vpop.f32.mrb[0].mxu0
  %v4470 = vadd.f32 %v4363, %v4469
  %v4471 = vpop.f32.mrb[0].mxu0
  %4472 = vmatprep.mubr.f32.mxu0 0.0
  %4473 = vmatmul.mubr.f32.gmra.mrb[0].mxu0 %v4377
  %v4474 = vpop.f32.mrb[0].mxu0
  %v4475 = vadd.f32 %v4363, %v4474
  %v4476 = vpop.f32.mrb[0].mxu0
  %4477 = vmatprep.mubr.f32.mxu0 0.0
  %4478 = vmatmul.mubr.f32.gmra.mrb[0].mxu0 %v4380
  %v4479 = vpop.f32.mrb[0].mxu0
  %v4480 = vadd.f32 %v4363, %v4479
  %v4481 = vpop.f32.mrb[0].mxu0
  %4482 = vmatprep.mubr.f32.mxu0 0.0
  %4483 = vmatmul.mubr.f32.gmra.mrb[0].mxu0 %v4383
  %v4484 = vpop.f32.mrb[0].mxu0
  %v4485 = vadd.f32 %v4363, %v4484
  %v4486 = vpop.f32.mrb[0].mxu0
  %4487 = vmatprep.mubr.f32.mxu0 0.0
  %4488 = vmatmul.mubr.f32.gmra.mrb[0].mxu0 %v4386
  %v4489 = vpop.f32.mrb[0].mxu0
  %v4490 = vadd.f32 %v4363, %v4489
  %v4491 = vpop.f32.mrb[0].mxu0
  %4492 = vdwg.mxu0
  %v4493 = vmax.f32 %v4455, 0.0
  %v4494 = vmax.f32 %v4460, 0.0
  %v4495 = vmax.f32 %v4465, 0.0
  %v4496 = vmax.f32 %v4470, 0.0
  %v4497 = vmax.f32 %v4475, 0.0
  %v4498 = vmax.f32 %v4480, 0.0
  %v4499 = vmax.f32 %v4485, 0.0
  %v4500 = vmax.f32 %v4490, 0.0
  %v4501 = vld [vmem:[%s2 + $0xe0] sm:$0xff]
  %v4502 = vld [vmem:[%s2 + $0xe8] sm:$0xff]
  %v4503 = vld [vmem:[%s2 + $0xf0] sm:$0xff]
  %v4504 = vld [vmem:[%s2 + $0xf8] sm:$0xff]
  %v4505 = vld [vmem:[%s2 + $0x100] sm:$0xff]
  %v4506 = vld [vmem:[%s2 + $0x108] sm:$0xff]
  %v4507 = vld [vmem:[%s2 + $0x110] sm:$0xff]
  %v4508 = vld [vmem:[%s2 + $0x118] sm:$0xff]
  %v4509 = vld [vmem:[%s2 + $0x120] sm:$0xff]
  %v4510 = vld [vmem:[%s2 + $0x128] sm:$0xff]
  %v4511 = vld [vmem:[%s2 + $0x130] sm:$0xff]
  %v4512 = vld [vmem:[%s2 + $0x138] sm:$0xff]
  %v4513 = vld [vmem:[%s2 + $0x140] sm:$0xff]
  %v4514 = vld [vmem:[%s2 + $0x148] sm:$0xff]
  %v4515 = vld [vmem:[%s2 + $0x150] sm:$0xff]
  %v4516 = vld [vmem:[%s2 + $0x158] sm:$0xff]
  %v4517 = vlaneseq
  %v4518 = vshrl.u32 %v4517, 7
  %v4519 = vsub.s32 0, %v4518
  %v4520 = vrot.slane %v938, %v4519
  %4521 = vmatprep.subr.mxu0 0.0
  %4522 = vmatpush1.msra.mxu0 %v4501
  %4523 = vmatprep.subr.mxu0 0.0
  %4524 = vmatpush1.msra.mxu0 %v4502
  %4525 = vmatprep.subr.mxu0 0.0
  %4526 = vmatpush1.msra.mxu0 %v4503
  %4527 = vmatprep.subr.mxu0 0.0
  %4528 = vmatpush1.msra.mxu0 %v4504
  %4529 = vmatprep.subr.mxu0 0.0
  %4530 = vmatpush1.msra.mxu0 %v4505
  %4531 = vmatprep.subr.mxu0 0.0
  %4532 = vmatpush1.msra.mxu0 %v4506
  %4533 = vmatprep.subr.mxu0 0.0
  %4534 = vmatpush1.msra.mxu0 %v4507
  %4535 = vmatprep.subr.mxu0 0.0
  %4536 = vmatpush1.msra.mxu0 %v4508
  %4537 = vmatprep.subr.mxu0 0.0
  %4538 = vmatpush1.msra.mxu0 %v4509
  %4539 = vmatprep.subr.mxu0 0.0
  %4540 = vmatpush1.msra.mxu0 %v4510
  %4541 = vmatprep.subr.mxu0 0.0
  %4542 = vmatpush1.msra.mxu0 %v4511
  %4543 = vmatprep.subr.mxu0 0.0
  %4544 = vmatpush1.msra.mxu0 %v4512
  %4545 = vmatprep.subr.mxu0 0.0
  %4546 = vmatpush1.msra.mxu0 %v4513
  %4547 = vmatprep.subr.mxu0 0.0
  %4548 = vmatpush1.msra.mxu0 %v4514
  %4549 = vmatprep.subr.mxu0 0.0
  %4550 = vmatpush1.msra.mxu0 %v4515
  %4551 = vmatprep.subr.mxu0 0.0
  %4552 = vmatpush1.msra.mxu0 %v4516
  %4553 = vmatprep.subr.mxu0 0.0
  %4554 = vmatpush1.msra.mxu0 0.0
  %4555 = vmatprep.subr.mxu0 0.0
  %4556 = vmatpush1.msra.mxu0 0.0
  %4557 = vmatprep.subr.mxu0 0.0
  %4558 = vmatpush1.msra.mxu0 0.0
  %4559 = vmatprep.subr.mxu0 0.0
  %4560 = vmatpush1.msra.mxu0 0.0
  %4561 = vmatprep.subr.mxu0 0.0
  %4562 = vmatpush1.msra.mxu0 0.0
  %4563 = vmatprep.subr.mxu0 0.0
  %4564 = vmatpush1.msra.mxu0 0.0
  %4565 = vmatprep.subr.mxu0 0.0
  %4566 = vmatpush1.msra.mxu0 0.0
  %4567 = vmatprep.subr.mxu0 0.0
  %4568 = vmatpush1.msra.mxu0 0.0
  %4569 = vmatprep.subr.mxu0 0.0
  %4570 = vmatpush1.msra.mxu0 0.0
  %4571 = vmatprep.subr.mxu0 0.0
  %4572 = vmatpush1.msra.mxu0 0.0
  %4573 = vmatprep.subr.mxu0 0.0
  %4574 = vmatpush1.msra.mxu0 0.0
  %4575 = vmatprep.subr.mxu0 0.0
  %4576 = vmatpush1.msra.mxu0 0.0
  %4577 = vmatprep.subr.mxu0 0.0
  %4578 = vmatpush1.msra.mxu0 0.0
  %4579 = vmatprep.subr.mxu0 0.0
  %4580 = vmatpush1.msra.mxu0 0.0
  %4581 = vmatprep.subr.mxu0 0.0
  %4582 = vmatpush1.msra.mxu0 0.0
  %4583 = vmatprep.subr.mxu0 0.0
  %4584 = vmatpush1.msra.mxu0 0.0
  %4585 = vmatprep.mubr.f32.mxu0 0.0
  %4586 = vmatmul.mubr.f32.gmra.mrb[0].mxu0 %v4493
  %v4587 = vpop.f32.mrb[0].mxu0
  %v4588 = vadd.f32 %v4520, %v4587
  %v4589 = vpop.f32.mrb[0].mxu0
  %4590 = vmatprep.mubr.f32.mxu0 0.0
  %4591 = vmatmul.mubr.f32.gmra.mrb[0].mxu0 %v4494
  %v4592 = vpop.f32.mrb[0].mxu0
  %v4593 = vadd.f32 %v4520, %v4592
  %v4594 = vpop.f32.mrb[0].mxu0
  %4595 = vmatprep.mubr.f32.mxu0 0.0
  %4596 = vmatmul.mubr.f32.gmra.mrb[0].mxu0 %v4495
  %v4597 = vpop.f32.mrb[0].mxu0
  %v4598 = vadd.f32 %v4520, %v4597
  %v4599 = vpop.f32.mrb[0].mxu0
  %4600 = vmatprep.mubr.f32.mxu0 0.0
  %4601 = vmatmul.mubr.f32.gmra.mrb[0].mxu0 %v4496
  %v4602 = vpop.f32.mrb[0].mxu0
  %v4603 = vadd.f32 %v4520, %v4602
  %v4604 = vpop.f32.mrb[0].mxu0
  %4605 = vmatprep.mubr.f32.mxu0 0.0
  %4606 = vmatmul.mubr.f32.gmra.mrb[0].mxu0 %v4497
  %v4607 = vpop.f32.mrb[0].mxu0
  %v4608 = vadd.f32 %v4520, %v4607
  %v4609 = vpop.f32.mrb[0].mxu0
  %4610 = vmatprep.mubr.f32.mxu0 0.0
  %4611 = vmatmul.mubr.f32.gmra.mrb[0].mxu0 %v4498
  %v4612 = vpop.f32.mrb[0].mxu0
  %v4613 = vadd.f32 %v4520, %v4612
  %v4614 = vpop.f32.mrb[0].mxu0
  %4615 = vmatprep.mubr.f32.mxu0 0.0
  %4616 = vmatmul.mubr.f32.gmra.mrb[0].mxu0 %v4499
  %v4617 = vpop.f32.mrb[0].mxu0
  %v4618 = vadd.f32 %v4520, %v4617
  %v4619 = vpop.f32.mrb[0].mxu0
  %4620 = vmatprep.mubr.f32.mxu0 0.0
  %4621 = vmatmul.mubr.f32.gmra.mrb[0].mxu0 %v4500
  %v4622 = vpop.f32.mrb[0].mxu0
  %v4623 = vadd.f32 %v4520, %v4622
  %v4624 = vpop.f32.mrb[0].mxu0
  %4625 = vdwg.mxu0
  %v4626 = vadd.f32 %v4352, %v4588
  %v4627 = vadd.f32 %v4353, %v4593
  %v4628 = vadd.f32 %v4354, %v4598
  %v4629 = vadd.f32 %v4355, %v4603
  %v4630 = vadd.f32 %v4356, %v4608
  %v4631 = vadd.f32 %v4357, %v4613
  %v4632 = vadd.f32 %v4358, %v4618
  %v4633 = vadd.f32 %v4359, %v4623
  %v4634 = vsel %vm76, %v4626, 0.0
  %4635 = vadd.xlane.f32.xlu0 %v4634
  %v4636 = vpop.xlane.xlu0 %4635
  %v4637 = vsel %vm76, %v4627, 0.0
  %4638 = vadd.xlane.f32.xlu0 %v4637
  %v4639 = vpop.xlane.xlu0 %4638
  %v4640 = vsel %vm76, %v4628, 0.0
  %4641 = vadd.xlane.f32.xlu0 %v4640
  %v4642 = vpop.xlane.xlu0 %4641
  %v4643 = vsel %vm76, %v4629, 0.0
  %4644 = vadd.xlane.f32.xlu0 %v4643
  %v4645 = vpop.xlane.xlu0 %4644
  %v4646 = vsel %vm76, %v4630, 0.0
  %4647 = vadd.xlane.f32.xlu0 %v4646
  %v4648 = vpop.xlane.xlu0 %4647
  %v4649 = vsel %vm76, %v4631, 0.0
  %4650 = vadd.xlane.f32.xlu0 %v4649
  %v4651 = vpop.xlane.xlu0 %4650
  %v4652 = vsel %vm76, %v4632, 0.0
  %4653 = vadd.xlane.f32.xlu0 %v4652
  %v4654 = vpop.xlane.xlu0 %4653
  %v4655 = vsel %vm76, %v4633, 0.0
  %4656 = vadd.xlane.f32.xlu0 %v4655
  %v4657 = vpop.xlane.xlu0 %4656
  %v4658 = vmul.f32 %v4636, %v3870
  %v4659 = vmul.f32 %v4639, %v3870
  %v4660 = vmul.f32 %v4642, %v3870
  %v4661 = vmul.f32 %v4645, %v3870
  %v4662 = vmul.f32 %v4648, %v3870
  %v4663 = vmul.f32 %v4651, %v3870
  %v4664 = vmul.f32 %v4654, %v3870
  %v4665 = vmul.f32 %v4657, %v3870
  %v4666 = vsub.f32 %v4626, %v4658
  %v4667 = vsub.f32 %v4627, %v4659
  %v4668 = vsub.f32 %v4628, %v4660
  %v4669 = vsub.f32 %v4629, %v4661
  %v4670 = vsub.f32 %v4630, %v4662
  %v4671 = vsub.f32 %v4631, %v4663
  %v4672 = vsub.f32 %v4632, %v4664
  %v4673 = vsub.f32 %v4633, %v4665
  %v4674 = vmul.f32 %v4666, %v4666
  %v4675 = vmul.f32 %v4667, %v4667
  %v4676 = vmul.f32 %v4668, %v4668
  %v4677 = vmul.f32 %v4669, %v4669
  %v4678 = vmul.f32 %v4670, %v4670
  %v4679 = vmul.f32 %v4671, %v4671
  %v4680 = vmul.f32 %v4672, %v4672
  %v4681 = vmul.f32 %v4673, %v4673
  %v4682 = vsel %vm76, %v4674, 0.0
  %4683 = vadd.xlane.f32.xlu0 %v4682
  %v4684 = vpop.xlane.xlu0 %4683
  %v4685 = vsel %vm76, %v4675, 0.0
  %4686 = vadd.xlane.f32.xlu0 %v4685
  %v4687 = vpop.xlane.xlu0 %4686
  %v4688 = vsel %vm76, %v4676, 0.0
  %4689 = vadd.xlane.f32.xlu0 %v4688
  %v4690 = vpop.xlane.xlu0 %4689
  %v4691 = vsel %vm76, %v4677, 0.0
  %4692 = vadd.xlane.f32.xlu0 %v4691
  %v4693 = vpop.xlane.xlu0 %4692
  %v4694 = vsel %vm76, %v4678, 0.0
  %4695 = vadd.xlane.f32.xlu0 %v4694
  %v4696 = vpop.xlane.xlu0 %4695
  %v4697 = vsel %vm76, %v4679, 0.0
  %4698 = vadd.xlane.f32.xlu0 %v4697
  %v4699 = vpop.xlane.xlu0 %4698
  %v4700 = vsel %vm76, %v4680, 0.0
  %4701 = vadd.xlane.f32.xlu0 %v4700
  %v4702 = vpop.xlane.xlu0 %4701
  %v4703 = vsel %vm76, %v4681, 0.0
  %4704 = vadd.xlane.f32.xlu0 %v4703
  %v4705 = vpop.xlane.xlu0 %4704
  %v4706 = vmul.f32 %v4684, %v3870
  %v4707 = vmul.f32 %v4687, %v3870
  %v4708 = vmul.f32 %v4690, %v3870
  %v4709 = vmul.f32 %v4693, %v3870
  %v4710 = vmul.f32 %v4696, %v3870
  %v4711 = vmul.f32 %v4699, %v3870
  %v4712 = vmul.f32 %v4702, %v3870
  %v4713 = vmul.f32 %v4705, %v3870
  %v4714 = vadd.f32 %v4706, 1e-05
  %v4715 = vadd.f32 %v4707, 1e-05
  %v4716 = vadd.f32 %v4708, 1e-05
  %v4717 = vadd.f32 %v4709, 1e-05
  %v4718 = vadd.f32 %v4710, 1e-05
  %v4719 = vadd.f32 %v4711, 1e-05
  %v4720 = vadd.f32 %v4712, 1e-05
  %v4721 = vadd.f32 %v4713, 1e-05
  %v4722 = vrsqrt.pop %v4714
  %v4723 = vrsqrt.pop %v4715
  %v4724 = vrsqrt.pop %v4716
  %v4725 = vrsqrt.pop %v4717
  %v4726 = vrsqrt.pop %v4718
  %v4727 = vrsqrt.pop %v4719
  %v4728 = vrsqrt.pop %v4720
  %v4729 = vrsqrt.pop %v4721
  %v4730 = vmul.f32 %v4666, %v4722
  %v4731 = vmul.f32 %v4667, %v4723
  %v4732 = vmul.f32 %v4668, %v4724
  %v4733 = vmul.f32 %v4669, %v4725
  %v4734 = vmul.f32 %v4670, %v4726
  %v4735 = vmul.f32 %v4671, %v4727
  %v4736 = vmul.f32 %v4672, %v4728
  %v4737 = vmul.f32 %v4673, %v4729
  %v4738 = vlaneseq
  %v4739 = vshrl.u32 %v4738, 7
  %v4740 = vsub.s32 0, %v4739
  %v4741 = vrot.slane %v943, %v4740
  %v4742 = vmul.f32 %v4730, %v4741
  %v4743 = vmul.f32 %v4731, %v4741
  %v4744 = vmul.f32 %v4732, %v4741
  %v4745 = vmul.f32 %v4733, %v4741
  %v4746 = vmul.f32 %v4734, %v4741
  %v4747 = vmul.f32 %v4735, %v4741
  %v4748 = vmul.f32 %v4736, %v4741
  %v4749 = vmul.f32 %v4737, %v4741
  %v4750 = vlaneseq
  %v4751 = vshrl.u32 %v4750, 7
  %v4752 = vsub.s32 0, %v4751
  %v4753 = vrot.slane %v944, %v4752
  %v4754 = vadd.f32 %v4742, %v4753
  %v4755 = vadd.f32 %v4743, %v4753
  %v4756 = vadd.f32 %v4744, %v4753
  %v4757 = vadd.f32 %v4745, %v4753
  %v4758 = vadd.f32 %v4746, %v4753
  %v4759 = vadd.f32 %v4747, %v4753
  %v4760 = vadd.f32 %v4748, %v4753
  %v4761 = vadd.f32 %v4749, %v4753
  %4762 = vst.msk [vmem:[%s4] sm:$0xff] %vm76, %v4754
  %4763 = vst.msk [vmem:[%s4 + $0x8] sm:$0xff] %vm76, %v4755
  %4764 = vst.msk [vmem:[%s4 + $0x10] sm:$0xff] %vm76, %v4756
  %4765 = vst.msk [vmem:[%s4 + $0x18] sm:$0xff] %vm76, %v4757
  %4766 = vst.msk [vmem:[%s4 + $0x20] sm:$0xff] %vm76, %v4758
  %4767 = vst.msk [vmem:[%s4 + $0x28] sm:$0xff] %vm76, %v4759
  %4768 = vst.msk [vmem:[%s4 + $0x30] sm:$0xff] %vm76, %v4760
  %4769 = vst.msk [vmem:[%s4 + $0x38] sm:$0xff] %vm76, %v4761
  %v4770 = vadd.f32 %v4754, %v26
  %v4771 = vadd.f32 %v4755, %v27
  %v4772 = vadd.f32 %v4756, %v28
  %v4773 = vadd.f32 %v4757, %v29
  %v4774 = vadd.f32 %v4758, %v30
  %v4775 = vadd.f32 %v4759, %v31
  %v4776 = vadd.f32 %v4760, %v32
  %v4777 = vadd.f32 %v4761, %v33
  %v4778 = vld [vmem:[%s2] sm:$0xff]
  %v4779 = vld [vmem:[%s2 + $0x8] sm:$0xff]
  %v4780 = vld [vmem:[%s2 + $0x10] sm:$0xff]
  %v4781 = vld [vmem:[%s2 + $0x18] sm:$0xff]
  %v4783 = vsel %vm76, %v4770, 0
  %v4786 = vsel %vm76, %v4771, 0
  %v4789 = vsel %vm76, %v4772, 0
  %v4792 = vsel %vm76, %v4773, 0
  %v4795 = vsel %vm76, %v4774, 0
  %v4798 = vsel %vm76, %v4775, 0
  %v4801 = vsel %vm76, %v4776, 0
  %v4804 = vsel %vm76, %v4777, 0
  %4806 = vmatprep.subr.mxu0 0.0
  %4807 = vmatpush1.msra.mxu0 %v4778
  %4808 = vmatprep.subr.mxu0 0.0
  %4809 = vmatpush1.msra.mxu0 %v4779
  %4810 = vmatprep.subr.mxu0 0.0
  %4811 = vmatpush1.msra.mxu0 %v4780
  %4812 = vmatprep.subr.mxu0 0.0
  %4813 = vmatpush1.msra.mxu0 %v4781
  %4814 = vmatprep.subr.mxu0 0.0
  %4815 = vmatpush1.msra.mxu0 0.0
  %4816 = vmatprep.subr.mxu0 0.0
  %4817 = vmatpush1.msra.mxu0 0.0
  %4818 = vmatprep.subr.mxu0 0.0
  %4819 = vmatpush1.msra.mxu0 0.0
  %4820 = vmatprep.subr.mxu0 0.0
  %4821 = vmatpush1.msra.mxu0 0.0
  %4822 = vmatprep.subr.mxu0 0.0
  %4823 = vmatpush1.msra.mxu0 0.0
  %4824 = vmatprep.subr.mxu0 0.0
  %4825 = vmatpush1.msra.mxu0 0.0
  %4826 = vmatprep.subr.mxu0 0.0
  %4827 = vmatpush1.msra.mxu0 0.0
  %4828 = vmatprep.subr.mxu0 0.0
  %4829 = vmatpush1.msra.mxu0 0.0
  %4830 = vmatprep.subr.mxu0 0.0
  %4831 = vmatpush1.msra.mxu0 0.0
  %4832 = vmatprep.subr.mxu0 0.0
  %4833 = vmatpush1.msra.mxu0 0.0
  %4834 = vmatprep.subr.mxu0 0.0
  %4835 = vmatpush1.msra.mxu0 0.0
  %4836 = vmatprep.subr.mxu0 0.0
  %4837 = vmatpush1.msra.mxu0 0.0
  %4838 = vmatprep.subr.mxu0 0.0
  %4839 = vmatpush1.msra.mxu0 0.0
  %4840 = vmatprep.subr.mxu0 0.0
  %4841 = vmatpush1.msra.mxu0 0.0
  %4842 = vmatprep.subr.mxu0 0.0
  %4843 = vmatpush1.msra.mxu0 0.0
  %4844 = vmatprep.subr.mxu0 0.0
  %4845 = vmatpush1.msra.mxu0 0.0
  %4846 = vmatprep.subr.mxu0 0.0
  %4847 = vmatpush1.msra.mxu0 0.0
  %4848 = vmatprep.subr.mxu0 0.0
  %4849 = vmatpush1.msra.mxu0 0.0
  %4850 = vmatprep.subr.mxu0 0.0
  %4851 = vmatpush1.msra.mxu0 0.0
  %4852 = vmatprep.subr.mxu0 0.0
  %4853 = vmatpush1.msra.mxu0 0.0
  %4854 = vmatprep.subr.mxu0 0.0
  %4855 = vmatpush1.msra.mxu0 0.0
  %4856 = vmatprep.subr.mxu0 0.0
  %4857 = vmatpush1.msra.mxu0 0.0
  %4858 = vmatprep.subr.mxu0 0.0
  %4859 = vmatpush1.msra.mxu0 0.0
  %4860 = vmatprep.subr.mxu0 0.0
  %4861 = vmatpush1.msra.mxu0 0.0
  %4862 = vmatprep.subr.mxu0 0.0
  %4863 = vmatpush1.msra.mxu0 0.0
  %4864 = vmatprep.subr.mxu0 0.0
  %4865 = vmatpush1.msra.mxu0 0.0
  %4866 = vmatprep.subr.mxu0 0.0
  %4867 = vmatpush1.msra.mxu0 0.0
  %4868 = vmatprep.subr.mxu0 0.0
  %4869 = vmatpush1.msra.mxu0 0.0
  %4870 = vmatprep.mubr.f32.mxu0 0.0
  %4871 = vmatmul.mubr.f32.gmra.mrb[0].mxu0 %v4783
  %v4872 = vpop.f32.mrb[0].mxu0
  %v4873 = vadd.f32 %v965, %v4872
  %v4874 = vpop.f32.mrb[0].mxu0
  %4875 = vmatprep.mubr.f32.mxu0 0.0
  %4876 = vmatmul.mubr.f32.gmra.mrb[0].mxu0 %v4786
  %v4877 = vpop.f32.mrb[0].mxu0
  %v4878 = vadd.f32 %v965, %v4877
  %v4879 = vpop.f32.mrb[0].mxu0
  %4880 = vmatprep.mubr.f32.mxu0 0.0
  %4881 = vmatmul.mubr.f32.gmra.mrb[0].mxu0 %v4789
  %v4882 = vpop.f32.mrb[0].mxu0
  %v4883 = vadd.f32 %v965, %v4882
  %v4884 = vpop.f32.mrb[0].mxu0
  %4885 = vmatprep.mubr.f32.mxu0 0.0
  %4886 = vmatmul.mubr.f32.gmra.mrb[0].mxu0 %v4792
  %v4887 = vpop.f32.mrb[0].mxu0
  %v4888 = vadd.f32 %v965, %v4887
  %v4889 = vpop.f32.mrb[0].mxu0
  %4890 = vmatprep.mubr.f32.mxu0 0.0
  %4891 = vmatmul.mubr.f32.gmra.mrb[0].mxu0 %v4795
  %v4892 = vpop.f32.mrb[0].mxu0
  %v4893 = vadd.f32 %v965, %v4892
  %v4894 = vpop.f32.mrb[0].mxu0
  %4895 = vmatprep.mubr.f32.mxu0 0.0
  %4896 = vmatmul.mubr.f32.gmra.mrb[0].mxu0 %v4798
  %v4897 = vpop.f32.mrb[0].mxu0
  %v4898 = vadd.f32 %v965, %v4897
  %v4899 = vpop.f32.mrb[0].mxu0
  %4900 = vmatprep.mubr.f32.mxu0 0.0
  %4901 = vmatmul.mubr.f32.gmra.mrb[0].mxu0 %v4801
  %v4902 = vpop.f32.mrb[0].mxu0
  %v4903 = vadd.f32 %v965, %v4902
  %v4904 = vpop.f32.mrb[0].mxu0
  %4905 = vmatprep.mubr.f32.mxu0 0.0
  %4906 = vmatmul.mubr.f32.gmra.mrb[0].mxu0 %v4804
  %v4907 = vpop.f32.mrb[0].mxu0
  %v4908 = vadd.f32 %v965, %v4907
  %v4909 = vpop.f32.mrb[0].mxu0
  %4910 = vdwg.mxu0
  %v4912 = vsel %vm1095, %v4873, 0
  %v4915 = vsel %vm1095, %v4878, 0
  %v4918 = vsel %vm1095, %v4883, 0
  %v4921 = vsel %vm1095, %v4888, 0
  %4923 = vmatprep.subr.mxu0 0.0
  %4924 = vmatpush1.xpose.msra.mxu0 %v1109
  %4925 = vmatprep.subr.mxu0 0.0
  %4926 = vmatpush1.xpose.msra.mxu0 %v1112
  %4927 = vmatprep.subr.mxu0 0.0
  %4928 = vmatpush1.xpose.msra.mxu0 %v1115
  %4929 = vmatprep.subr.mxu0 0.0
  %4930 = vmatpush1.xpose.msra.mxu0 %v1118
  %4931 = vmatprep.subr.mxu0 0.0
  %4932 = vmatpush1.xpose.msra.mxu0 0.0
  %4933 = vmatprep.subr.mxu0 0.0
  %4934 = vmatpush1.xpose.msra.mxu0 0.0
  %4935 = vmatprep.subr.mxu0 0.0
  %4936 = vmatpush1.xpose.msra.mxu0 0.0
  %4937 = vmatprep.subr.mxu0 0.0
  %4938 = vmatpush1.xpose.msra.mxu0 0.0
  %4939 = vmatprep.subr.mxu0 0.0
  %4940 = vmatpush1.xpose.msra.mxu0 0.0
  %4941 = vmatprep.subr.mxu0 0.0
  %4942 = vmatpush1.xpose.msra.mxu0 0.0
  %4943 = vmatprep.subr.mxu0 0.0
  %4944 = vmatpush1.xpose.msra.mxu0 0.0
  %4945 = vmatprep.subr.mxu0 0.0
  %4946 = vmatpush1.xpose.msra.mxu0 0.0
  %4947 = vmatprep.subr.mxu0 0.0
  %4948 = vmatpush1.xpose.msra.mxu0 0.0
  %4949 = vmatprep.subr.mxu0 0.0
  %4950 = vmatpush1.xpose.msra.mxu0 0.0
  %4951 = vmatprep.subr.mxu0 0.0
  %4952 = vmatpush1.xpose.msra.mxu0 0.0
  %4953 = vmatprep.subr.mxu0 0.0
  %4954 = vmatpush1.xpose.msra.mxu0 0.0
  %4955 = vmatprep.subr.mxu0 0.0
  %4956 = vmatpush1.xpose.msra.mxu0 0.0
  %4957 = vmatprep.subr.mxu0 0.0
  %4958 = vmatpush1.xpose.msra.mxu0 0.0
  %4959 = vmatprep.subr.mxu0 0.0
  %4960 = vmatpush1.xpose.msra.mxu0 0.0
  %4961 = vmatprep.subr.mxu0 0.0
  %4962 = vmatpush1.xpose.msra.mxu0 0.0
  %4963 = vmatprep.subr.mxu0 0.0
  %4964 = vmatpush1.xpose.msra.mxu0 0.0
  %4965 = vmatprep.subr.mxu0 0.0
  %4966 = vmatpush1.xpose.msra.mxu0 0.0
  %4967 = vmatprep.subr.mxu0 0.0
  %4968 = vmatpush1.xpose.msra.mxu0 0.0
  %4969 = vmatprep.subr.mxu0 0.0
  %4970 = vmatpush1.xpose.msra.mxu0 0.0
  %4971 = vmatprep.subr.mxu0 0.0
  %4972 = vmatpush1.xpose.msra.mxu0 0.0
  %4973 = vmatprep.subr.mxu0 0.0
  %4974 = vmatpush1.xpose.msra.mxu0 0.0
  %4975 = vmatprep.subr.mxu0 0.0
  %4976 = vmatpush1.xpose.msra.mxu0 0.0
  %4977 = vmatprep.subr.mxu0 0.0
  %4978 = vmatpush1.xpose.msra.mxu0 0.0
  %4979 = vmatprep.subr.mxu0 0.0
  %4980 = vmatpush1.xpose.msra.mxu0 0.0
  %4981 = vmatprep.subr.mxu0 0.0
  %4982 = vmatpush1.xpose.msra.mxu0 0.0
  %4983 = vmatprep.subr.mxu0 0.0
  %4984 = vmatpush1.xpose.msra.mxu0 0.0
  %4985 = vmatprep.subr.mxu0 0.0
  %4986 = vmatpush1.xpose.msra.mxu0 0.0
  %4987 = vmatprep.mubr.f32.mxu0 0.0
  %4988 = vmatmul.mubr.f32.gmra.mrb[0].mxu0 %v4912
  %v4989 = vpop.f32.mrb[0].mxu0
  %v4990 = vadd.f32 0.0, %v4989
  %v4991 = vpop.f32.mrb[0].mxu0
  %4992 = vmatprep.mubr.f32.mxu0 0.0
  %4993 = vmatmul.mubr.f32.gmra.mrb[0].mxu0 %v4915
  %v4994 = vpop.f32.mrb[0].mxu0
  %v4995 = vadd.f32 0.0, %v4994
  %v4996 = vpop.f32.mrb[0].mxu0
  %4997 = vmatprep.mubr.f32.mxu0 0.0
  %4998 = vmatmul.mubr.f32.gmra.mrb[0].mxu0 %v4918
  %v4999 = vpop.f32.mrb[0].mxu0
  %v5000 = vadd.f32 0.0, %v4999
  %v5001 = vpop.f32.mrb[0].mxu0
  %5002 = vmatprep.mubr.f32.mxu0 0.0
  %5003 = vmatmul.mubr.f32.gmra.mrb[0].mxu0 %v4921
  %v5004 = vpop.f32.mrb[0].mxu0
  %v5005 = vadd.f32 0.0, %v5004
  %v5006 = vpop.f32.mrb[0].mxu0
  %5007 = vdwg.mxu0
  %v5009 = vsel %vm1095, %v4893, 0
  %v5012 = vsel %vm1095, %v4898, 0
  %v5015 = vsel %vm1095, %v4903, 0
  %v5018 = vsel %vm1095, %v4908, 0
  %5020 = vmatprep.subr.mxu0 0.0
  %5021 = vmatpush1.xpose.msra.mxu0 %v1218
  %5022 = vmatprep.subr.mxu0 0.0
  %5023 = vmatpush1.xpose.msra.mxu0 %v1221
  %5024 = vmatprep.subr.mxu0 0.0
  %5025 = vmatpush1.xpose.msra.mxu0 %v1224
  %5026 = vmatprep.subr.mxu0 0.0
  %5027 = vmatpush1.xpose.msra.mxu0 %v1227
  %5028 = vmatprep.subr.mxu0 0.0
  %5029 = vmatpush1.xpose.msra.mxu0 0.0
  %5030 = vmatprep.subr.mxu0 0.0
  %5031 = vmatpush1.xpose.msra.mxu0 0.0
  %5032 = vmatprep.subr.mxu0 0.0
  %5033 = vmatpush1.xpose.msra.mxu0 0.0
  %5034 = vmatprep.subr.mxu0 0.0
  %5035 = vmatpush1.xpose.msra.mxu0 0.0
  %5036 = vmatprep.subr.mxu0 0.0
  %5037 = vmatpush1.xpose.msra.mxu0 0.0
  %5038 = vmatprep.subr.mxu0 0.0
  %5039 = vmatpush1.xpose.msra.mxu0 0.0
  %5040 = vmatprep.subr.mxu0 0.0
  %5041 = vmatpush1.xpose.msra.mxu0 0.0
  %5042 = vmatprep.subr.mxu0 0.0
  %5043 = vmatpush1.xpose.msra.mxu0 0.0
  %5044 = vmatprep.subr.mxu0 0.0
  %5045 = vmatpush1.xpose.msra.mxu0 0.0
  %5046 = vmatprep.subr.mxu0 0.0
  %5047 = vmatpush1.xpose.msra.mxu0 0.0
  %5048 = vmatprep.subr.mxu0 0.0
  %5049 = vmatpush1.xpose.msra.mxu0 0.0
  %5050 = vmatprep.subr.mxu0 0.0
  %5051 = vmatpush1.xpose.msra.mxu0 0.0
  %5052 = vmatprep.subr.mxu0 0.0
  %5053 = vmatpush1.xpose.msra.mxu0 0.0
  %5054 = vmatprep.subr.mxu0 0.0
  %5055 = vmatpush1.xpose.msra.mxu0 0.0
  %5056 = vmatprep.subr.mxu0 0.0
  %5057 = vmatpush1.xpose.msra.mxu0 0.0
  %5058 = vmatprep.subr.mxu0 0.0
  %5059 = vmatpush1.xpose.msra.mxu0 0.0
  %5060 = vmatprep.subr.mxu0 0.0
  %5061 = vmatpush1.xpose.msra.mxu0 0.0
  %5062 = vmatprep.subr.mxu0 0.0
  %5063 = vmatpush1.xpose.msra.mxu0 0.0
  %5064 = vmatprep.subr.mxu0 0.0
  %5065 = vmatpush1.xpose.msra.mxu0 0.0
  %5066 = vmatprep.subr.mxu0 0.0
  %5067 = vmatpush1.xpose.msra.mxu0 0.0
  %5068 = vmatprep.subr.mxu0 0.0
  %5069 = vmatpush1.xpose.msra.mxu0 0.0
  %5070 = vmatprep.subr.mxu0 0.0
  %5071 = vmatpush1.xpose.msra.mxu0 0.0
  %5072 = vmatprep.subr.mxu0 0.0
  %5073 = vmatpush1.xpose.msra.mxu0 0.0
  %5074 = vmatprep.subr.mxu0 0.0
  %5075 = vmatpush1.xpose.msra.mxu0 0.0
  %5076 = vmatprep.subr.mxu0 0.0
  %5077 = vmatpush1.xpose.msra.mxu0 0.0
  %5078 = vmatprep.subr.mxu0 0.0
  %5079 = vmatpush1.xpose.msra.mxu0 0.0
  %5080 = vmatprep.subr.mxu0 0.0
  %5081 = vmatpush1.xpose.msra.mxu0 0.0
  %5082 = vmatprep.subr.mxu0 0.0
  %5083 = vmatpush1.xpose.msra.mxu0 0.0
  %5084 = vmatprep.mubr.f32.mxu0 0.0
  %5085 = vmatmul.mubr.f32.gmra.mrb[0].mxu0 %v5009
  %v5086 = vpop.f32.mrb[0].mxu0
  %v5087 = vadd.f32 0.0, %v5086
  %v5088 = vpop.f32.mrb[0].mxu0
  %5089 = vmatprep.mubr.f32.mxu0 0.0
  %5090 = vmatmul.mubr.f32.gmra.mrb[0].mxu0 %v5012
  %v5091 = vpop.f32.mrb[0].mxu0
  %v5092 = vadd.f32 0.0, %v5091
  %v5093 = vpop.f32.mrb[0].mxu0
  %5094 = vmatprep.mubr.f32.mxu0 0.0
  %5095 = vmatmul.mubr.f32.gmra.mrb[0].mxu0 %v5015
  %v5096 = vpop.f32.mrb[0].mxu0
  %v5097 = vadd.f32 0.0, %v5096
  %v5098 = vpop.f32.mrb[0].mxu0
  %5099 = vmatprep.mubr.f32.mxu0 0.0
  %5100 = vmatmul.mubr.f32.gmra.mrb[0].mxu0 %v5018
  %v5101 = vpop.f32.mrb[0].mxu0
  %v5102 = vadd.f32 0.0, %v5101
  %v5103 = vpop.f32.mrb[0].mxu0
  %5104 = vdwg.mxu0
  %v5105 = vmul.f32 %v4990, 0.35355338
  %v5106 = vmul.f32 %v4995, 0.35355338
  %v5107 = vmul.f32 %v5000, 0.35355338
  %v5108 = vmul.f32 %v5005, 0.35355338
  %v5109 = vmul.f32 %v5087, 0.35355338
  %v5110 = vmul.f32 %v5092, 0.35355338
  %v5111 = vmul.f32 %v5097, 0.35355338
  %v5112 = vmul.f32 %v5102, 0.35355338
  %v5113 = vsel %vm1323, %v5105, -1e+30
  %v5114 = vsel %vm1323, %v5106, -1e+30
  %v5115 = vsel %vm1323, %v5107, -1e+30
  %v5116 = vsel %vm1323, %v5108, -1e+30
  %v5117 = vsel %vm1323, %v5109, -1e+30
  %v5118 = vsel %vm1323, %v5110, -1e+30
  %v5119 = vsel %vm1323, %v5111, -1e+30
  %v5120 = vsel %vm1323, %v5112, -1e+30
  %v5121 = vsel %vm76, %v5113, -inf
  %5122 = vmax.xlane.f32.xlu0 %v5121
  %v5123 = vpop.xlane.xlu0 %5122
  %v5124 = vsel %vm76, %v5114, -inf
  %5125 = vmax.xlane.f32.xlu0 %v5124
  %v5126 = vpop.xlane.xlu0 %5125
  %v5127 = vsel %vm76, %v5115, -inf
  %5128 = vmax.xlane.f32.xlu0 %v5127
  %v5129 = vpop.xlane.xlu0 %5128
  %v5130 = vsel %vm76, %v5116, -inf
  %5131 = vmax.xlane.f32.xlu0 %v5130
  %v5132 = vpop.xlane.xlu0 %5131
  %v5133 = vsel %vm76, %v5117, -inf
  %5134 = vmax.xlane.f32.xlu0 %v5133
  %v5135 = vpop.xlane.xlu0 %5134
  %v5136 = vsel %vm76, %v5118, -inf
  %5137 = vmax.xlane.f32.xlu0 %v5136
  %v5138 = vpop.xlane.xlu0 %5137
  %v5139 = vsel %vm76, %v5119, -inf
  %5140 = vmax.xlane.f32.xlu0 %v5139
  %v5141 = vpop.xlane.xlu0 %5140
  %v5142 = vsel %vm76, %v5120, -inf
  %5143 = vmax.xlane.f32.xlu0 %v5142
  %v5144 = vpop.xlane.xlu0 %5143
  %v5145 = vsub.f32 %v5113, %v5123
  %v5146 = vsub.f32 %v5114, %v5126
  %v5147 = vsub.f32 %v5115, %v5129
  %v5148 = vsub.f32 %v5116, %v5132
  %v5149 = vsub.f32 %v5117, %v5135
  %v5150 = vsub.f32 %v5118, %v5138
  %v5151 = vsub.f32 %v5119, %v5141
  %v5152 = vsub.f32 %v5120, %v5144
  %v5153 = vmul.f32 %v5145, 1.442695
  %v5154 = vpow.pop %v5153
  %v5155 = vmul.f32 %v5146, 1.442695
  %v5156 = vpow.pop %v5155
  %v5157 = vmul.f32 %v5147, 1.442695
  %v5158 = vpow.pop %v5157
  %v5159 = vmul.f32 %v5148, 1.442695
  %v5160 = vpow.pop %v5159
  %v5161 = vmul.f32 %v5149, 1.442695
  %v5162 = vpow.pop %v5161
  %v5163 = vmul.f32 %v5150, 1.442695
  %v5164 = vpow.pop %v5163
  %v5165 = vmul.f32 %v5151, 1.442695
  %v5166 = vpow.pop %v5165
  %v5167 = vmul.f32 %v5152, 1.442695
  %v5168 = vpow.pop %v5167
  %v5169 = vsel %vm76, %v5154, 0.0
  %5170 = vadd.xlane.f32.xlu0 %v5169
  %v5171 = vpop.xlane.xlu0 %5170
  %v5172 = vsel %vm76, %v5156, 0.0
  %5173 = vadd.xlane.f32.xlu0 %v5172
  %v5174 = vpop.xlane.xlu0 %5173
  %v5175 = vsel %vm76, %v5158, 0.0
  %5176 = vadd.xlane.f32.xlu0 %v5175
  %v5177 = vpop.xlane.xlu0 %5176
  %v5178 = vsel %vm76, %v5160, 0.0
  %5179 = vadd.xlane.f32.xlu0 %v5178
  %v5180 = vpop.xlane.xlu0 %5179
  %v5181 = vsel %vm76, %v5162, 0.0
  %5182 = vadd.xlane.f32.xlu0 %v5181
  %v5183 = vpop.xlane.xlu0 %5182
  %v5184 = vsel %vm76, %v5164, 0.0
  %5185 = vadd.xlane.f32.xlu0 %v5184
  %v5186 = vpop.xlane.xlu0 %5185
  %v5187 = vsel %vm76, %v5166, 0.0
  %5188 = vadd.xlane.f32.xlu0 %v5187
  %v5189 = vpop.xlane.xlu0 %5188
  %v5190 = vsel %vm76, %v5168, 0.0
  %5191 = vadd.xlane.f32.xlu0 %v5190
  %v5192 = vpop.xlane.xlu0 %5191
  %v5193 = vrcp.pop %v5171
  %v5194 = vrcp.pop %v5174
  %v5195 = vrcp.pop %v5177
  %v5196 = vrcp.pop %v5180
  %v5197 = vrcp.pop %v5183
  %v5198 = vrcp.pop %v5186
  %v5199 = vrcp.pop %v5189
  %v5200 = vrcp.pop %v5192
  %v5201 = vmul.f32 %v5154, %v5193
  %v5202 = vmul.f32 %v5156, %v5194
  %v5203 = vmul.f32 %v5158, %v5195
  %v5204 = vmul.f32 %v5160, %v5196
  %v5205 = vmul.f32 %v5162, %v5197
  %v5206 = vmul.f32 %v5164, %v5198
  %v5207 = vmul.f32 %v5166, %v5199
  %v5208 = vmul.f32 %v5168, %v5200
  %v5210 = vsel %vm76, %v5201, 0
  %v5213 = vsel %vm76, %v5202, 0
  %v5216 = vsel %vm76, %v5203, 0
  %v5219 = vsel %vm76, %v5204, 0
  %5221 = vmatprep.subr.mxu0 0.0
  %5222 = vmatpush1.msra.mxu0 %v282
  %5223 = vmatprep.subr.mxu0 0.0
  %5224 = vmatpush1.msra.mxu0 %v287
  %5225 = vmatprep.subr.mxu0 0.0
  %5226 = vmatpush1.msra.mxu0 %v292
  %5227 = vmatprep.subr.mxu0 0.0
  %5228 = vmatpush1.msra.mxu0 %v297
  %5229 = vmatprep.subr.mxu0 0.0
  %5230 = vmatpush1.msra.mxu0 0.0
  %5231 = vmatprep.subr.mxu0 0.0
  %5232 = vmatpush1.msra.mxu0 0.0
  %5233 = vmatprep.subr.mxu0 0.0
  %5234 = vmatpush1.msra.mxu0 0.0
  %5235 = vmatprep.subr.mxu0 0.0
  %5236 = vmatpush1.msra.mxu0 0.0
  %5237 = vmatprep.subr.mxu0 0.0
  %5238 = vmatpush1.msra.mxu0 0.0
  %5239 = vmatprep.subr.mxu0 0.0
  %5240 = vmatpush1.msra.mxu0 0.0
  %5241 = vmatprep.subr.mxu0 0.0
  %5242 = vmatpush1.msra.mxu0 0.0
  %5243 = vmatprep.subr.mxu0 0.0
  %5244 = vmatpush1.msra.mxu0 0.0
  %5245 = vmatprep.subr.mxu0 0.0
  %5246 = vmatpush1.msra.mxu0 0.0
  %5247 = vmatprep.subr.mxu0 0.0
  %5248 = vmatpush1.msra.mxu0 0.0
  %5249 = vmatprep.subr.mxu0 0.0
  %5250 = vmatpush1.msra.mxu0 0.0
  %5251 = vmatprep.subr.mxu0 0.0
  %5252 = vmatpush1.msra.mxu0 0.0
  %5253 = vmatprep.subr.mxu0 0.0
  %5254 = vmatpush1.msra.mxu0 0.0
  %5255 = vmatprep.subr.mxu0 0.0
  %5256 = vmatpush1.msra.mxu0 0.0
  %5257 = vmatprep.subr.mxu0 0.0
  %5258 = vmatpush1.msra.mxu0 0.0
  %5259 = vmatprep.subr.mxu0 0.0
  %5260 = vmatpush1.msra.mxu0 0.0
  %5261 = vmatprep.subr.mxu0 0.0
  %5262 = vmatpush1.msra.mxu0 0.0
  %5263 = vmatprep.subr.mxu0 0.0
  %5264 = vmatpush1.msra.mxu0 0.0
  %5265 = vmatprep.subr.mxu0 0.0
  %5266 = vmatpush1.msra.mxu0 0.0
  %5267 = vmatprep.subr.mxu0 0.0
  %5268 = vmatpush1.msra.mxu0 0.0
  %5269 = vmatprep.subr.mxu0 0.0
  %5270 = vmatpush1.msra.mxu0 0.0
  %5271 = vmatprep.subr.mxu0 0.0
  %5272 = vmatpush1.msra.mxu0 0.0
  %5273 = vmatprep.subr.mxu0 0.0
  %5274 = vmatpush1.msra.mxu0 0.0
  %5275 = vmatprep.subr.mxu0 0.0
  %5276 = vmatpush1.msra.mxu0 0.0
  %5277 = vmatprep.subr.mxu0 0.0
  %5278 = vmatpush1.msra.mxu0 0.0
  %5279 = vmatprep.subr.mxu0 0.0
  %5280 = vmatpush1.msra.mxu0 0.0
  %5281 = vmatprep.subr.mxu0 0.0
  %5282 = vmatpush1.msra.mxu0 0.0
  %5283 = vmatprep.subr.mxu0 0.0
  %5284 = vmatpush1.msra.mxu0 0.0
  %5285 = vmatprep.mubr.f32.mxu0 0.0
  %5286 = vmatmul.mubr.f32.gmra.mrb[0].mxu0 %v5210
  %v5287 = vpop.f32.mrb[0].mxu0
  %v5288 = vadd.f32 0.0, %v5287
  %v5289 = vpop.f32.mrb[0].mxu0
  %5290 = vmatprep.mubr.f32.mxu0 0.0
  %5291 = vmatmul.mubr.f32.gmra.mrb[0].mxu0 %v5213
  %v5292 = vpop.f32.mrb[0].mxu0
  %v5293 = vadd.f32 0.0, %v5292
  %v5294 = vpop.f32.mrb[0].mxu0
  %5295 = vmatprep.mubr.f32.mxu0 0.0
  %5296 = vmatmul.mubr.f32.gmra.mrb[0].mxu0 %v5216
  %v5297 = vpop.f32.mrb[0].mxu0
  %v5298 = vadd.f32 0.0, %v5297
  %v5299 = vpop.f32.mrb[0].mxu0
  %5300 = vmatprep.mubr.f32.mxu0 0.0
  %5301 = vmatmul.mubr.f32.gmra.mrb[0].mxu0 %v5219
  %v5302 = vpop.f32.mrb[0].mxu0
  %v5303 = vadd.f32 0.0, %v5302
  %v5304 = vpop.f32.mrb[0].mxu0
  %5305 = vdwg.mxu0
  %v5307 = vsel %vm76, %v5205, 0
  %v5310 = vsel %vm76, %v5206, 0
  %v5313 = vsel %vm76, %v5207, 0
  %v5316 = vsel %vm76, %v5208, 0
  %5318 = vmatprep.subr.mxu0 0.0
  %5319 = vmatpush1.msra.mxu0 %v302
  %5320 = vmatprep.subr.mxu0 0.0
  %5321 = vmatpush1.msra.mxu0 %v307
  %5322 = vmatprep.subr.mxu0 0.0
  %5323 = vmatpush1.msra.mxu0 %v312
  %5324 = vmatprep.subr.mxu0 0.0
  %5325 = vmatpush1.msra.mxu0 %v317
  %5326 = vmatprep.subr.mxu0 0.0
  %5327 = vmatpush1.msra.mxu0 0.0
  %5328 = vmatprep.subr.mxu0 0.0
  %5329 = vmatpush1.msra.mxu0 0.0
  %5330 = vmatprep.subr.mxu0 0.0
  %5331 = vmatpush1.msra.mxu0 0.0
  %5332 = vmatprep.subr.mxu0 0.0
  %5333 = vmatpush1.msra.mxu0 0.0
  %5334 = vmatprep.subr.mxu0 0.0
  %5335 = vmatpush1.msra.mxu0 0.0
  %5336 = vmatprep.subr.mxu0 0.0
  %5337 = vmatpush1.msra.mxu0 0.0
  %5338 = vmatprep.subr.mxu0 0.0
  %5339 = vmatpush1.msra.mxu0 0.0
  %5340 = vmatprep.subr.mxu0 0.0
  %5341 = vmatpush1.msra.mxu0 0.0
  %5342 = vmatprep.subr.mxu0 0.0
  %5343 = vmatpush1.msra.mxu0 0.0
  %5344 = vmatprep.subr.mxu0 0.0
  %5345 = vmatpush1.msra.mxu0 0.0
  %5346 = vmatprep.subr.mxu0 0.0
  %5347 = vmatpush1.msra.mxu0 0.0
  %5348 = vmatprep.subr.mxu0 0.0
  %5349 = vmatpush1.msra.mxu0 0.0
  %5350 = vmatprep.subr.mxu0 0.0
  %5351 = vmatpush1.msra.mxu0 0.0
  %5352 = vmatprep.subr.mxu0 0.0
  %5353 = vmatpush1.msra.mxu0 0.0
  %5354 = vmatprep.subr.mxu0 0.0
  %5355 = vmatpush1.msra.mxu0 0.0
  %5356 = vmatprep.subr.mxu0 0.0
  %5357 = vmatpush1.msra.mxu0 0.0
  %5358 = vmatprep.subr.mxu0 0.0
  %5359 = vmatpush1.msra.mxu0 0.0
  %5360 = vmatprep.subr.mxu0 0.0
  %5361 = vmatpush1.msra.mxu0 0.0
  %5362 = vmatprep.subr.mxu0 0.0
  %5363 = vmatpush1.msra.mxu0 0.0
  %5364 = vmatprep.subr.mxu0 0.0
  %5365 = vmatpush1.msra.mxu0 0.0
  %5366 = vmatprep.subr.mxu0 0.0
  %5367 = vmatpush1.msra.mxu0 0.0
  %5368 = vmatprep.subr.mxu0 0.0
  %5369 = vmatpush1.msra.mxu0 0.0
  %5370 = vmatprep.subr.mxu0 0.0
  %5371 = vmatpush1.msra.mxu0 0.0
  %5372 = vmatprep.subr.mxu0 0.0
  %5373 = vmatpush1.msra.mxu0 0.0
  %5374 = vmatprep.subr.mxu0 0.0
  %5375 = vmatpush1.msra.mxu0 0.0
  %5376 = vmatprep.subr.mxu0 0.0
  %5377 = vmatpush1.msra.mxu0 0.0
  %5378 = vmatprep.subr.mxu0 0.0
  %5379 = vmatpush1.msra.mxu0 0.0
  %5380 = vmatprep.subr.mxu0 0.0
  %5381 = vmatpush1.msra.mxu0 0.0
  %5382 = vmatprep.mubr.f32.mxu0 0.0
  %5383 = vmatmul.mubr.f32.gmra.mrb[0].mxu0 %v5307
  %v5384 = vpop.f32.mrb[0].mxu0
  %v5385 = vadd.f32 0.0, %v5384
  %v5386 = vpop.f32.mrb[0].mxu0
  %5387 = vmatprep.mubr.f32.mxu0 0.0
  %5388 = vmatmul.mubr.f32.gmra.mrb[0].mxu0 %v5310
  %v5389 = vpop.f32.mrb[0].mxu0
  %v5390 = vadd.f32 0.0, %v5389
  %v5391 = vpop.f32.mrb[0].mxu0
  %5392 = vmatprep.mubr.f32.mxu0 0.0
  %5393 = vmatmul.mubr.f32.gmra.mrb[0].mxu0 %v5313
  %v5394 = vpop.f32.mrb[0].mxu0
  %v5395 = vadd.f32 0.0, %v5394
  %v5396 = vpop.f32.mrb[0].mxu0
  %5397 = vmatprep.mubr.f32.mxu0 0.0
  %5398 = vmatmul.mubr.f32.gmra.mrb[0].mxu0 %v5316
  %v5399 = vpop.f32.mrb[0].mxu0
  %v5400 = vadd.f32 0.0, %v5399
  %v5401 = vpop.f32.mrb[0].mxu0
  %5402 = vdwg.mxu0
  %v5403 = vld [vmem:[%s2 + $0x60] sm:$0xff]
  %5404 = vrot.lane.b32.xlu0 %v4873, 120
  %v5405 = vpop.permute.xlu0 %5404
  %5406 = vrot.lane.b32.xlu0 %v4878, 120
  %v5407 = vpop.permute.xlu0 %5406
  %5408 = vrot.lane.b32.xlu0 %v4883, 120
  %v5409 = vpop.permute.xlu0 %5408
  %5410 = vrot.lane.b32.xlu0 %v4888, 120
  %v5411 = vpop.permute.xlu0 %5410
  %v5412 = vsel %vm1095, %v5405, 0
  %v5414 = vsel %vm1095, %v5407, 0
  %v5416 = vsel %vm1095, %v5409, 0
  %v5418 = vsel %vm1095, %v5411, 0
  %5420 = vmatprep.subr.mxu0 0.0
  %5421 = vmatpush1.xpose.msra.mxu0 %v1639
  %5422 = vmatprep.subr.mxu0 0.0
  %5423 = vmatpush1.xpose.msra.mxu0 %v1641
  %5424 = vmatprep.subr.mxu0 0.0
  %5425 = vmatpush1.xpose.msra.mxu0 %v1643
  %5426 = vmatprep.subr.mxu0 0.0
  %5427 = vmatpush1.xpose.msra.mxu0 %v1645
  %5428 = vmatprep.subr.mxu0 0.0
  %5429 = vmatpush1.xpose.msra.mxu0 0.0
  %5430 = vmatprep.subr.mxu0 0.0
  %5431 = vmatpush1.xpose.msra.mxu0 0.0
  %5432 = vmatprep.subr.mxu0 0.0
  %5433 = vmatpush1.xpose.msra.mxu0 0.0
  %5434 = vmatprep.subr.mxu0 0.0
  %5435 = vmatpush1.xpose.msra.mxu0 0.0
  %5436 = vmatprep.subr.mxu0 0.0
  %5437 = vmatpush1.xpose.msra.mxu0 0.0
  %5438 = vmatprep.subr.mxu0 0.0
  %5439 = vmatpush1.xpose.msra.mxu0 0.0
  %5440 = vmatprep.subr.mxu0 0.0
  %5441 = vmatpush1.xpose.msra.mxu0 0.0
  %5442 = vmatprep.subr.mxu0 0.0
  %5443 = vmatpush1.xpose.msra.mxu0 0.0
  %5444 = vmatprep.subr.mxu0 0.0
  %5445 = vmatpush1.xpose.msra.mxu0 0.0
  %5446 = vmatprep.subr.mxu0 0.0
  %5447 = vmatpush1.xpose.msra.mxu0 0.0
  %5448 = vmatprep.subr.mxu0 0.0
  %5449 = vmatpush1.xpose.msra.mxu0 0.0
  %5450 = vmatprep.subr.mxu0 0.0
  %5451 = vmatpush1.xpose.msra.mxu0 0.0
  %5452 = vmatprep.subr.mxu0 0.0
  %5453 = vmatpush1.xpose.msra.mxu0 0.0
  %5454 = vmatprep.subr.mxu0 0.0
  %5455 = vmatpush1.xpose.msra.mxu0 0.0
  %5456 = vmatprep.subr.mxu0 0.0
  %5457 = vmatpush1.xpose.msra.mxu0 0.0
  %5458 = vmatprep.subr.mxu0 0.0
  %5459 = vmatpush1.xpose.msra.mxu0 0.0
  %5460 = vmatprep.subr.mxu0 0.0
  %5461 = vmatpush1.xpose.msra.mxu0 0.0
  %5462 = vmatprep.subr.mxu0 0.0
  %5463 = vmatpush1.xpose.msra.mxu0 0.0
  %5464 = vmatprep.subr.mxu0 0.0
  %5465 = vmatpush1.xpose.msra.mxu0 0.0
  %5466 = vmatprep.subr.mxu0 0.0
  %5467 = vmatpush1.xpose.msra.mxu0 0.0
  %5468 = vmatprep.subr.mxu0 0.0
  %5469 = vmatpush1.xpose.msra.mxu0 0.0
  %5470 = vmatprep.subr.mxu0 0.0
  %5471 = vmatpush1.xpose.msra.mxu0 0.0
  %5472 = vmatprep.subr.mxu0 0.0
  %5473 = vmatpush1.xpose.msra.mxu0 0.0
  %5474 = vmatprep.subr.mxu0 0.0
  %5475 = vmatpush1.xpose.msra.mxu0 0.0
  %5476 = vmatprep.subr.mxu0 0.0
  %5477 = vmatpush1.xpose.msra.mxu0 0.0
  %5478 = vmatprep.subr.mxu0 0.0
  %5479 = vmatpush1.xpose.msra.mxu0 0.0
  %5480 = vmatprep.subr.mxu0 0.0
  %5481 = vmatpush1.xpose.msra.mxu0 0.0
  %5482 = vmatprep.subr.mxu0 0.0
  %5483 = vmatpush1.xpose.msra.mxu0 0.0
  %5484 = vmatprep.mubr.f32.mxu0 0.0
  %5485 = vmatmul.mubr.f32.gmra.mrb[0].mxu0 %v5412
  %v5486 = vpop.f32.mrb[0].mxu0
  %v5487 = vadd.f32 0.0, %v5486
  %v5488 = vpop.f32.mrb[0].mxu0
  %5489 = vmatprep.mubr.f32.mxu0 0.0
  %5490 = vmatmul.mubr.f32.gmra.mrb[0].mxu0 %v5414
  %v5491 = vpop.f32.mrb[0].mxu0
  %v5492 = vadd.f32 0.0, %v5491
  %v5493 = vpop.f32.mrb[0].mxu0
  %5494 = vmatprep.mubr.f32.mxu0 0.0
  %5495 = vmatmul.mubr.f32.gmra.mrb[0].mxu0 %v5416
  %v5496 = vpop.f32.mrb[0].mxu0
  %v5497 = vadd.f32 0.0, %v5496
  %v5498 = vpop.f32.mrb[0].mxu0
  %5499 = vmatprep.mubr.f32.mxu0 0.0
  %5500 = vmatmul.mubr.f32.gmra.mrb[0].mxu0 %v5418
  %v5501 = vpop.f32.mrb[0].mxu0
  %v5502 = vadd.f32 0.0, %v5501
  %v5503 = vpop.f32.mrb[0].mxu0
  %5504 = vdwg.mxu0
  %5505 = vrot.lane.b32.xlu0 %v4893, 120
  %v5506 = vpop.permute.xlu0 %5505
  %5507 = vrot.lane.b32.xlu0 %v4898, 120
  %v5508 = vpop.permute.xlu0 %5507
  %5509 = vrot.lane.b32.xlu0 %v4903, 120
  %v5510 = vpop.permute.xlu0 %5509
  %5511 = vrot.lane.b32.xlu0 %v4908, 120
  %v5512 = vpop.permute.xlu0 %5511
  %v5513 = vsel %vm1095, %v5506, 0
  %v5515 = vsel %vm1095, %v5508, 0
  %v5517 = vsel %vm1095, %v5510, 0
  %v5519 = vsel %vm1095, %v5512, 0
  %5521 = vmatprep.subr.mxu0 0.0
  %5522 = vmatpush1.xpose.msra.mxu0 %v1756
  %5523 = vmatprep.subr.mxu0 0.0
  %5524 = vmatpush1.xpose.msra.mxu0 %v1758
  %5525 = vmatprep.subr.mxu0 0.0
  %5526 = vmatpush1.xpose.msra.mxu0 %v1760
  %5527 = vmatprep.subr.mxu0 0.0
  %5528 = vmatpush1.xpose.msra.mxu0 %v1762
  %5529 = vmatprep.subr.mxu0 0.0
  %5530 = vmatpush1.xpose.msra.mxu0 0.0
  %5531 = vmatprep.subr.mxu0 0.0
  %5532 = vmatpush1.xpose.msra.mxu0 0.0
  %5533 = vmatprep.subr.mxu0 0.0
  %5534 = vmatpush1.xpose.msra.mxu0 0.0
  %5535 = vmatprep.subr.mxu0 0.0
  %5536 = vmatpush1.xpose.msra.mxu0 0.0
  %5537 = vmatprep.subr.mxu0 0.0
  %5538 = vmatpush1.xpose.msra.mxu0 0.0
  %5539 = vmatprep.subr.mxu0 0.0
  %5540 = vmatpush1.xpose.msra.mxu0 0.0
  %5541 = vmatprep.subr.mxu0 0.0
  %5542 = vmatpush1.xpose.msra.mxu0 0.0
  %5543 = vmatprep.subr.mxu0 0.0
  %5544 = vmatpush1.xpose.msra.mxu0 0.0
  %5545 = vmatprep.subr.mxu0 0.0
  %5546 = vmatpush1.xpose.msra.mxu0 0.0
  %5547 = vmatprep.subr.mxu0 0.0
  %5548 = vmatpush1.xpose.msra.mxu0 0.0
  %5549 = vmatprep.subr.mxu0 0.0
  %5550 = vmatpush1.xpose.msra.mxu0 0.0
  %5551 = vmatprep.subr.mxu0 0.0
  %5552 = vmatpush1.xpose.msra.mxu0 0.0
  %5553 = vmatprep.subr.mxu0 0.0
  %5554 = vmatpush1.xpose.msra.mxu0 0.0
  %5555 = vmatprep.subr.mxu0 0.0
  %5556 = vmatpush1.xpose.msra.mxu0 0.0
  %5557 = vmatprep.subr.mxu0 0.0
  %5558 = vmatpush1.xpose.msra.mxu0 0.0
  %5559 = vmatprep.subr.mxu0 0.0
  %5560 = vmatpush1.xpose.msra.mxu0 0.0
  %5561 = vmatprep.subr.mxu0 0.0
  %5562 = vmatpush1.xpose.msra.mxu0 0.0
  %5563 = vmatprep.subr.mxu0 0.0
  %5564 = vmatpush1.xpose.msra.mxu0 0.0
  %5565 = vmatprep.subr.mxu0 0.0
  %5566 = vmatpush1.xpose.msra.mxu0 0.0
  %5567 = vmatprep.subr.mxu0 0.0
  %5568 = vmatpush1.xpose.msra.mxu0 0.0
  %5569 = vmatprep.subr.mxu0 0.0
  %5570 = vmatpush1.xpose.msra.mxu0 0.0
  %5571 = vmatprep.subr.mxu0 0.0
  %5572 = vmatpush1.xpose.msra.mxu0 0.0
  %5573 = vmatprep.subr.mxu0 0.0
  %5574 = vmatpush1.xpose.msra.mxu0 0.0
  %5575 = vmatprep.subr.mxu0 0.0
  %5576 = vmatpush1.xpose.msra.mxu0 0.0
  %5577 = vmatprep.subr.mxu0 0.0
  %5578 = vmatpush1.xpose.msra.mxu0 0.0
  %5579 = vmatprep.subr.mxu0 0.0
  %5580 = vmatpush1.xpose.msra.mxu0 0.0
  %5581 = vmatprep.subr.mxu0 0.0
  %5582 = vmatpush1.xpose.msra.mxu0 0.0
  %5583 = vmatprep.subr.mxu0 0.0
  %5584 = vmatpush1.xpose.msra.mxu0 0.0
  %5585 = vmatprep.mubr.f32.mxu0 0.0
  %5586 = vmatmul.mubr.f32.gmra.mrb[0].mxu0 %v5513
  %v5587 = vpop.f32.mrb[0].mxu0
  %v5588 = vadd.f32 0.0, %v5587
  %v5589 = vpop.f32.mrb[0].mxu0
  %5590 = vmatprep.mubr.f32.mxu0 0.0
  %5591 = vmatmul.mubr.f32.gmra.mrb[0].mxu0 %v5515
  %v5592 = vpop.f32.mrb[0].mxu0
  %v5593 = vadd.f32 0.0, %v5592
  %v5594 = vpop.f32.mrb[0].mxu0
  %5595 = vmatprep.mubr.f32.mxu0 0.0
  %5596 = vmatmul.mubr.f32.gmra.mrb[0].mxu0 %v5517
  %v5597 = vpop.f32.mrb[0].mxu0
  %v5598 = vadd.f32 0.0, %v5597
  %v5599 = vpop.f32.mrb[0].mxu0
  %5600 = vmatprep.mubr.f32.mxu0 0.0
  %5601 = vmatmul.mubr.f32.gmra.mrb[0].mxu0 %v5519
  %v5602 = vpop.f32.mrb[0].mxu0
  %v5603 = vadd.f32 0.0, %v5602
  %v5604 = vpop.f32.mrb[0].mxu0
  %5605 = vdwg.mxu0
  %v5606 = vmul.f32 %v5487, 0.35355338
  %v5607 = vmul.f32 %v5492, 0.35355338
  %v5608 = vmul.f32 %v5497, 0.35355338
  %v5609 = vmul.f32 %v5502, 0.35355338
  %v5610 = vmul.f32 %v5588, 0.35355338
  %v5611 = vmul.f32 %v5593, 0.35355338
  %v5612 = vmul.f32 %v5598, 0.35355338
  %v5613 = vmul.f32 %v5603, 0.35355338
  %v5614 = vsel %vm1323, %v5606, -1e+30
  %v5615 = vsel %vm1323, %v5607, -1e+30
  %v5616 = vsel %vm1323, %v5608, -1e+30
  %v5617 = vsel %vm1323, %v5609, -1e+30
  %v5618 = vsel %vm1323, %v5610, -1e+30
  %v5619 = vsel %vm1323, %v5611, -1e+30
  %v5620 = vsel %vm1323, %v5612, -1e+30
  %v5621 = vsel %vm1323, %v5613, -1e+30
  %v5622 = vsel %vm76, %v5614, -inf
  %5623 = vmax.xlane.f32.xlu0 %v5622
  %v5624 = vpop.xlane.xlu0 %5623
  %v5625 = vsel %vm76, %v5615, -inf
  %5626 = vmax.xlane.f32.xlu0 %v5625
  %v5627 = vpop.xlane.xlu0 %5626
  %v5628 = vsel %vm76, %v5616, -inf
  %5629 = vmax.xlane.f32.xlu0 %v5628
  %v5630 = vpop.xlane.xlu0 %5629
  %v5631 = vsel %vm76, %v5617, -inf
  %5632 = vmax.xlane.f32.xlu0 %v5631
  %v5633 = vpop.xlane.xlu0 %5632
  %v5634 = vsel %vm76, %v5618, -inf
  %5635 = vmax.xlane.f32.xlu0 %v5634
  %v5636 = vpop.xlane.xlu0 %5635
  %v5637 = vsel %vm76, %v5619, -inf
  %5638 = vmax.xlane.f32.xlu0 %v5637
  %v5639 = vpop.xlane.xlu0 %5638
  %v5640 = vsel %vm76, %v5620, -inf
  %5641 = vmax.xlane.f32.xlu0 %v5640
  %v5642 = vpop.xlane.xlu0 %5641
  %v5643 = vsel %vm76, %v5621, -inf
  %5644 = vmax.xlane.f32.xlu0 %v5643
  %v5645 = vpop.xlane.xlu0 %5644
  %v5646 = vsub.f32 %v5614, %v5624
  %v5647 = vsub.f32 %v5615, %v5627
  %v5648 = vsub.f32 %v5616, %v5630
  %v5649 = vsub.f32 %v5617, %v5633
  %v5650 = vsub.f32 %v5618, %v5636
  %v5651 = vsub.f32 %v5619, %v5639
  %v5652 = vsub.f32 %v5620, %v5642
  %v5653 = vsub.f32 %v5621, %v5645
  %v5654 = vmul.f32 %v5646, 1.442695
  %v5655 = vpow.pop %v5654
  %v5656 = vmul.f32 %v5647, 1.442695
  %v5657 = vpow.pop %v5656
  %v5658 = vmul.f32 %v5648, 1.442695
  %v5659 = vpow.pop %v5658
  %v5660 = vmul.f32 %v5649, 1.442695
  %v5661 = vpow.pop %v5660
  %v5662 = vmul.f32 %v5650, 1.442695
  %v5663 = vpow.pop %v5662
  %v5664 = vmul.f32 %v5651, 1.442695
  %v5665 = vpow.pop %v5664
  %v5666 = vmul.f32 %v5652, 1.442695
  %v5667 = vpow.pop %v5666
  %v5668 = vmul.f32 %v5653, 1.442695
  %v5669 = vpow.pop %v5668
  %v5670 = vsel %vm76, %v5655, 0.0
  %5671 = vadd.xlane.f32.xlu0 %v5670
  %v5672 = vpop.xlane.xlu0 %5671
  %v5673 = vsel %vm76, %v5657, 0.0
  %5674 = vadd.xlane.f32.xlu0 %v5673
  %v5675 = vpop.xlane.xlu0 %5674
  %v5676 = vsel %vm76, %v5659, 0.0
  %5677 = vadd.xlane.f32.xlu0 %v5676
  %v5678 = vpop.xlane.xlu0 %5677
  %v5679 = vsel %vm76, %v5661, 0.0
  %5680 = vadd.xlane.f32.xlu0 %v5679
  %v5681 = vpop.xlane.xlu0 %5680
  %v5682 = vsel %vm76, %v5663, 0.0
  %5683 = vadd.xlane.f32.xlu0 %v5682
  %v5684 = vpop.xlane.xlu0 %5683
  %v5685 = vsel %vm76, %v5665, 0.0
  %5686 = vadd.xlane.f32.xlu0 %v5685
  %v5687 = vpop.xlane.xlu0 %5686
  %v5688 = vsel %vm76, %v5667, 0.0
  %5689 = vadd.xlane.f32.xlu0 %v5688
  %v5690 = vpop.xlane.xlu0 %5689
  %v5691 = vsel %vm76, %v5669, 0.0
  %5692 = vadd.xlane.f32.xlu0 %v5691
  %v5693 = vpop.xlane.xlu0 %5692
  %v5694 = vrcp.pop %v5672
  %v5695 = vrcp.pop %v5675
  %v5696 = vrcp.pop %v5678
  %v5697 = vrcp.pop %v5681
  %v5698 = vrcp.pop %v5684
  %v5699 = vrcp.pop %v5687
  %v5700 = vrcp.pop %v5690
  %v5701 = vrcp.pop %v5693
  %v5702 = vmul.f32 %v5655, %v5694
  %v5703 = vmul.f32 %v5657, %v5695
  %v5704 = vmul.f32 %v5659, %v5696
  %v5705 = vmul.f32 %v5661, %v5697
  %v5706 = vmul.f32 %v5663, %v5698
  %v5707 = vmul.f32 %v5665, %v5699
  %v5708 = vmul.f32 %v5667, %v5700
  %v5709 = vmul.f32 %v5669, %v5701
  %v5711 = vsel %vm76, %v5702, 0
  %v5714 = vsel %vm76, %v5703, 0
  %v5717 = vsel %vm76, %v5704, 0
  %v5720 = vsel %vm76, %v5705, 0
  %5722 = vmatprep.subr.mxu0 0.0
  %5723 = vmatpush1.msra.mxu0 %v1958
  %5724 = vmatprep.subr.mxu0 0.0
  %5725 = vmatpush1.msra.mxu0 %v1960
  %5726 = vmatprep.subr.mxu0 0.0
  %5727 = vmatpush1.msra.mxu0 %v1962
  %5728 = vmatprep.subr.mxu0 0.0
  %5729 = vmatpush1.msra.mxu0 %v1964
  %5730 = vmatprep.subr.mxu0 0.0
  %5731 = vmatpush1.msra.mxu0 0.0
  %5732 = vmatprep.subr.mxu0 0.0
  %5733 = vmatpush1.msra.mxu0 0.0
  %5734 = vmatprep.subr.mxu0 0.0
  %5735 = vmatpush1.msra.mxu0 0.0
  %5736 = vmatprep.subr.mxu0 0.0
  %5737 = vmatpush1.msra.mxu0 0.0
  %5738 = vmatprep.subr.mxu0 0.0
  %5739 = vmatpush1.msra.mxu0 0.0
  %5740 = vmatprep.subr.mxu0 0.0
  %5741 = vmatpush1.msra.mxu0 0.0
  %5742 = vmatprep.subr.mxu0 0.0
  %5743 = vmatpush1.msra.mxu0 0.0
  %5744 = vmatprep.subr.mxu0 0.0
  %5745 = vmatpush1.msra.mxu0 0.0
  %5746 = vmatprep.subr.mxu0 0.0
  %5747 = vmatpush1.msra.mxu0 0.0
  %5748 = vmatprep.subr.mxu0 0.0
  %5749 = vmatpush1.msra.mxu0 0.0
  %5750 = vmatprep.subr.mxu0 0.0
  %5751 = vmatpush1.msra.mxu0 0.0
  %5752 = vmatprep.subr.mxu0 0.0
  %5753 = vmatpush1.msra.mxu0 0.0
  %5754 = vmatprep.subr.mxu0 0.0
  %5755 = vmatpush1.msra.mxu0 0.0
  %5756 = vmatprep.subr.mxu0 0.0
  %5757 = vmatpush1.msra.mxu0 0.0
  %5758 = vmatprep.subr.mxu0 0.0
  %5759 = vmatpush1.msra.mxu0 0.0
  %5760 = vmatprep.subr.mxu0 0.0
  %5761 = vmatpush1.msra.mxu0 0.0
  %5762 = vmatprep.subr.mxu0 0.0
  %5763 = vmatpush1.msra.mxu0 0.0
  %5764 = vmatprep.subr.mxu0 0.0
  %5765 = vmatpush1.msra.mxu0 0.0
  %5766 = vmatprep.subr.mxu0 0.0
  %5767 = vmatpush1.msra.mxu0 0.0
  %5768 = vmatprep.subr.mxu0 0.0
  %5769 = vmatpush1.msra.mxu0 0.0
  %5770 = vmatprep.subr.mxu0 0.0
  %5771 = vmatpush1.msra.mxu0 0.0
  %5772 = vmatprep.subr.mxu0 0.0
  %5773 = vmatpush1.msra.mxu0 0.0
  %5774 = vmatprep.subr.mxu0 0.0
  %5775 = vmatpush1.msra.mxu0 0.0
  %5776 = vmatprep.subr.mxu0 0.0
  %5777 = vmatpush1.msra.mxu0 0.0
  %5778 = vmatprep.subr.mxu0 0.0
  %5779 = vmatpush1.msra.mxu0 0.0
  %5780 = vmatprep.subr.mxu0 0.0
  %5781 = vmatpush1.msra.mxu0 0.0
  %5782 = vmatprep.subr.mxu0 0.0
  %5783 = vmatpush1.msra.mxu0 0.0
  %5784 = vmatprep.subr.mxu0 0.0
  %5785 = vmatpush1.msra.mxu0 0.0
  %5786 = vmatprep.mubr.f32.mxu0 0.0
  %5787 = vmatmul.mubr.f32.gmra.mrb[0].mxu0 %v5711
  %v5788 = vpop.f32.mrb[0].mxu0
  %v5789 = vadd.f32 0.0, %v5788
  %v5790 = vpop.f32.mrb[0].mxu0
  %5791 = vmatprep.mubr.f32.mxu0 0.0
  %5792 = vmatmul.mubr.f32.gmra.mrb[0].mxu0 %v5714
  %v5793 = vpop.f32.mrb[0].mxu0
  %v5794 = vadd.f32 0.0, %v5793
  %v5795 = vpop.f32.mrb[0].mxu0
  %5796 = vmatprep.mubr.f32.mxu0 0.0
  %5797 = vmatmul.mubr.f32.gmra.mrb[0].mxu0 %v5717
  %v5798 = vpop.f32.mrb[0].mxu0
  %v5799 = vadd.f32 0.0, %v5798
  %v5800 = vpop.f32.mrb[0].mxu0
  %5801 = vmatprep.mubr.f32.mxu0 0.0
  %5802 = vmatmul.mubr.f32.gmra.mrb[0].mxu0 %v5720
  %v5803 = vpop.f32.mrb[0].mxu0
  %v5804 = vadd.f32 0.0, %v5803
  %v5805 = vpop.f32.mrb[0].mxu0
  %5806 = vdwg.mxu0
  %v5808 = vsel %vm76, %v5706, 0
  %v5811 = vsel %vm76, %v5707, 0
  %v5814 = vsel %vm76, %v5708, 0
  %v5817 = vsel %vm76, %v5709, 0
  %5819 = vmatprep.subr.mxu0 0.0
  %5820 = vmatpush1.msra.mxu0 %v2071
  %5821 = vmatprep.subr.mxu0 0.0
  %5822 = vmatpush1.msra.mxu0 %v2073
  %5823 = vmatprep.subr.mxu0 0.0
  %5824 = vmatpush1.msra.mxu0 %v2075
  %5825 = vmatprep.subr.mxu0 0.0
  %5826 = vmatpush1.msra.mxu0 %v2077
  %5827 = vmatprep.subr.mxu0 0.0
  %5828 = vmatpush1.msra.mxu0 0.0
  %5829 = vmatprep.subr.mxu0 0.0
  %5830 = vmatpush1.msra.mxu0 0.0
  %5831 = vmatprep.subr.mxu0 0.0
  %5832 = vmatpush1.msra.mxu0 0.0
  %5833 = vmatprep.subr.mxu0 0.0
  %5834 = vmatpush1.msra.mxu0 0.0
  %5835 = vmatprep.subr.mxu0 0.0
  %5836 = vmatpush1.msra.mxu0 0.0
  %5837 = vmatprep.subr.mxu0 0.0
  %5838 = vmatpush1.msra.mxu0 0.0
  %5839 = vmatprep.subr.mxu0 0.0
  %5840 = vmatpush1.msra.mxu0 0.0
  %5841 = vmatprep.subr.mxu0 0.0
  %5842 = vmatpush1.msra.mxu0 0.0
  %5843 = vmatprep.subr.mxu0 0.0
  %5844 = vmatpush1.msra.mxu0 0.0
  %5845 = vmatprep.subr.mxu0 0.0
  %5846 = vmatpush1.msra.mxu0 0.0
  %5847 = vmatprep.subr.mxu0 0.0
  %5848 = vmatpush1.msra.mxu0 0.0
  %5849 = vmatprep.subr.mxu0 0.0
  %5850 = vmatpush1.msra.mxu0 0.0
  %5851 = vmatprep.subr.mxu0 0.0
  %5852 = vmatpush1.msra.mxu0 0.0
  %5853 = vmatprep.subr.mxu0 0.0
  %5854 = vmatpush1.msra.mxu0 0.0
  %5855 = vmatprep.subr.mxu0 0.0
  %5856 = vmatpush1.msra.mxu0 0.0
  %5857 = vmatprep.subr.mxu0 0.0
  %5858 = vmatpush1.msra.mxu0 0.0
  %5859 = vmatprep.subr.mxu0 0.0
  %5860 = vmatpush1.msra.mxu0 0.0
  %5861 = vmatprep.subr.mxu0 0.0
  %5862 = vmatpush1.msra.mxu0 0.0
  %5863 = vmatprep.subr.mxu0 0.0
  %5864 = vmatpush1.msra.mxu0 0.0
  %5865 = vmatprep.subr.mxu0 0.0
  %5866 = vmatpush1.msra.mxu0 0.0
  %5867 = vmatprep.subr.mxu0 0.0
  %5868 = vmatpush1.msra.mxu0 0.0
  %5869 = vmatprep.subr.mxu0 0.0
  %5870 = vmatpush1.msra.mxu0 0.0
  %5871 = vmatprep.subr.mxu0 0.0
  %5872 = vmatpush1.msra.mxu0 0.0
  %5873 = vmatprep.subr.mxu0 0.0
  %5874 = vmatpush1.msra.mxu0 0.0
  %5875 = vmatprep.subr.mxu0 0.0
  %5876 = vmatpush1.msra.mxu0 0.0
  %5877 = vmatprep.subr.mxu0 0.0
  %5878 = vmatpush1.msra.mxu0 0.0
  %5879 = vmatprep.subr.mxu0 0.0
  %5880 = vmatpush1.msra.mxu0 0.0
  %5881 = vmatprep.subr.mxu0 0.0
  %5882 = vmatpush1.msra.mxu0 0.0
  %5883 = vmatprep.mubr.f32.mxu0 0.0
  %5884 = vmatmul.mubr.f32.gmra.mrb[0].mxu0 %v5808
  %v5885 = vpop.f32.mrb[0].mxu0
  %v5886 = vadd.f32 0.0, %v5885
  %v5887 = vpop.f32.mrb[0].mxu0
  %5888 = vmatprep.mubr.f32.mxu0 0.0
  %5889 = vmatmul.mubr.f32.gmra.mrb[0].mxu0 %v5811
  %v5890 = vpop.f32.mrb[0].mxu0
  %v5891 = vadd.f32 0.0, %v5890
  %v5892 = vpop.f32.mrb[0].mxu0
  %5893 = vmatprep.mubr.f32.mxu0 0.0
  %5894 = vmatmul.mubr.f32.gmra.mrb[0].mxu0 %v5814
  %v5895 = vpop.f32.mrb[0].mxu0
  %v5896 = vadd.f32 0.0, %v5895
  %v5897 = vpop.f32.mrb[0].mxu0
  %5898 = vmatprep.mubr.f32.mxu0 0.0
  %5899 = vmatmul.mubr.f32.gmra.mrb[0].mxu0 %v5817
  %v5900 = vpop.f32.mrb[0].mxu0
  %v5901 = vadd.f32 0.0, %v5900
  %v5902 = vpop.f32.mrb[0].mxu0
  %5903 = vdwg.mxu0
  %v5904 = vld [vmem:[%s2 + $0x68] sm:$0xff]
  %v5906 = vsel %vm1095, %v5789, 0
  %v5909 = vsel %vm1095, %v5794, 0
  %v5912 = vsel %vm1095, %v5799, 0
  %v5915 = vsel %vm1095, %v5804, 0
  %v5918 = vsel %vm1095, %v5886, 0
  %v5921 = vsel %vm1095, %v5891, 0
  %v5924 = vsel %vm1095, %v5896, 0
  %v5927 = vsel %vm1095, %v5901, 0
  %5929 = vmatprep.subr.mxu0 0.0
  %5930 = vmatpush1.msra.mxu0 %v5904
  %5931 = vmatprep.subr.mxu0 0.0
  %5932 = vmatpush1.msra.mxu0 0.0
  %5933 = vmatprep.subr.mxu0 0.0
  %5934 = vmatpush1.msra.mxu0 0.0
  %5935 = vmatprep.subr.mxu0 0.0
  %5936 = vmatpush1.msra.mxu0 0.0
  %5937 = vmatprep.subr.mxu0 0.0
  %5938 = vmatpush1.msra.mxu0 0.0
  %5939 = vmatprep.subr.mxu0 0.0
  %5940 = vmatpush1.msra.mxu0 0.0
  %5941 = vmatprep.subr.mxu0 0.0
  %5942 = vmatpush1.msra.mxu0 0.0
  %5943 = vmatprep.subr.mxu0 0.0
  %5944 = vmatpush1.msra.mxu0 0.0
  %5945 = vmatprep.subr.mxu0 0.0
  %5946 = vmatpush1.msra.mxu0 0.0
  %5947 = vmatprep.subr.mxu0 0.0
  %5948 = vmatpush1.msra.mxu0 0.0
  %5949 = vmatprep.subr.mxu0 0.0
  %5950 = vmatpush1.msra.mxu0 0.0
  %5951 = vmatprep.subr.mxu0 0.0
  %5952 = vmatpush1.msra.mxu0 0.0
  %5953 = vmatprep.subr.mxu0 0.0
  %5954 = vmatpush1.msra.mxu0 0.0
  %5955 = vmatprep.subr.mxu0 0.0
  %5956 = vmatpush1.msra.mxu0 0.0
  %5957 = vmatprep.subr.mxu0 0.0
  %5958 = vmatpush1.msra.mxu0 0.0
  %5959 = vmatprep.subr.mxu0 0.0
  %5960 = vmatpush1.msra.mxu0 0.0
  %5961 = vmatprep.subr.mxu0 0.0
  %5962 = vmatpush1.msra.mxu0 0.0
  %5963 = vmatprep.subr.mxu0 0.0
  %5964 = vmatpush1.msra.mxu0 0.0
  %5965 = vmatprep.subr.mxu0 0.0
  %5966 = vmatpush1.msra.mxu0 0.0
  %5967 = vmatprep.subr.mxu0 0.0
  %5968 = vmatpush1.msra.mxu0 0.0
  %5969 = vmatprep.subr.mxu0 0.0
  %5970 = vmatpush1.msra.mxu0 0.0
  %5971 = vmatprep.subr.mxu0 0.0
  %5972 = vmatpush1.msra.mxu0 0.0
  %5973 = vmatprep.subr.mxu0 0.0
  %5974 = vmatpush1.msra.mxu0 0.0
  %5975 = vmatprep.subr.mxu0 0.0
  %5976 = vmatpush1.msra.mxu0 0.0
  %5977 = vmatprep.subr.mxu0 0.0
  %5978 = vmatpush1.msra.mxu0 0.0
  %5979 = vmatprep.subr.mxu0 0.0
  %5980 = vmatpush1.msra.mxu0 0.0
  %5981 = vmatprep.subr.mxu0 0.0
  %5982 = vmatpush1.msra.mxu0 0.0
  %5983 = vmatprep.subr.mxu0 0.0
  %5984 = vmatpush1.msra.mxu0 0.0
  %5985 = vmatprep.subr.mxu0 0.0
  %5986 = vmatpush1.msra.mxu0 0.0
  %5987 = vmatprep.subr.mxu0 0.0
  %5988 = vmatpush1.msra.mxu0 0.0
  %5989 = vmatprep.subr.mxu0 0.0
  %5990 = vmatpush1.msra.mxu0 0.0
  %5991 = vmatprep.subr.mxu0 0.0
  %5992 = vmatpush1.msra.mxu0 0.0
  %5993 = vmatprep.mubr.f32.mxu0 0.0
  %5994 = vmatmul.mubr.f32.gmra.mrb[0].mxu0 %v5906
  %v5995 = vpop.f32.mrb[0].mxu0
  %v5996 = vadd.f32 0.0, %v5995
  %v5997 = vpop.f32.mrb[0].mxu0
  %5998 = vmatprep.mubr.f32.mxu0 0.0
  %5999 = vmatmul.mubr.f32.gmra.mrb[0].mxu0 %v5909
  %v6000 = vpop.f32.mrb[0].mxu0
  %v6001 = vadd.f32 0.0, %v6000
  %v6002 = vpop.f32.mrb[0].mxu0
  %6003 = vmatprep.mubr.f32.mxu0 0.0
  %6004 = vmatmul.mubr.f32.gmra.mrb[0].mxu0 %v5912
  %v6005 = vpop.f32.mrb[0].mxu0
  %v6006 = vadd.f32 0.0, %v6005
  %v6007 = vpop.f32.mrb[0].mxu0
  %6008 = vmatprep.mubr.f32.mxu0 0.0
  %6009 = vmatmul.mubr.f32.gmra.mrb[0].mxu0 %v5915
  %v6010 = vpop.f32.mrb[0].mxu0
  %v6011 = vadd.f32 0.0, %v6010
  %v6012 = vpop.f32.mrb[0].mxu0
  %6013 = vmatprep.mubr.f32.mxu0 0.0
  %6014 = vmatmul.mubr.f32.gmra.mrb[0].mxu0 %v5918
  %v6015 = vpop.f32.mrb[0].mxu0
  %v6016 = vadd.f32 0.0, %v6015
  %v6017 = vpop.f32.mrb[0].mxu0
  %6018 = vmatprep.mubr.f32.mxu0 0.0
  %6019 = vmatmul.mubr.f32.gmra.mrb[0].mxu0 %v5921
  %v6020 = vpop.f32.mrb[0].mxu0
  %v6021 = vadd.f32 0.0, %v6020
  %v6022 = vpop.f32.mrb[0].mxu0
  %6023 = vmatprep.mubr.f32.mxu0 0.0
  %6024 = vmatmul.mubr.f32.gmra.mrb[0].mxu0 %v5924
  %v6025 = vpop.f32.mrb[0].mxu0
  %v6026 = vadd.f32 0.0, %v6025
  %v6027 = vpop.f32.mrb[0].mxu0
  %6028 = vmatprep.mubr.f32.mxu0 0.0
  %6029 = vmatmul.mubr.f32.gmra.mrb[0].mxu0 %v5927
  %v6030 = vpop.f32.mrb[0].mxu0
  %v6031 = vadd.f32 0.0, %v6030
  %v6032 = vpop.f32.mrb[0].mxu0
  %6033 = vdwg.mxu0
  %v6035 = vsel %vm1095, %v5288, 0
  %v6038 = vsel %vm1095, %v5293, 0
  %v6041 = vsel %vm1095, %v5298, 0
  %v6044 = vsel %vm1095, %v5303, 0
  %v6047 = vsel %vm1095, %v5385, 0
  %v6050 = vsel %vm1095, %v5390, 0
  %v6053 = vsel %vm1095, %v5395, 0
  %v6056 = vsel %vm1095, %v5400, 0
  %6058 = vmatprep.subr.mxu0 0.0
  %6059 = vmatpush1.msra.mxu0 %v5403
  %6060 = vmatprep.subr.mxu0 0.0
  %6061 = vmatpush1.msra.mxu0 0.0
  %6062 = vmatprep.subr.mxu0 0.0
  %6063 = vmatpush1.msra.mxu0 0.0
  %6064 = vmatprep.subr.mxu0 0.0
  %6065 = vmatpush1.msra.mxu0 0.0
  %6066 = vmatprep.subr.mxu0 0.0
  %6067 = vmatpush1.msra.mxu0 0.0
  %6068 = vmatprep.subr.mxu0 0.0
  %6069 = vmatpush1.msra.mxu0 0.0
  %6070 = vmatprep.subr.mxu0 0.0
  %6071 = vmatpush1.msra.mxu0 0.0
  %6072 = vmatprep.subr.mxu0 0.0
  %6073 = vmatpush1.msra.mxu0 0.0
  %6074 = vmatprep.subr.mxu0 0.0
  %6075 = vmatpush1.msra.mxu0 0.0
  %6076 = vmatprep.subr.mxu0 0.0
  %6077 = vmatpush1.msra.mxu0 0.0
  %6078 = vmatprep.subr.mxu0 0.0
  %6079 = vmatpush1.msra.mxu0 0.0
  %6080 = vmatprep.subr.mxu0 0.0
  %6081 = vmatpush1.msra.mxu0 0.0
  %6082 = vmatprep.subr.mxu0 0.0
  %6083 = vmatpush1.msra.mxu0 0.0
  %6084 = vmatprep.subr.mxu0 0.0
  %6085 = vmatpush1.msra.mxu0 0.0
  %6086 = vmatprep.subr.mxu0 0.0
  %6087 = vmatpush1.msra.mxu0 0.0
  %6088 = vmatprep.subr.mxu0 0.0
  %6089 = vmatpush1.msra.mxu0 0.0
  %6090 = vmatprep.subr.mxu0 0.0
  %6091 = vmatpush1.msra.mxu0 0.0
  %6092 = vmatprep.subr.mxu0 0.0
  %6093 = vmatpush1.msra.mxu0 0.0
  %6094 = vmatprep.subr.mxu0 0.0
  %6095 = vmatpush1.msra.mxu0 0.0
  %6096 = vmatprep.subr.mxu0 0.0
  %6097 = vmatpush1.msra.mxu0 0.0
  %6098 = vmatprep.subr.mxu0 0.0
  %6099 = vmatpush1.msra.mxu0 0.0
  %6100 = vmatprep.subr.mxu0 0.0
  %6101 = vmatpush1.msra.mxu0 0.0
  %6102 = vmatprep.subr.mxu0 0.0
  %6103 = vmatpush1.msra.mxu0 0.0
  %6104 = vmatprep.subr.mxu0 0.0
  %6105 = vmatpush1.msra.mxu0 0.0
  %6106 = vmatprep.subr.mxu0 0.0
  %6107 = vmatpush1.msra.mxu0 0.0
  %6108 = vmatprep.subr.mxu0 0.0
  %6109 = vmatpush1.msra.mxu0 0.0
  %6110 = vmatprep.subr.mxu0 0.0
  %6111 = vmatpush1.msra.mxu0 0.0
  %6112 = vmatprep.subr.mxu0 0.0
  %6113 = vmatpush1.msra.mxu0 0.0
  %6114 = vmatprep.subr.mxu0 0.0
  %6115 = vmatpush1.msra.mxu0 0.0
  %6116 = vmatprep.subr.mxu0 0.0
  %6117 = vmatpush1.msra.mxu0 0.0
  %6118 = vmatprep.subr.mxu0 0.0
  %6119 = vmatpush1.msra.mxu0 0.0
  %6120 = vmatprep.subr.mxu0 0.0
  %6121 = vmatpush1.msra.mxu0 0.0
  %6122 = vmatprep.mubr.f32.mxu0 0.0
  %6123 = vmatmul.mubr.f32.gmra.mrb[0].mxu0 %v6035
  %v6124 = vpop.f32.mrb[0].mxu0
  %v6125 = vadd.f32 %v5996, %v6124
  %v6126 = vpop.f32.mrb[0].mxu0
  %6127 = vmatprep.mubr.f32.mxu0 0.0
  %6128 = vmatmul.mubr.f32.gmra.mrb[0].mxu0 %v6038
  %v6129 = vpop.f32.mrb[0].mxu0
  %v6130 = vadd.f32 %v6001, %v6129
  %v6131 = vpop.f32.mrb[0].mxu0
  %6132 = vmatprep.mubr.f32.mxu0 0.0
  %6133 = vmatmul.mubr.f32.gmra.mrb[0].mxu0 %v6041
  %v6134 = vpop.f32.mrb[0].mxu0
  %v6135 = vadd.f32 %v6006, %v6134
  %v6136 = vpop.f32.mrb[0].mxu0
  %6137 = vmatprep.mubr.f32.mxu0 0.0
  %6138 = vmatmul.mubr.f32.gmra.mrb[0].mxu0 %v6044
  %v6139 = vpop.f32.mrb[0].mxu0
  %v6140 = vadd.f32 %v6011, %v6139
  %v6141 = vpop.f32.mrb[0].mxu0
  %6142 = vmatprep.mubr.f32.mxu0 0.0
  %6143 = vmatmul.mubr.f32.gmra.mrb[0].mxu0 %v6047
  %v6144 = vpop.f32.mrb[0].mxu0
  %v6145 = vadd.f32 %v6016, %v6144
  %v6146 = vpop.f32.mrb[0].mxu0
  %6147 = vmatprep.mubr.f32.mxu0 0.0
  %6148 = vmatmul.mubr.f32.gmra.mrb[0].mxu0 %v6050
  %v6149 = vpop.f32.mrb[0].mxu0
  %v6150 = vadd.f32 %v6021, %v6149
  %v6151 = vpop.f32.mrb[0].mxu0
  %6152 = vmatprep.mubr.f32.mxu0 0.0
  %6153 = vmatmul.mubr.f32.gmra.mrb[0].mxu0 %v6053
  %v6154 = vpop.f32.mrb[0].mxu0
  %v6155 = vadd.f32 %v6026, %v6154
  %v6156 = vpop.f32.mrb[0].mxu0
  %6157 = vmatprep.mubr.f32.mxu0 0.0
  %6158 = vmatmul.mubr.f32.gmra.mrb[0].mxu0 %v6056
  %v6159 = vpop.f32.mrb[0].mxu0
  %v6160 = vadd.f32 %v6031, %v6159
  %v6161 = vpop.f32.mrb[0].mxu0
  %6162 = vdwg.mxu0
  %6163 = vrot.lane.b32.xlu0 %v4873, 112
  %v6164 = vpop.permute.xlu0 %6163
  %6165 = vrot.lane.b32.xlu0 %v4878, 112
  %v6166 = vpop.permute.xlu0 %6165
  %6167 = vrot.lane.b32.xlu0 %v4883, 112
  %v6168 = vpop.permute.xlu0 %6167
  %6169 = vrot.lane.b32.xlu0 %v4888, 112
  %v6170 = vpop.permute.xlu0 %6169
  %v6171 = vsel %vm1095, %v6164, 0
  %v6173 = vsel %vm1095, %v6166, 0
  %v6175 = vsel %vm1095, %v6168, 0
  %v6177 = vsel %vm1095, %v6170, 0
  %6179 = vmatprep.subr.mxu0 0.0
  %6180 = vmatpush1.xpose.msra.mxu0 %v2462
  %6181 = vmatprep.subr.mxu0 0.0
  %6182 = vmatpush1.xpose.msra.mxu0 %v2464
  %6183 = vmatprep.subr.mxu0 0.0
  %6184 = vmatpush1.xpose.msra.mxu0 %v2466
  %6185 = vmatprep.subr.mxu0 0.0
  %6186 = vmatpush1.xpose.msra.mxu0 %v2468
  %6187 = vmatprep.subr.mxu0 0.0
  %6188 = vmatpush1.xpose.msra.mxu0 0.0
  %6189 = vmatprep.subr.mxu0 0.0
  %6190 = vmatpush1.xpose.msra.mxu0 0.0
  %6191 = vmatprep.subr.mxu0 0.0
  %6192 = vmatpush1.xpose.msra.mxu0 0.0
  %6193 = vmatprep.subr.mxu0 0.0
  %6194 = vmatpush1.xpose.msra.mxu0 0.0
  %6195 = vmatprep.subr.mxu0 0.0
  %6196 = vmatpush1.xpose.msra.mxu0 0.0
  %6197 = vmatprep.subr.mxu0 0.0
  %6198 = vmatpush1.xpose.msra.mxu0 0.0
  %6199 = vmatprep.subr.mxu0 0.0
  %6200 = vmatpush1.xpose.msra.mxu0 0.0
  %6201 = vmatprep.subr.mxu0 0.0
  %6202 = vmatpush1.xpose.msra.mxu0 0.0
  %6203 = vmatprep.subr.mxu0 0.0
  %6204 = vmatpush1.xpose.msra.mxu0 0.0
  %6205 = vmatprep.subr.mxu0 0.0
  %6206 = vmatpush1.xpose.msra.mxu0 0.0
  %6207 = vmatprep.subr.mxu0 0.0
  %6208 = vmatpush1.xpose.msra.mxu0 0.0
  %6209 = vmatprep.subr.mxu0 0.0
  %6210 = vmatpush1.xpose.msra.mxu0 0.0
  %6211 = vmatprep.subr.mxu0 0.0
  %6212 = vmatpush1.xpose.msra.mxu0 0.0
  %6213 = vmatprep.subr.mxu0 0.0
  %6214 = vmatpush1.xpose.msra.mxu0 0.0
  %6215 = vmatprep.subr.mxu0 0.0
  %6216 = vmatpush1.xpose.msra.mxu0 0.0
  %6217 = vmatprep.subr.mxu0 0.0
  %6218 = vmatpush1.xpose.msra.mxu0 0.0
  %6219 = vmatprep.subr.mxu0 0.0
  %6220 = vmatpush1.xpose.msra.mxu0 0.0
  %6221 = vmatprep.subr.mxu0 0.0
  %6222 = vmatpush1.xpose.msra.mxu0 0.0
  %6223 = vmatprep.subr.mxu0 0.0
  %6224 = vmatpush1.xpose.msra.mxu0 0.0
  %6225 = vmatprep.subr.mxu0 0.0
  %6226 = vmatpush1.xpose.msra.mxu0 0.0
  %6227 = vmatprep.subr.mxu0 0.0
  %6228 = vmatpush1.xpose.msra.mxu0 0.0
  %6229 = vmatprep.subr.mxu0 0.0
  %6230 = vmatpush1.xpose.msra.mxu0 0.0
  %6231 = vmatprep.subr.mxu0 0.0
  %6232 = vmatpush1.xpose.msra.mxu0 0.0
  %6233 = vmatprep.subr.mxu0 0.0
  %6234 = vmatpush1.xpose.msra.mxu0 0.0
  %6235 = vmatprep.subr.mxu0 0.0
  %6236 = vmatpush1.xpose.msra.mxu0 0.0
  %6237 = vmatprep.subr.mxu0 0.0
  %6238 = vmatpush1.xpose.msra.mxu0 0.0
  %6239 = vmatprep.subr.mxu0 0.0
  %6240 = vmatpush1.xpose.msra.mxu0 0.0
  %6241 = vmatprep.subr.mxu0 0.0
  %6242 = vmatpush1.xpose.msra.mxu0 0.0
  %6243 = vmatprep.mubr.f32.mxu0 0.0
  %6244 = vmatmul.mubr.f32.gmra.mrb[0].mxu0 %v6171
  %v6245 = vpop.f32.mrb[0].mxu0
  %v6246 = vadd.f32 0.0, %v6245
  %v6247 = vpop.f32.mrb[0].mxu0
  %6248 = vmatprep.mubr.f32.mxu0 0.0
  %6249 = vmatmul.mubr.f32.gmra.mrb[0].mxu0 %v6173
  %v6250 = vpop.f32.mrb[0].mxu0
  %v6251 = vadd.f32 0.0, %v6250
  %v6252 = vpop.f32.mrb[0].mxu0
  %6253 = vmatprep.mubr.f32.mxu0 0.0
  %6254 = vmatmul.mubr.f32.gmra.mrb[0].mxu0 %v6175
  %v6255 = vpop.f32.mrb[0].mxu0
  %v6256 = vadd.f32 0.0, %v6255
  %v6257 = vpop.f32.mrb[0].mxu0
  %6258 = vmatprep.mubr.f32.mxu0 0.0
  %6259 = vmatmul.mubr.f32.gmra.mrb[0].mxu0 %v6177
  %v6260 = vpop.f32.mrb[0].mxu0
  %v6261 = vadd.f32 0.0, %v6260
  %v6262 = vpop.f32.mrb[0].mxu0
  %6263 = vdwg.mxu0
  %6264 = vrot.lane.b32.xlu0 %v4893, 112
  %v6265 = vpop.permute.xlu0 %6264
  %6266 = vrot.lane.b32.xlu0 %v4898, 112
  %v6267 = vpop.permute.xlu0 %6266
  %6268 = vrot.lane.b32.xlu0 %v4903, 112
  %v6269 = vpop.permute.xlu0 %6268
  %6270 = vrot.lane.b32.xlu0 %v4908, 112
  %v6271 = vpop.permute.xlu0 %6270
  %v6272 = vsel %vm1095, %v6265, 0
  %v6274 = vsel %vm1095, %v6267, 0
  %v6276 = vsel %vm1095, %v6269, 0
  %v6278 = vsel %vm1095, %v6271, 0
  %6280 = vmatprep.subr.mxu0 0.0
  %6281 = vmatpush1.xpose.msra.mxu0 %v2579
  %6282 = vmatprep.subr.mxu0 0.0
  %6283 = vmatpush1.xpose.msra.mxu0 %v2581
  %6284 = vmatprep.subr.mxu0 0.0
  %6285 = vmatpush1.xpose.msra.mxu0 %v2583
  %6286 = vmatprep.subr.mxu0 0.0
  %6287 = vmatpush1.xpose.msra.mxu0 %v2585
  %6288 = vmatprep.subr.mxu0 0.0
  %6289 = vmatpush1.xpose.msra.mxu0 0.0
  %6290 = vmatprep.subr.mxu0 0.0
  %6291 = vmatpush1.xpose.msra.mxu0 0.0
  %6292 = vmatprep.subr.mxu0 0.0
  %6293 = vmatpush1.xpose.msra.mxu0 0.0
  %6294 = vmatprep.subr.mxu0 0.0
  %6295 = vmatpush1.xpose.msra.mxu0 0.0
  %6296 = vmatprep.subr.mxu0 0.0
  %6297 = vmatpush1.xpose.msra.mxu0 0.0
  %6298 = vmatprep.subr.mxu0 0.0
  %6299 = vmatpush1.xpose.msra.mxu0 0.0
  %6300 = vmatprep.subr.mxu0 0.0
  %6301 = vmatpush1.xpose.msra.mxu0 0.0
  %6302 = vmatprep.subr.mxu0 0.0
  %6303 = vmatpush1.xpose.msra.mxu0 0.0
  %6304 = vmatprep.subr.mxu0 0.0
  %6305 = vmatpush1.xpose.msra.mxu0 0.0
  %6306 = vmatprep.subr.mxu0 0.0
  %6307 = vmatpush1.xpose.msra.mxu0 0.0
  %6308 = vmatprep.subr.mxu0 0.0
  %6309 = vmatpush1.xpose.msra.mxu0 0.0
  %6310 = vmatprep.subr.mxu0 0.0
  %6311 = vmatpush1.xpose.msra.mxu0 0.0
  %6312 = vmatprep.subr.mxu0 0.0
  %6313 = vmatpush1.xpose.msra.mxu0 0.0
  %6314 = vmatprep.subr.mxu0 0.0
  %6315 = vmatpush1.xpose.msra.mxu0 0.0
  %6316 = vmatprep.subr.mxu0 0.0
  %6317 = vmatpush1.xpose.msra.mxu0 0.0
  %6318 = vmatprep.subr.mxu0 0.0
  %6319 = vmatpush1.xpose.msra.mxu0 0.0
  %6320 = vmatprep.subr.mxu0 0.0
  %6321 = vmatpush1.xpose.msra.mxu0 0.0
  %6322 = vmatprep.subr.mxu0 0.0
  %6323 = vmatpush1.xpose.msra.mxu0 0.0
  %6324 = vmatprep.subr.mxu0 0.0
  %6325 = vmatpush1.xpose.msra.mxu0 0.0
  %6326 = vmatprep.subr.mxu0 0.0
  %6327 = vmatpush1.xpose.msra.mxu0 0.0
  %6328 = vmatprep.subr.mxu0 0.0
  %6329 = vmatpush1.xpose.msra.mxu0 0.0
  %6330 = vmatprep.subr.mxu0 0.0
  %6331 = vmatpush1.xpose.msra.mxu0 0.0
  %6332 = vmatprep.subr.mxu0 0.0
  %6333 = vmatpush1.xpose.msra.mxu0 0.0
  %6334 = vmatprep.subr.mxu0 0.0
  %6335 = vmatpush1.xpose.msra.mxu0 0.0
  %6336 = vmatprep.subr.mxu0 0.0
  %6337 = vmatpush1.xpose.msra.mxu0 0.0
  %6338 = vmatprep.subr.mxu0 0.0
  %6339 = vmatpush1.xpose.msra.mxu0 0.0
  %6340 = vmatprep.subr.mxu0 0.0
  %6341 = vmatpush1.xpose.msra.mxu0 0.0
  %6342 = vmatprep.subr.mxu0 0.0
  %6343 = vmatpush1.xpose.msra.mxu0 0.0
  %6344 = vmatprep.mubr.f32.mxu0 0.0
  %6345 = vmatmul.mubr.f32.gmra.mrb[0].mxu0 %v6272
  %v6346 = vpop.f32.mrb[0].mxu0
  %v6347 = vadd.f32 0.0, %v6346
  %v6348 = vpop.f32.mrb[0].mxu0
  %6349 = vmatprep.mubr.f32.mxu0 0.0
  %6350 = vmatmul.mubr.f32.gmra.mrb[0].mxu0 %v6274
  %v6351 = vpop.f32.mrb[0].mxu0
  %v6352 = vadd.f32 0.0, %v6351
  %v6353 = vpop.f32.mrb[0].mxu0
  %6354 = vmatprep.mubr.f32.mxu0 0.0
  %6355 = vmatmul.mubr.f32.gmra.mrb[0].mxu0 %v6276
  %v6356 = vpop.f32.mrb[0].mxu0
  %v6357 = vadd.f32 0.0, %v6356
  %v6358 = vpop.f32.mrb[0].mxu0
  %6359 = vmatprep.mubr.f32.mxu0 0.0
  %6360 = vmatmul.mubr.f32.gmra.mrb[0].mxu0 %v6278
  %v6361 = vpop.f32.mrb[0].mxu0
  %v6362 = vadd.f32 0.0, %v6361
  %v6363 = vpop.f32.mrb[0].mxu0
  %6364 = vdwg.mxu0
  %v6365 = vmul.f32 %v6246, 0.35355338
  %v6366 = vmul.f32 %v6251, 0.35355338
  %v6367 = vmul.f32 %v6256, 0.35355338
  %v6368 = vmul.f32 %v6261, 0.35355338
  %v6369 = vmul.f32 %v6347, 0.35355338
  %v6370 = vmul.f32 %v6352, 0.35355338
  %v6371 = vmul.f32 %v6357, 0.35355338
  %v6372 = vmul.f32 %v6362, 0.35355338
  %v6373 = vsel %vm1323, %v6365, -1e+30
  %v6374 = vsel %vm1323, %v6366, -1e+30
  %v6375 = vsel %vm1323, %v6367, -1e+30
  %v6376 = vsel %vm1323, %v6368, -1e+30
  %v6377 = vsel %vm1323, %v6369, -1e+30
  %v6378 = vsel %vm1323, %v6370, -1e+30
  %v6379 = vsel %vm1323, %v6371, -1e+30
  %v6380 = vsel %vm1323, %v6372, -1e+30
  %v6381 = vsel %vm76, %v6373, -inf
  %6382 = vmax.xlane.f32.xlu0 %v6381
  %v6383 = vpop.xlane.xlu0 %6382
  %v6384 = vsel %vm76, %v6374, -inf
  %6385 = vmax.xlane.f32.xlu0 %v6384
  %v6386 = vpop.xlane.xlu0 %6385
  %v6387 = vsel %vm76, %v6375, -inf
  %6388 = vmax.xlane.f32.xlu0 %v6387
  %v6389 = vpop.xlane.xlu0 %6388
  %v6390 = vsel %vm76, %v6376, -inf
  %6391 = vmax.xlane.f32.xlu0 %v6390
  %v6392 = vpop.xlane.xlu0 %6391
  %v6393 = vsel %vm76, %v6377, -inf
  %6394 = vmax.xlane.f32.xlu0 %v6393
  %v6395 = vpop.xlane.xlu0 %6394
  %v6396 = vsel %vm76, %v6378, -inf
  %6397 = vmax.xlane.f32.xlu0 %v6396
  %v6398 = vpop.xlane.xlu0 %6397
  %v6399 = vsel %vm76, %v6379, -inf
  %6400 = vmax.xlane.f32.xlu0 %v6399
  %v6401 = vpop.xlane.xlu0 %6400
  %v6402 = vsel %vm76, %v6380, -inf
  %6403 = vmax.xlane.f32.xlu0 %v6402
  %v6404 = vpop.xlane.xlu0 %6403
  %v6405 = vsub.f32 %v6373, %v6383
  %v6406 = vsub.f32 %v6374, %v6386
  %v6407 = vsub.f32 %v6375, %v6389
  %v6408 = vsub.f32 %v6376, %v6392
  %v6409 = vsub.f32 %v6377, %v6395
  %v6410 = vsub.f32 %v6378, %v6398
  %v6411 = vsub.f32 %v6379, %v6401
  %v6412 = vsub.f32 %v6380, %v6404
  %v6413 = vmul.f32 %v6405, 1.442695
  %v6414 = vpow.pop %v6413
  %v6415 = vmul.f32 %v6406, 1.442695
  %v6416 = vpow.pop %v6415
  %v6417 = vmul.f32 %v6407, 1.442695
  %v6418 = vpow.pop %v6417
  %v6419 = vmul.f32 %v6408, 1.442695
  %v6420 = vpow.pop %v6419
  %v6421 = vmul.f32 %v6409, 1.442695
  %v6422 = vpow.pop %v6421
  %v6423 = vmul.f32 %v6410, 1.442695
  %v6424 = vpow.pop %v6423
  %v6425 = vmul.f32 %v6411, 1.442695
  %v6426 = vpow.pop %v6425
  %v6427 = vmul.f32 %v6412, 1.442695
  %v6428 = vpow.pop %v6427
  %v6429 = vsel %vm76, %v6414, 0.0
  %6430 = vadd.xlane.f32.xlu0 %v6429
  %v6431 = vpop.xlane.xlu0 %6430
  %v6432 = vsel %vm76, %v6416, 0.0
  %6433 = vadd.xlane.f32.xlu0 %v6432
  %v6434 = vpop.xlane.xlu0 %6433
  %v6435 = vsel %vm76, %v6418, 0.0
  %6436 = vadd.xlane.f32.xlu0 %v6435
  %v6437 = vpop.xlane.xlu0 %6436
  %v6438 = vsel %vm76, %v6420, 0.0
  %6439 = vadd.xlane.f32.xlu0 %v6438
  %v6440 = vpop.xlane.xlu0 %6439
  %v6441 = vsel %vm76, %v6422, 0.0
  %6442 = vadd.xlane.f32.xlu0 %v6441
  %v6443 = vpop.xlane.xlu0 %6442
  %v6444 = vsel %vm76, %v6424, 0.0
  %6445 = vadd.xlane.f32.xlu0 %v6444
  %v6446 = vpop.xlane.xlu0 %6445
  %v6447 = vsel %vm76, %v6426, 0.0
  %6448 = vadd.xlane.f32.xlu0 %v6447
  %v6449 = vpop.xlane.xlu0 %6448
  %v6450 = vsel %vm76, %v6428, 0.0
  %6451 = vadd.xlane.f32.xlu0 %v6450
  %v6452 = vpop.xlane.xlu0 %6451
  %v6453 = vrcp.pop %v6431
  %v6454 = vrcp.pop %v6434
  %v6455 = vrcp.pop %v6437
  %v6456 = vrcp.pop %v6440
  %v6457 = vrcp.pop %v6443
  %v6458 = vrcp.pop %v6446
  %v6459 = vrcp.pop %v6449
  %v6460 = vrcp.pop %v6452
  %v6461 = vmul.f32 %v6414, %v6453
  %v6462 = vmul.f32 %v6416, %v6454
  %v6463 = vmul.f32 %v6418, %v6455
  %v6464 = vmul.f32 %v6420, %v6456
  %v6465 = vmul.f32 %v6422, %v6457
  %v6466 = vmul.f32 %v6424, %v6458
  %v6467 = vmul.f32 %v6426, %v6459
  %v6468 = vmul.f32 %v6428, %v6460
  %v6470 = vsel %vm76, %v6461, 0
  %v6473 = vsel %vm76, %v6462, 0
  %v6476 = vsel %vm76, %v6463, 0
  %v6479 = vsel %vm76, %v6464, 0
  %6481 = vmatprep.subr.mxu0 0.0
  %6482 = vmatpush1.msra.mxu0 %v2777
  %6483 = vmatprep.subr.mxu0 0.0
  %6484 = vmatpush1.msra.mxu0 %v2779
  %6485 = vmatprep.subr.mxu0 0.0
  %6486 = vmatpush1.msra.mxu0 %v2781
  %6487 = vmatprep.subr.mxu0 0.0
  %6488 = vmatpush1.msra.mxu0 %v2783
  %6489 = vmatprep.subr.mxu0 0.0
  %6490 = vmatpush1.msra.mxu0 0.0
  %6491 = vmatprep.subr.mxu0 0.0
  %6492 = vmatpush1.msra.mxu0 0.0
  %6493 = vmatprep.subr.mxu0 0.0
  %6494 = vmatpush1.msra.mxu0 0.0
  %6495 = vmatprep.subr.mxu0 0.0
  %6496 = vmatpush1.msra.mxu0 0.0
  %6497 = vmatprep.subr.mxu0 0.0
  %6498 = vmatpush1.msra.mxu0 0.0
  %6499 = vmatprep.subr.mxu0 0.0
  %6500 = vmatpush1.msra.mxu0 0.0
  %6501 = vmatprep.subr.mxu0 0.0
  %6502 = vmatpush1.msra.mxu0 0.0
  %6503 = vmatprep.subr.mxu0 0.0
  %6504 = vmatpush1.msra.mxu0 0.0
  %6505 = vmatprep.subr.mxu0 0.0
  %6506 = vmatpush1.msra.mxu0 0.0
  %6507 = vmatprep.subr.mxu0 0.0
  %6508 = vmatpush1.msra.mxu0 0.0
  %6509 = vmatprep.subr.mxu0 0.0
  %6510 = vmatpush1.msra.mxu0 0.0
  %6511 = vmatprep.subr.mxu0 0.0
  %6512 = vmatpush1.msra.mxu0 0.0
  %6513 = vmatprep.subr.mxu0 0.0
  %6514 = vmatpush1.msra.mxu0 0.0
  %6515 = vmatprep.subr.mxu0 0.0
  %6516 = vmatpush1.msra.mxu0 0.0
  %6517 = vmatprep.subr.mxu0 0.0
  %6518 = vmatpush1.msra.mxu0 0.0
  %6519 = vmatprep.subr.mxu0 0.0
  %6520 = vmatpush1.msra.mxu0 0.0
  %6521 = vmatprep.subr.mxu0 0.0
  %6522 = vmatpush1.msra.mxu0 0.0
  %6523 = vmatprep.subr.mxu0 0.0
  %6524 = vmatpush1.msra.mxu0 0.0
  %6525 = vmatprep.subr.mxu0 0.0
  %6526 = vmatpush1.msra.mxu0 0.0
  %6527 = vmatprep.subr.mxu0 0.0
  %6528 = vmatpush1.msra.mxu0 0.0
  %6529 = vmatprep.subr.mxu0 0.0
  %6530 = vmatpush1.msra.mxu0 0.0
  %6531 = vmatprep.subr.mxu0 0.0
  %6532 = vmatpush1.msra.mxu0 0.0
  %6533 = vmatprep.subr.mxu0 0.0
  %6534 = vmatpush1.msra.mxu0 0.0
  %6535 = vmatprep.subr.mxu0 0.0
  %6536 = vmatpush1.msra.mxu0 0.0
  %6537 = vmatprep.subr.mxu0 0.0
  %6538 = vmatpush1.msra.mxu0 0.0
  %6539 = vmatprep.subr.mxu0 0.0
  %6540 = vmatpush1.msra.mxu0 0.0
  %6541 = vmatprep.subr.mxu0 0.0
  %6542 = vmatpush1.msra.mxu0 0.0
  %6543 = vmatprep.subr.mxu0 0.0
  %6544 = vmatpush1.msra.mxu0 0.0
  %6545 = vmatprep.mubr.f32.mxu0 0.0
  %6546 = vmatmul.mubr.f32.gmra.mrb[0].mxu0 %v6470
  %v6547 = vpop.f32.mrb[0].mxu0
  %v6548 = vadd.f32 0.0, %v6547
  %v6549 = vpop.f32.mrb[0].mxu0
  %6550 = vmatprep.mubr.f32.mxu0 0.0
  %6551 = vmatmul.mubr.f32.gmra.mrb[0].mxu0 %v6473
  %v6552 = vpop.f32.mrb[0].mxu0
  %v6553 = vadd.f32 0.0, %v6552
  %v6554 = vpop.f32.mrb[0].mxu0
  %6555 = vmatprep.mubr.f32.mxu0 0.0
  %6556 = vmatmul.mubr.f32.gmra.mrb[0].mxu0 %v6476
  %v6557 = vpop.f32.mrb[0].mxu0
  %v6558 = vadd.f32 0.0, %v6557
  %v6559 = vpop.f32.mrb[0].mxu0
  %6560 = vmatprep.mubr.f32.mxu0 0.0
  %6561 = vmatmul.mubr.f32.gmra.mrb[0].mxu0 %v6479
  %v6562 = vpop.f32.mrb[0].mxu0
  %v6563 = vadd.f32 0.0, %v6562
  %v6564 = vpop.f32.mrb[0].mxu0
  %6565 = vdwg.mxu0
  %v6567 = vsel %vm76, %v6465, 0
  %v6570 = vsel %vm76, %v6466, 0
  %v6573 = vsel %vm76, %v6467, 0
  %v6576 = vsel %vm76, %v6468, 0
  %6578 = vmatprep.subr.mxu0 0.0
  %6579 = vmatpush1.msra.mxu0 %v2886
  %6580 = vmatprep.subr.mxu0 0.0
  %6581 = vmatpush1.msra.mxu0 %v2888
  %6582 = vmatprep.subr.mxu0 0.0
  %6583 = vmatpush1.msra.mxu0 %v2890
  %6584 = vmatprep.subr.mxu0 0.0
  %6585 = vmatpush1.msra.mxu0 %v2892
  %6586 = vmatprep.subr.mxu0 0.0
  %6587 = vmatpush1.msra.mxu0 0.0
  %6588 = vmatprep.subr.mxu0 0.0
  %6589 = vmatpush1.msra.mxu0 0.0
  %6590 = vmatprep.subr.mxu0 0.0
  %6591 = vmatpush1.msra.mxu0 0.0
  %6592 = vmatprep.subr.mxu0 0.0
  %6593 = vmatpush1.msra.mxu0 0.0
  %6594 = vmatprep.subr.mxu0 0.0
  %6595 = vmatpush1.msra.mxu0 0.0
  %6596 = vmatprep.subr.mxu0 0.0
  %6597 = vmatpush1.msra.mxu0 0.0
  %6598 = vmatprep.subr.mxu0 0.0
  %6599 = vmatpush1.msra.mxu0 0.0
  %6600 = vmatprep.subr.mxu0 0.0
  %6601 = vmatpush1.msra.mxu0 0.0
  %6602 = vmatprep.subr.mxu0 0.0
  %6603 = vmatpush1.msra.mxu0 0.0
  %6604 = vmatprep.subr.mxu0 0.0
  %6605 = vmatpush1.msra.mxu0 0.0
  %6606 = vmatprep.subr.mxu0 0.0
  %6607 = vmatpush1.msra.mxu0 0.0
  %6608 = vmatprep.subr.mxu0 0.0
  %6609 = vmatpush1.msra.mxu0 0.0
  %6610 = vmatprep.subr.mxu0 0.0
  %6611 = vmatpush1.msra.mxu0 0.0
  %6612 = vmatprep.subr.mxu0 0.0
  %6613 = vmatpush1.msra.mxu0 0.0
  %6614 = vmatprep.subr.mxu0 0.0
  %6615 = vmatpush1.msra.mxu0 0.0
  %6616 = vmatprep.subr.mxu0 0.0
  %6617 = vmatpush1.msra.mxu0 0.0
  %6618 = vmatprep.subr.mxu0 0.0
  %6619 = vmatpush1.msra.mxu0 0.0
  %6620 = vmatprep.subr.mxu0 0.0
  %6621 = vmatpush1.msra.mxu0 0.0
  %6622 = vmatprep.subr.mxu0 0.0
  %6623 = vmatpush1.msra.mxu0 0.0
  %6624 = vmatprep.subr.mxu0 0.0
  %6625 = vmatpush1.msra.mxu0 0.0
  %6626 = vmatprep.subr.mxu0 0.0
  %6627 = vmatpush1.msra.mxu0 0.0
  %6628 = vmatprep.subr.mxu0 0.0
  %6629 = vmatpush1.msra.mxu0 0.0
  %6630 = vmatprep.subr.mxu0 0.0
  %6631 = vmatpush1.msra.mxu0 0.0
  %6632 = vmatprep.subr.mxu0 0.0
  %6633 = vmatpush1.msra.mxu0 0.0
  %6634 = vmatprep.subr.mxu0 0.0
  %6635 = vmatpush1.msra.mxu0 0.0
  %6636 = vmatprep.subr.mxu0 0.0
  %6637 = vmatpush1.msra.mxu0 0.0
  %6638 = vmatprep.subr.mxu0 0.0
  %6639 = vmatpush1.msra.mxu0 0.0
  %6640 = vmatprep.subr.mxu0 0.0
  %6641 = vmatpush1.msra.mxu0 0.0
  %6642 = vmatprep.mubr.f32.mxu0 0.0
  %6643 = vmatmul.mubr.f32.gmra.mrb[0].mxu0 %v6567
  %v6644 = vpop.f32.mrb[0].mxu0
  %v6645 = vadd.f32 0.0, %v6644
  %v6646 = vpop.f32.mrb[0].mxu0
  %6647 = vmatprep.mubr.f32.mxu0 0.0
  %6648 = vmatmul.mubr.f32.gmra.mrb[0].mxu0 %v6570
  %v6649 = vpop.f32.mrb[0].mxu0
  %v6650 = vadd.f32 0.0, %v6649
  %v6651 = vpop.f32.mrb[0].mxu0
  %6652 = vmatprep.mubr.f32.mxu0 0.0
  %6653 = vmatmul.mubr.f32.gmra.mrb[0].mxu0 %v6573
  %v6654 = vpop.f32.mrb[0].mxu0
  %v6655 = vadd.f32 0.0, %v6654
  %v6656 = vpop.f32.mrb[0].mxu0
  %6657 = vmatprep.mubr.f32.mxu0 0.0
  %6658 = vmatmul.mubr.f32.gmra.mrb[0].mxu0 %v6576
  %v6659 = vpop.f32.mrb[0].mxu0
  %v6660 = vadd.f32 0.0, %v6659
  %v6661 = vpop.f32.mrb[0].mxu0
  %6662 = vdwg.mxu0
  %v6663 = vld [vmem:[%s2 + $0x70] sm:$0xff]
  %v6665 = vsel %vm1095, %v6548, 0
  %v6668 = vsel %vm1095, %v6553, 0
  %v6671 = vsel %vm1095, %v6558, 0
  %v6674 = vsel %vm1095, %v6563, 0
  %v6677 = vsel %vm1095, %v6645, 0
  %v6680 = vsel %vm1095, %v6650, 0
  %v6683 = vsel %vm1095, %v6655, 0
  %v6686 = vsel %vm1095, %v6660, 0
  %6688 = vmatprep.subr.mxu0 0.0
  %6689 = vmatpush1.msra.mxu0 %v6663
  %6690 = vmatprep.subr.mxu0 0.0
  %6691 = vmatpush1.msra.mxu0 0.0
  %6692 = vmatprep.subr.mxu0 0.0
  %6693 = vmatpush1.msra.mxu0 0.0
  %6694 = vmatprep.subr.mxu0 0.0
  %6695 = vmatpush1.msra.mxu0 0.0
  %6696 = vmatprep.subr.mxu0 0.0
  %6697 = vmatpush1.msra.mxu0 0.0
  %6698 = vmatprep.subr.mxu0 0.0
  %6699 = vmatpush1.msra.mxu0 0.0
  %6700 = vmatprep.subr.mxu0 0.0
  %6701 = vmatpush1.msra.mxu0 0.0
  %6702 = vmatprep.subr.mxu0 0.0
  %6703 = vmatpush1.msra.mxu0 0.0
  %6704 = vmatprep.subr.mxu0 0.0
  %6705 = vmatpush1.msra.mxu0 0.0
  %6706 = vmatprep.subr.mxu0 0.0
  %6707 = vmatpush1.msra.mxu0 0.0
  %6708 = vmatprep.subr.mxu0 0.0
  %6709 = vmatpush1.msra.mxu0 0.0
  %6710 = vmatprep.subr.mxu0 0.0
  %6711 = vmatpush1.msra.mxu0 0.0
  %6712 = vmatprep.subr.mxu0 0.0
  %6713 = vmatpush1.msra.mxu0 0.0
  %6714 = vmatprep.subr.mxu0 0.0
  %6715 = vmatpush1.msra.mxu0 0.0
  %6716 = vmatprep.subr.mxu0 0.0
  %6717 = vmatpush1.msra.mxu0 0.0
  %6718 = vmatprep.subr.mxu0 0.0
  %6719 = vmatpush1.msra.mxu0 0.0
  %6720 = vmatprep.subr.mxu0 0.0
  %6721 = vmatpush1.msra.mxu0 0.0
  %6722 = vmatprep.subr.mxu0 0.0
  %6723 = vmatpush1.msra.mxu0 0.0
  %6724 = vmatprep.subr.mxu0 0.0
  %6725 = vmatpush1.msra.mxu0 0.0
  %6726 = vmatprep.subr.mxu0 0.0
  %6727 = vmatpush1.msra.mxu0 0.0
  %6728 = vmatprep.subr.mxu0 0.0
  %6729 = vmatpush1.msra.mxu0 0.0
  %6730 = vmatprep.subr.mxu0 0.0
  %6731 = vmatpush1.msra.mxu0 0.0
  %6732 = vmatprep.subr.mxu0 0.0
  %6733 = vmatpush1.msra.mxu0 0.0
  %6734 = vmatprep.subr.mxu0 0.0
  %6735 = vmatpush1.msra.mxu0 0.0
  %6736 = vmatprep.subr.mxu0 0.0
  %6737 = vmatpush1.msra.mxu0 0.0
  %6738 = vmatprep.subr.mxu0 0.0
  %6739 = vmatpush1.msra.mxu0 0.0
  %6740 = vmatprep.subr.mxu0 0.0
  %6741 = vmatpush1.msra.mxu0 0.0
  %6742 = vmatprep.subr.mxu0 0.0
  %6743 = vmatpush1.msra.mxu0 0.0
  %6744 = vmatprep.subr.mxu0 0.0
  %6745 = vmatpush1.msra.mxu0 0.0
  %6746 = vmatprep.subr.mxu0 0.0
  %6747 = vmatpush1.msra.mxu0 0.0
  %6748 = vmatprep.subr.mxu0 0.0
  %6749 = vmatpush1.msra.mxu0 0.0
  %6750 = vmatprep.subr.mxu0 0.0
  %6751 = vmatpush1.msra.mxu0 0.0
  %6752 = vmatprep.mubr.f32.mxu0 0.0
  %6753 = vmatmul.mubr.f32.gmra.mrb[0].mxu0 %v6665
  %v6754 = vpop.f32.mrb[0].mxu0
  %v6755 = vadd.f32 0.0, %v6754
  %v6756 = vpop.f32.mrb[0].mxu0
  %6757 = vmatprep.mubr.f32.mxu0 0.0
  %6758 = vmatmul.mubr.f32.gmra.mrb[0].mxu0 %v6668
  %v6759 = vpop.f32.mrb[0].mxu0
  %v6760 = vadd.f32 0.0, %v6759
  %v6761 = vpop.f32.mrb[0].mxu0
  %6762 = vmatprep.mubr.f32.mxu0 0.0
  %6763 = vmatmul.mubr.f32.gmra.mrb[0].mxu0 %v6671
  %v6764 = vpop.f32.mrb[0].mxu0
  %v6765 = vadd.f32 0.0, %v6764
  %v6766 = vpop.f32.mrb[0].mxu0
  %6767 = vmatprep.mubr.f32.mxu0 0.0
  %6768 = vmatmul.mubr.f32.gmra.mrb[0].mxu0 %v6674
  %v6769 = vpop.f32.mrb[0].mxu0
  %v6770 = vadd.f32 0.0, %v6769
  %v6771 = vpop.f32.mrb[0].mxu0
  %6772 = vmatprep.mubr.f32.mxu0 0.0
  %6773 = vmatmul.mubr.f32.gmra.mrb[0].mxu0 %v6677
  %v6774 = vpop.f32.mrb[0].mxu0
  %v6775 = vadd.f32 0.0, %v6774
  %v6776 = vpop.f32.mrb[0].mxu0
  %6777 = vmatprep.mubr.f32.mxu0 0.0
  %6778 = vmatmul.mubr.f32.gmra.mrb[0].mxu0 %v6680
  %v6779 = vpop.f32.mrb[0].mxu0
  %v6780 = vadd.f32 0.0, %v6779
  %v6781 = vpop.f32.mrb[0].mxu0
  %6782 = vmatprep.mubr.f32.mxu0 0.0
  %6783 = vmatmul.mubr.f32.gmra.mrb[0].mxu0 %v6683
  %v6784 = vpop.f32.mrb[0].mxu0
  %v6785 = vadd.f32 0.0, %v6784
  %v6786 = vpop.f32.mrb[0].mxu0
  %6787 = vmatprep.mubr.f32.mxu0 0.0
  %6788 = vmatmul.mubr.f32.gmra.mrb[0].mxu0 %v6686
  %v6789 = vpop.f32.mrb[0].mxu0
  %v6790 = vadd.f32 0.0, %v6789
  %v6791 = vpop.f32.mrb[0].mxu0
  %6792 = vdwg.mxu0
  %v6793 = vadd.f32 %v6125, %v6755
  %v6794 = vadd.f32 %v6130, %v6760
  %v6795 = vadd.f32 %v6135, %v6765
  %v6796 = vadd.f32 %v6140, %v6770
  %v6797 = vadd.f32 %v6145, %v6775
  %v6798 = vadd.f32 %v6150, %v6780
  %v6799 = vadd.f32 %v6155, %v6785
  %v6800 = vadd.f32 %v6160, %v6790
  %6801 = vrot.lane.b32.xlu0 %v4873, 104
  %v6802 = vpop.permute.xlu0 %6801
  %6803 = vrot.lane.b32.xlu0 %v4878, 104
  %v6804 = vpop.permute.xlu0 %6803
  %6805 = vrot.lane.b32.xlu0 %v4883, 104
  %v6806 = vpop.permute.xlu0 %6805
  %6807 = vrot.lane.b32.xlu0 %v4888, 104
  %v6808 = vpop.permute.xlu0 %6807
  %v6809 = vsel %vm1095, %v6802, 0
  %v6811 = vsel %vm1095, %v6804, 0
  %v6813 = vsel %vm1095, %v6806, 0
  %v6815 = vsel %vm1095, %v6808, 0
  %6817 = vmatprep.subr.mxu0 0.0
  %6818 = vmatpush1.xpose.msra.mxu0 %v3156
  %6819 = vmatprep.subr.mxu0 0.0
  %6820 = vmatpush1.xpose.msra.mxu0 %v3158
  %6821 = vmatprep.subr.mxu0 0.0
  %6822 = vmatpush1.xpose.msra.mxu0 %v3160
  %6823 = vmatprep.subr.mxu0 0.0
  %6824 = vmatpush1.xpose.msra.mxu0 %v3162
  %6825 = vmatprep.subr.mxu0 0.0
  %6826 = vmatpush1.xpose.msra.mxu0 0.0
  %6827 = vmatprep.subr.mxu0 0.0
  %6828 = vmatpush1.xpose.msra.mxu0 0.0
  %6829 = vmatprep.subr.mxu0 0.0
  %6830 = vmatpush1.xpose.msra.mxu0 0.0
  %6831 = vmatprep.subr.mxu0 0.0
  %6832 = vmatpush1.xpose.msra.mxu0 0.0
  %6833 = vmatprep.subr.mxu0 0.0
  %6834 = vmatpush1.xpose.msra.mxu0 0.0
  %6835 = vmatprep.subr.mxu0 0.0
  %6836 = vmatpush1.xpose.msra.mxu0 0.0
  %6837 = vmatprep.subr.mxu0 0.0
  %6838 = vmatpush1.xpose.msra.mxu0 0.0
  %6839 = vmatprep.subr.mxu0 0.0
  %6840 = vmatpush1.xpose.msra.mxu0 0.0
  %6841 = vmatprep.subr.mxu0 0.0
  %6842 = vmatpush1.xpose.msra.mxu0 0.0
  %6843 = vmatprep.subr.mxu0 0.0
  %6844 = vmatpush1.xpose.msra.mxu0 0.0
  %6845 = vmatprep.subr.mxu0 0.0
  %6846 = vmatpush1.xpose.msra.mxu0 0.0
  %6847 = vmatprep.subr.mxu0 0.0
  %6848 = vmatpush1.xpose.msra.mxu0 0.0
  %6849 = vmatprep.subr.mxu0 0.0
  %6850 = vmatpush1.xpose.msra.mxu0 0.0
  %6851 = vmatprep.subr.mxu0 0.0
  %6852 = vmatpush1.xpose.msra.mxu0 0.0
  %6853 = vmatprep.subr.mxu0 0.0
  %6854 = vmatpush1.xpose.msra.mxu0 0.0
  %6855 = vmatprep.subr.mxu0 0.0
  %6856 = vmatpush1.xpose.msra.mxu0 0.0
  %6857 = vmatprep.subr.mxu0 0.0
  %6858 = vmatpush1.xpose.msra.mxu0 0.0
  %6859 = vmatprep.subr.mxu0 0.0
  %6860 = vmatpush1.xpose.msra.mxu0 0.0
  %6861 = vmatprep.subr.mxu0 0.0
  %6862 = vmatpush1.xpose.msra.mxu0 0.0
  %6863 = vmatprep.subr.mxu0 0.0
  %6864 = vmatpush1.xpose.msra.mxu0 0.0
  %6865 = vmatprep.subr.mxu0 0.0
  %6866 = vmatpush1.xpose.msra.mxu0 0.0
  %6867 = vmatprep.subr.mxu0 0.0
  %6868 = vmatpush1.xpose.msra.mxu0 0.0
  %6869 = vmatprep.subr.mxu0 0.0
  %6870 = vmatpush1.xpose.msra.mxu0 0.0
  %6871 = vmatprep.subr.mxu0 0.0
  %6872 = vmatpush1.xpose.msra.mxu0 0.0
  %6873 = vmatprep.subr.mxu0 0.0
  %6874 = vmatpush1.xpose.msra.mxu0 0.0
  %6875 = vmatprep.subr.mxu0 0.0
  %6876 = vmatpush1.xpose.msra.mxu0 0.0
  %6877 = vmatprep.subr.mxu0 0.0
  %6878 = vmatpush1.xpose.msra.mxu0 0.0
  %6879 = vmatprep.subr.mxu0 0.0
  %6880 = vmatpush1.xpose.msra.mxu0 0.0
  %6881 = vmatprep.mubr.f32.mxu0 0.0
  %6882 = vmatmul.mubr.f32.gmra.mrb[0].mxu0 %v6809
  %v6883 = vpop.f32.mrb[0].mxu0
  %v6884 = vadd.f32 0.0, %v6883
  %v6885 = vpop.f32.mrb[0].mxu0
  %6886 = vmatprep.mubr.f32.mxu0 0.0
  %6887 = vmatmul.mubr.f32.gmra.mrb[0].mxu0 %v6811
  %v6888 = vpop.f32.mrb[0].mxu0
  %v6889 = vadd.f32 0.0, %v6888
  %v6890 = vpop.f32.mrb[0].mxu0
  %6891 = vmatprep.mubr.f32.mxu0 0.0
  %6892 = vmatmul.mubr.f32.gmra.mrb[0].mxu0 %v6813
  %v6893 = vpop.f32.mrb[0].mxu0
  %v6894 = vadd.f32 0.0, %v6893
  %v6895 = vpop.f32.mrb[0].mxu0
  %6896 = vmatprep.mubr.f32.mxu0 0.0
  %6897 = vmatmul.mubr.f32.gmra.mrb[0].mxu0 %v6815
  %v6898 = vpop.f32.mrb[0].mxu0
  %v6899 = vadd.f32 0.0, %v6898
  %v6900 = vpop.f32.mrb[0].mxu0
  %6901 = vdwg.mxu0
  %6902 = vrot.lane.b32.xlu0 %v4893, 104
  %v6903 = vpop.permute.xlu0 %6902
  %6904 = vrot.lane.b32.xlu0 %v4898, 104
  %v6905 = vpop.permute.xlu0 %6904
  %6906 = vrot.lane.b32.xlu0 %v4903, 104
  %v6907 = vpop.permute.xlu0 %6906
  %6908 = vrot.lane.b32.xlu0 %v4908, 104
  %v6909 = vpop.permute.xlu0 %6908
  %v6910 = vsel %vm1095, %v6903, 0
  %v6912 = vsel %vm1095, %v6905, 0
  %v6914 = vsel %vm1095, %v6907, 0
  %v6916 = vsel %vm1095, %v6909, 0
  %6918 = vmatprep.subr.mxu0 0.0
  %6919 = vmatpush1.xpose.msra.mxu0 %v3273
  %6920 = vmatprep.subr.mxu0 0.0
  %6921 = vmatpush1.xpose.msra.mxu0 %v3275
  %6922 = vmatprep.subr.mxu0 0.0
  %6923 = vmatpush1.xpose.msra.mxu0 %v3277
  %6924 = vmatprep.subr.mxu0 0.0
  %6925 = vmatpush1.xpose.msra.mxu0 %v3279
  %6926 = vmatprep.subr.mxu0 0.0
  %6927 = vmatpush1.xpose.msra.mxu0 0.0
  %6928 = vmatprep.subr.mxu0 0.0
  %6929 = vmatpush1.xpose.msra.mxu0 0.0
  %6930 = vmatprep.subr.mxu0 0.0
  %6931 = vmatpush1.xpose.msra.mxu0 0.0
  %6932 = vmatprep.subr.mxu0 0.0
  %6933 = vmatpush1.xpose.msra.mxu0 0.0
  %6934 = vmatprep.subr.mxu0 0.0
  %6935 = vmatpush1.xpose.msra.mxu0 0.0
  %6936 = vmatprep.subr.mxu0 0.0
  %6937 = vmatpush1.xpose.msra.mxu0 0.0
  %6938 = vmatprep.subr.mxu0 0.0
  %6939 = vmatpush1.xpose.msra.mxu0 0.0
  %6940 = vmatprep.subr.mxu0 0.0
  %6941 = vmatpush1.xpose.msra.mxu0 0.0
  %6942 = vmatprep.subr.mxu0 0.0
  %6943 = vmatpush1.xpose.msra.mxu0 0.0
  %6944 = vmatprep.subr.mxu0 0.0
  %6945 = vmatpush1.xpose.msra.mxu0 0.0
  %6946 = vmatprep.subr.mxu0 0.0
  %6947 = vmatpush1.xpose.msra.mxu0 0.0
  %6948 = vmatprep.subr.mxu0 0.0
  %6949 = vmatpush1.xpose.msra.mxu0 0.0
  %6950 = vmatprep.subr.mxu0 0.0
  %6951 = vmatpush1.xpose.msra.mxu0 0.0
  %6952 = vmatprep.subr.mxu0 0.0
  %6953 = vmatpush1.xpose.msra.mxu0 0.0
  %6954 = vmatprep.subr.mxu0 0.0
  %6955 = vmatpush1.xpose.msra.mxu0 0.0
  %6956 = vmatprep.subr.mxu0 0.0
  %6957 = vmatpush1.xpose.msra.mxu0 0.0
  %6958 = vmatprep.subr.mxu0 0.0
  %6959 = vmatpush1.xpose.msra.mxu0 0.0
  %6960 = vmatprep.subr.mxu0 0.0
  %6961 = vmatpush1.xpose.msra.mxu0 0.0
  %6962 = vmatprep.subr.mxu0 0.0
  %6963 = vmatpush1.xpose.msra.mxu0 0.0
  %6964 = vmatprep.subr.mxu0 0.0
  %6965 = vmatpush1.xpose.msra.mxu0 0.0
  %6966 = vmatprep.subr.mxu0 0.0
  %6967 = vmatpush1.xpose.msra.mxu0 0.0
  %6968 = vmatprep.subr.mxu0 0.0
  %6969 = vmatpush1.xpose.msra.mxu0 0.0
  %6970 = vmatprep.subr.mxu0 0.0
  %6971 = vmatpush1.xpose.msra.mxu0 0.0
  %6972 = vmatprep.subr.mxu0 0.0
  %6973 = vmatpush1.xpose.msra.mxu0 0.0
  %6974 = vmatprep.subr.mxu0 0.0
  %6975 = vmatpush1.xpose.msra.mxu0 0.0
  %6976 = vmatprep.subr.mxu0 0.0
  %6977 = vmatpush1.xpose.msra.mxu0 0.0
  %6978 = vmatprep.subr.mxu0 0.0
  %6979 = vmatpush1.xpose.msra.mxu0 0.0
  %6980 = vmatprep.subr.mxu0 0.0
  %6981 = vmatpush1.xpose.msra.mxu0 0.0
  %6982 = vmatprep.mubr.f32.mxu0 0.0
  %6983 = vmatmul.mubr.f32.gmra.mrb[0].mxu0 %v6910
  %v6984 = vpop.f32.mrb[0].mxu0
  %v6985 = vadd.f32 0.0, %v6984
  %v6986 = vpop.f32.mrb[0].mxu0
  %6987 = vmatprep.mubr.f32.mxu0 0.0
  %6988 = vmatmul.mubr.f32.gmra.mrb[0].mxu0 %v6912
  %v6989 = vpop.f32.mrb[0].mxu0
  %v6990 = vadd.f32 0.0, %v6989
  %v6991 = vpop.f32.mrb[0].mxu0
  %6992 = vmatprep.mubr.f32.mxu0 0.0
  %6993 = vmatmul.mubr.f32.gmra.mrb[0].mxu0 %v6914
  %v6994 = vpop.f32.mrb[0].mxu0
  %v6995 = vadd.f32 0.0, %v6994
  %v6996 = vpop.f32.mrb[0].mxu0
  %6997 = vmatprep.mubr.f32.mxu0 0.0
  %6998 = vmatmul.mubr.f32.gmra.mrb[0].mxu0 %v6916
  %v6999 = vpop.f32.mrb[0].mxu0
  %v7000 = vadd.f32 0.0, %v6999
  %v7001 = vpop.f32.mrb[0].mxu0
  %7002 = vdwg.mxu0
  %v7003 = vmul.f32 %v6884, 0.35355338
  %v7004 = vmul.f32 %v6889, 0.35355338
  %v7005 = vmul.f32 %v6894, 0.35355338
  %v7006 = vmul.f32 %v6899, 0.35355338
  %v7007 = vmul.f32 %v6985, 0.35355338
  %v7008 = vmul.f32 %v6990, 0.35355338
  %v7009 = vmul.f32 %v6995, 0.35355338
  %v7010 = vmul.f32 %v7000, 0.35355338
  %v7011 = vsel %vm1323, %v7003, -1e+30
  %v7012 = vsel %vm1323, %v7004, -1e+30
  %v7013 = vsel %vm1323, %v7005, -1e+30
  %v7014 = vsel %vm1323, %v7006, -1e+30
  %v7015 = vsel %vm1323, %v7007, -1e+30
  %v7016 = vsel %vm1323, %v7008, -1e+30
  %v7017 = vsel %vm1323, %v7009, -1e+30
  %v7018 = vsel %vm1323, %v7010, -1e+30
  %v7019 = vsel %vm76, %v7011, -inf
  %7020 = vmax.xlane.f32.xlu0 %v7019
  %v7021 = vpop.xlane.xlu0 %7020
  %v7022 = vsel %vm76, %v7012, -inf
  %7023 = vmax.xlane.f32.xlu0 %v7022
  %v7024 = vpop.xlane.xlu0 %7023
  %v7025 = vsel %vm76, %v7013, -inf
  %7026 = vmax.xlane.f32.xlu0 %v7025
  %v7027 = vpop.xlane.xlu0 %7026
  %v7028 = vsel %vm76, %v7014, -inf
  %7029 = vmax.xlane.f32.xlu0 %v7028
  %v7030 = vpop.xlane.xlu0 %7029
  %v7031 = vsel %vm76, %v7015, -inf
  %7032 = vmax.xlane.f32.xlu0 %v7031
  %v7033 = vpop.xlane.xlu0 %7032
  %v7034 = vsel %vm76, %v7016, -inf
  %7035 = vmax.xlane.f32.xlu0 %v7034
  %v7036 = vpop.xlane.xlu0 %7035
  %v7037 = vsel %vm76, %v7017, -inf
  %7038 = vmax.xlane.f32.xlu0 %v7037
  %v7039 = vpop.xlane.xlu0 %7038
  %v7040 = vsel %vm76, %v7018, -inf
  %7041 = vmax.xlane.f32.xlu0 %v7040
  %v7042 = vpop.xlane.xlu0 %7041
  %v7043 = vsub.f32 %v7011, %v7021
  %v7044 = vsub.f32 %v7012, %v7024
  %v7045 = vsub.f32 %v7013, %v7027
  %v7046 = vsub.f32 %v7014, %v7030
  %v7047 = vsub.f32 %v7015, %v7033
  %v7048 = vsub.f32 %v7016, %v7036
  %v7049 = vsub.f32 %v7017, %v7039
  %v7050 = vsub.f32 %v7018, %v7042
  %v7051 = vmul.f32 %v7043, 1.442695
  %v7052 = vpow.pop %v7051
  %v7053 = vmul.f32 %v7044, 1.442695
  %v7054 = vpow.pop %v7053
  %v7055 = vmul.f32 %v7045, 1.442695
  %v7056 = vpow.pop %v7055
  %v7057 = vmul.f32 %v7046, 1.442695
  %v7058 = vpow.pop %v7057
  %v7059 = vmul.f32 %v7047, 1.442695
  %v7060 = vpow.pop %v7059
  %v7061 = vmul.f32 %v7048, 1.442695
  %v7062 = vpow.pop %v7061
  %v7063 = vmul.f32 %v7049, 1.442695
  %v7064 = vpow.pop %v7063
  %v7065 = vmul.f32 %v7050, 1.442695
  %v7066 = vpow.pop %v7065
  %v7067 = vsel %vm76, %v7052, 0.0
  %7068 = vadd.xlane.f32.xlu0 %v7067
  %v7069 = vpop.xlane.xlu0 %7068
  %v7070 = vsel %vm76, %v7054, 0.0
  %7071 = vadd.xlane.f32.xlu0 %v7070
  %v7072 = vpop.xlane.xlu0 %7071
  %v7073 = vsel %vm76, %v7056, 0.0
  %7074 = vadd.xlane.f32.xlu0 %v7073
  %v7075 = vpop.xlane.xlu0 %7074
  %v7076 = vsel %vm76, %v7058, 0.0
  %7077 = vadd.xlane.f32.xlu0 %v7076
  %v7078 = vpop.xlane.xlu0 %7077
  %v7079 = vsel %vm76, %v7060, 0.0
  %7080 = vadd.xlane.f32.xlu0 %v7079
  %v7081 = vpop.xlane.xlu0 %7080
  %v7082 = vsel %vm76, %v7062, 0.0
  %7083 = vadd.xlane.f32.xlu0 %v7082
  %v7084 = vpop.xlane.xlu0 %7083
  %v7085 = vsel %vm76, %v7064, 0.0
  %7086 = vadd.xlane.f32.xlu0 %v7085
  %v7087 = vpop.xlane.xlu0 %7086
  %v7088 = vsel %vm76, %v7066, 0.0
  %7089 = vadd.xlane.f32.xlu0 %v7088
  %v7090 = vpop.xlane.xlu0 %7089
  %v7091 = vrcp.pop %v7069
  %v7092 = vrcp.pop %v7072
  %v7093 = vrcp.pop %v7075
  %v7094 = vrcp.pop %v7078
  %v7095 = vrcp.pop %v7081
  %v7096 = vrcp.pop %v7084
  %v7097 = vrcp.pop %v7087
  %v7098 = vrcp.pop %v7090
  %v7099 = vmul.f32 %v7052, %v7091
  %v7100 = vmul.f32 %v7054, %v7092
  %v7101 = vmul.f32 %v7056, %v7093
  %v7102 = vmul.f32 %v7058, %v7094
  %v7103 = vmul.f32 %v7060, %v7095
  %v7104 = vmul.f32 %v7062, %v7096
  %v7105 = vmul.f32 %v7064, %v7097
  %v7106 = vmul.f32 %v7066, %v7098
  %v7108 = vsel %vm76, %v7099, 0
  %v7111 = vsel %vm76, %v7100, 0
  %v7114 = vsel %vm76, %v7101, 0
  %v7117 = vsel %vm76, %v7102, 0
  %7119 = vmatprep.subr.mxu0 0.0
  %7120 = vmatpush1.msra.mxu0 %v3471
  %7121 = vmatprep.subr.mxu0 0.0
  %7122 = vmatpush1.msra.mxu0 %v3473
  %7123 = vmatprep.subr.mxu0 0.0
  %7124 = vmatpush1.msra.mxu0 %v3475
  %7125 = vmatprep.subr.mxu0 0.0
  %7126 = vmatpush1.msra.mxu0 %v3477
  %7127 = vmatprep.subr.mxu0 0.0
  %7128 = vmatpush1.msra.mxu0 0.0
  %7129 = vmatprep.subr.mxu0 0.0
  %7130 = vmatpush1.msra.mxu0 0.0
  %7131 = vmatprep.subr.mxu0 0.0
  %7132 = vmatpush1.msra.mxu0 0.0
  %7133 = vmatprep.subr.mxu0 0.0
  %7134 = vmatpush1.msra.mxu0 0.0
  %7135 = vmatprep.subr.mxu0 0.0
  %7136 = vmatpush1.msra.mxu0 0.0
  %7137 = vmatprep.subr.mxu0 0.0
  %7138 = vmatpush1.msra.mxu0 0.0
  %7139 = vmatprep.subr.mxu0 0.0
  %7140 = vmatpush1.msra.mxu0 0.0
  %7141 = vmatprep.subr.mxu0 0.0
  %7142 = vmatpush1.msra.mxu0 0.0
  %7143 = vmatprep.subr.mxu0 0.0
  %7144 = vmatpush1.msra.mxu0 0.0
  %7145 = vmatprep.subr.mxu0 0.0
  %7146 = vmatpush1.msra.mxu0 0.0
  %7147 = vmatprep.subr.mxu0 0.0
  %7148 = vmatpush1.msra.mxu0 0.0
  %7149 = vmatprep.subr.mxu0 0.0
  %7150 = vmatpush1.msra.mxu0 0.0
  %7151 = vmatprep.subr.mxu0 0.0
  %7152 = vmatpush1.msra.mxu0 0.0
  %7153 = vmatprep.subr.mxu0 0.0
  %7154 = vmatpush1.msra.mxu0 0.0
  %7155 = vmatprep.subr.mxu0 0.0
  %7156 = vmatpush1.msra.mxu0 0.0
  %7157 = vmatprep.subr.mxu0 0.0
  %7158 = vmatpush1.msra.mxu0 0.0
  %7159 = vmatprep.subr.mxu0 0.0
  %7160 = vmatpush1.msra.mxu0 0.0
  %7161 = vmatprep.subr.mxu0 0.0
  %7162 = vmatpush1.msra.mxu0 0.0
  %7163 = vmatprep.subr.mxu0 0.0
  %7164 = vmatpush1.msra.mxu0 0.0
  %7165 = vmatprep.subr.mxu0 0.0
  %7166 = vmatpush1.msra.mxu0 0.0
  %7167 = vmatprep.subr.mxu0 0.0
  %7168 = vmatpush1.msra.mxu0 0.0
  %7169 = vmatprep.subr.mxu0 0.0
  %7170 = vmatpush1.msra.mxu0 0.0
  %7171 = vmatprep.subr.mxu0 0.0
  %7172 = vmatpush1.msra.mxu0 0.0
  %7173 = vmatprep.subr.mxu0 0.0
  %7174 = vmatpush1.msra.mxu0 0.0
  %7175 = vmatprep.subr.mxu0 0.0
  %7176 = vmatpush1.msra.mxu0 0.0
  %7177 = vmatprep.subr.mxu0 0.0
  %7178 = vmatpush1.msra.mxu0 0.0
  %7179 = vmatprep.subr.mxu0 0.0
  %7180 = vmatpush1.msra.mxu0 0.0
  %7181 = vmatprep.subr.mxu0 0.0
  %7182 = vmatpush1.msra.mxu0 0.0
  %7183 = vmatprep.mubr.f32.mxu0 0.0
  %7184 = vmatmul.mubr.f32.gmra.mrb[0].mxu0 %v7108
  %v7185 = vpop.f32.mrb[0].mxu0
  %v7186 = vadd.f32 0.0, %v7185
  %v7187 = vpop.f32.mrb[0].mxu0
  %7188 = vmatprep.mubr.f32.mxu0 0.0
  %7189 = vmatmul.mubr.f32.gmra.mrb[0].mxu0 %v7111
  %v7190 = vpop.f32.mrb[0].mxu0
  %v7191 = vadd.f32 0.0, %v7190
  %v7192 = vpop.f32.mrb[0].mxu0
  %7193 = vmatprep.mubr.f32.mxu0 0.0
  %7194 = vmatmul.mubr.f32.gmra.mrb[0].mxu0 %v7114
  %v7195 = vpop.f32.mrb[0].mxu0
  %v7196 = vadd.f32 0.0, %v7195
  %v7197 = vpop.f32.mrb[0].mxu0
  %7198 = vmatprep.mubr.f32.mxu0 0.0
  %7199 = vmatmul.mubr.f32.gmra.mrb[0].mxu0 %v7117
  %v7200 = vpop.f32.mrb[0].mxu0
  %v7201 = vadd.f32 0.0, %v7200
  %v7202 = vpop.f32.mrb[0].mxu0
  %7203 = vdwg.mxu0
  %v7205 = vsel %vm76, %v7103, 0
  %v7208 = vsel %vm76, %v7104, 0
  %v7211 = vsel %vm76, %v7105, 0
  %v7214 = vsel %vm76, %v7106, 0
  %7216 = vmatprep.subr.mxu0 0.0
  %7217 = vmatpush1.msra.mxu0 %v3580
  %7218 = vmatprep.subr.mxu0 0.0
  %7219 = vmatpush1.msra.mxu0 %v3582
  %7220 = vmatprep.subr.mxu0 0.0
  %7221 = vmatpush1.msra.mxu0 %v3584
  %7222 = vmatprep.subr.mxu0 0.0
  %7223 = vmatpush1.msra.mxu0 %v3586
  %7224 = vmatprep.subr.mxu0 0.0
  %7225 = vmatpush1.msra.mxu0 0.0
  %7226 = vmatprep.subr.mxu0 0.0
  %7227 = vmatpush1.msra.mxu0 0.0
  %7228 = vmatprep.subr.mxu0 0.0
  %7229 = vmatpush1.msra.mxu0 0.0
  %7230 = vmatprep.subr.mxu0 0.0
  %7231 = vmatpush1.msra.mxu0 0.0
  %7232 = vmatprep.subr.mxu0 0.0
  %7233 = vmatpush1.msra.mxu0 0.0
  %7234 = vmatprep.subr.mxu0 0.0
  %7235 = vmatpush1.msra.mxu0 0.0
  %7236 = vmatprep.subr.mxu0 0.0
  %7237 = vmatpush1.msra.mxu0 0.0
  %7238 = vmatprep.subr.mxu0 0.0
  %7239 = vmatpush1.msra.mxu0 0.0
  %7240 = vmatprep.subr.mxu0 0.0
  %7241 = vmatpush1.msra.mxu0 0.0
  %7242 = vmatprep.subr.mxu0 0.0
  %7243 = vmatpush1.msra.mxu0 0.0
  %7244 = vmatprep.subr.mxu0 0.0
  %7245 = vmatpush1.msra.mxu0 0.0
  %7246 = vmatprep.subr.mxu0 0.0
  %7247 = vmatpush1.msra.mxu0 0.0
  %7248 = vmatprep.subr.mxu0 0.0
  %7249 = vmatpush1.msra.mxu0 0.0
  %7250 = vmatprep.subr.mxu0 0.0
  %7251 = vmatpush1.msra.mxu0 0.0
  %7252 = vmatprep.subr.mxu0 0.0
  %7253 = vmatpush1.msra.mxu0 0.0
  %7254 = vmatprep.subr.mxu0 0.0
  %7255 = vmatpush1.msra.mxu0 0.0
  %7256 = vmatprep.subr.mxu0 0.0
  %7257 = vmatpush1.msra.mxu0 0.0
  %7258 = vmatprep.subr.mxu0 0.0
  %7259 = vmatpush1.msra.mxu0 0.0
  %7260 = vmatprep.subr.mxu0 0.0
  %7261 = vmatpush1.msra.mxu0 0.0
  %7262 = vmatprep.subr.mxu0 0.0
  %7263 = vmatpush1.msra.mxu0 0.0
  %7264 = vmatprep.subr.mxu0 0.0
  %7265 = vmatpush1.msra.mxu0 0.0
  %7266 = vmatprep.subr.mxu0 0.0
  %7267 = vmatpush1.msra.mxu0 0.0
  %7268 = vmatprep.subr.mxu0 0.0
  %7269 = vmatpush1.msra.mxu0 0.0
  %7270 = vmatprep.subr.mxu0 0.0
  %7271 = vmatpush1.msra.mxu0 0.0
  %7272 = vmatprep.subr.mxu0 0.0
  %7273 = vmatpush1.msra.mxu0 0.0
  %7274 = vmatprep.subr.mxu0 0.0
  %7275 = vmatpush1.msra.mxu0 0.0
  %7276 = vmatprep.subr.mxu0 0.0
  %7277 = vmatpush1.msra.mxu0 0.0
  %7278 = vmatprep.subr.mxu0 0.0
  %7279 = vmatpush1.msra.mxu0 0.0
  %7280 = vmatprep.mubr.f32.mxu0 0.0
  %7281 = vmatmul.mubr.f32.gmra.mrb[0].mxu0 %v7205
  %v7282 = vpop.f32.mrb[0].mxu0
  %v7283 = vadd.f32 0.0, %v7282
  %v7284 = vpop.f32.mrb[0].mxu0
  %7285 = vmatprep.mubr.f32.mxu0 0.0
  %7286 = vmatmul.mubr.f32.gmra.mrb[0].mxu0 %v7208
  %v7287 = vpop.f32.mrb[0].mxu0
  %v7288 = vadd.f32 0.0, %v7287
  %v7289 = vpop.f32.mrb[0].mxu0
  %7290 = vmatprep.mubr.f32.mxu0 0.0
  %7291 = vmatmul.mubr.f32.gmra.mrb[0].mxu0 %v7211
  %v7292 = vpop.f32.mrb[0].mxu0
  %v7293 = vadd.f32 0.0, %v7292
  %v7294 = vpop.f32.mrb[0].mxu0
  %7295 = vmatprep.mubr.f32.mxu0 0.0
  %7296 = vmatmul.mubr.f32.gmra.mrb[0].mxu0 %v7214
  %v7297 = vpop.f32.mrb[0].mxu0
  %v7298 = vadd.f32 0.0, %v7297
  %v7299 = vpop.f32.mrb[0].mxu0
  %7300 = vdwg.mxu0
  %v7301 = vld [vmem:[%s2 + $0x78] sm:$0xff]
  %v7303 = vsel %vm1095, %v7186, 0
  %v7306 = vsel %vm1095, %v7191, 0
  %v7309 = vsel %vm1095, %v7196, 0
  %v7312 = vsel %vm1095, %v7201, 0
  %v7315 = vsel %vm1095, %v7283, 0
  %v7318 = vsel %vm1095, %v7288, 0
  %v7321 = vsel %vm1095, %v7293, 0
  %v7324 = vsel %vm1095, %v7298, 0
  %7326 = vmatprep.subr.mxu0 0.0
  %7327 = vmatpush1.msra.mxu0 %v7301
  %7328 = vmatprep.subr.mxu0 0.0
  %7329 = vmatpush1.msra.mxu0 0.0
  %7330 = vmatprep.subr.mxu0 0.0
  %7331 = vmatpush1.msra.mxu0 0.0
  %7332 = vmatprep.subr.mxu0 0.0
  %7333 = vmatpush1.msra.mxu0 0.0
  %7334 = vmatprep.subr.mxu0 0.0
  %7335 = vmatpush1.msra.mxu0 0.0
  %7336 = vmatprep.subr.mxu0 0.0
  %7337 = vmatpush1.msra.mxu0 0.0
  %7338 = vmatprep.subr.mxu0 0.0
  %7339 = vmatpush1.msra.mxu0 0.0
  %7340 = vmatprep.subr.mxu0 0.0
  %7341 = vmatpush1.msra.mxu0 0.0
  %7342 = vmatprep.subr.mxu0 0.0
  %7343 = vmatpush1.msra.mxu0 0.0
  %7344 = vmatprep.subr.mxu0 0.0
  %7345 = vmatpush1.msra.mxu0 0.0
  %7346 = vmatprep.subr.mxu0 0.0
  %7347 = vmatpush1.msra.mxu0 0.0
  %7348 = vmatprep.subr.mxu0 0.0
  %7349 = vmatpush1.msra.mxu0 0.0
  %7350 = vmatprep.subr.mxu0 0.0
  %7351 = vmatpush1.msra.mxu0 0.0
  %7352 = vmatprep.subr.mxu0 0.0
  %7353 = vmatpush1.msra.mxu0 0.0
  %7354 = vmatprep.subr.mxu0 0.0
  %7355 = vmatpush1.msra.mxu0 0.0
  %7356 = vmatprep.subr.mxu0 0.0
  %7357 = vmatpush1.msra.mxu0 0.0
  %7358 = vmatprep.subr.mxu0 0.0
  %7359 = vmatpush1.msra.mxu0 0.0
  %7360 = vmatprep.subr.mxu0 0.0
  %7361 = vmatpush1.msra.mxu0 0.0
  %7362 = vmatprep.subr.mxu0 0.0
  %7363 = vmatpush1.msra.mxu0 0.0
  %7364 = vmatprep.subr.mxu0 0.0
  %7365 = vmatpush1.msra.mxu0 0.0
  %7366 = vmatprep.subr.mxu0 0.0
  %7367 = vmatpush1.msra.mxu0 0.0
  %7368 = vmatprep.subr.mxu0 0.0
  %7369 = vmatpush1.msra.mxu0 0.0
  %7370 = vmatprep.subr.mxu0 0.0
  %7371 = vmatpush1.msra.mxu0 0.0
  %7372 = vmatprep.subr.mxu0 0.0
  %7373 = vmatpush1.msra.mxu0 0.0
  %7374 = vmatprep.subr.mxu0 0.0
  %7375 = vmatpush1.msra.mxu0 0.0
  %7376 = vmatprep.subr.mxu0 0.0
  %7377 = vmatpush1.msra.mxu0 0.0
  %7378 = vmatprep.subr.mxu0 0.0
  %7379 = vmatpush1.msra.mxu0 0.0
  %7380 = vmatprep.subr.mxu0 0.0
  %7381 = vmatpush1.msra.mxu0 0.0
  %7382 = vmatprep.subr.mxu0 0.0
  %7383 = vmatpush1.msra.mxu0 0.0
  %7384 = vmatprep.subr.mxu0 0.0
  %7385 = vmatpush1.msra.mxu0 0.0
  %7386 = vmatprep.subr.mxu0 0.0
  %7387 = vmatpush1.msra.mxu0 0.0
  %7388 = vmatprep.subr.mxu0 0.0
  %7389 = vmatpush1.msra.mxu0 0.0
  %7390 = vmatprep.mubr.f32.mxu0 0.0
  %7391 = vmatmul.mubr.f32.gmra.mrb[0].mxu0 %v7303
  %v7392 = vpop.f32.mrb[0].mxu0
  %v7393 = vadd.f32 0.0, %v7392
  %v7394 = vpop.f32.mrb[0].mxu0
  %7395 = vmatprep.mubr.f32.mxu0 0.0
  %7396 = vmatmul.mubr.f32.gmra.mrb[0].mxu0 %v7306
  %v7397 = vpop.f32.mrb[0].mxu0
  %v7398 = vadd.f32 0.0, %v7397
  %v7399 = vpop.f32.mrb[0].mxu0
  %7400 = vmatprep.mubr.f32.mxu0 0.0
  %7401 = vmatmul.mubr.f32.gmra.mrb[0].mxu0 %v7309
  %v7402 = vpop.f32.mrb[0].mxu0
  %v7403 = vadd.f32 0.0, %v7402
  %v7404 = vpop.f32.mrb[0].mxu0
  %7405 = vmatprep.mubr.f32.mxu0 0.0
  %7406 = vmatmul.mubr.f32.gmra.mrb[0].mxu0 %v7312
  %v7407 = vpop.f32.mrb[0].mxu0
  %v7408 = vadd.f32 0.0, %v7407
  %v7409 = vpop.f32.mrb[0].mxu0
  %7410 = vmatprep.mubr.f32.mxu0 0.0
  %7411 = vmatmul.mubr.f32.gmra.mrb[0].mxu0 %v7315
  %v7412 = vpop.f32.mrb[0].mxu0
  %v7413 = vadd.f32 0.0, %v7412
  %v7414 = vpop.f32.mrb[0].mxu0
  %7415 = vmatprep.mubr.f32.mxu0 0.0
  %7416 = vmatmul.mubr.f32.gmra.mrb[0].mxu0 %v7318
  %v7417 = vpop.f32.mrb[0].mxu0
  %v7418 = vadd.f32 0.0, %v7417
  %v7419 = vpop.f32.mrb[0].mxu0
  %7420 = vmatprep.mubr.f32.mxu0 0.0
  %7421 = vmatmul.mubr.f32.gmra.mrb[0].mxu0 %v7321
  %v7422 = vpop.f32.mrb[0].mxu0
  %v7423 = vadd.f32 0.0, %v7422
  %v7424 = vpop.f32.mrb[0].mxu0
  %7425 = vmatprep.mubr.f32.mxu0 0.0
  %7426 = vmatmul.mubr.f32.gmra.mrb[0].mxu0 %v7324
  %v7427 = vpop.f32.mrb[0].mxu0
  %v7428 = vadd.f32 0.0, %v7427
  %v7429 = vpop.f32.mrb[0].mxu0
  %7430 = vdwg.mxu0
  %v7431 = vadd.f32 %v6793, %v7393
  %v7432 = vadd.f32 %v6794, %v7398
  %v7433 = vadd.f32 %v6795, %v7403
  %v7434 = vadd.f32 %v6796, %v7408
  %v7435 = vadd.f32 %v6797, %v7413
  %v7436 = vadd.f32 %v6798, %v7418
  %v7437 = vadd.f32 %v6799, %v7423
  %v7438 = vadd.f32 %v6800, %v7428
  %v7439 = vadd.f32 %v4754, %v7431
  %v7440 = vadd.f32 %v4755, %v7432
  %v7441 = vadd.f32 %v4756, %v7433
  %v7442 = vadd.f32 %v4757, %v7434
  %v7443 = vadd.f32 %v4758, %v7435
  %v7444 = vadd.f32 %v4759, %v7436
  %v7445 = vadd.f32 %v4760, %v7437
  %v7446 = vadd.f32 %v4761, %v7438
  %v7447 = vadd.f32 %v7439, %v3837
  %v7448 = vadd.f32 %v7440, %v3837
  %v7449 = vadd.f32 %v7441, %v3837
  %v7450 = vadd.f32 %v7442, %v3837
  %v7451 = vadd.f32 %v7443, %v3837
  %v7452 = vadd.f32 %v7444, %v3837
  %v7453 = vadd.f32 %v7445, %v3837
  %v7454 = vadd.f32 %v7446, %v3837
  %v7455 = vsel %vm76, %v7447, 0.0
  %7456 = vadd.xlane.f32.xlu0 %v7455
  %v7457 = vpop.xlane.xlu0 %7456
  %v7458 = vsel %vm76, %v7448, 0.0
  %7459 = vadd.xlane.f32.xlu0 %v7458
  %v7460 = vpop.xlane.xlu0 %7459
  %v7461 = vsel %vm76, %v7449, 0.0
  %7462 = vadd.xlane.f32.xlu0 %v7461
  %v7463 = vpop.xlane.xlu0 %7462
  %v7464 = vsel %vm76, %v7450, 0.0
  %7465 = vadd.xlane.f32.xlu0 %v7464
  %v7466 = vpop.xlane.xlu0 %7465
  %v7467 = vsel %vm76, %v7451, 0.0
  %7468 = vadd.xlane.f32.xlu0 %v7467
  %v7469 = vpop.xlane.xlu0 %7468
  %v7470 = vsel %vm76, %v7452, 0.0
  %7471 = vadd.xlane.f32.xlu0 %v7470
  %v7472 = vpop.xlane.xlu0 %7471
  %v7473 = vsel %vm76, %v7453, 0.0
  %7474 = vadd.xlane.f32.xlu0 %v7473
  %v7475 = vpop.xlane.xlu0 %7474
  %v7476 = vsel %vm76, %v7454, 0.0
  %7477 = vadd.xlane.f32.xlu0 %v7476
  %v7478 = vpop.xlane.xlu0 %7477
  %v7479 = vmul.f32 %v7457, %v3870
  %v7480 = vmul.f32 %v7460, %v3870
  %v7481 = vmul.f32 %v7463, %v3870
  %v7482 = vmul.f32 %v7466, %v3870
  %v7483 = vmul.f32 %v7469, %v3870
  %v7484 = vmul.f32 %v7472, %v3870
  %v7485 = vmul.f32 %v7475, %v3870
  %v7486 = vmul.f32 %v7478, %v3870
  %v7487 = vsub.f32 %v7447, %v7479
  %v7488 = vsub.f32 %v7448, %v7480
  %v7489 = vsub.f32 %v7449, %v7481
  %v7490 = vsub.f32 %v7450, %v7482
  %v7491 = vsub.f32 %v7451, %v7483
  %v7492 = vsub.f32 %v7452, %v7484
  %v7493 = vsub.f32 %v7453, %v7485
  %v7494 = vsub.f32 %v7454, %v7486
  %v7495 = vmul.f32 %v7487, %v7487
  %v7496 = vmul.f32 %v7488, %v7488
  %v7497 = vmul.f32 %v7489, %v7489
  %v7498 = vmul.f32 %v7490, %v7490
  %v7499 = vmul.f32 %v7491, %v7491
  %v7500 = vmul.f32 %v7492, %v7492
  %v7501 = vmul.f32 %v7493, %v7493
  %v7502 = vmul.f32 %v7494, %v7494
  %v7503 = vsel %vm76, %v7495, 0.0
  %7504 = vadd.xlane.f32.xlu0 %v7503
  %v7505 = vpop.xlane.xlu0 %7504
  %v7506 = vsel %vm76, %v7496, 0.0
  %7507 = vadd.xlane.f32.xlu0 %v7506
  %v7508 = vpop.xlane.xlu0 %7507
  %v7509 = vsel %vm76, %v7497, 0.0
  %7510 = vadd.xlane.f32.xlu0 %v7509
  %v7511 = vpop.xlane.xlu0 %7510
  %v7512 = vsel %vm76, %v7498, 0.0
  %7513 = vadd.xlane.f32.xlu0 %v7512
  %v7514 = vpop.xlane.xlu0 %7513
  %v7515 = vsel %vm76, %v7499, 0.0
  %7516 = vadd.xlane.f32.xlu0 %v7515
  %v7517 = vpop.xlane.xlu0 %7516
  %v7518 = vsel %vm76, %v7500, 0.0
  %7519 = vadd.xlane.f32.xlu0 %v7518
  %v7520 = vpop.xlane.xlu0 %7519
  %v7521 = vsel %vm76, %v7501, 0.0
  %7522 = vadd.xlane.f32.xlu0 %v7521
  %v7523 = vpop.xlane.xlu0 %7522
  %v7524 = vsel %vm76, %v7502, 0.0
  %7525 = vadd.xlane.f32.xlu0 %v7524
  %v7526 = vpop.xlane.xlu0 %7525
  %v7527 = vmul.f32 %v7505, %v3870
  %v7528 = vmul.f32 %v7508, %v3870
  %v7529 = vmul.f32 %v7511, %v3870
  %v7530 = vmul.f32 %v7514, %v3870
  %v7531 = vmul.f32 %v7517, %v3870
  %v7532 = vmul.f32 %v7520, %v3870
  %v7533 = vmul.f32 %v7523, %v3870
  %v7534 = vmul.f32 %v7526, %v3870
  %v7535 = vadd.f32 %v7527, 1e-05
  %v7536 = vadd.f32 %v7528, 1e-05
  %v7537 = vadd.f32 %v7529, 1e-05
  %v7538 = vadd.f32 %v7530, 1e-05
  %v7539 = vadd.f32 %v7531, 1e-05
  %v7540 = vadd.f32 %v7532, 1e-05
  %v7541 = vadd.f32 %v7533, 1e-05
  %v7542 = vadd.f32 %v7534, 1e-05
  %v7543 = vrsqrt.pop %v7535
  %v7544 = vrsqrt.pop %v7536
  %v7545 = vrsqrt.pop %v7537
  %v7546 = vrsqrt.pop %v7538
  %v7547 = vrsqrt.pop %v7539
  %v7548 = vrsqrt.pop %v7540
  %v7549 = vrsqrt.pop %v7541
  %v7550 = vrsqrt.pop %v7542
  %v7551 = vmul.f32 %v7487, %v7543
  %v7552 = vmul.f32 %v7488, %v7544
  %v7553 = vmul.f32 %v7489, %v7545
  %v7554 = vmul.f32 %v7490, %v7546
  %v7555 = vmul.f32 %v7491, %v7547
  %v7556 = vmul.f32 %v7492, %v7548
  %v7557 = vmul.f32 %v7493, %v7549
  %v7558 = vmul.f32 %v7494, %v7550
  %v7559 = vmul.f32 %v7551, %v3954
  %v7560 = vmul.f32 %v7552, %v3954
  %v7561 = vmul.f32 %v7553, %v3954
  %v7562 = vmul.f32 %v7554, %v3954
  %v7563 = vmul.f32 %v7555, %v3954
  %v7564 = vmul.f32 %v7556, %v3954
  %v7565 = vmul.f32 %v7557, %v3954
  %v7566 = vmul.f32 %v7558, %v3954
  %v7567 = vadd.f32 %v7559, %v3966
  %v7568 = vadd.f32 %v7560, %v3966
  %v7569 = vadd.f32 %v7561, %v3966
  %v7570 = vadd.f32 %v7562, %v3966
  %v7571 = vadd.f32 %v7563, %v3966
  %v7572 = vadd.f32 %v7564, %v3966
  %v7573 = vadd.f32 %v7565, %v3966
  %v7574 = vadd.f32 %v7566, %v3966
  %v7575 = vadd.f32 %v7567, %v26
  %v7576 = vadd.f32 %v7568, %v27
  %v7577 = vadd.f32 %v7569, %v28
  %v7578 = vadd.f32 %v7570, %v29
  %v7579 = vadd.f32 %v7571, %v30
  %v7580 = vadd.f32 %v7572, %v31
  %v7581 = vadd.f32 %v7573, %v32
  %v7582 = vadd.f32 %v7574, %v33
  %v7583 = vld [vmem:[%s2 + $0x80] sm:$0xff]
  %v7584 = vld [vmem:[%s2 + $0x88] sm:$0xff]
  %v7585 = vld [vmem:[%s2 + $0x90] sm:$0xff]
  %v7586 = vld [vmem:[%s2 + $0x98] sm:$0xff]
  %v7588 = vsel %vm76, %v7575, 0
  %v7591 = vsel %vm76, %v7576, 0
  %v7594 = vsel %vm76, %v7577, 0
  %v7597 = vsel %vm76, %v7578, 0
  %v7600 = vsel %vm76, %v7579, 0
  %v7603 = vsel %vm76, %v7580, 0
  %v7606 = vsel %vm76, %v7581, 0
  %v7609 = vsel %vm76, %v7582, 0
  %7611 = vmatprep.subr.mxu0 0.0
  %7612 = vmatpush1.msra.mxu0 %v7583
  %7613 = vmatprep.subr.mxu0 0.0
  %7614 = vmatpush1.msra.mxu0 %v7584
  %7615 = vmatprep.subr.mxu0 0.0
  %7616 = vmatpush1.msra.mxu0 %v7585
  %7617 = vmatprep.subr.mxu0 0.0
  %7618 = vmatpush1.msra.mxu0 %v7586
  %7619 = vmatprep.subr.mxu0 0.0
  %7620 = vmatpush1.msra.mxu0 0.0
  %7621 = vmatprep.subr.mxu0 0.0
  %7622 = vmatpush1.msra.mxu0 0.0
  %7623 = vmatprep.subr.mxu0 0.0
  %7624 = vmatpush1.msra.mxu0 0.0
  %7625 = vmatprep.subr.mxu0 0.0
  %7626 = vmatpush1.msra.mxu0 0.0
  %7627 = vmatprep.subr.mxu0 0.0
  %7628 = vmatpush1.msra.mxu0 0.0
  %7629 = vmatprep.subr.mxu0 0.0
  %7630 = vmatpush1.msra.mxu0 0.0
  %7631 = vmatprep.subr.mxu0 0.0
  %7632 = vmatpush1.msra.mxu0 0.0
  %7633 = vmatprep.subr.mxu0 0.0
  %7634 = vmatpush1.msra.mxu0 0.0
  %7635 = vmatprep.subr.mxu0 0.0
  %7636 = vmatpush1.msra.mxu0 0.0
  %7637 = vmatprep.subr.mxu0 0.0
  %7638 = vmatpush1.msra.mxu0 0.0
  %7639 = vmatprep.subr.mxu0 0.0
  %7640 = vmatpush1.msra.mxu0 0.0
  %7641 = vmatprep.subr.mxu0 0.0
  %7642 = vmatpush1.msra.mxu0 0.0
  %7643 = vmatprep.subr.mxu0 0.0
  %7644 = vmatpush1.msra.mxu0 0.0
  %7645 = vmatprep.subr.mxu0 0.0
  %7646 = vmatpush1.msra.mxu0 0.0
  %7647 = vmatprep.subr.mxu0 0.0
  %7648 = vmatpush1.msra.mxu0 0.0
  %7649 = vmatprep.subr.mxu0 0.0
  %7650 = vmatpush1.msra.mxu0 0.0
  %7651 = vmatprep.subr.mxu0 0.0
  %7652 = vmatpush1.msra.mxu0 0.0
  %7653 = vmatprep.subr.mxu0 0.0
  %7654 = vmatpush1.msra.mxu0 0.0
  %7655 = vmatprep.subr.mxu0 0.0
  %7656 = vmatpush1.msra.mxu0 0.0
  %7657 = vmatprep.subr.mxu0 0.0
  %7658 = vmatpush1.msra.mxu0 0.0
  %7659 = vmatprep.subr.mxu0 0.0
  %7660 = vmatpush1.msra.mxu0 0.0
  %7661 = vmatprep.subr.mxu0 0.0
  %7662 = vmatpush1.msra.mxu0 0.0
  %7663 = vmatprep.subr.mxu0 0.0
  %7664 = vmatpush1.msra.mxu0 0.0
  %7665 = vmatprep.subr.mxu0 0.0
  %7666 = vmatpush1.msra.mxu0 0.0
  %7667 = vmatprep.subr.mxu0 0.0
  %7668 = vmatpush1.msra.mxu0 0.0
  %7669 = vmatprep.subr.mxu0 0.0
  %7670 = vmatpush1.msra.mxu0 0.0
  %7671 = vmatprep.subr.mxu0 0.0
  %7672 = vmatpush1.msra.mxu0 0.0
  %7673 = vmatprep.subr.mxu0 0.0
  %7674 = vmatpush1.msra.mxu0 0.0
  %7675 = vmatprep.mubr.f32.mxu0 0.0
  %7676 = vmatmul.mubr.f32.gmra.mrb[0].mxu0 %v7588
  %v7677 = vpop.f32.mrb[0].mxu0
  %v7678 = vadd.f32 %v3990, %v7677
  %v7679 = vpop.f32.mrb[0].mxu0
  %7680 = vmatprep.mubr.f32.mxu0 0.0
  %7681 = vmatmul.mubr.f32.gmra.mrb[0].mxu0 %v7591
  %v7682 = vpop.f32.mrb[0].mxu0
  %v7683 = vadd.f32 %v3990, %v7682
  %v7684 = vpop.f32.mrb[0].mxu0
  %7685 = vmatprep.mubr.f32.mxu0 0.0
  %7686 = vmatmul.mubr.f32.gmra.mrb[0].mxu0 %v7594
  %v7687 = vpop.f32.mrb[0].mxu0
  %v7688 = vadd.f32 %v3990, %v7687
  %v7689 = vpop.f32.mrb[0].mxu0
  %7690 = vmatprep.mubr.f32.mxu0 0.0
  %7691 = vmatmul.mubr.f32.gmra.mrb[0].mxu0 %v7597
  %v7692 = vpop.f32.mrb[0].mxu0
  %v7693 = vadd.f32 %v3990, %v7692
  %v7694 = vpop.f32.mrb[0].mxu0
  %7695 = vmatprep.mubr.f32.mxu0 0.0
  %7696 = vmatmul.mubr.f32.gmra.mrb[0].mxu0 %v7600
  %v7697 = vpop.f32.mrb[0].mxu0
  %v7698 = vadd.f32 %v3990, %v7697
  %v7699 = vpop.f32.mrb[0].mxu0
  %7700 = vmatprep.mubr.f32.mxu0 0.0
  %7701 = vmatmul.mubr.f32.gmra.mrb[0].mxu0 %v7603
  %v7702 = vpop.f32.mrb[0].mxu0
  %v7703 = vadd.f32 %v3990, %v7702
  %v7704 = vpop.f32.mrb[0].mxu0
  %7705 = vmatprep.mubr.f32.mxu0 0.0
  %7706 = vmatmul.mubr.f32.gmra.mrb[0].mxu0 %v7606
  %v7707 = vpop.f32.mrb[0].mxu0
  %v7708 = vadd.f32 %v3990, %v7707
  %v7709 = vpop.f32.mrb[0].mxu0
  %7710 = vmatprep.mubr.f32.mxu0 0.0
  %7711 = vmatmul.mubr.f32.gmra.mrb[0].mxu0 %v7609
  %v7712 = vpop.f32.mrb[0].mxu0
  %v7713 = vadd.f32 %v3990, %v7712
  %v7714 = vpop.f32.mrb[0].mxu0
  %7715 = vdwg.mxu0
  %v7716 = vmul.f32 %v7678, 0.17677669
  %v7717 = vmul.f32 %v7683, 0.17677669
  %v7718 = vmul.f32 %v7688, 0.17677669
  %v7719 = vmul.f32 %v7693, 0.17677669
  %v7720 = vmul.f32 %v7698, 0.17677669
  %v7721 = vmul.f32 %v7703, 0.17677669
  %v7722 = vmul.f32 %v7708, 0.17677669
  %v7723 = vmul.f32 %v7713, 0.17677669
  %v7724 = vsel %vm76, %v7716, -inf
  %7725 = vmax.xlane.f32.xlu0 %v7724
  %v7726 = vpop.xlane.xlu0 %7725
  %v7727 = vsel %vm76, %v7717, -inf
  %7728 = vmax.xlane.f32.xlu0 %v7727
  %v7729 = vpop.xlane.xlu0 %7728
  %v7730 = vsel %vm76, %v7718, -inf
  %7731 = vmax.xlane.f32.xlu0 %v7730
  %v7732 = vpop.xlane.xlu0 %7731
  %v7733 = vsel %vm76, %v7719, -inf
  %7734 = vmax.xlane.f32.xlu0 %v7733
  %v7735 = vpop.xlane.xlu0 %7734
  %v7736 = vsel %vm76, %v7720, -inf
  %7737 = vmax.xlane.f32.xlu0 %v7736
  %v7738 = vpop.xlane.xlu0 %7737
  %v7739 = vsel %vm76, %v7721, -inf
  %7740 = vmax.xlane.f32.xlu0 %v7739
  %v7741 = vpop.xlane.xlu0 %7740
  %v7742 = vsel %vm76, %v7722, -inf
  %7743 = vmax.xlane.f32.xlu0 %v7742
  %v7744 = vpop.xlane.xlu0 %7743
  %v7745 = vsel %vm76, %v7723, -inf
  %7746 = vmax.xlane.f32.xlu0 %v7745
  %v7747 = vpop.xlane.xlu0 %7746
  %v7748 = vsub.f32 %v7716, %v7726
  %v7749 = vsub.f32 %v7717, %v7729
  %v7750 = vsub.f32 %v7718, %v7732
  %v7751 = vsub.f32 %v7719, %v7735
  %v7752 = vsub.f32 %v7720, %v7738
  %v7753 = vsub.f32 %v7721, %v7741
  %v7754 = vsub.f32 %v7722, %v7744
  %v7755 = vsub.f32 %v7723, %v7747
  %v7756 = vmul.f32 %v7748, 1.442695
  %v7757 = vpow.pop %v7756
  %v7758 = vmul.f32 %v7749, 1.442695
  %v7759 = vpow.pop %v7758
  %v7760 = vmul.f32 %v7750, 1.442695
  %v7761 = vpow.pop %v7760
  %v7762 = vmul.f32 %v7751, 1.442695
  %v7763 = vpow.pop %v7762
  %v7764 = vmul.f32 %v7752, 1.442695
  %v7765 = vpow.pop %v7764
  %v7766 = vmul.f32 %v7753, 1.442695
  %v7767 = vpow.pop %v7766
  %v7768 = vmul.f32 %v7754, 1.442695
  %v7769 = vpow.pop %v7768
  %v7770 = vmul.f32 %v7755, 1.442695
  %v7771 = vpow.pop %v7770
  %v7772 = vsel %vm76, %v7757, 0.0
  %7773 = vadd.xlane.f32.xlu0 %v7772
  %v7774 = vpop.xlane.xlu0 %7773
  %v7775 = vsel %vm76, %v7759, 0.0
  %7776 = vadd.xlane.f32.xlu0 %v7775
  %v7777 = vpop.xlane.xlu0 %7776
  %v7778 = vsel %vm76, %v7761, 0.0
  %7779 = vadd.xlane.f32.xlu0 %v7778
  %v7780 = vpop.xlane.xlu0 %7779
  %v7781 = vsel %vm76, %v7763, 0.0
  %7782 = vadd.xlane.f32.xlu0 %v7781
  %v7783 = vpop.xlane.xlu0 %7782
  %v7784 = vsel %vm76, %v7765, 0.0
  %7785 = vadd.xlane.f32.xlu0 %v7784
  %v7786 = vpop.xlane.xlu0 %7785
  %v7787 = vsel %vm76, %v7767, 0.0
  %7788 = vadd.xlane.f32.xlu0 %v7787
  %v7789 = vpop.xlane.xlu0 %7788
  %v7790 = vsel %vm76, %v7769, 0.0
  %7791 = vadd.xlane.f32.xlu0 %v7790
  %v7792 = vpop.xlane.xlu0 %7791
  %v7793 = vsel %vm76, %v7771, 0.0
  %7794 = vadd.xlane.f32.xlu0 %v7793
  %v7795 = vpop.xlane.xlu0 %7794
  %v7796 = vrcp.pop %v7774
  %v7797 = vrcp.pop %v7777
  %v7798 = vrcp.pop %v7780
  %v7799 = vrcp.pop %v7783
  %v7800 = vrcp.pop %v7786
  %v7801 = vrcp.pop %v7789
  %v7802 = vrcp.pop %v7792
  %v7803 = vrcp.pop %v7795
  %v7804 = vmul.f32 %v7757, %v7796
  %v7805 = vmul.f32 %v7759, %v7797
  %v7806 = vmul.f32 %v7761, %v7798
  %v7807 = vmul.f32 %v7763, %v7799
  %v7808 = vmul.f32 %v7765, %v7800
  %v7809 = vmul.f32 %v7767, %v7801
  %v7810 = vmul.f32 %v7769, %v7802
  %v7811 = vmul.f32 %v7771, %v7803
  %v7812 = vmul.f32 %v7804, %v934
  %v7813 = vmul.f32 %v7805, %v934
  %v7814 = vmul.f32 %v7806, %v934
  %v7815 = vmul.f32 %v7807, %v934
  %v7816 = vmul.f32 %v7808, %v934
  %v7817 = vmul.f32 %v7809, %v934
  %v7818 = vmul.f32 %v7810, %v934
  %v7819 = vmul.f32 %v7811, %v934
  %v7820 = vadd.f32 %v7567, %v7812
  %v7821 = vadd.f32 %v7568, %v7813
  %v7822 = vadd.f32 %v7569, %v7814
  %v7823 = vadd.f32 %v7570, %v7815
  %v7824 = vadd.f32 %v7571, %v7816
  %v7825 = vadd.f32 %v7572, %v7817
  %v7826 = vadd.f32 %v7573, %v7818
  %v7827 = vadd.f32 %v7574, %v7819
  %v7828 = vsel %vm76, %v7820, 0.0
  %7829 = vadd.xlane.f32.xlu0 %v7828
  %v7830 = vpop.xlane.xlu0 %7829
  %v7831 = vsel %vm76, %v7821, 0.0
  %7832 = vadd.xlane.f32.xlu0 %v7831
  %v7833 = vpop.xlane.xlu0 %7832
  %v7834 = vsel %vm76, %v7822, 0.0
  %7835 = vadd.xlane.f32.xlu0 %v7834
  %v7836 = vpop.xlane.xlu0 %7835
  %v7837 = vsel %vm76, %v7823, 0.0
  %7838 = vadd.xlane.f32.xlu0 %v7837
  %v7839 = vpop.xlane.xlu0 %7838
  %v7840 = vsel %vm76, %v7824, 0.0
  %7841 = vadd.xlane.f32.xlu0 %v7840
  %v7842 = vpop.xlane.xlu0 %7841
  %v7843 = vsel %vm76, %v7825, 0.0
  %7844 = vadd.xlane.f32.xlu0 %v7843
  %v7845 = vpop.xlane.xlu0 %7844
  %v7846 = vsel %vm76, %v7826, 0.0
  %7847 = vadd.xlane.f32.xlu0 %v7846
  %v7848 = vpop.xlane.xlu0 %7847
  %v7849 = vsel %vm76, %v7827, 0.0
  %7850 = vadd.xlane.f32.xlu0 %v7849
  %v7851 = vpop.xlane.xlu0 %7850
  %v7852 = vmul.f32 %v7830, %v3870
  %v7853 = vmul.f32 %v7833, %v3870
  %v7854 = vmul.f32 %v7836, %v3870
  %v7855 = vmul.f32 %v7839, %v3870
  %v7856 = vmul.f32 %v7842, %v3870
  %v7857 = vmul.f32 %v7845, %v3870
  %v7858 = vmul.f32 %v7848, %v3870
  %v7859 = vmul.f32 %v7851, %v3870
  %v7860 = vsub.f32 %v7820, %v7852
  %v7861 = vsub.f32 %v7821, %v7853
  %v7862 = vsub.f32 %v7822, %v7854
  %v7863 = vsub.f32 %v7823, %v7855
  %v7864 = vsub.f32 %v7824, %v7856
  %v7865 = vsub.f32 %v7825, %v7857
  %v7866 = vsub.f32 %v7826, %v7858
  %v7867 = vsub.f32 %v7827, %v7859
  %v7868 = vmul.f32 %v7860, %v7860
  %v7869 = vmul.f32 %v7861, %v7861
  %v7870 = vmul.f32 %v7862, %v7862
  %v7871 = vmul.f32 %v7863, %v7863
  %v7872 = vmul.f32 %v7864, %v7864
  %v7873 = vmul.f32 %v7865, %v7865
  %v7874 = vmul.f32 %v7866, %v7866
  %v7875 = vmul.f32 %v7867, %v7867
  %v7876 = vsel %vm76, %v7868, 0.0
  %7877 = vadd.xlane.f32.xlu0 %v7876
  %v7878 = vpop.xlane.xlu0 %7877
  %v7879 = vsel %vm76, %v7869, 0.0
  %7880 = vadd.xlane.f32.xlu0 %v7879
  %v7881 = vpop.xlane.xlu0 %7880
  %v7882 = vsel %vm76, %v7870, 0.0
  %7883 = vadd.xlane.f32.xlu0 %v7882
  %v7884 = vpop.xlane.xlu0 %7883
  %v7885 = vsel %vm76, %v7871, 0.0
  %7886 = vadd.xlane.f32.xlu0 %v7885
  %v7887 = vpop.xlane.xlu0 %7886
  %v7888 = vsel %vm76, %v7872, 0.0
  %7889 = vadd.xlane.f32.xlu0 %v7888
  %v7890 = vpop.xlane.xlu0 %7889
  %v7891 = vsel %vm76, %v7873, 0.0
  %7892 = vadd.xlane.f32.xlu0 %v7891
  %v7893 = vpop.xlane.xlu0 %7892
  %v7894 = vsel %vm76, %v7874, 0.0
  %7895 = vadd.xlane.f32.xlu0 %v7894
  %v7896 = vpop.xlane.xlu0 %7895
  %v7897 = vsel %vm76, %v7875, 0.0
  %7898 = vadd.xlane.f32.xlu0 %v7897
  %v7899 = vpop.xlane.xlu0 %7898
  %v7900 = vmul.f32 %v7878, %v3870
  %v7901 = vmul.f32 %v7881, %v3870
  %v7902 = vmul.f32 %v7884, %v3870
  %v7903 = vmul.f32 %v7887, %v3870
  %v7904 = vmul.f32 %v7890, %v3870
  %v7905 = vmul.f32 %v7893, %v3870
  %v7906 = vmul.f32 %v7896, %v3870
  %v7907 = vmul.f32 %v7899, %v3870
  %v7908 = vadd.f32 %v7900, 1e-05
  %v7909 = vadd.f32 %v7901, 1e-05
  %v7910 = vadd.f32 %v7902, 1e-05
  %v7911 = vadd.f32 %v7903, 1e-05
  %v7912 = vadd.f32 %v7904, 1e-05
  %v7913 = vadd.f32 %v7905, 1e-05
  %v7914 = vadd.f32 %v7906, 1e-05
  %v7915 = vadd.f32 %v7907, 1e-05
  %v7916 = vrsqrt.pop %v7908
  %v7917 = vrsqrt.pop %v7909
  %v7918 = vrsqrt.pop %v7910
  %v7919 = vrsqrt.pop %v7911
  %v7920 = vrsqrt.pop %v7912
  %v7921 = vrsqrt.pop %v7913
  %v7922 = vrsqrt.pop %v7914
  %v7923 = vrsqrt.pop %v7915
  %v7924 = vmul.f32 %v7860, %v7916
  %v7925 = vmul.f32 %v7861, %v7917
  %v7926 = vmul.f32 %v7862, %v7918
  %v7927 = vmul.f32 %v7863, %v7919
  %v7928 = vmul.f32 %v7864, %v7920
  %v7929 = vmul.f32 %v7865, %v7921
  %v7930 = vmul.f32 %v7866, %v7922
  %v7931 = vmul.f32 %v7867, %v7923
  %v7932 = vmul.f32 %v7924, %v4339
  %v7933 = vmul.f32 %v7925, %v4339
  %v7934 = vmul.f32 %v7926, %v4339
  %v7935 = vmul.f32 %v7927, %v4339
  %v7936 = vmul.f32 %v7928, %v4339
  %v7937 = vmul.f32 %v7929, %v4339
  %v7938 = vmul.f32 %v7930, %v4339
  %v7939 = vmul.f32 %v7931, %v4339
  %v7940 = vadd.f32 %v7932, %v4351
  %v7941 = vadd.f32 %v7933, %v4351
  %v7942 = vadd.f32 %v7934, %v4351
  %v7943 = vadd.f32 %v7935, %v4351
  %v7944 = vadd.f32 %v7936, %v4351
  %v7945 = vadd.f32 %v7937, %v4351
  %v7946 = vadd.f32 %v7938, %v4351
  %v7947 = vadd.f32 %v7939, %v4351
  %v7949 = vsel %vm76, %v7940, 0
  %v7952 = vsel %vm76, %v7941, 0
  %v7955 = vsel %vm76, %v7942, 0
  %v7958 = vsel %vm76, %v7943, 0
  %v7961 = vsel %vm76, %v7944, 0
  %v7964 = vsel %vm76, %v7945, 0
  %v7967 = vsel %vm76, %v7946, 0
  %v7970 = vsel %vm76, %v7947, 0
  %7972 = vmatprep.subr.mxu0 0.0
  %7973 = vmatpush1.msra.mxu0 %v945
  %7974 = vmatprep.subr.mxu0 0.0
  %7975 = vmatpush1.msra.mxu0 %v946
  %7976 = vmatprep.subr.mxu0 0.0
  %7977 = vmatpush1.msra.mxu0 %v947
  %7978 = vmatprep.subr.mxu0 0.0
  %7979 = vmatpush1.msra.mxu0 %v948
  %7980 = vmatprep.subr.mxu0 0.0
  %7981 = vmatpush1.msra.mxu0 0.0
  %7982 = vmatprep.subr.mxu0 0.0
  %7983 = vmatpush1.msra.mxu0 0.0
  %7984 = vmatprep.subr.mxu0 0.0
  %7985 = vmatpush1.msra.mxu0 0.0
  %7986 = vmatprep.subr.mxu0 0.0
  %7987 = vmatpush1.msra.mxu0 0.0
  %7988 = vmatprep.subr.mxu0 0.0
  %7989 = vmatpush1.msra.mxu0 0.0
  %7990 = vmatprep.subr.mxu0 0.0
  %7991 = vmatpush1.msra.mxu0 0.0
  %7992 = vmatprep.subr.mxu0 0.0
  %7993 = vmatpush1.msra.mxu0 0.0
  %7994 = vmatprep.subr.mxu0 0.0
  %7995 = vmatpush1.msra.mxu0 0.0
  %7996 = vmatprep.subr.mxu0 0.0
  %7997 = vmatpush1.msra.mxu0 0.0
  %7998 = vmatprep.subr.mxu0 0.0
  %7999 = vmatpush1.msra.mxu0 0.0
  %8000 = vmatprep.subr.mxu0 0.0
  %8001 = vmatpush1.msra.mxu0 0.0
  %8002 = vmatprep.subr.mxu0 0.0
  %8003 = vmatpush1.msra.mxu0 0.0
  %8004 = vmatprep.subr.mxu0 0.0
  %8005 = vmatpush1.msra.mxu0 0.0
  %8006 = vmatprep.subr.mxu0 0.0
  %8007 = vmatpush1.msra.mxu0 0.0
  %8008 = vmatprep.subr.mxu0 0.0
  %8009 = vmatpush1.msra.mxu0 0.0
  %8010 = vmatprep.subr.mxu0 0.0
  %8011 = vmatpush1.msra.mxu0 0.0
  %8012 = vmatprep.subr.mxu0 0.0
  %8013 = vmatpush1.msra.mxu0 0.0
  %8014 = vmatprep.subr.mxu0 0.0
  %8015 = vmatpush1.msra.mxu0 0.0
  %8016 = vmatprep.subr.mxu0 0.0
  %8017 = vmatpush1.msra.mxu0 0.0
  %8018 = vmatprep.subr.mxu0 0.0
  %8019 = vmatpush1.msra.mxu0 0.0
  %8020 = vmatprep.subr.mxu0 0.0
  %8021 = vmatpush1.msra.mxu0 0.0
  %8022 = vmatprep.subr.mxu0 0.0
  %8023 = vmatpush1.msra.mxu0 0.0
  %8024 = vmatprep.subr.mxu0 0.0
  %8025 = vmatpush1.msra.mxu0 0.0
  %8026 = vmatprep.subr.mxu0 0.0
  %8027 = vmatpush1.msra.mxu0 0.0
  %8028 = vmatprep.subr.mxu0 0.0
  %8029 = vmatpush1.msra.mxu0 0.0
  %8030 = vmatprep.subr.mxu0 0.0
  %8031 = vmatpush1.msra.mxu0 0.0
  %8032 = vmatprep.subr.mxu0 0.0
  %8033 = vmatpush1.msra.mxu0 0.0
  %8034 = vmatprep.subr.mxu0 0.0
  %8035 = vmatpush1.msra.mxu0 0.0
  %8036 = vmatprep.mubr.f32.mxu0 0.0
  %8037 = vmatmul.mubr.f32.gmra.mrb[0].mxu0 %v7949
  %v8038 = vpop.f32.mrb[0].mxu0
  %v8039 = vadd.f32 %v4363, %v8038
  %v8040 = vpop.f32.mrb[0].mxu0
  %8041 = vmatprep.mubr.f32.mxu0 0.0
  %8042 = vmatmul.mubr.f32.gmra.mrb[0].mxu0 %v7952
  %v8043 = vpop.f32.mrb[0].mxu0
  %v8044 = vadd.f32 %v4363, %v8043
  %v8045 = vpop.f32.mrb[0].mxu0
  %8046 = vmatprep.mubr.f32.mxu0 0.0
  %8047 = vmatmul.mubr.f32.gmra.mrb[0].mxu0 %v7955
  %v8048 = vpop.f32.mrb[0].mxu0
  %v8049 = vadd.f32 %v4363, %v8048
  %v8050 = vpop.f32.mrb[0].mxu0
  %8051 = vmatprep.mubr.f32.mxu0 0.0
  %8052 = vmatmul.mubr.f32.gmra.mrb[0].mxu0 %v7958
  %v8053 = vpop.f32.mrb[0].mxu0
  %v8054 = vadd.f32 %v4363, %v8053
  %v8055 = vpop.f32.mrb[0].mxu0
  %8056 = vmatprep.mubr.f32.mxu0 0.0
  %8057 = vmatmul.mubr.f32.gmra.mrb[0].mxu0 %v7961
  %v8058 = vpop.f32.mrb[0].mxu0
  %v8059 = vadd.f32 %v4363, %v8058
  %v8060 = vpop.f32.mrb[0].mxu0
  %8061 = vmatprep.mubr.f32.mxu0 0.0
  %8062 = vmatmul.mubr.f32.gmra.mrb[0].mxu0 %v7964
  %v8063 = vpop.f32.mrb[0].mxu0
  %v8064 = vadd.f32 %v4363, %v8063
  %v8065 = vpop.f32.mrb[0].mxu0
  %8066 = vmatprep.mubr.f32.mxu0 0.0
  %8067 = vmatmul.mubr.f32.gmra.mrb[0].mxu0 %v7967
  %v8068 = vpop.f32.mrb[0].mxu0
  %v8069 = vadd.f32 %v4363, %v8068
  %v8070 = vpop.f32.mrb[0].mxu0
  %8071 = vmatprep.mubr.f32.mxu0 0.0
  %8072 = vmatmul.mubr.f32.gmra.mrb[0].mxu0 %v7970
  %v8073 = vpop.f32.mrb[0].mxu0
  %v8074 = vadd.f32 %v4363, %v8073
  %v8075 = vpop.f32.mrb[0].mxu0
  %8076 = vdwg.mxu0
  %v8077 = vmax.f32 %v8039, 0.0
  %v8078 = vmax.f32 %v8044, 0.0
  %v8079 = vmax.f32 %v8049, 0.0
  %v8080 = vmax.f32 %v8054, 0.0
  %v8081 = vmax.f32 %v8059, 0.0
  %v8082 = vmax.f32 %v8064, 0.0
  %v8083 = vmax.f32 %v8069, 0.0
  %v8084 = vmax.f32 %v8074, 0.0
  %v8085 = vld [vmem:[%s2 + $0xe0] sm:$0xff]
  %v8086 = vld [vmem:[%s2 + $0xe8] sm:$0xff]
  %v8087 = vld [vmem:[%s2 + $0xf0] sm:$0xff]
  %v8088 = vld [vmem:[%s2 + $0xf8] sm:$0xff]
  %v8089 = vld [vmem:[%s2 + $0x100] sm:$0xff]
  %v8090 = vld [vmem:[%s2 + $0x108] sm:$0xff]
  %v8091 = vld [vmem:[%s2 + $0x110] sm:$0xff]
  %v8092 = vld [vmem:[%s2 + $0x118] sm:$0xff]
  %v8093 = vld [vmem:[%s2 + $0x120] sm:$0xff]
  %v8094 = vld [vmem:[%s2 + $0x128] sm:$0xff]
  %v8095 = vld [vmem:[%s2 + $0x130] sm:$0xff]
  %v8096 = vld [vmem:[%s2 + $0x138] sm:$0xff]
  %v8097 = vld [vmem:[%s2 + $0x140] sm:$0xff]
  %v8098 = vld [vmem:[%s2 + $0x148] sm:$0xff]
  %v8099 = vld [vmem:[%s2 + $0x150] sm:$0xff]
  %v8100 = vld [vmem:[%s2 + $0x158] sm:$0xff]
  %8101 = vmatprep.subr.mxu0 0.0
  %8102 = vmatpush1.msra.mxu0 %v8085
  %8103 = vmatprep.subr.mxu0 0.0
  %8104 = vmatpush1.msra.mxu0 %v8086
  %8105 = vmatprep.subr.mxu0 0.0
  %8106 = vmatpush1.msra.mxu0 %v8087
  %8107 = vmatprep.subr.mxu0 0.0
  %8108 = vmatpush1.msra.mxu0 %v8088
  %8109 = vmatprep.subr.mxu0 0.0
  %8110 = vmatpush1.msra.mxu0 %v8089
  %8111 = vmatprep.subr.mxu0 0.0
  %8112 = vmatpush1.msra.mxu0 %v8090
  %8113 = vmatprep.subr.mxu0 0.0
  %8114 = vmatpush1.msra.mxu0 %v8091
  %8115 = vmatprep.subr.mxu0 0.0
  %8116 = vmatpush1.msra.mxu0 %v8092
  %8117 = vmatprep.subr.mxu0 0.0
  %8118 = vmatpush1.msra.mxu0 %v8093
  %8119 = vmatprep.subr.mxu0 0.0
  %8120 = vmatpush1.msra.mxu0 %v8094
  %8121 = vmatprep.subr.mxu0 0.0
  %8122 = vmatpush1.msra.mxu0 %v8095
  %8123 = vmatprep.subr.mxu0 0.0
  %8124 = vmatpush1.msra.mxu0 %v8096
  %8125 = vmatprep.subr.mxu0 0.0
  %8126 = vmatpush1.msra.mxu0 %v8097
  %8127 = vmatprep.subr.mxu0 0.0
  %8128 = vmatpush1.msra.mxu0 %v8098
  %8129 = vmatprep.subr.mxu0 0.0
  %8130 = vmatpush1.msra.mxu0 %v8099
  %8131 = vmatprep.subr.mxu0 0.0
  %8132 = vmatpush1.msra.mxu0 %v8100
  %8133 = vmatprep.subr.mxu0 0.0
  %8134 = vmatpush1.msra.mxu0 0.0
  %8135 = vmatprep.subr.mxu0 0.0
  %8136 = vmatpush1.msra.mxu0 0.0
  %8137 = vmatprep.subr.mxu0 0.0
  %8138 = vmatpush1.msra.mxu0 0.0
  %8139 = vmatprep.subr.mxu0 0.0
  %8140 = vmatpush1.msra.mxu0 0.0
  %8141 = vmatprep.subr.mxu0 0.0
  %8142 = vmatpush1.msra.mxu0 0.0
  %8143 = vmatprep.subr.mxu0 0.0
  %8144 = vmatpush1.msra.mxu0 0.0
  %8145 = vmatprep.subr.mxu0 0.0
  %8146 = vmatpush1.msra.mxu0 0.0
  %8147 = vmatprep.subr.mxu0 0.0
  %8148 = vmatpush1.msra.mxu0 0.0
  %8149 = vmatprep.subr.mxu0 0.0
  %8150 = vmatpush1.msra.mxu0 0.0
  %8151 = vmatprep.subr.mxu0 0.0
  %8152 = vmatpush1.msra.mxu0 0.0
  %8153 = vmatprep.subr.mxu0 0.0
  %8154 = vmatpush1.msra.mxu0 0.0
  %8155 = vmatprep.subr.mxu0 0.0
  %8156 = vmatpush1.msra.mxu0 0.0
  %8157 = vmatprep.subr.mxu0 0.0
  %8158 = vmatpush1.msra.mxu0 0.0
  %8159 = vmatprep.subr.mxu0 0.0
  %8160 = vmatpush1.msra.mxu0 0.0
  %8161 = vmatprep.subr.mxu0 0.0
  %8162 = vmatpush1.msra.mxu0 0.0
  %8163 = vmatprep.subr.mxu0 0.0
  %8164 = vmatpush1.msra.mxu0 0.0
  %8165 = vmatprep.mubr.f32.mxu0 0.0
  %8166 = vmatmul.mubr.f32.gmra.mrb[0].mxu0 %v8077
  %v8167 = vpop.f32.mrb[0].mxu0
  %v8168 = vadd.f32 %v4520, %v8167
  %v8169 = vpop.f32.mrb[0].mxu0
  %8170 = vmatprep.mubr.f32.mxu0 0.0
  %8171 = vmatmul.mubr.f32.gmra.mrb[0].mxu0 %v8078
  %v8172 = vpop.f32.mrb[0].mxu0
  %v8173 = vadd.f32 %v4520, %v8172
  %v8174 = vpop.f32.mrb[0].mxu0
  %8175 = vmatprep.mubr.f32.mxu0 0.0
  %8176 = vmatmul.mubr.f32.gmra.mrb[0].mxu0 %v8079
  %v8177 = vpop.f32.mrb[0].mxu0
  %v8178 = vadd.f32 %v4520, %v8177
  %v8179 = vpop.f32.mrb[0].mxu0
  %8180 = vmatprep.mubr.f32.mxu0 0.0
  %8181 = vmatmul.mubr.f32.gmra.mrb[0].mxu0 %v8080
  %v8182 = vpop.f32.mrb[0].mxu0
  %v8183 = vadd.f32 %v4520, %v8182
  %v8184 = vpop.f32.mrb[0].mxu0
  %8185 = vmatprep.mubr.f32.mxu0 0.0
  %8186 = vmatmul.mubr.f32.gmra.mrb[0].mxu0 %v8081
  %v8187 = vpop.f32.mrb[0].mxu0
  %v8188 = vadd.f32 %v4520, %v8187
  %v8189 = vpop.f32.mrb[0].mxu0
  %8190 = vmatprep.mubr.f32.mxu0 0.0
  %8191 = vmatmul.mubr.f32.gmra.mrb[0].mxu0 %v8082
  %v8192 = vpop.f32.mrb[0].mxu0
  %v8193 = vadd.f32 %v4520, %v8192
  %v8194 = vpop.f32.mrb[0].mxu0
  %8195 = vmatprep.mubr.f32.mxu0 0.0
  %8196 = vmatmul.mubr.f32.gmra.mrb[0].mxu0 %v8083
  %v8197 = vpop.f32.mrb[0].mxu0
  %v8198 = vadd.f32 %v4520, %v8197
  %v8199 = vpop.f32.mrb[0].mxu0
  %8200 = vmatprep.mubr.f32.mxu0 0.0
  %8201 = vmatmul.mubr.f32.gmra.mrb[0].mxu0 %v8084
  %v8202 = vpop.f32.mrb[0].mxu0
  %v8203 = vadd.f32 %v4520, %v8202
  %v8204 = vpop.f32.mrb[0].mxu0
  %8205 = vdwg.mxu0
  %v8206 = vadd.f32 %v7940, %v8168
  %v8207 = vadd.f32 %v7941, %v8173
  %v8208 = vadd.f32 %v7942, %v8178
  %v8209 = vadd.f32 %v7943, %v8183
  %v8210 = vadd.f32 %v7944, %v8188
  %v8211 = vadd.f32 %v7945, %v8193
  %v8212 = vadd.f32 %v7946, %v8198
  %v8213 = vadd.f32 %v7947, %v8203
  %v8214 = vsel %vm76, %v8206, 0.0
  %8215 = vadd.xlane.f32.xlu0 %v8214
  %v8216 = vpop.xlane.xlu0 %8215
  %v8217 = vsel %vm76, %v8207, 0.0
  %8218 = vadd.xlane.f32.xlu0 %v8217
  %v8219 = vpop.xlane.xlu0 %8218
  %v8220 = vsel %vm76, %v8208, 0.0
  %8221 = vadd.xlane.f32.xlu0 %v8220
  %v8222 = vpop.xlane.xlu0 %8221
  %v8223 = vsel %vm76, %v8209, 0.0
  %8224 = vadd.xlane.f32.xlu0 %v8223
  %v8225 = vpop.xlane.xlu0 %8224
  %v8226 = vsel %vm76, %v8210, 0.0
  %8227 = vadd.xlane.f32.xlu0 %v8226
  %v8228 = vpop.xlane.xlu0 %8227
  %v8229 = vsel %vm76, %v8211, 0.0
  %8230 = vadd.xlane.f32.xlu0 %v8229
  %v8231 = vpop.xlane.xlu0 %8230
  %v8232 = vsel %vm76, %v8212, 0.0
  %8233 = vadd.xlane.f32.xlu0 %v8232
  %v8234 = vpop.xlane.xlu0 %8233
  %v8235 = vsel %vm76, %v8213, 0.0
  %8236 = vadd.xlane.f32.xlu0 %v8235
  %v8237 = vpop.xlane.xlu0 %8236
  %v8238 = vmul.f32 %v8216, %v3870
  %v8239 = vmul.f32 %v8219, %v3870
  %v8240 = vmul.f32 %v8222, %v3870
  %v8241 = vmul.f32 %v8225, %v3870
  %v8242 = vmul.f32 %v8228, %v3870
  %v8243 = vmul.f32 %v8231, %v3870
  %v8244 = vmul.f32 %v8234, %v3870
  %v8245 = vmul.f32 %v8237, %v3870
  %v8246 = vsub.f32 %v8206, %v8238
  %v8247 = vsub.f32 %v8207, %v8239
  %v8248 = vsub.f32 %v8208, %v8240
  %v8249 = vsub.f32 %v8209, %v8241
  %v8250 = vsub.f32 %v8210, %v8242
  %v8251 = vsub.f32 %v8211, %v8243
  %v8252 = vsub.f32 %v8212, %v8244
  %v8253 = vsub.f32 %v8213, %v8245
  %v8254 = vmul.f32 %v8246, %v8246
  %v8255 = vmul.f32 %v8247, %v8247
  %v8256 = vmul.f32 %v8248, %v8248
  %v8257 = vmul.f32 %v8249, %v8249
  %v8258 = vmul.f32 %v8250, %v8250
  %v8259 = vmul.f32 %v8251, %v8251
  %v8260 = vmul.f32 %v8252, %v8252
  %v8261 = vmul.f32 %v8253, %v8253
  %v8262 = vsel %vm76, %v8254, 0.0
  %8263 = vadd.xlane.f32.xlu0 %v8262
  %v8264 = vpop.xlane.xlu0 %8263
  %v8265 = vsel %vm76, %v8255, 0.0
  %8266 = vadd.xlane.f32.xlu0 %v8265
  %v8267 = vpop.xlane.xlu0 %8266
  %v8268 = vsel %vm76, %v8256, 0.0
  %8269 = vadd.xlane.f32.xlu0 %v8268
  %v8270 = vpop.xlane.xlu0 %8269
  %v8271 = vsel %vm76, %v8257, 0.0
  %8272 = vadd.xlane.f32.xlu0 %v8271
  %v8273 = vpop.xlane.xlu0 %8272
  %v8274 = vsel %vm76, %v8258, 0.0
  %8275 = vadd.xlane.f32.xlu0 %v8274
  %v8276 = vpop.xlane.xlu0 %8275
  %v8277 = vsel %vm76, %v8259, 0.0
  %8278 = vadd.xlane.f32.xlu0 %v8277
  %v8279 = vpop.xlane.xlu0 %8278
  %v8280 = vsel %vm76, %v8260, 0.0
  %8281 = vadd.xlane.f32.xlu0 %v8280
  %v8282 = vpop.xlane.xlu0 %8281
  %v8283 = vsel %vm76, %v8261, 0.0
  %8284 = vadd.xlane.f32.xlu0 %v8283
  %v8285 = vpop.xlane.xlu0 %8284
  %v8286 = vmul.f32 %v8264, %v3870
  %v8287 = vmul.f32 %v8267, %v3870
  %v8288 = vmul.f32 %v8270, %v3870
  %v8289 = vmul.f32 %v8273, %v3870
  %v8290 = vmul.f32 %v8276, %v3870
  %v8291 = vmul.f32 %v8279, %v3870
  %v8292 = vmul.f32 %v8282, %v3870
  %v8293 = vmul.f32 %v8285, %v3870
  %v8294 = vadd.f32 %v8286, 1e-05
  %v8295 = vadd.f32 %v8287, 1e-05
  %v8296 = vadd.f32 %v8288, 1e-05
  %v8297 = vadd.f32 %v8289, 1e-05
  %v8298 = vadd.f32 %v8290, 1e-05
  %v8299 = vadd.f32 %v8291, 1e-05
  %v8300 = vadd.f32 %v8292, 1e-05
  %v8301 = vadd.f32 %v8293, 1e-05
  %v8302 = vrsqrt.pop %v8294
  %v8303 = vrsqrt.pop %v8295
  %v8304 = vrsqrt.pop %v8296
  %v8305 = vrsqrt.pop %v8297
  %v8306 = vrsqrt.pop %v8298
  %v8307 = vrsqrt.pop %v8299
  %v8308 = vrsqrt.pop %v8300
  %v8309 = vrsqrt.pop %v8301
  %v8310 = vmul.f32 %v8246, %v8302
  %v8311 = vmul.f32 %v8247, %v8303
  %v8312 = vmul.f32 %v8248, %v8304
  %v8313 = vmul.f32 %v8249, %v8305
  %v8314 = vmul.f32 %v8250, %v8306
  %v8315 = vmul.f32 %v8251, %v8307
  %v8316 = vmul.f32 %v8252, %v8308
  %v8317 = vmul.f32 %v8253, %v8309
  %v8318 = vmul.f32 %v8310, %v4741
  %v8319 = vmul.f32 %v8311, %v4741
  %v8320 = vmul.f32 %v8312, %v4741
  %v8321 = vmul.f32 %v8313, %v4741
  %v8322 = vmul.f32 %v8314, %v4741
  %v8323 = vmul.f32 %v8315, %v4741
  %v8324 = vmul.f32 %v8316, %v4741
  %v8325 = vmul.f32 %v8317, %v4741
  %v8326 = vadd.f32 %v8318, %v4753
  %v8327 = vadd.f32 %v8319, %v4753
  %v8328 = vadd.f32 %v8320, %v4753
  %v8329 = vadd.f32 %v8321, %v4753
  %v8330 = vadd.f32 %v8322, %v4753
  %v8331 = vadd.f32 %v8323, %v4753
  %v8332 = vadd.f32 %v8324, %v4753
  %v8333 = vadd.f32 %v8325, %v4753
  %s8334 = scalar_lea.vmem %s4, 64
  %8335 = vst.msk [vmem:[%s8334] sm:$0xff] %vm76, %v8326
  %8336 = vst.msk [vmem:[%s8334 + $0x8] sm:$0xff] %vm76, %v8327
  %8337 = vst.msk [vmem:[%s8334 + $0x10] sm:$0xff] %vm76, %v8328
  %8338 = vst.msk [vmem:[%s8334 + $0x18] sm:$0xff] %vm76, %v8329
  %8339 = vst.msk [vmem:[%s8334 + $0x20] sm:$0xff] %vm76, %v8330
  %8340 = vst.msk [vmem:[%s8334 + $0x28] sm:$0xff] %vm76, %v8331
  %8341 = vst.msk [vmem:[%s8334 + $0x30] sm:$0xff] %vm76, %v8332
  %8342 = vst.msk [vmem:[%s8334 + $0x38] sm:$0xff] %vm76, %v8333
  // Predicated region
  $region18: #{ielf_forward.1} parent=0 // pred_check
    _
  $region19: #{ielf_forward.1} parent=0 // pred_check_branch
    %8344 = sbr.rel (0) target = $region21
  $region20: #{ielf_forward.1} parent=0 // pred_region
    _
  $region21: #{ielf_forward.1} parent=0 // pred_fallthru
    _
  // Predicated region
  $region22: #{ielf_forward.1} parent=0 // pred_check
    _
  $region23: #{ielf_forward.1} parent=0 // pred_check_branch
    %8346 = sbr.rel (0) target = $region25
  $region24: #{ielf_forward.1} parent=0 // pred_region
    _
  $region25: #{ielf_forward.1} parent=0 // pred_fallthru
    _

</llo_original>
